<compile_context>
chip_gen: v5e
topology: v5e:2x2
jax: 0.10.0
libtpu: 0.0.40
codegen_flags: <defaults>
</compile_context>

<pallas_src>
import jax
import jax.numpy as jnp
from jax import lax
from jax.experimental import pallas as pl
from jax.experimental.pallas import tpu as pltpu

_IN_EPS = 1e-5                       # torch.nn.InstanceNorm2d default eps
_VMEM_LIMIT = 48 * 1024 * 1024       # explicit scoped-VMEM cap (safe on v5e/v6e/v7x)
_TM_CAP = 512                        # spatial-row tile cap (multiple of 8)
_TK_CAP = 1024                       # contraction tile cap (multiple of 128)
_TC_CAP = 256                        # output-channel tile cap (multiple of 128)


def _round_up(x, m):
    return (x + m - 1) // m * m


def _choose_tile(total, cap, quantum):
    """Largest divisor of `total` that is <= cap and a multiple of `quantum`;
    falls back to the full extent (always legal as a block dim)."""
    if total <= cap:
        return total
    d = (cap // quantum) * quantum
    while d >= quantum:
        if total % d == 0:
            return d
        d -= quantum
    return total


# ----------------------------------------------------------------------------
# Kernel 1: tiled GEMM + bias, optionally accumulating per-(n, c) sum / sumsq
# (for InstanceNorm), optionally fusing the activation when there is no norm.
# Grid: (N, Cp/tc, M/tm, Kp/tk);  K (and M for the stats) are reduction axes.
# ----------------------------------------------------------------------------
def _make_gemm_kernel(do_stats, act):
    def kernel(p_ref, w_ref, b_ref, *rest):
        if do_stats:
            y_ref, s1_ref, s2_ref, acc_ref = rest
        else:
            y_ref, acc_ref = rest
        m = pl.program_id(2)
        k = pl.program_id(3)
        nk = pl.num_programs(3)

        @pl.when(k == 0)
        def _():
            acc_ref[...] = jnp.zeros_like(acc_ref)

        if do_stats:
            @pl.when((m == 0) & (k == 0))
            def _():
                s1_ref[...] = jnp.zeros_like(s1_ref)
                s2_ref[...] = jnp.zeros_like(s2_ref)

        acc_ref[...] += jnp.dot(p_ref[0], w_ref[...],
                                preferred_element_type=jnp.float32)

        @pl.when(k == nk - 1)
        def _():
            val = acc_ref[...] + b_ref[...]          # [tm, tc] + [1, tc]
            if do_stats:
                s1_ref[0] = s1_ref[0] + jnp.sum(val, axis=0, keepdims=True)
                s2_ref[0] = s2_ref[0] + jnp.sum(val * val, axis=0,
                                                keepdims=True)
            if act == 'relu':
                val = jnp.maximum(val, 0.0)
            elif act == 'tanh':
                val = jnp.tanh(val)
            y_ref[0] = val.astype(y_ref.dtype)

    return kernel


# ----------------------------------------------------------------------------
# Kernel 2: InstanceNorm finalize (+ residual add + activation), fully parallel.
# ----------------------------------------------------------------------------
def _make_norm_kernel(act, add_res, inv_m):
    def kernel(y_ref, s1_ref, s2_ref, *rest):
        if add_res:
            r_ref, o_ref = rest
        else:
            (o_ref,) = rest
        mean = s1_ref[0] * inv_m                     # [1, tc]
        ex2 = s2_ref[0] * inv_m
        var = jnp.maximum(ex2 - mean * mean, 0.0)    # single-pass variance
        val = (y_ref[0] - mean) * lax.rsqrt(var + _IN_EPS)
        if add_res:
            val = val + r_ref[0]
        if act == 'relu':
            val = jnp.maximum(val, 0.0)
        elif act == 'tanh':
            val = jnp.tanh(val)
        o_ref[0] = val.astype(o_ref.dtype)

    return kernel


# ----------------------------------------------------------------------------
# Wrapper: tiled fused conv (GEMM [+ IN stats] -> [normalize + res + act])
# ----------------------------------------------------------------------------
def fused_conv(patches, w_mat, bias, *, do_norm, act, res=None, m_true):
    """patches: [N, M, Kp] bf16, w_mat: [Kp, Cp] f32, bias: [Cp] f32,
    res: [N, M, Cp] f32 or None."""
    N, M, Kp = patches.shape
    Cp = w_mat.shape[1]
    tm = _choose_tile(M, _TM_CAP, 8)
    tk = _choose_tile(Kp, _TK_CAP, 128)
    tc = _choose_tile(Cp, _TC_CAP, 128)
    n_mt, n_kt, n_ct = M // tm, Kp // tk, Cp // tc

    p_bf = patches.astype(jnp.bfloat16)
    w_bf = w_mat.astype(jnp.bfloat16)
    b2 = bias.reshape(1, Cp).astype(jnp.float32)

    gemm_in_specs = [
        pl.BlockSpec((1, tm, tk), lambda n, c, m, k: (n, m, k)),
        pl.BlockSpec((tk, tc), lambda n, c, m, k: (k, c)),
        pl.BlockSpec((1, tc), lambda n, c, m, k: (0, c)),
    ]
    y_spec = pl.BlockSpec((1, tm, tc), lambda n, c, m, k: (n, m, c))
    scratch = [pltpu.VMEM((tm, tc), jnp.float32)]
    grid = (N, n_ct, n_mt, n_kt)

    if do_norm:
        stat_spec = pl.BlockSpec((1, 1, tc), lambda n, c, m, k: (n, 0, c))
        y, s1, s2 = pl.pallas_call(
            _make_gemm_kernel(True, 'none'),
            grid=grid,
            in_specs=gemm_in_specs,
            out_specs=(y_spec, stat_spec, stat_spec),
            out_shape=(
                jax.ShapeDtypeStruct((N, M, Cp), jnp.float32),
                jax.ShapeDtypeStruct((N, 1, Cp), jnp.float32),
                jax.ShapeDtypeStruct((N, 1, Cp), jnp.float32),
            ),
            scratch_shapes=scratch,
            compiler_params=pltpu.CompilerParams(
                dimension_semantics=("parallel", "parallel",
                                     "arbitrary", "arbitrary"),
                vmem_limit_bytes=_VMEM_LIMIT),
        )(p_bf, w_bf, b2)

        norm_in_specs = [
            pl.BlockSpec((1, tm, tc), lambda n, m, c: (n, m, c)),
            pl.BlockSpec((1, 1, tc), lambda n, m, c: (n, 0, c)),
            pl.BlockSpec((1, 1, tc), lambda n, m, c: (n, 0, c)),
        ]
        args = [y, s1, s2]
        if res is not None:
            norm_in_specs.append(
                pl.BlockSpec((1, tm, tc), lambda n, m, c: (n, m, c)))
            args.append(res)
        return pl.pallas_call(
            _make_norm_kernel(act, res is not None, 1.0 / float(m_true)),
            grid=(N, n_mt, n_ct),
            in_specs=norm_in_specs,
            out_specs=pl.BlockSpec((1, tm, tc), lambda n, m, c: (n, m, c)),
            out_shape=jax.ShapeDtypeStruct((N, M, Cp), jnp.float32),
            compiler_params=pltpu.CompilerParams(
                dimension_semantics=("parallel", "parallel", "parallel"),
                vmem_limit_bytes=_VMEM_LIMIT),
        )(*args)

    # No norm: fuse the activation straight into the GEMM epilogue.
    assert res is None
    return pl.pallas_call(
        _make_gemm_kernel(False, act),
        grid=grid,
        in_specs=gemm_in_specs,
        out_specs=y_spec,
        out_shape=jax.ShapeDtypeStruct((N, M, Cp), jnp.float32),
        scratch_shapes=scratch,
        compiler_params=pltpu.CompilerParams(
            dimension_semantics=("parallel", "parallel",
                                 "parallel", "arbitrary"),
            vmem_limit_bytes=_VMEM_LIMIT),
    )(p_bf, w_bf, b2)


# ----------------------------------------------------------------------------
# Plain-JAX glue: padding, im2col, weight reshapes (layout plumbing only)
# ----------------------------------------------------------------------------
def _pad2d(x, p, mode):
    if p == 0:
        return x
    widths = ((0, 0), (p, p), (p, p), (0, 0))
    if mode == 'reflect':
        return jnp.pad(x, widths, mode='reflect')
    return jnp.pad(x, widths)


def _im2col(x, k, stride):
    """x: NHWC (already padded). Returns ([N, Ho*Wo, k*k*C], Ho, Wo)."""
    N, H, W, C = x.shape
    Ho = (H - k) // stride + 1
    Wo = (W - k) // stride + 1
    cols = []
    for i in range(k):
        for j in range(k):
            cols.append(x[:, i:i + Ho * stride:stride,
                          j:j + Wo * stride:stride, :])
    patches = jnp.stack(cols, axis=3)            # [N, Ho, Wo, k*k, C]
    return patches.reshape(N, Ho * Wo, k * k * C), Ho, Wo


def _conv_core(xp, w_conv, b, *, stride, do_norm, act, res=None):
    """xp: NHWC (already spatially padded / dilated; channels may carry zero
    padding).  w_conv: forward-conv weight (Cout_true, Cin_true, k, k)."""
    N, _, _, cin_p = xp.shape
    cout, cin_t, k, _ = w_conv.shape

    patches, Ho, Wo = _im2col(xp.astype(jnp.bfloat16), k, stride)
    M = Ho * Wo
    K_raw = k * k * cin_p
    Kp = _round_up(K_raw, 128)
    Cp = _round_up(cout, 128)
    if Kp > K_raw:
        patches = jnp.pad(patches, ((0, 0), (0, 0), (0, Kp - K_raw)))

    # Zero-pad weight over the (carried) padded input channels and padded
    # output channels; flatten to [Kp, Cp] in (tap, cin) order (matches im2col).
    w_full = jnp.zeros((cout, cin_p, k, k), jnp.float32)
    w_full = w_full.at[:, :cin_t].set(w_conv.astype(jnp.float32))
    w_mat = jnp.transpose(w_full, (2, 3, 1, 0)).reshape(K_raw, cout)
    w_mat = jnp.pad(w_mat, ((0, Kp - K_raw), (0, Cp - cout)))
    b_pad = jnp.pad(b.astype(jnp.float32), (0, Cp - cout))

    res_flat = None if res is None else res.reshape(N, M, res.shape[-1])
    out = fused_conv(patches, w_mat, b_pad, do_norm=do_norm, act=act,
                     res=res_flat, m_true=M)
    return out.reshape(N, Ho, Wo, Cp)


def conv_layer(x, w_t, b, *, stride, pad, pad_mode, do_norm, act, res=None):
    return _conv_core(_pad2d(x, pad, pad_mode), w_t, b, stride=stride,
                      do_norm=do_norm, act=act, res=res)


def deconv_layer(x, w_t, b, *, do_norm, act):
    """ConvTranspose2d(k=3, s=2, p=1, output_padding=1) as dilate + conv."""
    N, H, W, C = x.shape
    k, s, p, op = 3, 2, 1, 1
    xd = jnp.zeros((N, (H - 1) * s + 1, (W - 1) * s + 1, C), x.dtype)
    xd = xd.at[:, ::s, ::s, :].set(x)
    lo, hi = k - 1 - p, k - 1 - p + op
    xd = jnp.pad(xd, ((0, 0), (lo, hi), (lo, hi), (0, 0)))
    # Equivalent forward-conv weight: flip spatially, swap in/out channels.
    w_conv = jnp.transpose(jnp.flip(w_t, axis=(2, 3)), (1, 0, 2, 3))
    return _conv_core(xd, w_conv, b, stride=1, do_norm=do_norm, act=act)


# ----------------------------------------------------------------------------
# Parameter init (deterministic: normal * 0.02 weights, zero bias)
# ----------------------------------------------------------------------------
def init_params(key, in_ch, out_ch, base, num_blocks):
    keys = iter(jax.random.split(key, 64))

    def conv_p(cin, cout, k):
        w = jax.random.normal(next(keys), (cout, cin, k, k), jnp.float32) * 0.02
        return w, jnp.zeros((cout,), jnp.float32)

    def deconv_p(cin, cout, k):
        w = jax.random.normal(next(keys), (cin, cout, k, k), jnp.float32) * 0.02
        return w, jnp.zeros((cout,), jnp.float32)

    return {
        'c0': conv_p(in_ch, base, 7),
        'd0': conv_p(base, base * 2, 3),
        'd1': conv_p(base * 2, base * 4, 3),
        'res': [(conv_p(base * 4, base * 4, 3), conv_p(base * 4, base * 4, 3))
                for _ in range(num_blocks)],
        'u0': deconv_p(base * 4, base * 2, 3),
        'u1': deconv_p(base * 2, base, 3),
        'cf': conv_p(base, out_ch, 7),
    }


# ----------------------------------------------------------------------------
# Full ResnetGenerator forward (NCHW in -> NCHW out)
# ----------------------------------------------------------------------------
@jax.jit
def resnet_generator_forward(params, x_nchw):
    x = jnp.transpose(x_nchw, (0, 2, 3, 1)).astype(jnp.float32)  # NHWC

    w, b = params['c0']
    x = conv_layer(x, w, b, stride=1, pad=3, pad_mode='reflect',
                   do_norm=True, act='relu')
    w, b = params['d0']
    x = conv_layer(x, w, b, stride=2, pad=1, pad_mode='zeros',
                   do_norm=True, act='relu')
    w, b = params['d1']
    x = conv_layer(x, w, b, stride=2, pad=1, pad_mode='zeros',
                   do_norm=True, act='relu')

    for (w1, b1), (w2, b2) in params['res']:
        skip = x
        h = conv_layer(x, w1, b1, stride=1, pad=1, pad_mode='reflect',
                       do_norm=True, act='relu')
        x = conv_layer(h, w2, b2, stride=1, pad=1, pad_mode='reflect',
                       do_norm=True, act='none', res=skip)

    w, b = params['u0']
    x = deconv_layer(x, w, b, do_norm=True, act='relu')
    w, b = params['u1']
    x = deconv_layer(x, w, b, do_norm=True, act='relu')

    w, b = params['cf']
    out_ch = w.shape[0]
    x = conv_layer(x, w, b, stride=1, pad=3, pad_mode='reflect',
                   do_norm=False, act='tanh')

    x = x[..., :out_ch]                           # strip channel padding
    return jnp.transpose(x, (0, 3, 1, 2))         # back to NCHW


if __name__ == "__main__":
    # Small synthetic config: in_channels=3, out_channels=3, base_channels=8,
    # num_blocks=2, input (n, c, h, w) = (2, 3, 16, 16).
    key = jax.random.PRNGKey(0)
    k_x, k_p = jax.random.split(key)
    x = jax.random.normal(k_x, (2, 3, 16, 16), jnp.float32)
    params = init_params(k_p, in_ch=3, out_ch=3, base=8, num_blocks=2)

    y = resnet_generator_forward(params, x)
    jax.block_until_ready(y)
    assert y.shape == (2, 3, 16, 16), y.shape
    assert bool(jnp.all(jnp.isfinite(y)))
    print("KERNEL_OK")
</pallas_src>

<mosaic_0001>
module attributes {stable_mosaic.version = 11 : i64} {
  func.func @kernel(%arg0: i32, %arg1: i32, %arg2: i32, %arg3: i32, %arg4: memref<1x256x256xbf16, #tpu.memory_space<vmem>>, %arg5: memref<256x128xbf16, #tpu.memory_space<vmem>>, %arg6: memref<1x128xf32, #tpu.memory_space<vmem>>, %arg7: memref<1x256x128xf32, #tpu.memory_space<vmem>>, %arg8: memref<1x1x128xf32, #tpu.memory_space<vmem>>, %arg9: memref<1x1x128xf32, #tpu.memory_space<vmem>>, %arg10: memref<256x128xf32, #tpu.memory_space<vmem>>) attributes {dimension_semantics = [#tpu.dimension_semantics<parallel>, #tpu.dimension_semantics<parallel>, #tpu.dimension_semantics<arbitrary>, #tpu.dimension_semantics<arbitrary>], iteration_bounds = array<i64: 2, 1, 1, 1>, scalar_prefetch = 0 : i64, scratch_operands = 1 : i64, tpu.core_type = #tpu.core_type<tc>, window_params = [{transform_indices = @transform_0, window_bounds = array<i64: 1, 256, 256>}, {transform_indices = @transform_1, window_bounds = array<i64: 256, 128>}, {transform_indices = @transform_2, window_bounds = array<i64: 1, 128>}, {transform_indices = @transform_3, window_bounds = array<i64: 1, 256, 128>}, {transform_indices = @transform_4, window_bounds = array<i64: 1, 1, 128>}, {transform_indices = @transform_5, window_bounds = array<i64: 1, 1, 128>}]} {
    %c0_i32 = arith.constant 0 : i32
    %0 = arith.cmpi eq, %arg3, %c0_i32 : i32
    %1 = arith.extui %0 : i1 to i32
    %c0_i32_0 = arith.constant 0 : i32
    %2 = arith.cmpi ne, %1, %c0_i32_0 : i32
    scf.if %2 {
      %cst_14 = arith.constant 0.000000e+00 : f32
      %18 = vector.broadcast %cst_14 : f32 to vector<256x128xf32>
      %c0_15 = arith.constant 0 : index
      %c0_16 = arith.constant 0 : index
      %19 = vector.load %arg10[%c0_15, %c0_16] : memref<256x128xf32, #tpu.memory_space<vmem>>, vector<256x128xf32>
      tpu.vector_store %arg10[%c0_15, %c0_16], %18 {strides = array<i32>} : memref<256x128xf32, #tpu.memory_space<vmem>>, vector<256x128xf32>,
    } else {
    }
    %c0_i32_1 = arith.constant 0 : i32
    %3 = arith.cmpi eq, %arg2, %c0_i32_1 : i32
    %c0_i32_2 = arith.constant 0 : i32
    %4 = arith.cmpi eq, %arg3, %c0_i32_2 : i32
    %5 = arith.andi %3, %4 : i1
    %6 = arith.extui %5 : i1 to i32
    %c0_i32_3 = arith.constant 0 : i32
    %7 = arith.cmpi ne, %6, %c0_i32_3 : i32
    scf.if %7 {
      %cst_14 = arith.constant 0.000000e+00 : f32
      %18 = vector.broadcast %cst_14 : f32 to vector<1x1x128xf32>
      %c0_15 = arith.constant 0 : index
      %c0_16 = arith.constant 0 : index
      %c0_17 = arith.constant 0 : index
      %19 = vector.load %arg8[%c0_15, %c0_16, %c0_17] : memref<1x1x128xf32, #tpu.memory_space<vmem>>, vector<1x1x128xf32>
      tpu.vector_store %arg8[%c0_15, %c0_16, %c0_17], %18 {strides = array<i32>} : memref<1x1x128xf32, #tpu.memory_space<vmem>>, vector<1x1x128xf32>,
      %cst_18 = arith.constant 0.000000e+00 : f32
      %20 = vector.broadcast %cst_18 : f32 to vector<1x1x128xf32>
      %c0_19 = arith.constant 0 : index
      %c0_20 = arith.constant 0 : index
      %c0_21 = arith.constant 0 : index
      %21 = vector.load %arg9[%c0_19, %c0_20, %c0_21] : memref<1x1x128xf32, #tpu.memory_space<vmem>>, vector<1x1x128xf32>
      tpu.vector_store %arg9[%c0_19, %c0_20, %c0_21], %20 {strides = array<i32>} : memref<1x1x128xf32, #tpu.memory_space<vmem>>, vector<1x1x128xf32>,
    } else {
    }
    %c0 = arith.constant 0 : index
    %c0_4 = arith.constant 0 : index
    %8 = vector.load %arg10[%c0, %c0_4] : memref<256x128xf32, #tpu.memory_space<vmem>>, vector<256x128xf32>
    %c0_5 = arith.constant 0 : index
    %c0_6 = arith.constant 0 : index
    %c0_7 = arith.constant 0 : index
    %9 = vector.load %arg4[%c0_5, %c0_6, %c0_7] : memref<1x256x256xbf16, #tpu.memory_space<vmem>>, vector<1x256x256xbf16>
    %10 = vector.shape_cast %9 : vector<1x256x256xbf16> to vector<256x256xbf16>
    %c0_8 = arith.constant 0 : index
    %c0_9 = arith.constant 0 : index
    %11 = vector.load %arg5[%c0_8, %c0_9] : memref<256x128xbf16, #tpu.memory_space<vmem>>, vector<256x128xbf16>
    %cst = arith.constant dense<0.000000e+00> : vector<256x128xf32>
    %12 = tpu.matmul %10, %11, %cst {dimension_numbers = #tpu.dot_dimension_numbers<[1], [0], [0], [1], [0, 0, 1, 1], [], []>} : vector<256x256xbf16>, vector<256x128xbf16>, vector<256x128xf32> -> vector<256x128xf32>
    %13 = arith.addf %8, %12 : vector<256x128xf32>
    %c0_10 = arith.constant 0 : index
    %c0_11 = arith.constant 0 : index
    %14 = vector.load %arg10[%c0_10, %c0_11] : memref<256x128xf32, #tpu.memory_space<vmem>>, vector<256x128xf32>
    tpu.vector_store %arg10[%c0_10, %c0_11], %13 {strides = array<i32>} : memref<256x128xf32, #tpu.memory_space<vmem>>, vector<256x128xf32>,
    %c0_i32_12 = arith.constant 0 : i32
    %15 = arith.cmpi eq, %arg3, %c0_i32_12 : i32
    %16 = arith.extui %15 : i1 to i32
    %c0_i32_13 = arith.constant 0 : i32
    %17 = arith.cmpi ne, %16, %c0_i32_13 : i32
    scf.if %17 {
      %c0_14 = arith.constant 0 : index
      %c0_15 = arith.constant 0 : index
      %18 = vector.load %arg10[%c0_14, %c0_15] : memref<256x128xf32, #tpu.memory_space<vmem>>, vector<256x128xf32>
      %c0_16 = arith.constant 0 : index
      %c0_17 = arith.constant 0 : index
      %19 = vector.load %arg6[%c0_16, %c0_17] : memref<1x128xf32, #tpu.memory_space<vmem>>, vector<1x128xf32>
      %20 = vector.broadcast %19 : vector<1x128xf32> to vector<256x128xf32>
      %21 = arith.addf %18, %20 : vector<256x128xf32>
      %c0_18 = arith.constant 0 : index
      %c0_19 = arith.constant 0 : index
      %c0_20 = arith.constant 0 : index
      %22 = vector.load %arg8[%c0_18, %c0_19, %c0_20] : memref<1x1x128xf32, #tpu.memory_space<vmem>>, vector<1x1x128xf32>
      %23 = vector.shape_cast %22 : vector<1x1x128xf32> to vector<1x128xf32>
      %cst_21 = arith.constant dense<0.000000e+00> : vector<128xf32>
      %24 = vector.multi_reduction <add>, %21, %cst_21 [0] : vector<256x128xf32> to vector<128xf32>
      %25 = vector.shape_cast %24 : vector<128xf32> to vector<1x128xf32>
      %26 = arith.addf %23, %25 : vector<1x128xf32>
      %c0_22 = arith.constant 0 : index
      %c0_23 = arith.constant 0 : index
      %c0_24 = arith.constant 0 : index
      %27 = vector.load %arg8[%c0_22, %c0_23, %c0_24] : memref<1x1x128xf32, #tpu.memory_space<vmem>>, vector<1x1x128xf32>
      %28 = vector.shape_cast %27 : vector<1x1x128xf32> to vector<1x128xf32>
      %29 = vector.shape_cast %26 : vector<1x128xf32> to vector<1x1x128xf32>
      tpu.vector_store %arg8[%c0_22, %c0_23, %c0_24], %29 {strides = array<i32>} : memref<1x1x128xf32, #tpu.memory_space<vmem>>, vector<1x1x128xf32>,
      %c0_25 = arith.constant 0 : index
      %c0_26 = arith.constant 0 : index
      %c0_27 = arith.constant 0 : index
      %30 = vector.load %arg9[%c0_25, %c0_26, %c0_27] : memref<1x1x128xf32, #tpu.memory_space<vmem>>, vector<1x1x128xf32>
      %31 = vector.shape_cast %30 : vector<1x1x128xf32> to vector<1x128xf32>
      %32 = arith.mulf %21, %21 : vector<256x128xf32>
      %cst_28 = arith.constant dense<0.000000e+00> : vector<128xf32>
      %33 = vector.multi_reduction <add>, %32, %cst_28 [0] : vector<256x128xf32> to vector<128xf32>
      %34 = vector.shape_cast %33 : vector<128xf32> to vector<1x128xf32>
      %35 = arith.addf %31, %34 : vector<1x128xf32>
      %c0_29 = arith.constant 0 : index
      %c0_30 = arith.constant 0 : index
      %c0_31 = arith.constant 0 : index
      %36 = vector.load %arg9[%c0_29, %c0_30, %c0_31] : memref<1x1x128xf32, #tpu.memory_space<vmem>>, vector<1x1x128xf32>
      %37 = vector.shape_cast %36 : vector<1x1x128xf32> to vector<1x128xf32>
      %38 = vector.shape_cast %35 : vector<1x128xf32> to vector<1x1x128xf32>
      tpu.vector_store %arg9[%c0_29, %c0_30, %c0_31], %38 {strides = array<i32>} : memref<1x1x128xf32, #tpu.memory_space<vmem>>, vector<1x1x128xf32>,
      %c0_32 = arith.constant 0 : index
      %c0_33 = arith.constant 0 : index
      %c0_34 = arith.constant 0 : index
      %39 = vector.load %arg7[%c0_32, %c0_33, %c0_34] : memref<1x256x128xf32, #tpu.memory_space<vmem>>, vector<1x256x128xf32>
      %40 = vector.shape_cast %39 : vector<1x256x128xf32> to vector<256x128xf32>
      %41 = vector.shape_cast %21 : vector<256x128xf32> to vector<1x256x128xf32>
      tpu.vector_store %arg7[%c0_32, %c0_33, %c0_34], %41 {strides = array<i32>} : memref<1x256x128xf32, #tpu.memory_space<vmem>>, vector<1x256x128xf32>,
    } else {
    }
    return
  }
  func.func @transform_0(%arg0: i32, %arg1: i32, %arg2: i32, %arg3: i32) -> (i32, i32, i32) {
    %c0_i32 = arith.constant 0 : i32
    return %arg0, %arg2, %arg3 : i32, i32, i32
  }
  func.func @transform_1(%arg0: i32, %arg1: i32, %arg2: i32, %arg3: i32) -> (i32, i32) {
    %c0_i32 = arith.constant 0 : i32
    return %arg3, %arg1 : i32, i32
  }
  func.func @transform_2(%arg0: i32, %arg1: i32, %arg2: i32, %arg3: i32) -> (i32, i32) {
    %c0_i32 = arith.constant 0 : i32
    %c0_i32_0 = arith.constant 0 : i32
    return %c0_i32, %arg1 : i32, i32
  }
  func.func @transform_3(%arg0: i32, %arg1: i32, %arg2: i32, %arg3: i32) -> (i32, i32, i32) {
    %c0_i32 = arith.constant 0 : i32
    return %arg0, %arg2, %arg1 : i32, i32, i32
  }
  func.func @transform_4(%arg0: i32, %arg1: i32, %arg2: i32, %arg3: i32) -> (i32, i32, i32) {
    %c0_i32 = arith.constant 0 : i32
    %c0_i32_0 = arith.constant 0 : i32
    return %arg0, %c0_i32, %arg1 : i32, i32, i32
  }
  func.func @transform_5(%arg0: i32, %arg1: i32, %arg2: i32, %arg3: i32) -> (i32, i32, i32) {
    %c0_i32 = arith.constant 0 : i32
    %c0_i32_0 = arith.constant 0 : i32
    return %arg0, %c0_i32, %arg1 : i32, i32, i32
  }
}

module attributes {stable_mosaic.version = 11 : i64} {
  func.func @kernel(%arg0: i32, %arg1: i32, %arg2: i32, %arg3: memref<1x256x128xf32, #tpu.memory_space<vmem>>, %arg4: memref<1x1x128xf32, #tpu.memory_space<vmem>>, %arg5: memref<1x1x128xf32, #tpu.memory_space<vmem>>, %arg6: memref<1x256x128xf32, #tpu.memory_space<vmem>>) attributes {dimension_semantics = [#tpu.dimension_semantics<parallel>, #tpu.dimension_semantics<parallel>, #tpu.dimension_semantics<parallel>], iteration_bounds = array<i64: 2, 1, 1>, scalar_prefetch = 0 : i64, scratch_operands = 0 : i64, tpu.core_type = #tpu.core_type<tc>, window_params = [{transform_indices = @transform_0, window_bounds = array<i64: 1, 256, 128>}, {transform_indices = @transform_1, window_bounds = array<i64: 1, 1, 128>}, {transform_indices = @transform_2, window_bounds = array<i64: 1, 1, 128>}, {transform_indices = @transform_3, window_bounds = array<i64: 1, 256, 128>}]} {
    %c0 = arith.constant 0 : index
    %c0_0 = arith.constant 0 : index
    %c0_1 = arith.constant 0 : index
    %0 = vector.load %arg4[%c0, %c0_0, %c0_1] : memref<1x1x128xf32, #tpu.memory_space<vmem>>, vector<1x1x128xf32>
    %1 = vector.shape_cast %0 : vector<1x1x128xf32> to vector<1x128xf32>
    %cst = arith.constant 3.906250e-03 : f32
    %2 = vector.broadcast %cst : f32 to vector<1x128xf32>
    %3 = arith.mulf %1, %2 : vector<1x128xf32>
    %c0_2 = arith.constant 0 : index
    %c0_3 = arith.constant 0 : index
    %c0_4 = arith.constant 0 : index
    %4 = vector.load %arg5[%c0_2, %c0_3, %c0_4] : memref<1x1x128xf32, #tpu.memory_space<vmem>>, vector<1x1x128xf32>
    %5 = vector.shape_cast %4 : vector<1x1x128xf32> to vector<1x128xf32>
    %cst_5 = arith.constant 3.906250e-03 : f32
    %6 = vector.broadcast %cst_5 : f32 to vector<1x128xf32>
    %7 = arith.mulf %5, %6 : vector<1x128xf32>
    %8 = arith.mulf %3, %3 : vector<1x128xf32>
    %9 = arith.subf %7, %8 : vector<1x128xf32>
    %cst_6 = arith.constant 0.000000e+00 : f32
    %10 = vector.broadcast %cst_6 : f32 to vector<1x128xf32>
    %11 = arith.maximumf %9, %10 : vector<1x128xf32>
    %c0_7 = arith.constant 0 : index
    %c0_8 = arith.constant 0 : index
    %c0_9 = arith.constant 0 : index
    %12 = vector.load %arg3[%c0_7, %c0_8, %c0_9] : memref<1x256x128xf32, #tpu.memory_space<vmem>>, vector<1x256x128xf32>
    %13 = vector.shape_cast %12 : vector<1x256x128xf32> to vector<256x128xf32>
    %14 = vector.broadcast %3 : vector<1x128xf32> to vector<256x128xf32>
    %15 = arith.subf %13, %14 : vector<256x128xf32>
    %cst_10 = arith.constant 9.99999974E-6 : f32
    %16 = vector.broadcast %cst_10 : f32 to vector<1x128xf32>
    %17 = arith.addf %11, %16 : vector<1x128xf32>
    %18 = math.rsqrt %17 : vector<1x128xf32>
    %19 = vector.broadcast %18 : vector<1x128xf32> to vector<256x128xf32>
    %20 = arith.mulf %15, %19 : vector<256x128xf32>
    %cst_11 = arith.constant 0.000000e+00 : f32
    %21 = vector.broadcast %cst_11 : f32 to vector<256x128xf32>
    %22 = arith.maximumf %20, %21 : vector<256x128xf32>
    %c0_12 = arith.constant 0 : index
    %c0_13 = arith.constant 0 : index
    %c0_14 = arith.constant 0 : index
    %23 = vector.load %arg6[%c0_12, %c0_13, %c0_14] : memref<1x256x128xf32, #tpu.memory_space<vmem>>, vector<1x256x128xf32>
    %24 = vector.shape_cast %23 : vector<1x256x128xf32> to vector<256x128xf32>
    %25 = vector.shape_cast %22 : vector<256x128xf32> to vector<1x256x128xf32>
    tpu.vector_store %arg6[%c0_12, %c0_13, %c0_14], %25 {strides = array<i32>} : memref<1x256x128xf32, #tpu.memory_space<vmem>>, vector<1x256x128xf32>,
    return
  }
  func.func @transform_0(%arg0: i32, %arg1: i32, %arg2: i32) -> (i32, i32, i32) {
    %c0_i32 = arith.constant 0 : i32
    return %arg0, %arg1, %arg2 : i32, i32, i32
  }
  func.func @transform_1(%arg0: i32, %arg1: i32, %arg2: i32) -> (i32, i32, i32) {
    %c0_i32 = arith.constant 0 : i32
    %c0_i32_0 = arith.constant 0 : i32
    return %arg0, %c0_i32, %arg2 : i32, i32, i32
  }
  func.func @transform_2(%arg0: i32, %arg1: i32, %arg2: i32) -> (i32, i32, i32) {
    %c0_i32 = arith.constant 0 : i32
    %c0_i32_0 = arith.constant 0 : i32
    return %arg0, %c0_i32, %arg2 : i32, i32, i32
  }
  func.func @transform_3(%arg0: i32, %arg1: i32, %arg2: i32) -> (i32, i32, i32) {
    %c0_i32 = arith.constant 0 : i32
    return %arg0, %arg1, %arg2 : i32, i32, i32
  }
}

module attributes {stable_mosaic.version = 11 : i64} {
  func.func @kernel(%arg0: i32, %arg1: i32, %arg2: i32, %arg3: i32, %arg4: memref<1x64x384xbf16, #tpu.memory_space<vmem>>, %arg5: memref<384x128xbf16, #tpu.memory_space<vmem>>, %arg6: memref<1x128xf32, #tpu.memory_space<vmem>>, %arg7: memref<1x64x128xf32, #tpu.memory_space<vmem>>, %arg8: memref<1x1x128xf32, #tpu.memory_space<vmem>>, %arg9: memref<1x1x128xf32, #tpu.memory_space<vmem>>, %arg10: memref<64x128xf32, #tpu.memory_space<vmem>>) attributes {dimension_semantics = [#tpu.dimension_semantics<parallel>, #tpu.dimension_semantics<parallel>, #tpu.dimension_semantics<arbitrary>, #tpu.dimension_semantics<arbitrary>], iteration_bounds = array<i64: 2, 1, 1, 3>, scalar_prefetch = 0 : i64, scratch_operands = 1 : i64, tpu.core_type = #tpu.core_type<tc>, window_params = [{transform_indices = @transform_0, window_bounds = array<i64: 1, 64, 384>}, {transform_indices = @transform_1, window_bounds = array<i64: 384, 128>}, {transform_indices = @transform_2, window_bounds = array<i64: 1, 128>}, {transform_indices = @transform_3, window_bounds = array<i64: 1, 64, 128>}, {transform_indices = @transform_4, window_bounds = array<i64: 1, 1, 128>}, {transform_indices = @transform_5, window_bounds = array<i64: 1, 1, 128>}]} {
    %c0_i32 = arith.constant 0 : i32
    %0 = arith.cmpi eq, %arg3, %c0_i32 : i32
    %1 = arith.extui %0 : i1 to i32
    %c0_i32_0 = arith.constant 0 : i32
    %2 = arith.cmpi ne, %1, %c0_i32_0 : i32
    scf.if %2 {
      %cst_13 = arith.constant 0.000000e+00 : f32
      %18 = vector.broadcast %cst_13 : f32 to vector<64x128xf32>
      %c0_14 = arith.constant 0 : index
      %c0_15 = arith.constant 0 : index
      %19 = vector.load %arg10[%c0_14, %c0_15] : memref<64x128xf32, #tpu.memory_space<vmem>>, vector<64x128xf32>
      tpu.vector_store %arg10[%c0_14, %c0_15], %18 {strides = array<i32>} : memref<64x128xf32, #tpu.memory_space<vmem>>, vector<64x128xf32>,
    } else {
    }
    %c0_i32_1 = arith.constant 0 : i32
    %3 = arith.cmpi eq, %arg2, %c0_i32_1 : i32
    %c0_i32_2 = arith.constant 0 : i32
    %4 = arith.cmpi eq, %arg3, %c0_i32_2 : i32
    %5 = arith.andi %3, %4 : i1
    %6 = arith.extui %5 : i1 to i32
    %c0_i32_3 = arith.constant 0 : i32
    %7 = arith.cmpi ne, %6, %c0_i32_3 : i32
    scf.if %7 {
      %cst_13 = arith.constant 0.000000e+00 : f32
      %18 = vector.broadcast %cst_13 : f32 to vector<1x1x128xf32>
      %c0_14 = arith.constant 0 : index
      %c0_15 = arith.constant 0 : index
      %c0_16 = arith.constant 0 : index
      %19 = vector.load %arg8[%c0_14, %c0_15, %c0_16] : memref<1x1x128xf32, #tpu.memory_space<vmem>>, vector<1x1x128xf32>
      tpu.vector_store %arg8[%c0_14, %c0_15, %c0_16], %18 {strides = array<i32>} : memref<1x1x128xf32, #tpu.memory_space<vmem>>, vector<1x1x128xf32>,
      %cst_17 = arith.constant 0.000000e+00 : f32
      %20 = vector.broadcast %cst_17 : f32 to vector<1x1x128xf32>
      %c0_18 = arith.constant 0 : index
      %c0_19 = arith.constant 0 : index
      %c0_20 = arith.constant 0 : index
      %21 = vector.load %arg9[%c0_18, %c0_19, %c0_20] : memref<1x1x128xf32, #tpu.memory_space<vmem>>, vector<1x1x128xf32>
      tpu.vector_store %arg9[%c0_18, %c0_19, %c0_20], %20 {strides = array<i32>} : memref<1x1x128xf32, #tpu.memory_space<vmem>>, vector<1x1x128xf32>,
    } else {
    }
    %c0 = arith.constant 0 : index
    %c0_4 = arith.constant 0 : index
    %8 = vector.load %arg10[%c0, %c0_4] : memref<64x128xf32, #tpu.memory_space<vmem>>, vector<64x128xf32>
    %c0_5 = arith.constant 0 : index
    %c0_6 = arith.constant 0 : index
    %c0_7 = arith.constant 0 : index
    %9 = vector.load %arg4[%c0_5, %c0_6, %c0_7] : memref<1x64x384xbf16, #tpu.memory_space<vmem>>, vector<1x64x384xbf16>
    %10 = vector.shape_cast %9 : vector<1x64x384xbf16> to vector<64x384xbf16>
    %c0_8 = arith.constant 0 : index
    %c0_9 = arith.constant 0 : index
    %11 = vector.load %arg5[%c0_8, %c0_9] : memref<384x128xbf16, #tpu.memory_space<vmem>>, vector<384x128xbf16>
    %cst = arith.constant dense<0.000000e+00> : vector<64x128xf32>
    %12 = tpu.matmul %10, %11, %cst {dimension_numbers = #tpu.dot_dimension_numbers<[1], [0], [0], [1], [0, 0, 1, 1], [], []>} : vector<64x384xbf16>, vector<384x128xbf16>, vector<64x128xf32> -> vector<64x128xf32>
    %13 = arith.addf %8, %12 : vector<64x128xf32>
    %c0_10 = arith.constant 0 : index
    %c0_11 = arith.constant 0 : index
    %14 = vector.load %arg10[%c0_10, %c0_11] : memref<64x128xf32, #tpu.memory_space<vmem>>, vector<64x128xf32>
    tpu.vector_store %arg10[%c0_10, %c0_11], %13 {strides = array<i32>} : memref<64x128xf32, #tpu.memory_space<vmem>>, vector<64x128xf32>,
    %c2_i32 = arith.constant 2 : i32
    %15 = arith.cmpi eq, %arg3, %c2_i32 : i32
    %16 = arith.extui %15 : i1 to i32
    %c0_i32_12 = arith.constant 0 : i32
    %17 = arith.cmpi ne, %16, %c0_i32_12 : i32
    scf.if %17 {
      %c0_13 = arith.constant 0 : index
      %c0_14 = arith.constant 0 : index
      %18 = vector.load %arg10[%c0_13, %c0_14] : memref<64x128xf32, #tpu.memory_space<vmem>>, vector<64x128xf32>
      %c0_15 = arith.constant 0 : index
      %c0_16 = arith.constant 0 : index
      %19 = vector.load %arg6[%c0_15, %c0_16] : memref<1x128xf32, #tpu.memory_space<vmem>>, vector<1x128xf32>
      %20 = vector.broadcast %19 : vector<1x128xf32> to vector<64x128xf32>
      %21 = arith.addf %18, %20 : vector<64x128xf32>
      %c0_17 = arith.constant 0 : index
      %c0_18 = arith.constant 0 : index
      %c0_19 = arith.constant 0 : index
      %22 = vector.load %arg8[%c0_17, %c0_18, %c0_19] : memref<1x1x128xf32, #tpu.memory_space<vmem>>, vector<1x1x128xf32>
      %23 = vector.shape_cast %22 : vector<1x1x128xf32> to vector<1x128xf32>
      %cst_20 = arith.constant dense<0.000000e+00> : vector<128xf32>
      %24 = vector.multi_reduction <add>, %21, %cst_20 [0] : vector<64x128xf32> to vector<128xf32>
      %25 = vector.shape_cast %24 : vector<128xf32> to vector<1x128xf32>
      %26 = arith.addf %23, %25 : vector<1x128xf32>
      %c0_21 = arith.constant 0 : index
      %c0_22 = arith.constant 0 : index
      %c0_23 = arith.constant 0 : index
      %27 = vector.load %arg8[%c0_21, %c0_22, %c0_23] : memref<1x1x128xf32, #tpu.memory_space<vmem>>, vector<1x1x128xf32>
      %28 = vector.shape_cast %27 : vector<1x1x128xf32> to vector<1x128xf32>
      %29 = vector.shape_cast %26 : vector<1x128xf32> to vector<1x1x128xf32>
      tpu.vector_store %arg8[%c0_21, %c0_22, %c0_23], %29 {strides = array<i32>} : memref<1x1x128xf32, #tpu.memory_space<vmem>>, vector<1x1x128xf32>,
      %c0_24 = arith.constant 0 : index
      %c0_25 = arith.constant 0 : index
      %c0_26 = arith.constant 0 : index
      %30 = vector.load %arg9[%c0_24, %c0_25, %c0_26] : memref<1x1x128xf32, #tpu.memory_space<vmem>>, vector<1x1x128xf32>
      %31 = vector.shape_cast %30 : vector<1x1x128xf32> to vector<1x128xf32>
      %32 = arith.mulf %21, %21 : vector<64x128xf32>
      %cst_27 = arith.constant dense<0.000000e+00> : vector<128xf32>
      %33 = vector.multi_reduction <add>, %32, %cst_27 [0] : vector<64x128xf32> to vector<128xf32>
      %34 = vector.shape_cast %33 : vector<128xf32> to vector<1x128xf32>
      %35 = arith.addf %31, %34 : vector<1x128xf32>
      %c0_28 = arith.constant 0 : index
      %c0_29 = arith.constant 0 : index
      %c0_30 = arith.constant 0 : index
      %36 = vector.load %arg9[%c0_28, %c0_29, %c0_30] : memref<1x1x128xf32, #tpu.memory_space<vmem>>, vector<1x1x128xf32>
      %37 = vector.shape_cast %36 : vector<1x1x128xf32> to vector<1x128xf32>
      %38 = vector.shape_cast %35 : vector<1x128xf32> to vector<1x1x128xf32>
      tpu.vector_store %arg9[%c0_28, %c0_29, %c0_30], %38 {strides = array<i32>} : memref<1x1x128xf32, #tpu.memory_space<vmem>>, vector<1x1x128xf32>,
      %c0_31 = arith.constant 0 : index
      %c0_32 = arith.constant 0 : index
      %c0_33 = arith.constant 0 : index
      %39 = vector.load %arg7[%c0_31, %c0_32, %c0_33] : memref<1x64x128xf32, #tpu.memory_space<vmem>>, vector<1x64x128xf32>
      %40 = vector.shape_cast %39 : vector<1x64x128xf32> to vector<64x128xf32>
      %41 = vector.shape_cast %21 : vector<64x128xf32> to vector<1x64x128xf32>
      tpu.vector_store %arg7[%c0_31, %c0_32, %c0_33], %41 {strides = array<i32>} : memref<1x64x128xf32, #tpu.memory_space<vmem>>, vector<1x64x128xf32>,
    } else {
    }
    return
  }
  func.func @transform_0(%arg0: i32, %arg1: i32, %arg2: i32, %arg3: i32) -> (i32, i32, i32) {
    %c0_i32 = arith.constant 0 : i32
    return %arg0, %arg2, %arg3 : i32, i32, i32
  }
  func.func @transform_1(%arg0: i32, %arg1: i32, %arg2: i32, %arg3: i32) -> (i32, i32) {
    %c0_i32 = arith.constant 0 : i32
    return %arg3, %arg1 : i32, i32
  }
  func.func @transform_2(%arg0: i32, %arg1: i32, %arg2: i32, %arg3: i32) -> (i32, i32) {
    %c0_i32 = arith.constant 0 : i32
    %c0_i32_0 = arith.constant 0 : i32
    return %c0_i32, %arg1 : i32, i32
  }
  func.func @transform_3(%arg0: i32, %arg1: i32, %arg2: i32, %arg3: i32) -> (i32, i32, i32) {
    %c0_i32 = arith.constant 0 : i32
    return %arg0, %arg2, %arg1 : i32, i32, i32
  }
  func.func @transform_4(%arg0: i32, %arg1: i32, %arg2: i32, %arg3: i32) -> (i32, i32, i32) {
    %c0_i32 = arith.constant 0 : i32
    %c0_i32_0 = arith.constant 0 : i32
    return %arg0, %c0_i32, %arg1 : i32, i32, i32
  }
  func.func @transform_5(%arg0: i32, %arg1: i32, %arg2: i32, %arg3: i32) -> (i32, i32, i32) {
    %c0_i32 = arith.constant 0 : i32
    %c0_i32_0 = arith.constant 0 : i32
    return %arg0, %c0_i32, %arg1 : i32, i32, i32
  }
}

module attributes {stable_mosaic.version = 11 : i64} {
  func.func @kernel(%arg0: i32, %arg1: i32, %arg2: i32, %arg3: memref<1x64x128xf32, #tpu.memory_space<vmem>>, %arg4: memref<1x1x128xf32, #tpu.memory_space<vmem>>, %arg5: memref<1x1x128xf32, #tpu.memory_space<vmem>>, %arg6: memref<1x64x128xf32, #tpu.memory_space<vmem>>) attributes {dimension_semantics = [#tpu.dimension_semantics<parallel>, #tpu.dimension_semantics<parallel>, #tpu.dimension_semantics<parallel>], iteration_bounds = array<i64: 2, 1, 1>, scalar_prefetch = 0 : i64, scratch_operands = 0 : i64, tpu.core_type = #tpu.core_type<tc>, window_params = [{transform_indices = @transform_0, window_bounds = array<i64: 1, 64, 128>}, {transform_indices = @transform_1, window_bounds = array<i64: 1, 1, 128>}, {transform_indices = @transform_2, window_bounds = array<i64: 1, 1, 128>}, {transform_indices = @transform_3, window_bounds = array<i64: 1, 64, 128>}]} {
    %c0 = arith.constant 0 : index
    %c0_0 = arith.constant 0 : index
    %c0_1 = arith.constant 0 : index
    %0 = vector.load %arg4[%c0, %c0_0, %c0_1] : memref<1x1x128xf32, #tpu.memory_space<vmem>>, vector<1x1x128xf32>
    %1 = vector.shape_cast %0 : vector<1x1x128xf32> to vector<1x128xf32>
    %cst = arith.constant 1.562500e-02 : f32
    %2 = vector.broadcast %cst : f32 to vector<1x128xf32>
    %3 = arith.mulf %1, %2 : vector<1x128xf32>
    %c0_2 = arith.constant 0 : index
    %c0_3 = arith.constant 0 : index
    %c0_4 = arith.constant 0 : index
    %4 = vector.load %arg5[%c0_2, %c0_3, %c0_4] : memref<1x1x128xf32, #tpu.memory_space<vmem>>, vector<1x1x128xf32>
    %5 = vector.shape_cast %4 : vector<1x1x128xf32> to vector<1x128xf32>
    %cst_5 = arith.constant 1.562500e-02 : f32
    %6 = vector.broadcast %cst_5 : f32 to vector<1x128xf32>
    %7 = arith.mulf %5, %6 : vector<1x128xf32>
    %8 = arith.mulf %3, %3 : vector<1x128xf32>
    %9 = arith.subf %7, %8 : vector<1x128xf32>
    %cst_6 = arith.constant 0.000000e+00 : f32
    %10 = vector.broadcast %cst_6 : f32 to vector<1x128xf32>
    %11 = arith.maximumf %9, %10 : vector<1x128xf32>
    %c0_7 = arith.constant 0 : index
    %c0_8 = arith.constant 0 : index
    %c0_9 = arith.constant 0 : index
    %12 = vector.load %arg3[%c0_7, %c0_8, %c0_9] : memref<1x64x128xf32, #tpu.memory_space<vmem>>, vector<1x64x128xf32>
    %13 = vector.shape_cast %12 : vector<1x64x128xf32> to vector<64x128xf32>
    %14 = vector.broadcast %3 : vector<1x128xf32> to vector<64x128xf32>
    %15 = arith.subf %13, %14 : vector<64x128xf32>
    %cst_10 = arith.constant 9.99999974E-6 : f32
    %16 = vector.broadcast %cst_10 : f32 to vector<1x128xf32>
    %17 = arith.addf %11, %16 : vector<1x128xf32>
    %18 = math.rsqrt %17 : vector<1x128xf32>
    %19 = vector.broadcast %18 : vector<1x128xf32> to vector<64x128xf32>
    %20 = arith.mulf %15, %19 : vector<64x128xf32>
    %cst_11 = arith.constant 0.000000e+00 : f32
    %21 = vector.broadcast %cst_11 : f32 to vector<64x128xf32>
    %22 = arith.maximumf %20, %21 : vector<64x128xf32>
    %c0_12 = arith.constant 0 : index
    %c0_13 = arith.constant 0 : index
    %c0_14 = arith.constant 0 : index
    %23 = vector.load %arg6[%c0_12, %c0_13, %c0_14] : memref<1x64x128xf32, #tpu.memory_space<vmem>>, vector<1x64x128xf32>
    %24 = vector.shape_cast %23 : vector<1x64x128xf32> to vector<64x128xf32>
    %25 = vector.shape_cast %22 : vector<64x128xf32> to vector<1x64x128xf32>
    tpu.vector_store %arg6[%c0_12, %c0_13, %c0_14], %25 {strides = array<i32>} : memref<1x64x128xf32, #tpu.memory_space<vmem>>, vector<1x64x128xf32>,
    return
  }
  func.func @transform_0(%arg0: i32, %arg1: i32, %arg2: i32) -> (i32, i32, i32) {
    %c0_i32 = arith.constant 0 : i32
    return %arg0, %arg1, %arg2 : i32, i32, i32
  }
  func.func @transform_1(%arg0: i32, %arg1: i32, %arg2: i32) -> (i32, i32, i32) {
    %c0_i32 = arith.constant 0 : i32
    %c0_i32_0 = arith.constant 0 : i32
    return %arg0, %c0_i32, %arg2 : i32, i32, i32
  }
  func.func @transform_2(%arg0: i32, %arg1: i32, %arg2: i32) -> (i32, i32, i32) {
    %c0_i32 = arith.constant 0 : i32
    %c0_i32_0 = arith.constant 0 : i32
    return %arg0, %c0_i32, %arg2 : i32, i32, i32
  }
  func.func @transform_3(%arg0: i32, %arg1: i32, %arg2: i32) -> (i32, i32, i32) {
    %c0_i32 = arith.constant 0 : i32
    return %arg0, %arg1, %arg2 : i32, i32, i32
  }
}

module attributes {stable_mosaic.version = 11 : i64} {
  func.func @kernel(%arg0: i32, %arg1: i32, %arg2: i32, %arg3: i32, %arg4: memref<1x16x384xbf16, #tpu.memory_space<vmem>>, %arg5: memref<384x128xbf16, #tpu.memory_space<vmem>>, %arg6: memref<1x128xf32, #tpu.memory_space<vmem>>, %arg7: memref<1x16x128xf32, #tpu.memory_space<vmem>>, %arg8: memref<1x1x128xf32, #tpu.memory_space<vmem>>, %arg9: memref<1x1x128xf32, #tpu.memory_space<vmem>>, %arg10: memref<16x128xf32, #tpu.memory_space<vmem>>) attributes {dimension_semantics = [#tpu.dimension_semantics<parallel>, #tpu.dimension_semantics<parallel>, #tpu.dimension_semantics<arbitrary>, #tpu.dimension_semantics<arbitrary>], iteration_bounds = array<i64: 2, 1, 1, 3>, scalar_prefetch = 0 : i64, scratch_operands = 1 : i64, tpu.core_type = #tpu.core_type<tc>, window_params = [{transform_indices = @transform_0, window_bounds = array<i64: 1, 16, 384>}, {transform_indices = @transform_1, window_bounds = array<i64: 384, 128>}, {transform_indices = @transform_2, window_bounds = array<i64: 1, 128>}, {transform_indices = @transform_3, window_bounds = array<i64: 1, 16, 128>}, {transform_indices = @transform_4, window_bounds = array<i64: 1, 1, 128>}, {transform_indices = @transform_5, window_bounds = array<i64: 1, 1, 128>}]} {
    %c0_i32 = arith.constant 0 : i32
    %0 = arith.cmpi eq, %arg3, %c0_i32 : i32
    %1 = arith.extui %0 : i1 to i32
    %c0_i32_0 = arith.constant 0 : i32
    %2 = arith.cmpi ne, %1, %c0_i32_0 : i32
    scf.if %2 {
      %cst_13 = arith.constant 0.000000e+00 : f32
      %18 = vector.broadcast %cst_13 : f32 to vector<16x128xf32>
      %c0_14 = arith.constant 0 : index
      %c0_15 = arith.constant 0 : index
      %19 = vector.load %arg10[%c0_14, %c0_15] : memref<16x128xf32, #tpu.memory_space<vmem>>, vector<16x128xf32>
      tpu.vector_store %arg10[%c0_14, %c0_15], %18 {strides = array<i32>} : memref<16x128xf32, #tpu.memory_space<vmem>>, vector<16x128xf32>,
    } else {
    }
    %c0_i32_1 = arith.constant 0 : i32
    %3 = arith.cmpi eq, %arg2, %c0_i32_1 : i32
    %c0_i32_2 = arith.constant 0 : i32
    %4 = arith.cmpi eq, %arg3, %c0_i32_2 : i32
    %5 = arith.andi %3, %4 : i1
    %6 = arith.extui %5 : i1 to i32
    %c0_i32_3 = arith.constant 0 : i32
    %7 = arith.cmpi ne, %6, %c0_i32_3 : i32
    scf.if %7 {
      %cst_13 = arith.constant 0.000000e+00 : f32
      %18 = vector.broadcast %cst_13 : f32 to vector<1x1x128xf32>
      %c0_14 = arith.constant 0 : index
      %c0_15 = arith.constant 0 : index
      %c0_16 = arith.constant 0 : index
      %19 = vector.load %arg8[%c0_14, %c0_15, %c0_16] : memref<1x1x128xf32, #tpu.memory_space<vmem>>, vector<1x1x128xf32>
      tpu.vector_store %arg8[%c0_14, %c0_15, %c0_16], %18 {strides = array<i32>} : memref<1x1x128xf32, #tpu.memory_space<vmem>>, vector<1x1x128xf32>,
      %cst_17 = arith.constant 0.000000e+00 : f32
      %20 = vector.broadcast %cst_17 : f32 to vector<1x1x128xf32>
      %c0_18 = arith.constant 0 : index
      %c0_19 = arith.constant 0 : index
      %c0_20 = arith.constant 0 : index
      %21 = vector.load %arg9[%c0_18, %c0_19, %c0_20] : memref<1x1x128xf32, #tpu.memory_space<vmem>>, vector<1x1x128xf32>
      tpu.vector_store %arg9[%c0_18, %c0_19, %c0_20], %20 {strides = array<i32>} : memref<1x1x128xf32, #tpu.memory_space<vmem>>, vector<1x1x128xf32>,
    } else {
    }
    %c0 = arith.constant 0 : index
    %c0_4 = arith.constant 0 : index
    %8 = vector.load %arg10[%c0, %c0_4] : memref<16x128xf32, #tpu.memory_space<vmem>>, vector<16x128xf32>
    %c0_5 = arith.constant 0 : index
    %c0_6 = arith.constant 0 : index
    %c0_7 = arith.constant 0 : index
    %9 = vector.load %arg4[%c0_5, %c0_6, %c0_7] : memref<1x16x384xbf16, #tpu.memory_space<vmem>>, vector<1x16x384xbf16>
    %10 = vector.shape_cast %9 : vector<1x16x384xbf16> to vector<16x384xbf16>
    %c0_8 = arith.constant 0 : index
    %c0_9 = arith.constant 0 : index
    %11 = vector.load %arg5[%c0_8, %c0_9] : memref<384x128xbf16, #tpu.memory_space<vmem>>, vector<384x128xbf16>
    %cst = arith.constant dense<0.000000e+00> : vector<16x128xf32>
    %12 = tpu.matmul %10, %11, %cst {dimension_numbers = #tpu.dot_dimension_numbers<[1], [0], [0], [1], [0, 0, 1, 1], [], []>} : vector<16x384xbf16>, vector<384x128xbf16>, vector<16x128xf32> -> vector<16x128xf32>
    %13 = arith.addf %8, %12 : vector<16x128xf32>
    %c0_10 = arith.constant 0 : index
    %c0_11 = arith.constant 0 : index
    %14 = vector.load %arg10[%c0_10, %c0_11] : memref<16x128xf32, #tpu.memory_space<vmem>>, vector<16x128xf32>
    tpu.vector_store %arg10[%c0_10, %c0_11], %13 {strides = array<i32>} : memref<16x128xf32, #tpu.memory_space<vmem>>, vector<16x128xf32>,
    %c2_i32 = arith.constant 2 : i32
    %15 = arith.cmpi eq, %arg3, %c2_i32 : i32
    %16 = arith.extui %15 : i1 to i32
    %c0_i32_12 = arith.constant 0 : i32
    %17 = arith.cmpi ne, %16, %c0_i32_12 : i32
    scf.if %17 {
      %c0_13 = arith.constant 0 : index
      %c0_14 = arith.constant 0 : index
      %18 = vector.load %arg10[%c0_13, %c0_14] : memref<16x128xf32, #tpu.memory_space<vmem>>, vector<16x128xf32>
      %c0_15 = arith.constant 0 : index
      %c0_16 = arith.constant 0 : index
      %19 = vector.load %arg6[%c0_15, %c0_16] : memref<1x128xf32, #tpu.memory_space<vmem>>, vector<1x128xf32>
      %20 = vector.broadcast %19 : vector<1x128xf32> to vector<16x128xf32>
      %21 = arith.addf %18, %20 : vector<16x128xf32>
      %c0_17 = arith.constant 0 : index
      %c0_18 = arith.constant 0 : index
      %c0_19 = arith.constant 0 : index
      %22 = vector.load %arg8[%c0_17, %c0_18, %c0_19] : memref<1x1x128xf32, #tpu.memory_space<vmem>>, vector<1x1x128xf32>
      %23 = vector.shape_cast %22 : vector<1x1x128xf32> to vector<1x128xf32>
      %cst_20 = arith.constant dense<0.000000e+00> : vector<128xf32>
      %24 = vector.multi_reduction <add>, %21, %cst_20 [0] : vector<16x128xf32> to vector<128xf32>
      %25 = vector.shape_cast %24 : vector<128xf32> to vector<1x128xf32>
      %26 = arith.addf %23, %25 : vector<1x128xf32>
      %c0_21 = arith.constant 0 : index
      %c0_22 = arith.constant 0 : index
      %c0_23 = arith.constant 0 : index
      %27 = vector.load %arg8[%c0_21, %c0_22, %c0_23] : memref<1x1x128xf32, #tpu.memory_space<vmem>>, vector<1x1x128xf32>
      %28 = vector.shape_cast %27 : vector<1x1x128xf32> to vector<1x128xf32>
      %29 = vector.shape_cast %26 : vector<1x128xf32> to vector<1x1x128xf32>
      tpu.vector_store %arg8[%c0_21, %c0_22, %c0_23], %29 {strides = array<i32>} : memref<1x1x128xf32, #tpu.memory_space<vmem>>, vector<1x1x128xf32>,
      %c0_24 = arith.constant 0 : index
      %c0_25 = arith.constant 0 : index
      %c0_26 = arith.constant 0 : index
      %30 = vector.load %arg9[%c0_24, %c0_25, %c0_26] : memref<1x1x128xf32, #tpu.memory_space<vmem>>, vector<1x1x128xf32>
      %31 = vector.shape_cast %30 : vector<1x1x128xf32> to vector<1x128xf32>
      %32 = arith.mulf %21, %21 : vector<16x128xf32>
      %cst_27 = arith.constant dense<0.000000e+00> : vector<128xf32>
      %33 = vector.multi_reduction <add>, %32, %cst_27 [0] : vector<16x128xf32> to vector<128xf32>
      %34 = vector.shape_cast %33 : vector<128xf32> to vector<1x128xf32>
      %35 = arith.addf %31, %34 : vector<1x128xf32>
      %c0_28 = arith.constant 0 : index
      %c0_29 = arith.constant 0 : index
      %c0_30 = arith.constant 0 : index
      %36 = vector.load %arg9[%c0_28, %c0_29, %c0_30] : memref<1x1x128xf32, #tpu.memory_space<vmem>>, vector<1x1x128xf32>
      %37 = vector.shape_cast %36 : vector<1x1x128xf32> to vector<1x128xf32>
      %38 = vector.shape_cast %35 : vector<1x128xf32> to vector<1x1x128xf32>
      tpu.vector_store %arg9[%c0_28, %c0_29, %c0_30], %38 {strides = array<i32>} : memref<1x1x128xf32, #tpu.memory_space<vmem>>, vector<1x1x128xf32>,
      %c0_31 = arith.constant 0 : index
      %c0_32 = arith.constant 0 : index
      %c0_33 = arith.constant 0 : index
      %39 = vector.load %arg7[%c0_31, %c0_32, %c0_33] : memref<1x16x128xf32, #tpu.memory_space<vmem>>, vector<1x16x128xf32>
      %40 = vector.shape_cast %39 : vector<1x16x128xf32> to vector<16x128xf32>
      %41 = vector.shape_cast %21 : vector<16x128xf32> to vector<1x16x128xf32>
      tpu.vector_store %arg7[%c0_31, %c0_32, %c0_33], %41 {strides = array<i32>} : memref<1x16x128xf32, #tpu.memory_space<vmem>>, vector<1x16x128xf32>,
    } else {
    }
    return
  }
  func.func @transform_0(%arg0: i32, %arg1: i32, %arg2: i32, %arg3: i32) -> (i32, i32, i32) {
    %c0_i32 = arith.constant 0 : i32
    return %arg0, %arg2, %arg3 : i32, i32, i32
  }
  func.func @transform_1(%arg0: i32, %arg1: i32, %arg2: i32, %arg3: i32) -> (i32, i32) {
    %c0_i32 = arith.constant 0 : i32
    return %arg3, %arg1 : i32, i32
  }
  func.func @transform_2(%arg0: i32, %arg1: i32, %arg2: i32, %arg3: i32) -> (i32, i32) {
    %c0_i32 = arith.constant 0 : i32
    %c0_i32_0 = arith.constant 0 : i32
    return %c0_i32, %arg1 : i32, i32
  }
  func.func @transform_3(%arg0: i32, %arg1: i32, %arg2: i32, %arg3: i32) -> (i32, i32, i32) {
    %c0_i32 = arith.constant 0 : i32
    return %arg0, %arg2, %arg1 : i32, i32, i32
  }
  func.func @transform_4(%arg0: i32, %arg1: i32, %arg2: i32, %arg3: i32) -> (i32, i32, i32) {
    %c0_i32 = arith.constant 0 : i32
    %c0_i32_0 = arith.constant 0 : i32
    return %arg0, %c0_i32, %arg1 : i32, i32, i32
  }
  func.func @transform_5(%arg0: i32, %arg1: i32, %arg2: i32, %arg3: i32) -> (i32, i32, i32) {
    %c0_i32 = arith.constant 0 : i32
    %c0_i32_0 = arith.constant 0 : i32
    return %arg0, %c0_i32, %arg1 : i32, i32, i32
  }
}

module attributes {stable_mosaic.version = 11 : i64} {
  func.func @kernel(%arg0: i32, %arg1: i32, %arg2: i32, %arg3: memref<1x16x128xf32, #tpu.memory_space<vmem>>, %arg4: memref<1x1x128xf32, #tpu.memory_space<vmem>>, %arg5: memref<1x1x128xf32, #tpu.memory_space<vmem>>, %arg6: memref<1x16x128xf32, #tpu.memory_space<vmem>>) attributes {dimension_semantics = [#tpu.dimension_semantics<parallel>, #tpu.dimension_semantics<parallel>, #tpu.dimension_semantics<parallel>], iteration_bounds = array<i64: 2, 1, 1>, scalar_prefetch = 0 : i64, scratch_operands = 0 : i64, tpu.core_type = #tpu.core_type<tc>, window_params = [{transform_indices = @transform_0, window_bounds = array<i64: 1, 16, 128>}, {transform_indices = @transform_1, window_bounds = array<i64: 1, 1, 128>}, {transform_indices = @transform_2, window_bounds = array<i64: 1, 1, 128>}, {transform_indices = @transform_3, window_bounds = array<i64: 1, 16, 128>}]} {
    %c0 = arith.constant 0 : index
    %c0_0 = arith.constant 0 : index
    %c0_1 = arith.constant 0 : index
    %0 = vector.load %arg4[%c0, %c0_0, %c0_1] : memref<1x1x128xf32, #tpu.memory_space<vmem>>, vector<1x1x128xf32>
    %1 = vector.shape_cast %0 : vector<1x1x128xf32> to vector<1x128xf32>
    %cst = arith.constant 6.250000e-02 : f32
    %2 = vector.broadcast %cst : f32 to vector<1x128xf32>
    %3 = arith.mulf %1, %2 : vector<1x128xf32>
    %c0_2 = arith.constant 0 : index
    %c0_3 = arith.constant 0 : index
    %c0_4 = arith.constant 0 : index
    %4 = vector.load %arg5[%c0_2, %c0_3, %c0_4] : memref<1x1x128xf32, #tpu.memory_space<vmem>>, vector<1x1x128xf32>
    %5 = vector.shape_cast %4 : vector<1x1x128xf32> to vector<1x128xf32>
    %cst_5 = arith.constant 6.250000e-02 : f32
    %6 = vector.broadcast %cst_5 : f32 to vector<1x128xf32>
    %7 = arith.mulf %5, %6 : vector<1x128xf32>
    %8 = arith.mulf %3, %3 : vector<1x128xf32>
    %9 = arith.subf %7, %8 : vector<1x128xf32>
    %cst_6 = arith.constant 0.000000e+00 : f32
    %10 = vector.broadcast %cst_6 : f32 to vector<1x128xf32>
    %11 = arith.maximumf %9, %10 : vector<1x128xf32>
    %c0_7 = arith.constant 0 : index
    %c0_8 = arith.constant 0 : index
    %c0_9 = arith.constant 0 : index
    %12 = vector.load %arg3[%c0_7, %c0_8, %c0_9] : memref<1x16x128xf32, #tpu.memory_space<vmem>>, vector<1x16x128xf32>
    %13 = vector.shape_cast %12 : vector<1x16x128xf32> to vector<16x128xf32>
    %14 = vector.broadcast %3 : vector<1x128xf32> to vector<16x128xf32>
    %15 = arith.subf %13, %14 : vector<16x128xf32>
    %cst_10 = arith.constant 9.99999974E-6 : f32
    %16 = vector.broadcast %cst_10 : f32 to vector<1x128xf32>
    %17 = arith.addf %11, %16 : vector<1x128xf32>
    %18 = math.rsqrt %17 : vector<1x128xf32>
    %19 = vector.broadcast %18 : vector<1x128xf32> to vector<16x128xf32>
    %20 = arith.mulf %15, %19 : vector<16x128xf32>
    %cst_11 = arith.constant 0.000000e+00 : f32
    %21 = vector.broadcast %cst_11 : f32 to vector<16x128xf32>
    %22 = arith.maximumf %20, %21 : vector<16x128xf32>
    %c0_12 = arith.constant 0 : index
    %c0_13 = arith.constant 0 : index
    %c0_14 = arith.constant 0 : index
    %23 = vector.load %arg6[%c0_12, %c0_13, %c0_14] : memref<1x16x128xf32, #tpu.memory_space<vmem>>, vector<1x16x128xf32>
    %24 = vector.shape_cast %23 : vector<1x16x128xf32> to vector<16x128xf32>
    %25 = vector.shape_cast %22 : vector<16x128xf32> to vector<1x16x128xf32>
    tpu.vector_store %arg6[%c0_12, %c0_13, %c0_14], %25 {strides = array<i32>} : memref<1x16x128xf32, #tpu.memory_space<vmem>>, vector<1x16x128xf32>,
    return
  }
  func.func @transform_0(%arg0: i32, %arg1: i32, %arg2: i32) -> (i32, i32, i32) {
    %c0_i32 = arith.constant 0 : i32
    return %arg0, %arg1, %arg2 : i32, i32, i32
  }
  func.func @transform_1(%arg0: i32, %arg1: i32, %arg2: i32) -> (i32, i32, i32) {
    %c0_i32 = arith.constant 0 : i32
    %c0_i32_0 = arith.constant 0 : i32
    return %arg0, %c0_i32, %arg2 : i32, i32, i32
  }
  func.func @transform_2(%arg0: i32, %arg1: i32, %arg2: i32) -> (i32, i32, i32) {
    %c0_i32 = arith.constant 0 : i32
    %c0_i32_0 = arith.constant 0 : i32
    return %arg0, %c0_i32, %arg2 : i32, i32, i32
  }
  func.func @transform_3(%arg0: i32, %arg1: i32, %arg2: i32) -> (i32, i32, i32) {
    %c0_i32 = arith.constant 0 : i32
    return %arg0, %arg1, %arg2 : i32, i32, i32
  }
}

module attributes {stable_mosaic.version = 11 : i64} {
  func.func @kernel(%arg0: i32, %arg1: i32, %arg2: i32, %arg3: memref<1x16x128xf32, #tpu.memory_space<vmem>>, %arg4: memref<1x1x128xf32, #tpu.memory_space<vmem>>, %arg5: memref<1x1x128xf32, #tpu.memory_space<vmem>>, %arg6: memref<1x16x128xf32, #tpu.memory_space<vmem>>, %arg7: memref<1x16x128xf32, #tpu.memory_space<vmem>>) attributes {dimension_semantics = [#tpu.dimension_semantics<parallel>, #tpu.dimension_semantics<parallel>, #tpu.dimension_semantics<parallel>], iteration_bounds = array<i64: 2, 1, 1>, scalar_prefetch = 0 : i64, scratch_operands = 0 : i64, tpu.core_type = #tpu.core_type<tc>, window_params = [{transform_indices = @transform_0, window_bounds = array<i64: 1, 16, 128>}, {transform_indices = @transform_1, window_bounds = array<i64: 1, 1, 128>}, {transform_indices = @transform_2, window_bounds = array<i64: 1, 1, 128>}, {transform_indices = @transform_3, window_bounds = array<i64: 1, 16, 128>}, {transform_indices = @transform_4, window_bounds = array<i64: 1, 16, 128>}]} {
    %c0 = arith.constant 0 : index
    %c0_0 = arith.constant 0 : index
    %c0_1 = arith.constant 0 : index
    %0 = vector.load %arg4[%c0, %c0_0, %c0_1] : memref<1x1x128xf32, #tpu.memory_space<vmem>>, vector<1x1x128xf32>
    %1 = vector.shape_cast %0 : vector<1x1x128xf32> to vector<1x128xf32>
    %cst = arith.constant 6.250000e-02 : f32
    %2 = vector.broadcast %cst : f32 to vector<1x128xf32>
    %3 = arith.mulf %1, %2 : vector<1x128xf32>
    %c0_2 = arith.constant 0 : index
    %c0_3 = arith.constant 0 : index
    %c0_4 = arith.constant 0 : index
    %4 = vector.load %arg5[%c0_2, %c0_3, %c0_4] : memref<1x1x128xf32, #tpu.memory_space<vmem>>, vector<1x1x128xf32>
    %5 = vector.shape_cast %4 : vector<1x1x128xf32> to vector<1x128xf32>
    %cst_5 = arith.constant 6.250000e-02 : f32
    %6 = vector.broadcast %cst_5 : f32 to vector<1x128xf32>
    %7 = arith.mulf %5, %6 : vector<1x128xf32>
    %8 = arith.mulf %3, %3 : vector<1x128xf32>
    %9 = arith.subf %7, %8 : vector<1x128xf32>
    %cst_6 = arith.constant 0.000000e+00 : f32
    %10 = vector.broadcast %cst_6 : f32 to vector<1x128xf32>
    %11 = arith.maximumf %9, %10 : vector<1x128xf32>
    %c0_7 = arith.constant 0 : index
    %c0_8 = arith.constant 0 : index
    %c0_9 = arith.constant 0 : index
    %12 = vector.load %arg3[%c0_7, %c0_8, %c0_9] : memref<1x16x128xf32, #tpu.memory_space<vmem>>, vector<1x16x128xf32>
    %13 = vector.shape_cast %12 : vector<1x16x128xf32> to vector<16x128xf32>
    %14 = vector.broadcast %3 : vector<1x128xf32> to vector<16x128xf32>
    %15 = arith.subf %13, %14 : vector<16x128xf32>
    %cst_10 = arith.constant 9.99999974E-6 : f32
    %16 = vector.broadcast %cst_10 : f32 to vector<1x128xf32>
    %17 = arith.addf %11, %16 : vector<1x128xf32>
    %18 = math.rsqrt %17 : vector<1x128xf32>
    %19 = vector.broadcast %18 : vector<1x128xf32> to vector<16x128xf32>
    %20 = arith.mulf %15, %19 : vector<16x128xf32>
    %c0_11 = arith.constant 0 : index
    %c0_12 = arith.constant 0 : index
    %c0_13 = arith.constant 0 : index
    %21 = vector.load %arg6[%c0_11, %c0_12, %c0_13] : memref<1x16x128xf32, #tpu.memory_space<vmem>>, vector<1x16x128xf32>
    %22 = vector.shape_cast %21 : vector<1x16x128xf32> to vector<16x128xf32>
    %23 = arith.addf %20, %22 : vector<16x128xf32>
    %c0_14 = arith.constant 0 : index
    %c0_15 = arith.constant 0 : index
    %c0_16 = arith.constant 0 : index
    %24 = vector.load %arg7[%c0_14, %c0_15, %c0_16] : memref<1x16x128xf32, #tpu.memory_space<vmem>>, vector<1x16x128xf32>
    %25 = vector.shape_cast %24 : vector<1x16x128xf32> to vector<16x128xf32>
    %26 = vector.shape_cast %23 : vector<16x128xf32> to vector<1x16x128xf32>
    tpu.vector_store %arg7[%c0_14, %c0_15, %c0_16], %26 {strides = array<i32>} : memref<1x16x128xf32, #tpu.memory_space<vmem>>, vector<1x16x128xf32>,
    return
  }
  func.func @transform_0(%arg0: i32, %arg1: i32, %arg2: i32) -> (i32, i32, i32) {
    %c0_i32 = arith.constant 0 : i32
    return %arg0, %arg1, %arg2 : i32, i32, i32
  }
  func.func @transform_1(%arg0: i32, %arg1: i32, %arg2: i32) -> (i32, i32, i32) {
    %c0_i32 = arith.constant 0 : i32
    %c0_i32_0 = arith.constant 0 : i32
    return %arg0, %c0_i32, %arg2 : i32, i32, i32
  }
  func.func @transform_2(%arg0: i32, %arg1: i32, %arg2: i32) -> (i32, i32, i32) {
    %c0_i32 = arith.constant 0 : i32
    %c0_i32_0 = arith.constant 0 : i32
    return %arg0, %c0_i32, %arg2 : i32, i32, i32
  }
  func.func @transform_3(%arg0: i32, %arg1: i32, %arg2: i32) -> (i32, i32, i32) {
    %c0_i32 = arith.constant 0 : i32
    return %arg0, %arg1, %arg2 : i32, i32, i32
  }
  func.func @transform_4(%arg0: i32, %arg1: i32, %arg2: i32) -> (i32, i32, i32) {
    %c0_i32 = arith.constant 0 : i32
    return %arg0, %arg1, %arg2 : i32, i32, i32
  }
}

module attributes {stable_mosaic.version = 11 : i64} {
  func.func @kernel(%arg0: i32, %arg1: i32, %arg2: i32, %arg3: i32, %arg4: memref<1x256x384xbf16, #tpu.memory_space<vmem>>, %arg5: memref<384x128xbf16, #tpu.memory_space<vmem>>, %arg6: memref<1x128xf32, #tpu.memory_space<vmem>>, %arg7: memref<1x256x128xf32, #tpu.memory_space<vmem>>, %arg8: memref<1x1x128xf32, #tpu.memory_space<vmem>>, %arg9: memref<1x1x128xf32, #tpu.memory_space<vmem>>, %arg10: memref<256x128xf32, #tpu.memory_space<vmem>>) attributes {dimension_semantics = [#tpu.dimension_semantics<parallel>, #tpu.dimension_semantics<parallel>, #tpu.dimension_semantics<arbitrary>, #tpu.dimension_semantics<arbitrary>], iteration_bounds = array<i64: 2, 1, 1, 3>, scalar_prefetch = 0 : i64, scratch_operands = 1 : i64, tpu.core_type = #tpu.core_type<tc>, window_params = [{transform_indices = @transform_0, window_bounds = array<i64: 1, 256, 384>}, {transform_indices = @transform_1, window_bounds = array<i64: 384, 128>}, {transform_indices = @transform_2, window_bounds = array<i64: 1, 128>}, {transform_indices = @transform_3, window_bounds = array<i64: 1, 256, 128>}, {transform_indices = @transform_4, window_bounds = array<i64: 1, 1, 128>}, {transform_indices = @transform_5, window_bounds = array<i64: 1, 1, 128>}]} {
    %c0_i32 = arith.constant 0 : i32
    %0 = arith.cmpi eq, %arg3, %c0_i32 : i32
    %1 = arith.extui %0 : i1 to i32
    %c0_i32_0 = arith.constant 0 : i32
    %2 = arith.cmpi ne, %1, %c0_i32_0 : i32
    scf.if %2 {
      %cst_13 = arith.constant 0.000000e+00 : f32
      %18 = vector.broadcast %cst_13 : f32 to vector<256x128xf32>
      %c0_14 = arith.constant 0 : index
      %c0_15 = arith.constant 0 : index
      %19 = vector.load %arg10[%c0_14, %c0_15] : memref<256x128xf32, #tpu.memory_space<vmem>>, vector<256x128xf32>
      tpu.vector_store %arg10[%c0_14, %c0_15], %18 {strides = array<i32>} : memref<256x128xf32, #tpu.memory_space<vmem>>, vector<256x128xf32>,
    } else {
    }
    %c0_i32_1 = arith.constant 0 : i32
    %3 = arith.cmpi eq, %arg2, %c0_i32_1 : i32
    %c0_i32_2 = arith.constant 0 : i32
    %4 = arith.cmpi eq, %arg3, %c0_i32_2 : i32
    %5 = arith.andi %3, %4 : i1
    %6 = arith.extui %5 : i1 to i32
    %c0_i32_3 = arith.constant 0 : i32
    %7 = arith.cmpi ne, %6, %c0_i32_3 : i32
    scf.if %7 {
      %cst_13 = arith.constant 0.000000e+00 : f32
      %18 = vector.broadcast %cst_13 : f32 to vector<1x1x128xf32>
      %c0_14 = arith.constant 0 : index
      %c0_15 = arith.constant 0 : index
      %c0_16 = arith.constant 0 : index
      %19 = vector.load %arg8[%c0_14, %c0_15, %c0_16] : memref<1x1x128xf32, #tpu.memory_space<vmem>>, vector<1x1x128xf32>
      tpu.vector_store %arg8[%c0_14, %c0_15, %c0_16], %18 {strides = array<i32>} : memref<1x1x128xf32, #tpu.memory_space<vmem>>, vector<1x1x128xf32>,
      %cst_17 = arith.constant 0.000000e+00 : f32
      %20 = vector.broadcast %cst_17 : f32 to vector<1x1x128xf32>
      %c0_18 = arith.constant 0 : index
      %c0_19 = arith.constant 0 : index
      %c0_20 = arith.constant 0 : index
      %21 = vector.load %arg9[%c0_18, %c0_19, %c0_20] : memref<1x1x128xf32, #tpu.memory_space<vmem>>, vector<1x1x128xf32>
      tpu.vector_store %arg9[%c0_18, %c0_19, %c0_20], %20 {strides = array<i32>} : memref<1x1x128xf32, #tpu.memory_space<vmem>>, vector<1x1x128xf32>,
    } else {
    }
    %c0 = arith.constant 0 : index
    %c0_4 = arith.constant 0 : index
    %8 = vector.load %arg10[%c0, %c0_4] : memref<256x128xf32, #tpu.memory_space<vmem>>, vector<256x128xf32>
    %c0_5 = arith.constant 0 : index
    %c0_6 = arith.constant 0 : index
    %c0_7 = arith.constant 0 : index
    %9 = vector.load %arg4[%c0_5, %c0_6, %c0_7] : memref<1x256x384xbf16, #tpu.memory_space<vmem>>, vector<1x256x384xbf16>
    %10 = vector.shape_cast %9 : vector<1x256x384xbf16> to vector<256x384xbf16>
    %c0_8 = arith.constant 0 : index
    %c0_9 = arith.constant 0 : index
    %11 = vector.load %arg5[%c0_8, %c0_9] : memref<384x128xbf16, #tpu.memory_space<vmem>>, vector<384x128xbf16>
    %cst = arith.constant dense<0.000000e+00> : vector<256x128xf32>
    %12 = tpu.matmul %10, %11, %cst {dimension_numbers = #tpu.dot_dimension_numbers<[1], [0], [0], [1], [0, 0, 1, 1], [], []>} : vector<256x384xbf16>, vector<384x128xbf16>, vector<256x128xf32> -> vector<256x128xf32>
    %13 = arith.addf %8, %12 : vector<256x128xf32>
    %c0_10 = arith.constant 0 : index
    %c0_11 = arith.constant 0 : index
    %14 = vector.load %arg10[%c0_10, %c0_11] : memref<256x128xf32, #tpu.memory_space<vmem>>, vector<256x128xf32>
    tpu.vector_store %arg10[%c0_10, %c0_11], %13 {strides = array<i32>} : memref<256x128xf32, #tpu.memory_space<vmem>>, vector<256x128xf32>,
    %c2_i32 = arith.constant 2 : i32
    %15 = arith.cmpi eq, %arg3, %c2_i32 : i32
    %16 = arith.extui %15 : i1 to i32
    %c0_i32_12 = arith.constant 0 : i32
    %17 = arith.cmpi ne, %16, %c0_i32_12 : i32
    scf.if %17 {
      %c0_13 = arith.constant 0 : index
      %c0_14 = arith.constant 0 : index
      %18 = vector.load %arg10[%c0_13, %c0_14] : memref<256x128xf32, #tpu.memory_space<vmem>>, vector<256x128xf32>
      %c0_15 = arith.constant 0 : index
      %c0_16 = arith.constant 0 : index
      %19 = vector.load %arg6[%c0_15, %c0_16] : memref<1x128xf32, #tpu.memory_space<vmem>>, vector<1x128xf32>
      %20 = vector.broadcast %19 : vector<1x128xf32> to vector<256x128xf32>
      %21 = arith.addf %18, %20 : vector<256x128xf32>
      %c0_17 = arith.constant 0 : index
      %c0_18 = arith.constant 0 : index
      %c0_19 = arith.constant 0 : index
      %22 = vector.load %arg8[%c0_17, %c0_18, %c0_19] : memref<1x1x128xf32, #tpu.memory_space<vmem>>, vector<1x1x128xf32>
      %23 = vector.shape_cast %22 : vector<1x1x128xf32> to vector<1x128xf32>
      %cst_20 = arith.constant dense<0.000000e+00> : vector<128xf32>
      %24 = vector.multi_reduction <add>, %21, %cst_20 [0] : vector<256x128xf32> to vector<128xf32>
      %25 = vector.shape_cast %24 : vector<128xf32> to vector<1x128xf32>
      %26 = arith.addf %23, %25 : vector<1x128xf32>
      %c0_21 = arith.constant 0 : index
      %c0_22 = arith.constant 0 : index
      %c0_23 = arith.constant 0 : index
      %27 = vector.load %arg8[%c0_21, %c0_22, %c0_23] : memref<1x1x128xf32, #tpu.memory_space<vmem>>, vector<1x1x128xf32>
      %28 = vector.shape_cast %27 : vector<1x1x128xf32> to vector<1x128xf32>
      %29 = vector.shape_cast %26 : vector<1x128xf32> to vector<1x1x128xf32>
      tpu.vector_store %arg8[%c0_21, %c0_22, %c0_23], %29 {strides = array<i32>} : memref<1x1x128xf32, #tpu.memory_space<vmem>>, vector<1x1x128xf32>,
      %c0_24 = arith.constant 0 : index
      %c0_25 = arith.constant 0 : index
      %c0_26 = arith.constant 0 : index
      %30 = vector.load %arg9[%c0_24, %c0_25, %c0_26] : memref<1x1x128xf32, #tpu.memory_space<vmem>>, vector<1x1x128xf32>
      %31 = vector.shape_cast %30 : vector<1x1x128xf32> to vector<1x128xf32>
      %32 = arith.mulf %21, %21 : vector<256x128xf32>
      %cst_27 = arith.constant dense<0.000000e+00> : vector<128xf32>
      %33 = vector.multi_reduction <add>, %32, %cst_27 [0] : vector<256x128xf32> to vector<128xf32>
      %34 = vector.shape_cast %33 : vector<128xf32> to vector<1x128xf32>
      %35 = arith.addf %31, %34 : vector<1x128xf32>
      %c0_28 = arith.constant 0 : index
      %c0_29 = arith.constant 0 : index
      %c0_30 = arith.constant 0 : index
      %36 = vector.load %arg9[%c0_28, %c0_29, %c0_30] : memref<1x1x128xf32, #tpu.memory_space<vmem>>, vector<1x1x128xf32>
      %37 = vector.shape_cast %36 : vector<1x1x128xf32> to vector<1x128xf32>
      %38 = vector.shape_cast %35 : vector<1x128xf32> to vector<1x1x128xf32>
      tpu.vector_store %arg9[%c0_28, %c0_29, %c0_30], %38 {strides = array<i32>} : memref<1x1x128xf32, #tpu.memory_space<vmem>>, vector<1x1x128xf32>,
      %c0_31 = arith.constant 0 : index
      %c0_32 = arith.constant 0 : index
      %c0_33 = arith.constant 0 : index
      %39 = vector.load %arg7[%c0_31, %c0_32, %c0_33] : memref<1x256x128xf32, #tpu.memory_space<vmem>>, vector<1x256x128xf32>
      %40 = vector.shape_cast %39 : vector<1x256x128xf32> to vector<256x128xf32>
      %41 = vector.shape_cast %21 : vector<256x128xf32> to vector<1x256x128xf32>
      tpu.vector_store %arg7[%c0_31, %c0_32, %c0_33], %41 {strides = array<i32>} : memref<1x256x128xf32, #tpu.memory_space<vmem>>, vector<1x256x128xf32>,
    } else {
    }
    return
  }
  func.func @transform_0(%arg0: i32, %arg1: i32, %arg2: i32, %arg3: i32) -> (i32, i32, i32) {
    %c0_i32 = arith.constant 0 : i32
    return %arg0, %arg2, %arg3 : i32, i32, i32
  }
  func.func @transform_1(%arg0: i32, %arg1: i32, %arg2: i32, %arg3: i32) -> (i32, i32) {
    %c0_i32 = arith.constant 0 : i32
    return %arg3, %arg1 : i32, i32
  }
  func.func @transform_2(%arg0: i32, %arg1: i32, %arg2: i32, %arg3: i32) -> (i32, i32) {
    %c0_i32 = arith.constant 0 : i32
    %c0_i32_0 = arith.constant 0 : i32
    return %c0_i32, %arg1 : i32, i32
  }
  func.func @transform_3(%arg0: i32, %arg1: i32, %arg2: i32, %arg3: i32) -> (i32, i32, i32) {
    %c0_i32 = arith.constant 0 : i32
    return %arg0, %arg2, %arg1 : i32, i32, i32
  }
  func.func @transform_4(%arg0: i32, %arg1: i32, %arg2: i32, %arg3: i32) -> (i32, i32, i32) {
    %c0_i32 = arith.constant 0 : i32
    %c0_i32_0 = arith.constant 0 : i32
    return %arg0, %c0_i32, %arg1 : i32, i32, i32
  }
  func.func @transform_5(%arg0: i32, %arg1: i32, %arg2: i32, %arg3: i32) -> (i32, i32, i32) {
    %c0_i32 = arith.constant 0 : i32
    %c0_i32_0 = arith.constant 0 : i32
    return %arg0, %c0_i32, %arg1 : i32, i32, i32
  }
}

module attributes {stable_mosaic.version = 11 : i64} {
  func.func @kernel(%arg0: i32, %arg1: i32, %arg2: i32, %arg3: i32, %arg4: memref<1x256x896xbf16, #tpu.memory_space<vmem>>, %arg5: memref<896x128xbf16, #tpu.memory_space<vmem>>, %arg6: memref<1x128xf32, #tpu.memory_space<vmem>>, %arg7: memref<1x256x128xf32, #tpu.memory_space<vmem>>, %arg8: memref<256x128xf32, #tpu.memory_space<vmem>>) attributes {dimension_semantics = [#tpu.dimension_semantics<parallel>, #tpu.dimension_semantics<parallel>, #tpu.dimension_semantics<parallel>, #tpu.dimension_semantics<arbitrary>], iteration_bounds = array<i64: 2, 1, 1, 7>, scalar_prefetch = 0 : i64, scratch_operands = 1 : i64, tpu.core_type = #tpu.core_type<tc>, window_params = [{transform_indices = @transform_0, window_bounds = array<i64: 1, 256, 896>}, {transform_indices = @transform_1, window_bounds = array<i64: 896, 128>}, {transform_indices = @transform_2, window_bounds = array<i64: 1, 128>}, {transform_indices = @transform_3, window_bounds = array<i64: 1, 256, 128>}]} {
    %c0_i32 = arith.constant 0 : i32
    %0 = arith.cmpi eq, %arg3, %c0_i32 : i32
    %1 = arith.extui %0 : i1 to i32
    %c0_i32_0 = arith.constant 0 : i32
    %2 = arith.cmpi ne, %1, %c0_i32_0 : i32
    scf.if %2 {
      %cst_10 = arith.constant 0.000000e+00 : f32
      %13 = vector.broadcast %cst_10 : f32 to vector<256x128xf32>
      %c0_11 = arith.constant 0 : index
      %c0_12 = arith.constant 0 : index
      %14 = vector.load %arg8[%c0_11, %c0_12] : memref<256x128xf32, #tpu.memory_space<vmem>>, vector<256x128xf32>
      tpu.vector_store %arg8[%c0_11, %c0_12], %13 {strides = array<i32>} : memref<256x128xf32, #tpu.memory_space<vmem>>, vector<256x128xf32>,
    } else {
    }
    %c0 = arith.constant 0 : index
    %c0_1 = arith.constant 0 : index
    %3 = vector.load %arg8[%c0, %c0_1] : memref<256x128xf32, #tpu.memory_space<vmem>>, vector<256x128xf32>
    %c0_2 = arith.constant 0 : index
    %c0_3 = arith.constant 0 : index
    %c0_4 = arith.constant 0 : index
    %4 = vector.load %arg4[%c0_2, %c0_3, %c0_4] : memref<1x256x896xbf16, #tpu.memory_space<vmem>>, vector<1x256x896xbf16>
    %5 = vector.shape_cast %4 : vector<1x256x896xbf16> to vector<256x896xbf16>
    %c0_5 = arith.constant 0 : index
    %c0_6 = arith.constant 0 : index
    %6 = vector.load %arg5[%c0_5, %c0_6] : memref<896x128xbf16, #tpu.memory_space<vmem>>, vector<896x128xbf16>
    %cst = arith.constant dense<0.000000e+00> : vector<256x128xf32>
    %7 = tpu.matmul %5, %6, %cst {dimension_numbers = #tpu.dot_dimension_numbers<[1], [0], [0], [1], [0, 0, 1, 1], [], []>} : vector<256x896xbf16>, vector<896x128xbf16>, vector<256x128xf32> -> vector<256x128xf32>
    %8 = arith.addf %3, %7 : vector<256x128xf32>
    %c0_7 = arith.constant 0 : index
    %c0_8 = arith.constant 0 : index
    %9 = vector.load %arg8[%c0_7, %c0_8] : memref<256x128xf32, #tpu.memory_space<vmem>>, vector<256x128xf32>
    tpu.vector_store %arg8[%c0_7, %c0_8], %8 {strides = array<i32>} : memref<256x128xf32, #tpu.memory_space<vmem>>, vector<256x128xf32>,
    %c6_i32 = arith.constant 6 : i32
    %10 = arith.cmpi eq, %arg3, %c6_i32 : i32
    %11 = arith.extui %10 : i1 to i32
    %c0_i32_9 = arith.constant 0 : i32
    %12 = arith.cmpi ne, %11, %c0_i32_9 : i32
    scf.if %12 {
      %c0_10 = arith.constant 0 : index
      %c0_11 = arith.constant 0 : index
      %13 = vector.load %arg8[%c0_10, %c0_11] : memref<256x128xf32, #tpu.memory_space<vmem>>, vector<256x128xf32>
      %c0_12 = arith.constant 0 : index
      %c0_13 = arith.constant 0 : index
      %14 = vector.load %arg6[%c0_12, %c0_13] : memref<1x128xf32, #tpu.memory_space<vmem>>, vector<1x128xf32>
      %15 = vector.broadcast %14 : vector<1x128xf32> to vector<256x128xf32>
      %16 = arith.addf %13, %15 : vector<256x128xf32>
      %17 = math.tanh %16 : vector<256x128xf32>
      %c0_14 = arith.constant 0 : index
      %c0_15 = arith.constant 0 : index
      %c0_16 = arith.constant 0 : index
      %18 = vector.load %arg7[%c0_14, %c0_15, %c0_16] : memref<1x256x128xf32, #tpu.memory_space<vmem>>, vector<1x256x128xf32>
      %19 = vector.shape_cast %18 : vector<1x256x128xf32> to vector<256x128xf32>
      %20 = vector.shape_cast %17 : vector<256x128xf32> to vector<1x256x128xf32>
      tpu.vector_store %arg7[%c0_14, %c0_15, %c0_16], %20 {strides = array<i32>} : memref<1x256x128xf32, #tpu.memory_space<vmem>>, vector<1x256x128xf32>,
    } else {
    }
    return
  }
  func.func @transform_0(%arg0: i32, %arg1: i32, %arg2: i32, %arg3: i32) -> (i32, i32, i32) {
    %c0_i32 = arith.constant 0 : i32
    return %arg0, %arg2, %arg3 : i32, i32, i32
  }
  func.func @transform_1(%arg0: i32, %arg1: i32, %arg2: i32, %arg3: i32) -> (i32, i32) {
    %c0_i32 = arith.constant 0 : i32
    return %arg3, %arg1 : i32, i32
  }
  func.func @transform_2(%arg0: i32, %arg1: i32, %arg2: i32, %arg3: i32) -> (i32, i32) {
    %c0_i32 = arith.constant 0 : i32
    %c0_i32_0 = arith.constant 0 : i32
    return %c0_i32, %arg1 : i32, i32
  }
  func.func @transform_3(%arg0: i32, %arg1: i32, %arg2: i32, %arg3: i32) -> (i32, i32, i32) {
    %c0_i32 = arith.constant 0 : i32
    return %arg0, %arg2, %arg1 : i32, i32, i32
  }
}

</mosaic_0001>

<llo_original>
// kernel: resnet_generator_forward.20
$region0: #{resnet_generator_forward.20}
  #allocation0 [shape = 'u32[]', space=smem, size = 0x4, offset = 0x4, fixed_abs, tag = 'smem constant byte address 0x4 - core index']
  #allocation1 [shape = 'u32[72,128]{1,0:T(1,128)}', space=vmem, size = 0x9000, scoped, tag = 'internal scratch']
  %s0 = inlined_call_operand.vmem [shape: f32[2,256,128], index: 0, kind: input, shape index: {}]
  %s1 = inlined_call_operand.vmem [shape: f32[2,1,128], index: 1, kind: input, shape index: {}]
  %s2 = inlined_call_operand.vmem [shape: f32[2,1,128], index: 2, kind: input, shape index: {}]
  %s3 = inlined_call_operand.vmem [shape: f32[2,256,128], index: 3, kind: output, shape index: {}]
  %s4 = sld [smem:[#allocation0]]
  $region45: #{resnet_generator_forward.20} parent=0
    _
  %s6 = ssub.s32 1, %s4
  %s7 = scalar_select 0, %s6, %s4
  loop: start=0, step=1, limit=4
  $region2: #{resnet_generator_forward.20} parent=0 // loop_pre_header
    _
  $region3: #{resnet_generator_forward.20} parent=0 // loop_header
    %s9 = sphi 0, %s13
    %p10 = scmp.ge.s32.totalorder %s9, 4
    %s16 = sphi 0, %s35
    %s17 = sphi 0, %s31
    %s18 = sphi 0, %s27
    %s19 = sphi 0, %s16
    %s20 = sphi 0, %s17
    %s21 = sphi 0, %s18
    %s22 = sphi 0, %s19
    %s23 = sphi 0, %s20
    %s24 = sphi 0, %s21
    %s42 = sphi 0, %s44
    %s45 = sphi 0, %s42
    %s46 = sphi 0, %s45
    %s62 = sphi 0, %s46
    %s70 = sphi 0, %s72
    %s73 = sphi 0, %s70
    %s74 = sphi 0, %s73
    %s90 = sphi 0, %s74
    %s98 = sphi 0, %s100
    %s101 = sphi 0, %s98
    %s102 = sphi 0, %s101
    %s118 = sphi 0, %s102
    %s128 = sphi 0, %s130
    %s131 = sphi 0, %s128
    %s132 = sphi 0, %s131
    %s148 = sphi 0, %s132
  $region4: #{resnet_generator_forward.20} parent=0 // loop_header_branch
    %12 = sbr.rel (%p10) target = $region8
  $region5: #{resnet_generator_forward.20} parent=0 // loop_body
    %s14 = ssub.s32 %s9, 1
    %s15 = ssub.s32 %s9, 2
    %s25 = sadd.s32 1, %s18
    %p26 = scmp.ge.s32.totalorder %s25, 1
    %s27 = scalar_select %p26, 0, %s25
    %s28 = sadd.s32 1, %s17
    %s29 = scalar_select %p26, %s28, %s17
    %p30 = scmp.ge.s32.totalorder %s29, 1
    %s31 = scalar_select %p30, 0, %s29
    %s32 = sadd.s32 1, %s16
    %s33 = scalar_select %p30, %s32, %s16
    %p34 = scmp.ge.s32.totalorder %s33, 2
    %s35 = scalar_select %p34, 0, %s33
    %s36 = ssub.s32 %s16, %s35
    %s37 = ssub.s32 %s17, %s31
    %s38 = sor.u32 %s36, %s37
    %s39 = ssub.s32 %s18, %s27
    %s40 = sor.u32 %s38, %s39
    %p41 = scmp.eq.s32.totalorder %s40, 0
    %s43 = sadd.s32 %s42, 1
    %s44 = scalar_select %p41, %s42, %s43
    %p47 = pneg %p41
    %p48 = scmp.eq.s32.totalorder %s9, 1
    %p49 = por %p47, %p48
    %p50 = scmp.ne.s32.totalorder %s42, %s45
    %p51 = scmp.eq.s32.totalorder %s9, 0
    %p52 = por %p50, %p51
    %p53 = scmp.ne.s32.totalorder %s42, %s45
    %p54 = scmp.eq.s32.totalorder %s14, 1
    %p55 = por %p53, %p54
    %p56 = scmp.ne.s32.totalorder %s45, %s46
    %p57 = scmp.eq.s32.totalorder %s14, 0
    %p58 = por %p56, %p57
    %p59 = scmp.ne.s32.totalorder %s45, %s46
    %p60 = scmp.eq.s32.totalorder %s15, 1
    %p61 = por %p59, %p60
    %p63 = scmp.ne.s32.totalorder %s46, %s62
    %p64 = scmp.eq.s32.totalorder %s15, 0
    %p65 = por %p63, %p64
    %s66 = ssub.s32 %s16, %s35
    %s67 = ssub.s32 %s18, %s27
    %s68 = sor.u32 %s66, %s67
    %p69 = scmp.eq.s32.totalorder %s68, 0
    %s71 = sadd.s32 %s70, 1
    %s72 = scalar_select %p69, %s70, %s71
    %p75 = pneg %p69
    %p76 = scmp.eq.s32.totalorder %s9, 1
    %p77 = por %p75, %p76
    %p78 = scmp.ne.s32.totalorder %s70, %s73
    %p79 = scmp.eq.s32.totalorder %s9, 0
    %p80 = por %p78, %p79
    %p81 = scmp.ne.s32.totalorder %s70, %s73
    %p82 = scmp.eq.s32.totalorder %s14, 1
    %p83 = por %p81, %p82
    %p84 = scmp.ne.s32.totalorder %s73, %s74
    %p85 = scmp.eq.s32.totalorder %s14, 0
    %p86 = por %p84, %p85
    %p87 = scmp.ne.s32.totalorder %s73, %s74
    %p88 = scmp.eq.s32.totalorder %s15, 1
    %p89 = por %p87, %p88
    %p91 = scmp.ne.s32.totalorder %s74, %s90
    %p92 = scmp.eq.s32.totalorder %s15, 0
    %p93 = por %p91, %p92
    %s94 = ssub.s32 %s16, %s35
    %s95 = ssub.s32 %s18, %s27
    %s96 = sor.u32 %s94, %s95
    %p97 = scmp.eq.s32.totalorder %s96, 0
    %s99 = sadd.s32 %s98, 1
    %s100 = scalar_select %p97, %s98, %s99
    %p103 = pneg %p97
    %p104 = scmp.eq.s32.totalorder %s9, 1
    %p105 = por %p103, %p104
    %p106 = scmp.ne.s32.totalorder %s98, %s101
    %p107 = scmp.eq.s32.totalorder %s9, 0
    %p108 = por %p106, %p107
    %p109 = scmp.ne.s32.totalorder %s98, %s101
    %p110 = scmp.eq.s32.totalorder %s14, 1
    %p111 = por %p109, %p110
    %p112 = scmp.ne.s32.totalorder %s101, %s102
    %p113 = scmp.eq.s32.totalorder %s14, 0
    %p114 = por %p112, %p113
    %p115 = scmp.ne.s32.totalorder %s101, %s102
    %p116 = scmp.eq.s32.totalorder %s15, 1
    %p117 = por %p115, %p116
    %p119 = scmp.ne.s32.totalorder %s102, %s118
    %p120 = scmp.eq.s32.totalorder %s15, 0
    %p121 = por %p119, %p120
    %s122 = ssub.s32 %s16, %s35
    %s123 = ssub.s32 %s17, %s31
    %s124 = sor.u32 %s122, %s123
    %s125 = ssub.s32 %s18, %s27
    %s126 = sor.u32 %s124, %s125
    %p127 = scmp.eq.s32.totalorder %s126, 0
    %s129 = sadd.s32 %s128, 1
    %s130 = scalar_select %p127, %s128, %s129
    %p133 = pneg %p127
    %p134 = scmp.eq.s32.totalorder %s9, 1
    %p135 = por %p133, %p134
    %p136 = scmp.ne.s32.totalorder %s128, %s131
    %p137 = scmp.eq.s32.totalorder %s9, 0
    %p138 = por %p136, %p137
    %p139 = scmp.ne.s32.totalorder %s128, %s131
    %p140 = scmp.eq.s32.totalorder %s14, 1
    %p141 = por %p139, %p140
    %p142 = scmp.ne.s32.totalorder %s131, %s132
    %p143 = scmp.eq.s32.totalorder %s14, 0
    %p144 = por %p142, %p143
    %p145 = scmp.ne.s32.totalorder %s131, %s132
    %p146 = scmp.eq.s32.totalorder %s15, 1
    %p147 = por %p145, %p146
    %p149 = scmp.ne.s32.totalorder %s132, %s148
    %p150 = scmp.eq.s32.totalorder %s15, 0
    %p151 = por %p149, %p150
    %p152 = scmp.le.s32.totalorder 1, %s9
    %p153 = scmp.lt.s32.totalorder %s9, 3
    %p154 = pnand %p152, %p153
    %p155 = pneg %p154
    // Predicated region
    $region9: #{resnet_generator_forward.20} parent=5 // pred_check
      _
    $region10: #{resnet_generator_forward.20} parent=5 // pred_check_branch
      %157 = sbr.rel (%p154) target = $region12
    $region11: #{resnet_generator_forward.20} parent=5 // pred_region
      %s158 = ssub.s32 %s9, 1
    $region12: #{resnet_generator_forward.20} parent=5 // pred_fallthru
      _
    %p159 = scmp.lt.s32.totalorder %s9, 2
    // Predicated region
    $region13: #{resnet_generator_forward.20} parent=5 // pred_check
      %p160 = pneg %p159
    $region14: #{resnet_generator_forward.20} parent=5 // pred_check_branch
      %162 = sbr.rel (%p160) target = $region16
    $region15: #{resnet_generator_forward.20} parent=5 // pred_region
      // Predicated region
      $region17: #{resnet_generator_forward.20} parent=15 // pred_check
        %p163 = pneg %p52
      $region18: #{resnet_generator_forward.20} parent=15 // pred_check_branch
        %165 = sbr.rel (%p163) target = $region20
      $region19: #{resnet_generator_forward.20} parent=15 // pred_region
        %s166 = smul.u32 32, %s17
        %p167 = scmp.lt.s32.totalorder %s16, 1
        %s168 = scalar_select %p167, %s16, 1
        %p169 = scmp.lt.s32.totalorder %s166, 31
        %s170 = scalar_select %p169, %s166, 31
        %p171 = scmp.lt.s32.totalorder %s18, 0
        %s172 = scalar_select %p171, %s18, 0
        %s173 = sadd.s32 %s172, %s170
        %s174 = smul.addr %s168, 32
        %s175 = sadd.s32 %s173, %s174
        %s176 = smul.addr %s175, 8
        %s177 = scalar_lea.vmem %s0, %s176
        %s178 = smul.u32 32, %s17
      $region20: #{resnet_generator_forward.20} parent=15 // pred_fallthru
        _
      // Predicated region
      $region21: #{resnet_generator_forward.20} parent=15 // pred_check
        %p179 = pneg %p80
      $region22: #{resnet_generator_forward.20} parent=15 // pred_check_branch
        %181 = sbr.rel (%p179) target = $region24
      $region23: #{resnet_generator_forward.20} parent=15 // pred_region
        %p182 = scmp.lt.s32.totalorder %s16, 1
        %s183 = scalar_select %p182, %s16, 1
        %p184 = scmp.lt.s32.totalorder %s18, 0
        %s185 = scalar_select %p184, %s18, 0
        %s186 = sadd.s32 %s185, %s183
        %s187 = scalar_lea.vmem %s1, %s186
      $region24: #{resnet_generator_forward.20} parent=15 // pred_fallthru
        _
      // Predicated region
      $region25: #{resnet_generator_forward.20} parent=15 // pred_check
        %p188 = pneg %p108
      $region26: #{resnet_generator_forward.20} parent=15 // pred_check_branch
        %190 = sbr.rel (%p188) target = $region28
      $region27: #{resnet_generator_forward.20} parent=15 // pred_region
        %p191 = scmp.lt.s32.totalorder %s16, 1
        %s192 = scalar_select %p191, %s16, 1
        %p193 = scmp.lt.s32.totalorder %s18, 0
        %s194 = scalar_select %p193, %s18, 0
        %s195 = sadd.s32 %s194, %s192
        %s196 = scalar_lea.vmem %s2, %s195
      $region28: #{resnet_generator_forward.20} parent=15 // pred_fallthru
        _
    $region16: #{resnet_generator_forward.20} parent=5 // pred_fallthru
      _
    %p197 = scmp.le.s32.totalorder 1, %s9
    %p198 = scmp.lt.s32.totalorder %s9, 3
    %p199 = pnand %p197, %p198
    %p200 = pneg %p199
    // Predicated region
    $region29: #{resnet_generator_forward.20} parent=5 // pred_check
      _
    $region30: #{resnet_generator_forward.20} parent=5 // pred_check_branch
      %202 = sbr.rel (%p199) target = $region32
    $region31: #{resnet_generator_forward.20} parent=5 // pred_region
      %s203 = ssub.s32 %s9, 1
      %s204 = smul.u32 32, %s20
      %p205 = scmp.lt.s32.totalorder %s19, 1
      %s206 = scalar_select %p205, %s19, 1
      %p207 = scmp.lt.s32.totalorder %s204, 31
      %s208 = scalar_select %p207, %s204, 31
      %p209 = scmp.lt.s32.totalorder %s21, 0
      %s210 = scalar_select %p209, %s21, 0
      %s211 = sadd.s32 %s210, %s208
      %s212 = smul.addr %s206, 32
      %s213 = sadd.s32 %s211, %s212
      %s214 = smul.addr %s213, 8
      %s215 = scalar_lea.vmem %s0, %s214
      %p216 = pneg %p58
      %p217 = pneg %p55
      %p218 = scmp.lt.s32.totalorder %s19, 1
      %s219 = scalar_select %p218, %s19, 1
      %p220 = scmp.lt.s32.totalorder %s21, 0
      %s221 = scalar_select %p220, %s21, 0
      %s222 = sadd.s32 %s221, %s219
      %s223 = scalar_lea.vmem %s1, %s222
      %p224 = pneg %p86
      %p225 = pneg %p83
      %p226 = scmp.lt.s32.totalorder %s19, 1
      %s227 = scalar_select %p226, %s19, 1
      %p228 = scmp.lt.s32.totalorder %s21, 0
      %s229 = scalar_select %p228, %s21, 0
      %s230 = sadd.s32 %s229, %s227
      %s231 = scalar_lea.vmem %s2, %s230
      %p232 = pneg %p114
      %p233 = pneg %p111
      %p234 = pneg %p144
      %p235 = pneg %p141
      %s236 = smul.u32 32, %s20
      %p237 = scmp.lt.s32.totalorder %s19, 1
      %s238 = scalar_select %p237, %s19, 1
      %p239 = scmp.lt.s32.totalorder %s236, 31
      %s240 = scalar_select %p239, %s236, 31
      %p241 = scmp.lt.s32.totalorder %s21, 0
      %s242 = scalar_select %p241, %s21, 0
      %s243 = sadd.s32 %s242, %s240
      %s244 = smul.addr %s238, 32
      %s245 = sadd.s32 %s243, %s244
      %s246 = smul.addr %s245, 8
      %s247 = scalar_lea.vmem %s3, %s246
      %s248 = smul.u32 32, %s20
      %p249 = scmp.lt.s32.totalorder %s19, 1
      %s250 = scalar_select %p249, %s19, 1
      %p251 = scmp.lt.s32.totalorder %s248, 31
      %s252 = scalar_select %p251, %s248, 31
      %p253 = scmp.lt.s32.totalorder %s21, 0
      %s254 = scalar_select %p253, %s21, 0
      %s255 = sadd.s32 %s254, %s252
      %s256 = smul.addr %s250, 32
      %s257 = sadd.s32 %s255, %s256
      %s258 = smul.addr %s257, 8
      %s259 = scalar_lea.vmem %s0, %s258
      %s260 = smul.u32 32, %s20
      %p261 = scmp.lt.s32.totalorder %s19, 1
      %s262 = scalar_select %p261, %s19, 1
      %p263 = scmp.lt.s32.totalorder %s21, 0
      %s264 = scalar_select %p263, %s21, 0
      %s265 = sadd.s32 %s264, %s262
      %s266 = scalar_lea.vmem %s1, %s265
      %p267 = scmp.lt.s32.totalorder %s19, 1
      %s268 = scalar_select %p267, %s19, 1
      %p269 = scmp.lt.s32.totalorder %s21, 0
      %s270 = scalar_select %p269, %s21, 0
      %s271 = sadd.s32 %s270, %s268
      %s272 = scalar_lea.vmem %s2, %s271
      %s273 = smul.u32 32, %s20
      %p274 = scmp.lt.s32.totalorder %s19, 1
      %s275 = scalar_select %p274, %s19, 1
      %p276 = scmp.lt.s32.totalorder %s273, 31
      %s277 = scalar_select %p276, %s273, 31
      %p278 = scmp.lt.s32.totalorder %s21, 0
      %s279 = scalar_select %p278, %s21, 0
      %s280 = sadd.s32 %s279, %s277
      %s281 = smul.addr %s275, 32
      %s282 = sadd.s32 %s280, %s281
      %s283 = smul.addr %s282, 8
      %s284 = scalar_lea.vmem %s3, %s283
      %s285 = smul.u32 32, %s20
      %v286 = vld [vmem:[%s266] sm:$0x1]
      %v287 = vmul.f32 %v286, 0.00390625
      %v288 = vld [vmem:[%s272] sm:$0x1]
      %v289 = vmul.f32 %v288, 0.00390625
      %v290 = vmul.f32 %v287, %v287
      %v291 = vsub.f32 %v289, %v290
      %v292 = vmax.f32 %v291, 0.0
      %v293 = vld [vmem:[%s259] sm:$0xff]
      %v294 = vld [vmem:[%s259 + $0x8] sm:$0xff]
      %v295 = vld [vmem:[%s259 + $0x10] sm:$0xff]
      %v296 = vld [vmem:[%s259 + $0x18] sm:$0xff]
      %v297 = vld [vmem:[%s259 + $0x20] sm:$0xff]
      %v298 = vld [vmem:[%s259 + $0x28] sm:$0xff]
      %v299 = vld [vmem:[%s259 + $0x30] sm:$0xff]
      %v300 = vld [vmem:[%s259 + $0x38] sm:$0xff]
      %v301 = vld [vmem:[%s259 + $0x40] sm:$0xff]
      %v302 = vld [vmem:[%s259 + $0x48] sm:$0xff]
      %v303 = vld [vmem:[%s259 + $0x50] sm:$0xff]
      %v304 = vld [vmem:[%s259 + $0x58] sm:$0xff]
      %v305 = vld [vmem:[%s259 + $0x60] sm:$0xff]
      %v306 = vld [vmem:[%s259 + $0x68] sm:$0xff]
      %v307 = vld [vmem:[%s259 + $0x70] sm:$0xff]
      %v308 = vld [vmem:[%s259 + $0x78] sm:$0xff]
      %v309 = vld [vmem:[%s259 + $0x80] sm:$0xff]
      %v310 = vld [vmem:[%s259 + $0x88] sm:$0xff]
      %v311 = vld [vmem:[%s259 + $0x90] sm:$0xff]
      %v312 = vld [vmem:[%s259 + $0x98] sm:$0xff]
      %v313 = vld [vmem:[%s259 + $0xa0] sm:$0xff]
      %v314 = vld [vmem:[%s259 + $0xa8] sm:$0xff]
      %v315 = vld [vmem:[%s259 + $0xb0] sm:$0xff]
      %v316 = vld [vmem:[%s259 + $0xb8] sm:$0xff]
      %v317 = vld [vmem:[%s259 + $0xc0] sm:$0xff]
      %v318 = vld [vmem:[%s259 + $0xc8] sm:$0xff]
      %v319 = vld [vmem:[%s259 + $0xd0] sm:$0xff]
      %v320 = vld [vmem:[%s259 + $0xd8] sm:$0xff]
      %v321 = vld [vmem:[%s259 + $0xe0] sm:$0xff]
      %v322 = vld [vmem:[%s259 + $0xe8] sm:$0xff]
      %v323 = vld [vmem:[%s259 + $0xf0] sm:$0xff]
      %v324 = vld [vmem:[%s259 + $0xf8] sm:$0xff]
      %v326 = vperm.slane %v287, 0
      %v328 = vsub.f32 %v293, %v326
      %v329 = vsub.f32 %v294, %v326
      %v330 = vsub.f32 %v295, %v326
      %v331 = vsub.f32 %v296, %v326
      %v332 = vsub.f32 %v297, %v326
      %v333 = vsub.f32 %v298, %v326
      %v334 = vsub.f32 %v299, %v326
      %v335 = vsub.f32 %v300, %v326
      %v336 = vsub.f32 %v301, %v326
      %v337 = vsub.f32 %v302, %v326
      %v338 = vsub.f32 %v303, %v326
      %v339 = vsub.f32 %v304, %v326
      %v340 = vsub.f32 %v305, %v326
      %v341 = vsub.f32 %v306, %v326
      %v342 = vsub.f32 %v307, %v326
      %v343 = vsub.f32 %v308, %v326
      %v344 = vsub.f32 %v309, %v326
      %v345 = vsub.f32 %v310, %v326
      %v346 = vsub.f32 %v311, %v326
      %v347 = vsub.f32 %v312, %v326
      %v348 = vsub.f32 %v313, %v326
      %v349 = vsub.f32 %v314, %v326
      %v350 = vsub.f32 %v315, %v326
      %v351 = vsub.f32 %v316, %v326
      %v352 = vsub.f32 %v317, %v326
      %v353 = vsub.f32 %v318, %v326
      %v354 = vsub.f32 %v319, %v326
      %v355 = vsub.f32 %v320, %v326
      %v356 = vsub.f32 %v321, %v326
      %v357 = vsub.f32 %v322, %v326
      %v358 = vsub.f32 %v323, %v326
      %v359 = vsub.f32 %v324, %v326
      %v360 = vadd.f32 %v292, 1e-05
      %v361 = vrsqrt.pop %v360
      %v362 = vmul.f32 %v361, %v360
      %v363 = vmul.f32 %v362, %v361
      %v364 = vmul.f32 0.5, %v363
      %v365 = vsub.f32 1.5, %v364
      %v366 = vmul.f32 %v361, %v365
      %vm367 = vweird.f32 %v360
      %vm368 = vweird.f32 %v361
      %vm369 = vmor %vm367, %vm368
      %v370 = vsel %vm369, %v361, %v366
      %v372 = vperm.slane %v370, 0
      %v374 = vmul.f32 %v328, %v372
      %v375 = vmul.f32 %v329, %v372
      %v376 = vmul.f32 %v330, %v372
      %v377 = vmul.f32 %v331, %v372
      %v378 = vmul.f32 %v332, %v372
      %v379 = vmul.f32 %v333, %v372
      %v380 = vmul.f32 %v334, %v372
      %v381 = vmul.f32 %v335, %v372
      %v382 = vmul.f32 %v336, %v372
      %v383 = vmul.f32 %v337, %v372
      %v384 = vmul.f32 %v338, %v372
      %v385 = vmul.f32 %v339, %v372
      %v386 = vmul.f32 %v340, %v372
      %v387 = vmul.f32 %v341, %v372
      %v388 = vmul.f32 %v342, %v372
      %v389 = vmul.f32 %v343, %v372
      %v390 = vmul.f32 %v344, %v372
      %v391 = vmul.f32 %v345, %v372
      %v392 = vmul.f32 %v346, %v372
      %v393 = vmul.f32 %v347, %v372
      %v394 = vmul.f32 %v348, %v372
      %v395 = vmul.f32 %v349, %v372
      %v396 = vmul.f32 %v350, %v372
      %v397 = vmul.f32 %v351, %v372
      %v398 = vmul.f32 %v352, %v372
      %v399 = vmul.f32 %v353, %v372
      %v400 = vmul.f32 %v354, %v372
      %v401 = vmul.f32 %v355, %v372
      %v402 = vmul.f32 %v356, %v372
      %v403 = vmul.f32 %v357, %v372
      %v404 = vmul.f32 %v358, %v372
      %v405 = vmul.f32 %v359, %v372
      %v406 = vmax.f32 %v374, 0.0
      %v407 = vmax.f32 %v375, 0.0
      %v408 = vmax.f32 %v376, 0.0
      %v409 = vmax.f32 %v377, 0.0
      %v410 = vmax.f32 %v378, 0.0
      %v411 = vmax.f32 %v379, 0.0
      %v412 = vmax.f32 %v380, 0.0
      %v413 = vmax.f32 %v381, 0.0
      %v414 = vmax.f32 %v382, 0.0
      %v415 = vmax.f32 %v383, 0.0
      %v416 = vmax.f32 %v384, 0.0
      %v417 = vmax.f32 %v385, 0.0
      %v418 = vmax.f32 %v386, 0.0
      %v419 = vmax.f32 %v387, 0.0
      %v420 = vmax.f32 %v388, 0.0
      %v421 = vmax.f32 %v389, 0.0
      %v422 = vmax.f32 %v390, 0.0
      %v423 = vmax.f32 %v391, 0.0
      %v424 = vmax.f32 %v392, 0.0
      %v425 = vmax.f32 %v393, 0.0
      %v426 = vmax.f32 %v394, 0.0
      %v427 = vmax.f32 %v395, 0.0
      %v428 = vmax.f32 %v396, 0.0
      %v429 = vmax.f32 %v397, 0.0
      %v430 = vmax.f32 %v398, 0.0
      %v431 = vmax.f32 %v399, 0.0
      %v432 = vmax.f32 %v400, 0.0
      %v433 = vmax.f32 %v401, 0.0
      %v434 = vmax.f32 %v402, 0.0
      %v435 = vmax.f32 %v403, 0.0
      %v436 = vmax.f32 %v404, 0.0
      %v437 = vmax.f32 %v405, 0.0
      %438 = vst [vmem:[%s284] sm:$0xff] %v406
      %439 = vst [vmem:[%s284 + $0x8] sm:$0xff] %v407
      %440 = vst [vmem:[%s284 + $0x10] sm:$0xff] %v408
      %441 = vst [vmem:[%s284 + $0x18] sm:$0xff] %v409
      %442 = vst [vmem:[%s284 + $0x20] sm:$0xff] %v410
      %443 = vst [vmem:[%s284 + $0x28] sm:$0xff] %v411
      %444 = vst [vmem:[%s284 + $0x30] sm:$0xff] %v412
      %445 = vst [vmem:[%s284 + $0x38] sm:$0xff] %v413
      %446 = vst [vmem:[%s284 + $0x40] sm:$0xff] %v414
      %447 = vst [vmem:[%s284 + $0x48] sm:$0xff] %v415
      %448 = vst [vmem:[%s284 + $0x50] sm:$0xff] %v416
      %449 = vst [vmem:[%s284 + $0x58] sm:$0xff] %v417
      %450 = vst [vmem:[%s284 + $0x60] sm:$0xff] %v418
      %451 = vst [vmem:[%s284 + $0x68] sm:$0xff] %v419
      %452 = vst [vmem:[%s284 + $0x70] sm:$0xff] %v420
      %453 = vst [vmem:[%s284 + $0x78] sm:$0xff] %v421
      %454 = vst [vmem:[%s284 + $0x80] sm:$0xff] %v422
      %455 = vst [vmem:[%s284 + $0x88] sm:$0xff] %v423
      %456 = vst [vmem:[%s284 + $0x90] sm:$0xff] %v424
      %457 = vst [vmem:[%s284 + $0x98] sm:$0xff] %v425
      %458 = vst [vmem:[%s284 + $0xa0] sm:$0xff] %v426
      %459 = vst [vmem:[%s284 + $0xa8] sm:$0xff] %v427
      %460 = vst [vmem:[%s284 + $0xb0] sm:$0xff] %v428
      %461 = vst [vmem:[%s284 + $0xb8] sm:$0xff] %v429
      %462 = vst [vmem:[%s284 + $0xc0] sm:$0xff] %v430
      %463 = vst [vmem:[%s284 + $0xc8] sm:$0xff] %v431
      %464 = vst [vmem:[%s284 + $0xd0] sm:$0xff] %v432
      %465 = vst [vmem:[%s284 + $0xd8] sm:$0xff] %v433
      %466 = vst [vmem:[%s284 + $0xe0] sm:$0xff] %v434
      %467 = vst [vmem:[%s284 + $0xe8] sm:$0xff] %v435
      %468 = vst [vmem:[%s284 + $0xf0] sm:$0xff] %v436
      %469 = vst [vmem:[%s284 + $0xf8] sm:$0xff] %v437
      %s470 = smul.u32 32, %s20
      %p471 = scmp.lt.s32.totalorder %s19, 1
      %s472 = scalar_select %p471, %s19, 1
      %p473 = scmp.lt.s32.totalorder %s470, 31
      %s474 = scalar_select %p473, %s470, 31
      %p475 = scmp.lt.s32.totalorder %s21, 0
      %s476 = scalar_select %p475, %s21, 0
      %s477 = sadd.s32 %s476, %s474
      %s478 = smul.addr %s472, 32
      %s479 = sadd.s32 %s477, %s478
      %s480 = smul.addr %s479, 8
      %s481 = scalar_lea.vmem %s3, %s480
      // Predicated region
      $region33: #{resnet_generator_forward.20} parent=31 // pred_check
        %p482 = pneg %p141
      $region34: #{resnet_generator_forward.20} parent=31 // pred_check_branch
        %484 = sbr.rel (%p482) target = $region36
      $region35: #{resnet_generator_forward.20} parent=31 // pred_region
        %s485 = smul.u32 32, %s20
      $region36: #{resnet_generator_forward.20} parent=31 // pred_fallthru
        _
    $region32: #{resnet_generator_forward.20} parent=5 // pred_fallthru
      _
    %p486 = scmp.le.s32.totalorder 2, %s9
    // Predicated region
    $region37: #{resnet_generator_forward.20} parent=5 // pred_check
      %p487 = pneg %p486
    $region38: #{resnet_generator_forward.20} parent=5 // pred_check_branch
      %489 = sbr.rel (%p487) target = $region40
    $region39: #{resnet_generator_forward.20} parent=5 // pred_region
      %s490 = ssub.s32 %s9, 2
      // Predicated region
      $region41: #{resnet_generator_forward.20} parent=39 // pred_check
        %p491 = pneg %p147
      $region42: #{resnet_generator_forward.20} parent=39 // pred_check_branch
        %493 = sbr.rel (%p491) target = $region44
      $region43: #{resnet_generator_forward.20} parent=39 // pred_region
        %s494 = smul.u32 32, %s23
        %p495 = scmp.lt.s32.totalorder %s22, 1
        %s496 = scalar_select %p495, %s22, 1
        %p497 = scmp.lt.s32.totalorder %s494, 31
        %s498 = scalar_select %p497, %s494, 31
        %p499 = scmp.lt.s32.totalorder %s24, 0
        %s500 = scalar_select %p499, %s24, 0
        %s501 = sadd.s32 %s500, %s498
        %s502 = smul.addr %s496, 32
        %s503 = sadd.s32 %s501, %s502
        %s504 = smul.addr %s503, 8
        %s505 = scalar_lea.vmem %s3, %s504
      $region44: #{resnet_generator_forward.20} parent=39 // pred_fallthru
        _
    $region40: #{resnet_generator_forward.20} parent=5 // pred_fallthru
      _
  $region6: #{resnet_generator_forward.20} parent=0 // loop_footer
    %s13 = sadd.s32 1, %s9
  $region7: #{resnet_generator_forward.20} parent=0 // loop_footer_branch
    %8 = sbr.rel target = $region3
  $region8: #{resnet_generator_forward.20} parent=0 // loop_exit
    _

// kernel: resnet_generator_forward.19
$region0: #{resnet_generator_forward.19}
  #allocation0 [shape = 'u32[]', space=smem, size = 0x4, offset = 0x4, fixed_abs, tag = 'smem constant byte address 0x4 - core index']
  #allocation1 [shape = 'u32[72,128]{1,0:T(1,128)}', space=vmem, size = 0x9000, scoped, tag = 'internal scratch']
  #allocation2 [shape = 'f32[256,128]{1,0:T(8,128)}', space=vmem, size = 0x20000, scoped, tag = 'scratch operand']
  %s0 = inlined_call_operand.vmem [shape: bf16[2,256,256], index: 0, kind: input, shape index: {}]
  %s1 = inlined_call_operand.vmem [shape: bf16[256,128], index: 1, kind: input, shape index: {}]
  %s2 = inlined_call_operand.vmem [shape: f32[1,128], index: 2, kind: input, shape index: {}]
  %s3 = inlined_call_operand.vmem [shape: f32[2,256,128], index: 3, kind: output, shape index: {0}]
  %s4 = inlined_call_operand.vmem [shape: f32[2,1,128], index: 4, kind: output, shape index: {1}]
  %s5 = inlined_call_operand.vmem [shape: f32[2,1,128], index: 5, kind: output, shape index: {2}]
  %6 = xla_tuple %s3, %s4, %s5
  %s7 = sld [smem:[#allocation0]]
  $region73: #{resnet_generator_forward.19} parent=0
    _
  %s9 = ssub.s32 1, %s7
  %s10 = scalar_select 0, %s9, %s7
  loop: start=0, step=1, limit=4
  $region2: #{resnet_generator_forward.19} parent=0 // loop_pre_header
    _
  $region3: #{resnet_generator_forward.19} parent=0 // loop_header
    %s12 = sphi 0, %s16
    %p13 = scmp.ge.s32.totalorder %s12, 4
    %s19 = sphi 0, %s45
    %s20 = sphi 0, %s41
    %s21 = sphi 0, %s37
    %s22 = sphi 0, %s33
    %s23 = sphi 0, %s19
    %s24 = sphi 0, %s20
    %s25 = sphi 0, %s21
    %s26 = sphi 0, %s22
    %s27 = sphi 0, %s23
    %s28 = sphi 0, %s24
    %s29 = sphi 0, %s25
    %s30 = sphi 0, %s26
    %s52 = sphi 0, %s54
    %s55 = sphi 0, %s52
    %s56 = sphi 0, %s55
    %s72 = sphi 0, %s56
    %s80 = sphi 0, %s82
    %s83 = sphi 0, %s80
    %s84 = sphi 0, %s83
    %s100 = sphi 0, %s84
    %s106 = sphi 0, %s108
    %s109 = sphi 0, %s106
    %s110 = sphi 0, %s109
    %s126 = sphi 0, %s110
    %s136 = sphi 0, %s138
    %s139 = sphi 0, %s136
    %s140 = sphi 0, %s139
    %s156 = sphi 0, %s140
    %s164 = sphi 0, %s166
    %s167 = sphi 0, %s164
    %s168 = sphi 0, %s167
    %s184 = sphi 0, %s168
    %s192 = sphi 0, %s194
    %s195 = sphi 0, %s192
    %s196 = sphi 0, %s195
    %s212 = sphi 0, %s196
  $region4: #{resnet_generator_forward.19} parent=0 // loop_header_branch
    %15 = sbr.rel (%p13) target = $region8
  $region5: #{resnet_generator_forward.19} parent=0 // loop_body
    %s17 = ssub.s32 %s12, 1
    %s18 = ssub.s32 %s12, 2
    %s31 = sadd.s32 1, %s22
    %p32 = scmp.ge.s32.totalorder %s31, 1
    %s33 = scalar_select %p32, 0, %s31
    %s34 = sadd.s32 1, %s21
    %s35 = scalar_select %p32, %s34, %s21
    %p36 = scmp.ge.s32.totalorder %s35, 1
    %s37 = scalar_select %p36, 0, %s35
    %s38 = sadd.s32 1, %s20
    %s39 = scalar_select %p36, %s38, %s20
    %p40 = scmp.ge.s32.totalorder %s39, 1
    %s41 = scalar_select %p40, 0, %s39
    %s42 = sadd.s32 1, %s19
    %s43 = scalar_select %p40, %s42, %s19
    %p44 = scmp.ge.s32.totalorder %s43, 2
    %s45 = scalar_select %p44, 0, %s43
    %s46 = ssub.s32 %s19, %s45
    %s47 = ssub.s32 %s21, %s37
    %s48 = sor.u32 %s46, %s47
    %s49 = ssub.s32 %s22, %s33
    %s50 = sor.u32 %s48, %s49
    %p51 = scmp.eq.s32.totalorder %s50, 0
    %s53 = sadd.s32 %s52, 1
    %s54 = scalar_select %p51, %s52, %s53
    %p57 = pneg %p51
    %p58 = scmp.eq.s32.totalorder %s12, 1
    %p59 = por %p57, %p58
    %p60 = scmp.ne.s32.totalorder %s52, %s55
    %p61 = scmp.eq.s32.totalorder %s12, 0
    %p62 = por %p60, %p61
    %p63 = scmp.ne.s32.totalorder %s52, %s55
    %p64 = scmp.eq.s32.totalorder %s17, 1
    %p65 = por %p63, %p64
    %p66 = scmp.ne.s32.totalorder %s55, %s56
    %p67 = scmp.eq.s32.totalorder %s17, 0
    %p68 = por %p66, %p67
    %p69 = scmp.ne.s32.totalorder %s55, %s56
    %p70 = scmp.eq.s32.totalorder %s18, 1
    %p71 = por %p69, %p70
    %p73 = scmp.ne.s32.totalorder %s56, %s72
    %p74 = scmp.eq.s32.totalorder %s18, 0
    %p75 = por %p73, %p74
    %s76 = ssub.s32 %s22, %s33
    %s77 = ssub.s32 %s20, %s41
    %s78 = sor.u32 %s76, %s77
    %p79 = scmp.eq.s32.totalorder %s78, 0
    %s81 = sadd.s32 %s80, 1
    %s82 = scalar_select %p79, %s80, %s81
    %p85 = pneg %p79
    %p86 = scmp.eq.s32.totalorder %s12, 1
    %p87 = por %p85, %p86
    %p88 = scmp.ne.s32.totalorder %s80, %s83
    %p89 = scmp.eq.s32.totalorder %s12, 0
    %p90 = por %p88, %p89
    %p91 = scmp.ne.s32.totalorder %s80, %s83
    %p92 = scmp.eq.s32.totalorder %s17, 1
    %p93 = por %p91, %p92
    %p94 = scmp.ne.s32.totalorder %s83, %s84
    %p95 = scmp.eq.s32.totalorder %s17, 0
    %p96 = por %p94, %p95
    %p97 = scmp.ne.s32.totalorder %s83, %s84
    %p98 = scmp.eq.s32.totalorder %s18, 1
    %p99 = por %p97, %p98
    %p101 = scmp.ne.s32.totalorder %s84, %s100
    %p102 = scmp.eq.s32.totalorder %s18, 0
    %p103 = por %p101, %p102
    %s104 = ssub.s32 %s20, %s41
    %p105 = scmp.eq.s32.totalorder %s104, 0
    %s107 = sadd.s32 %s106, 1
    %s108 = scalar_select %p105, %s106, %s107
    %p111 = pneg %p105
    %p112 = scmp.eq.s32.totalorder %s12, 1
    %p113 = por %p111, %p112
    %p114 = scmp.ne.s32.totalorder %s106, %s109
    %p115 = scmp.eq.s32.totalorder %s12, 0
    %p116 = por %p114, %p115
    %p117 = scmp.ne.s32.totalorder %s106, %s109
    %p118 = scmp.eq.s32.totalorder %s17, 1
    %p119 = por %p117, %p118
    %p120 = scmp.ne.s32.totalorder %s109, %s110
    %p121 = scmp.eq.s32.totalorder %s17, 0
    %p122 = por %p120, %p121
    %p123 = scmp.ne.s32.totalorder %s109, %s110
    %p124 = scmp.eq.s32.totalorder %s18, 1
    %p125 = por %p123, %p124
    %p127 = scmp.ne.s32.totalorder %s110, %s126
    %p128 = scmp.eq.s32.totalorder %s18, 0
    %p129 = por %p127, %p128
    %s130 = ssub.s32 %s19, %s45
    %s131 = ssub.s32 %s21, %s37
    %s132 = sor.u32 %s130, %s131
    %s133 = ssub.s32 %s20, %s41
    %s134 = sor.u32 %s132, %s133
    %p135 = scmp.eq.s32.totalorder %s134, 0
    %s137 = sadd.s32 %s136, 1
    %s138 = scalar_select %p135, %s136, %s137
    %p141 = pneg %p135
    %p142 = scmp.eq.s32.totalorder %s12, 1
    %p143 = por %p141, %p142
    %p144 = scmp.ne.s32.totalorder %s136, %s139
    %p145 = scmp.eq.s32.totalorder %s12, 0
    %p146 = por %p144, %p145
    %p147 = scmp.ne.s32.totalorder %s136, %s139
    %p148 = scmp.eq.s32.totalorder %s17, 1
    %p149 = por %p147, %p148
    %p150 = scmp.ne.s32.totalorder %s139, %s140
    %p151 = scmp.eq.s32.totalorder %s17, 0
    %p152 = por %p150, %p151
    %p153 = scmp.ne.s32.totalorder %s139, %s140
    %p154 = scmp.eq.s32.totalorder %s18, 1
    %p155 = por %p153, %p154
    %p157 = scmp.ne.s32.totalorder %s140, %s156
    %p158 = scmp.eq.s32.totalorder %s18, 0
    %p159 = por %p157, %p158
    %s160 = ssub.s32 %s19, %s45
    %s161 = ssub.s32 %s20, %s41
    %s162 = sor.u32 %s160, %s161
    %p163 = scmp.eq.s32.totalorder %s162, 0
    %s165 = sadd.s32 %s164, 1
    %s166 = scalar_select %p163, %s164, %s165
    %p169 = pneg %p163
    %p170 = scmp.eq.s32.totalorder %s12, 1
    %p171 = por %p169, %p170
    %p172 = scmp.ne.s32.totalorder %s164, %s167
    %p173 = scmp.eq.s32.totalorder %s12, 0
    %p174 = por %p172, %p173
    %p175 = scmp.ne.s32.totalorder %s164, %s167
    %p176 = scmp.eq.s32.totalorder %s17, 1
    %p177 = por %p175, %p176
    %p178 = scmp.ne.s32.totalorder %s167, %s168
    %p179 = scmp.eq.s32.totalorder %s17, 0
    %p180 = por %p178, %p179
    %p181 = scmp.ne.s32.totalorder %s167, %s168
    %p182 = scmp.eq.s32.totalorder %s18, 1
    %p183 = por %p181, %p182
    %p185 = scmp.ne.s32.totalorder %s168, %s184
    %p186 = scmp.eq.s32.totalorder %s18, 0
    %p187 = por %p185, %p186
    %s188 = ssub.s32 %s19, %s45
    %s189 = ssub.s32 %s20, %s41
    %s190 = sor.u32 %s188, %s189
    %p191 = scmp.eq.s32.totalorder %s190, 0
    %s193 = sadd.s32 %s192, 1
    %s194 = scalar_select %p191, %s192, %s193
    %p197 = pneg %p191
    %p198 = scmp.eq.s32.totalorder %s12, 1
    %p199 = por %p197, %p198
    %p200 = scmp.ne.s32.totalorder %s192, %s195
    %p201 = scmp.eq.s32.totalorder %s12, 0
    %p202 = por %p200, %p201
    %p203 = scmp.ne.s32.totalorder %s192, %s195
    %p204 = scmp.eq.s32.totalorder %s17, 1
    %p205 = por %p203, %p204
    %p206 = scmp.ne.s32.totalorder %s195, %s196
    %p207 = scmp.eq.s32.totalorder %s17, 0
    %p208 = por %p206, %p207
    %p209 = scmp.ne.s32.totalorder %s195, %s196
    %p210 = scmp.eq.s32.totalorder %s18, 1
    %p211 = por %p209, %p210
    %p213 = scmp.ne.s32.totalorder %s196, %s212
    %p214 = scmp.eq.s32.totalorder %s18, 0
    %p215 = por %p213, %p214
    %p216 = scmp.le.s32.totalorder 1, %s12
    %p217 = scmp.lt.s32.totalorder %s12, 3
    %p218 = pnand %p216, %p217
    %p219 = pneg %p218
    // Predicated region
    $region9: #{resnet_generator_forward.19} parent=5 // pred_check
      _
    $region10: #{resnet_generator_forward.19} parent=5 // pred_check_branch
      %221 = sbr.rel (%p218) target = $region12
    $region11: #{resnet_generator_forward.19} parent=5 // pred_region
      %s222 = ssub.s32 %s12, 1
      // Predicated region
      $region13: #{resnet_generator_forward.19} parent=11 // pred_check
        %p223 = pneg %p96
      $region14: #{resnet_generator_forward.19} parent=11 // pred_check_branch
        %225 = sbr.rel (%p223) target = $region16
      $region15: #{resnet_generator_forward.19} parent=11 // pred_region
        %s226 = smul.u32 32, %s26
        %p227 = scmp.lt.s32.totalorder %s226, 31
        %s228 = scalar_select %p227, %s226, 31
        %p229 = scmp.lt.s32.totalorder %s24, 0
        %s230 = scalar_select %p229, %s24, 0
        %s231 = sadd.s32 %s230, %s228
        %s232 = smul.addr %s231, 4
        %s233 = scalar_lea.vmem %s1, %s232
        %s234 = smul.u32 32, %s26
      $region16: #{resnet_generator_forward.19} parent=11 // pred_fallthru
        _
      // Predicated region
      $region17: #{resnet_generator_forward.19} parent=11 // pred_check
        %p235 = pneg %p122
      $region18: #{resnet_generator_forward.19} parent=11 // pred_check_branch
        %237 = sbr.rel (%p235) target = $region20
      $region19: #{resnet_generator_forward.19} parent=11 // pred_region
        %p238 = scmp.lt.s32.totalorder %s24, 0
        %s239 = scalar_select %p238, %s24, 0
        %s240 = scalar_lea.vmem %s2, %s239
      $region20: #{resnet_generator_forward.19} parent=11 // pred_fallthru
        _
    $region12: #{resnet_generator_forward.19} parent=5 // pred_fallthru
      _
    %p241 = scmp.lt.s32.totalorder %s12, 2
    // Predicated region
    $region21: #{resnet_generator_forward.19} parent=5 // pred_check
      %p242 = pneg %p241
    $region22: #{resnet_generator_forward.19} parent=5 // pred_check_branch
      %244 = sbr.rel (%p242) target = $region24
    $region23: #{resnet_generator_forward.19} parent=5 // pred_region
      // Predicated region
      $region25: #{resnet_generator_forward.19} parent=23 // pred_check
        %p245 = pneg %p62
      $region26: #{resnet_generator_forward.19} parent=23 // pred_check_branch
        %247 = sbr.rel (%p245) target = $region28
      $region27: #{resnet_generator_forward.19} parent=23 // pred_region
        %s248 = smul.u32 32, %s21
        %s249 = smul.u32 2, %s22
        %p250 = scmp.lt.s32.totalorder %s19, 1
        %s251 = scalar_select %p250, %s19, 1
        %p252 = scmp.lt.s32.totalorder %s248, 31
        %s253 = scalar_select %p252, %s248, 31
        %p254 = scmp.lt.s32.totalorder %s249, 1
        %s255 = scalar_select %p254, %s249, 1
        %s256 = smul.addr %s253, 2
        %s257 = sadd.s32 %s255, %s256
        %s258 = smul.addr %s251, 64
        %s259 = sadd.s32 %s257, %s258
        %s260 = smul.addr %s259, 4
        %s261 = scalar_lea.vmem %s0, %s260
        %s262 = smul.u32 32, %s21
        %s263 = smul.u32 2, %s22
      $region28: #{resnet_generator_forward.19} parent=23 // pred_fallthru
        _
    $region24: #{resnet_generator_forward.19} parent=5 // pred_fallthru
      _
    %p264 = scmp.le.s32.totalorder 1, %s12
    %p265 = scmp.lt.s32.totalorder %s12, 3
    %p266 = pnand %p264, %p265
    %p267 = pneg %p266
    // Predicated region
    $region29: #{resnet_generator_forward.19} parent=5 // pred_check
      _
    $region30: #{resnet_generator_forward.19} parent=5 // pred_check_branch
      %269 = sbr.rel (%p266) target = $region32
    $region31: #{resnet_generator_forward.19} parent=5 // pred_region
      %s270 = ssub.s32 %s12, 1
      %s271 = smul.u32 32, %s25
      %s272 = smul.u32 2, %s26
      %p273 = scmp.lt.s32.totalorder %s23, 1
      %s274 = scalar_select %p273, %s23, 1
      %p275 = scmp.lt.s32.totalorder %s271, 31
      %s276 = scalar_select %p275, %s271, 31
      %p277 = scmp.lt.s32.totalorder %s272, 1
      %s278 = scalar_select %p277, %s272, 1
      %s279 = smul.addr %s276, 2
      %s280 = sadd.s32 %s278, %s279
      %s281 = smul.addr %s274, 64
      %s282 = sadd.s32 %s280, %s281
      %s283 = smul.addr %s282, 4
      %s284 = scalar_lea.vmem %s0, %s283
      %p285 = pneg %p68
      %p286 = pneg %p65
      %s287 = smul.u32 32, %s26
      %p288 = scmp.lt.s32.totalorder %s287, 31
      %s289 = scalar_select %p288, %s287, 31
      %p290 = scmp.lt.s32.totalorder %s24, 0
      %s291 = scalar_select %p290, %s24, 0
      %s292 = sadd.s32 %s291, %s289
      %s293 = smul.addr %s292, 4
      %s294 = scalar_lea.vmem %s1, %s293
      %p295 = pneg %p96
      %p296 = pneg %p93
      %p297 = scmp.lt.s32.totalorder %s24, 0
      %s298 = scalar_select %p297, %s24, 0
      %s299 = scalar_lea.vmem %s2, %s298
      %p300 = pneg %p122
      %p301 = pneg %p119
      %p302 = pneg %p152
      %p303 = pneg %p149
      %s304 = smul.u32 32, %s25
      %p305 = scmp.lt.s32.totalorder %s23, 1
      %s306 = scalar_select %p305, %s23, 1
      %p307 = scmp.lt.s32.totalorder %s304, 31
      %s308 = scalar_select %p307, %s304, 31
      %p309 = scmp.lt.s32.totalorder %s24, 0
      %s310 = scalar_select %p309, %s24, 0
      %s311 = sadd.s32 %s310, %s308
      %s312 = smul.addr %s306, 32
      %s313 = sadd.s32 %s311, %s312
      %s314 = smul.addr %s313, 8
      %s315 = scalar_lea.vmem %s3, %s314
      %p316 = pneg %p180
      %p317 = pneg %p177
      %p318 = scmp.lt.s32.totalorder %s23, 1
      %s319 = scalar_select %p318, %s23, 1
      %p320 = scmp.lt.s32.totalorder %s24, 0
      %s321 = scalar_select %p320, %s24, 0
      %s322 = sadd.s32 %s321, %s319
      %s323 = scalar_lea.vmem %s4, %s322
      %p324 = pneg %p208
      %p325 = pneg %p205
      %p326 = scmp.lt.s32.totalorder %s23, 1
      %s327 = scalar_select %p326, %s23, 1
      %p328 = scmp.lt.s32.totalorder %s24, 0
      %s329 = scalar_select %p328, %s24, 0
      %s330 = sadd.s32 %s329, %s327
      %s331 = scalar_lea.vmem %s5, %s330
      %s332 = smul.u32 32, %s25
      %s333 = smul.u32 2, %s26
      %p334 = scmp.lt.s32.totalorder %s23, 1
      %s335 = scalar_select %p334, %s23, 1
      %p336 = scmp.lt.s32.totalorder %s332, 31
      %s337 = scalar_select %p336, %s332, 31
      %p338 = scmp.lt.s32.totalorder %s333, 1
      %s339 = scalar_select %p338, %s333, 1
      %s340 = smul.addr %s337, 2
      %s341 = sadd.s32 %s339, %s340
      %s342 = smul.addr %s335, 64
      %s343 = sadd.s32 %s341, %s342
      %s344 = smul.addr %s343, 4
      %s345 = scalar_lea.vmem %s0, %s344
      %s346 = smul.u32 32, %s25
      %s347 = smul.u32 2, %s26
      %s348 = smul.u32 32, %s26
      %p349 = scmp.lt.s32.totalorder %s348, 31
      %s350 = scalar_select %p349, %s348, 31
      %p351 = scmp.lt.s32.totalorder %s24, 0
      %s352 = scalar_select %p351, %s24, 0
      %s353 = sadd.s32 %s352, %s350
      %s354 = smul.addr %s353, 4
      %s355 = scalar_lea.vmem %s1, %s354
      %s356 = smul.u32 32, %s26
      %p357 = scmp.lt.s32.totalorder %s24, 0
      %s358 = scalar_select %p357, %s24, 0
      %s359 = scalar_lea.vmem %s2, %s358
      %s360 = smul.u32 32, %s25
      %p361 = scmp.lt.s32.totalorder %s23, 1
      %s362 = scalar_select %p361, %s23, 1
      %p363 = scmp.lt.s32.totalorder %s360, 31
      %s364 = scalar_select %p363, %s360, 31
      %p365 = scmp.lt.s32.totalorder %s24, 0
      %s366 = scalar_select %p365, %s24, 0
      %s367 = sadd.s32 %s366, %s364
      %s368 = smul.addr %s362, 32
      %s369 = sadd.s32 %s367, %s368
      %s370 = smul.addr %s369, 8
      %s371 = scalar_lea.vmem %s3, %s370
      %s372 = smul.u32 32, %s25
      %p373 = scmp.lt.s32.totalorder %s23, 1
      %s374 = scalar_select %p373, %s23, 1
      %p375 = scmp.lt.s32.totalorder %s24, 0
      %s376 = scalar_select %p375, %s24, 0
      %s377 = sadd.s32 %s376, %s374
      %s378 = scalar_lea.vmem %s4, %s377
      %p379 = scmp.lt.s32.totalorder %s23, 1
      %s380 = scalar_select %p379, %s23, 1
      %p381 = scmp.lt.s32.totalorder %s24, 0
      %s382 = scalar_select %p381, %s24, 0
      %s383 = sadd.s32 %s382, %s380
      %s384 = scalar_lea.vmem %s5, %s383
      %p385 = scmp.eq.s32.totalorder %s26, 0
      // Predicated region
      $region33: #{resnet_generator_forward.19} parent=31 // pred_check
        %p386 = pneg %p385
      $region34: #{resnet_generator_forward.19} parent=31 // pred_check_branch
        %388 = sbr.rel (%p386) target = $region36
      $region35: #{resnet_generator_forward.19} parent=31 // pred_region
        %389 = vst [vmem:[#allocation2] sm:$0xff] 0.0
        %390 = vst [vmem:[#allocation2 + $0x8] sm:$0xff] 0.0
        %391 = vst [vmem:[#allocation2 + $0x10] sm:$0xff] 0.0
        %392 = vst [vmem:[#allocation2 + $0x18] sm:$0xff] 0.0
        %393 = vst [vmem:[#allocation2 + $0x20] sm:$0xff] 0.0
        %394 = vst [vmem:[#allocation2 + $0x28] sm:$0xff] 0.0
        %395 = vst [vmem:[#allocation2 + $0x30] sm:$0xff] 0.0
        %396 = vst [vmem:[#allocation2 + $0x38] sm:$0xff] 0.0
        %397 = vst [vmem:[#allocation2 + $0x40] sm:$0xff] 0.0
        %398 = vst [vmem:[#allocation2 + $0x48] sm:$0xff] 0.0
        %399 = vst [vmem:[#allocation2 + $0x50] sm:$0xff] 0.0
        %400 = vst [vmem:[#allocation2 + $0x58] sm:$0xff] 0.0
        %401 = vst [vmem:[#allocation2 + $0x60] sm:$0xff] 0.0
        %402 = vst [vmem:[#allocation2 + $0x68] sm:$0xff] 0.0
        %403 = vst [vmem:[#allocation2 + $0x70] sm:$0xff] 0.0
        %404 = vst [vmem:[#allocation2 + $0x78] sm:$0xff] 0.0
        %405 = vst [vmem:[#allocation2 + $0x80] sm:$0xff] 0.0
        %406 = vst [vmem:[#allocation2 + $0x88] sm:$0xff] 0.0
        %407 = vst [vmem:[#allocation2 + $0x90] sm:$0xff] 0.0
        %408 = vst [vmem:[#allocation2 + $0x98] sm:$0xff] 0.0
        %409 = vst [vmem:[#allocation2 + $0xa0] sm:$0xff] 0.0
        %410 = vst [vmem:[#allocation2 + $0xa8] sm:$0xff] 0.0
        %411 = vst [vmem:[#allocation2 + $0xb0] sm:$0xff] 0.0
        %412 = vst [vmem:[#allocation2 + $0xb8] sm:$0xff] 0.0
        %413 = vst [vmem:[#allocation2 + $0xc0] sm:$0xff] 0.0
        %414 = vst [vmem:[#allocation2 + $0xc8] sm:$0xff] 0.0
        %415 = vst [vmem:[#allocation2 + $0xd0] sm:$0xff] 0.0
        %416 = vst [vmem:[#allocation2 + $0xd8] sm:$0xff] 0.0
        %417 = vst [vmem:[#allocation2 + $0xe0] sm:$0xff] 0.0
        %418 = vst [vmem:[#allocation2 + $0xe8] sm:$0xff] 0.0
        %419 = vst [vmem:[#allocation2 + $0xf0] sm:$0xff] 0.0
        %420 = vst [vmem:[#allocation2 + $0xf8] sm:$0xff] 0.0
      $region36: #{resnet_generator_forward.19} parent=31 // pred_fallthru
        _
      %p421 = scmp.eq.s32.totalorder %s25, 0
      %p422 = pnand %p421, %p385
      %p423 = pneg %p422
      // Predicated region
      $region37: #{resnet_generator_forward.19} parent=31 // pred_check
        _
      $region38: #{resnet_generator_forward.19} parent=31 // pred_check_branch
        %425 = sbr.rel (%p422) target = $region40
      $region39: #{resnet_generator_forward.19} parent=31 // pred_region
        %426 = vst [vmem:[%s378] sm:$0x1] 0.0
        %427 = vst [vmem:[%s384] sm:$0x1] 0.0
      $region40: #{resnet_generator_forward.19} parent=31 // pred_fallthru
        _
      %v428 = vld [vmem:[#allocation2] sm:$0xff]
      %v429 = vld [vmem:[#allocation2 + $0x8] sm:$0xff]
      %v430 = vld [vmem:[#allocation2 + $0x10] sm:$0xff]
      %v431 = vld [vmem:[#allocation2 + $0x18] sm:$0xff]
      %v432 = vld [vmem:[#allocation2 + $0x20] sm:$0xff]
      %v433 = vld [vmem:[#allocation2 + $0x28] sm:$0xff]
      %v434 = vld [vmem:[#allocation2 + $0x30] sm:$0xff]
      %v435 = vld [vmem:[#allocation2 + $0x38] sm:$0xff]
      %v436 = vld [vmem:[#allocation2 + $0x40] sm:$0xff]
      %v437 = vld [vmem:[#allocation2 + $0x48] sm:$0xff]
      %v438 = vld [vmem:[#allocation2 + $0x50] sm:$0xff]
      %v439 = vld [vmem:[#allocation2 + $0x58] sm:$0xff]
      %v440 = vld [vmem:[#allocation2 + $0x60] sm:$0xff]
      %v441 = vld [vmem:[#allocation2 + $0x68] sm:$0xff]
      %v442 = vld [vmem:[#allocation2 + $0x70] sm:$0xff]
      %v443 = vld [vmem:[#allocation2 + $0x78] sm:$0xff]
      %v444 = vld [vmem:[#allocation2 + $0x80] sm:$0xff]
      %v445 = vld [vmem:[#allocation2 + $0x88] sm:$0xff]
      %v446 = vld [vmem:[#allocation2 + $0x90] sm:$0xff]
      %v447 = vld [vmem:[#allocation2 + $0x98] sm:$0xff]
      %v448 = vld [vmem:[#allocation2 + $0xa0] sm:$0xff]
      %v449 = vld [vmem:[#allocation2 + $0xa8] sm:$0xff]
      %v450 = vld [vmem:[#allocation2 + $0xb0] sm:$0xff]
      %v451 = vld [vmem:[#allocation2 + $0xb8] sm:$0xff]
      %v452 = vld [vmem:[#allocation2 + $0xc0] sm:$0xff]
      %v453 = vld [vmem:[#allocation2 + $0xc8] sm:$0xff]
      %v454 = vld [vmem:[#allocation2 + $0xd0] sm:$0xff]
      %v455 = vld [vmem:[#allocation2 + $0xd8] sm:$0xff]
      %v456 = vld [vmem:[#allocation2 + $0xe0] sm:$0xff]
      %v457 = vld [vmem:[#allocation2 + $0xe8] sm:$0xff]
      %v458 = vld [vmem:[#allocation2 + $0xf0] sm:$0xff]
      %v459 = vld [vmem:[#allocation2 + $0xf8] sm:$0xff]
      %v460 = vld [vmem:[%s345] sm:$0xff]
      %v461 = vld [vmem:[%s345 + $0x8] sm:$0xff]
      %v462 = vld [vmem:[%s345 + $0x10] sm:$0xff]
      %v463 = vld [vmem:[%s345 + $0x18] sm:$0xff]
      %v464 = vld [vmem:[%s345 + $0x20] sm:$0xff]
      %v465 = vld [vmem:[%s345 + $0x28] sm:$0xff]
      %v466 = vld [vmem:[%s345 + $0x30] sm:$0xff]
      %v467 = vld [vmem:[%s345 + $0x38] sm:$0xff]
      %v468 = vld [vmem:[%s345 + $0x40] sm:$0xff]
      %v469 = vld [vmem:[%s345 + $0x48] sm:$0xff]
      %v470 = vld [vmem:[%s345 + $0x50] sm:$0xff]
      %v471 = vld [vmem:[%s345 + $0x58] sm:$0xff]
      %v472 = vld [vmem:[%s345 + $0x60] sm:$0xff]
      %v473 = vld [vmem:[%s345 + $0x68] sm:$0xff]
      %v474 = vld [vmem:[%s345 + $0x70] sm:$0xff]
      %v475 = vld [vmem:[%s345 + $0x78] sm:$0xff]
      %v476 = vld [vmem:[%s345 + $0x80] sm:$0xff]
      %v477 = vld [vmem:[%s345 + $0x88] sm:$0xff]
      %v478 = vld [vmem:[%s345 + $0x90] sm:$0xff]
      %v479 = vld [vmem:[%s345 + $0x98] sm:$0xff]
      %v480 = vld [vmem:[%s345 + $0xa0] sm:$0xff]
      %v481 = vld [vmem:[%s345 + $0xa8] sm:$0xff]
      %v482 = vld [vmem:[%s345 + $0xb0] sm:$0xff]
      %v483 = vld [vmem:[%s345 + $0xb8] sm:$0xff]
      %v484 = vld [vmem:[%s345 + $0xc0] sm:$0xff]
      %v485 = vld [vmem:[%s345 + $0xc8] sm:$0xff]
      %v486 = vld [vmem:[%s345 + $0xd0] sm:$0xff]
      %v487 = vld [vmem:[%s345 + $0xd8] sm:$0xff]
      %v488 = vld [vmem:[%s345 + $0xe0] sm:$0xff]
      %v489 = vld [vmem:[%s345 + $0xe8] sm:$0xff]
      %v490 = vld [vmem:[%s345 + $0xf0] sm:$0xff]
      %v491 = vld [vmem:[%s345 + $0xf8] sm:$0xff]
      %v492 = vld [vmem:[%s355] sm:$0xf]
      %v493 = vld [vmem:[%s355 + $0x4] sm:$0xf]
      %v494 = vld [vmem:[%s355 + $0x8] sm:$0xf]
      %v495 = vld [vmem:[%s355 + $0xc] sm:$0xf]
      %v496 = vld [vmem:[%s355 + $0x10] sm:$0xf]
      %v497 = vld [vmem:[%s355 + $0x14] sm:$0xf]
      %v498 = vld [vmem:[%s355 + $0x18] sm:$0xf]
      %v499 = vld [vmem:[%s355 + $0x1c] sm:$0xf]
      %v500 = vld [vmem:[%s355 + $0x20] sm:$0xf]
      %v501 = vld [vmem:[%s355 + $0x24] sm:$0xf]
      %v502 = vld [vmem:[%s355 + $0x28] sm:$0xf]
      %v503 = vld [vmem:[%s355 + $0x2c] sm:$0xf]
      %v504 = vld [vmem:[%s355 + $0x30] sm:$0xf]
      %v505 = vld [vmem:[%s355 + $0x34] sm:$0xf]
      %v506 = vld [vmem:[%s355 + $0x38] sm:$0xf]
      %v507 = vld [vmem:[%s355 + $0x3c] sm:$0xf]
      %v508 = vld [vmem:[%s355 + $0x40] sm:$0xf]
      %v509 = vld [vmem:[%s355 + $0x44] sm:$0xf]
      %v510 = vld [vmem:[%s355 + $0x48] sm:$0xf]
      %v511 = vld [vmem:[%s355 + $0x4c] sm:$0xf]
      %v512 = vld [vmem:[%s355 + $0x50] sm:$0xf]
      %v513 = vld [vmem:[%s355 + $0x54] sm:$0xf]
      %v514 = vld [vmem:[%s355 + $0x58] sm:$0xf]
      %v515 = vld [vmem:[%s355 + $0x5c] sm:$0xf]
      %v516 = vld [vmem:[%s355 + $0x60] sm:$0xf]
      %v517 = vld [vmem:[%s355 + $0x64] sm:$0xf]
      %v518 = vld [vmem:[%s355 + $0x68] sm:$0xf]
      %v519 = vld [vmem:[%s355 + $0x6c] sm:$0xf]
      %v520 = vld [vmem:[%s355 + $0x70] sm:$0xf]
      %v521 = vld [vmem:[%s355 + $0x74] sm:$0xf]
      %v522 = vld [vmem:[%s355 + $0x78] sm:$0xf]
      %v523 = vld [vmem:[%s355 + $0x7c] sm:$0xf]
      %v556 = vunpack.c.l.b16 %v460
      %v557 = vunpack.c.h.b16 %v460
      %v558 = vunpack.c.l.b16 %v461
      %v559 = vunpack.c.h.b16 %v461
      %v560 = vunpack.c.l.b16 %v462
      %v561 = vunpack.c.h.b16 %v462
      %v562 = vunpack.c.l.b16 %v463
      %v563 = vunpack.c.h.b16 %v463
      %v564 = vunpack.c.l.b16 %v464
      %v565 = vunpack.c.h.b16 %v464
      %v566 = vunpack.c.l.b16 %v465
      %v567 = vunpack.c.h.b16 %v465
      %v568 = vunpack.c.l.b16 %v466
      %v569 = vunpack.c.h.b16 %v466
      %v570 = vunpack.c.l.b16 %v467
      %v571 = vunpack.c.h.b16 %v467
      %v572 = vunpack.c.l.b16 %v468
      %v573 = vunpack.c.h.b16 %v468
      %v574 = vunpack.c.l.b16 %v469
      %v575 = vunpack.c.h.b16 %v469
      %v576 = vunpack.c.l.b16 %v470
      %v577 = vunpack.c.h.b16 %v470
      %v578 = vunpack.c.l.b16 %v471
      %v579 = vunpack.c.h.b16 %v471
      %v580 = vunpack.c.l.b16 %v472
      %v581 = vunpack.c.h.b16 %v472
      %v582 = vunpack.c.l.b16 %v473
      %v583 = vunpack.c.h.b16 %v473
      %v584 = vunpack.c.l.b16 %v474
      %v585 = vunpack.c.h.b16 %v474
      %v586 = vunpack.c.l.b16 %v475
      %v587 = vunpack.c.h.b16 %v475
      %v588 = vunpack.c.l.b16 %v476
      %v589 = vunpack.c.h.b16 %v476
      %v590 = vunpack.c.l.b16 %v477
      %v591 = vunpack.c.h.b16 %v477
      %v592 = vunpack.c.l.b16 %v478
      %v593 = vunpack.c.h.b16 %v478
      %v594 = vunpack.c.l.b16 %v479
      %v595 = vunpack.c.h.b16 %v479
      %v596 = vunpack.c.l.b16 %v480
      %v597 = vunpack.c.h.b16 %v480
      %v598 = vunpack.c.l.b16 %v481
      %v599 = vunpack.c.h.b16 %v481
      %v600 = vunpack.c.l.b16 %v482
      %v601 = vunpack.c.h.b16 %v482
      %v602 = vunpack.c.l.b16 %v483
      %v603 = vunpack.c.h.b16 %v483
      %v604 = vunpack.c.l.b16 %v484
      %v605 = vunpack.c.h.b16 %v484
      %v606 = vunpack.c.l.b16 %v485
      %v607 = vunpack.c.h.b16 %v485
      %v608 = vunpack.c.l.b16 %v486
      %v609 = vunpack.c.h.b16 %v486
      %v610 = vunpack.c.l.b16 %v487
      %v611 = vunpack.c.h.b16 %v487
      %v612 = vunpack.c.l.b16 %v488
      %v613 = vunpack.c.h.b16 %v488
      %v614 = vunpack.c.l.b16 %v489
      %v615 = vunpack.c.h.b16 %v489
      %v616 = vunpack.c.l.b16 %v490
      %v617 = vunpack.c.h.b16 %v490
      %v618 = vunpack.c.l.b16 %v491
      %v619 = vunpack.c.h.b16 %v491
      %v620 = vpack.c.b16 %v558, %v556
      %v621 = vpack.c.b16 %v559, %v557
      %v622 = vpack.c.b16 %v562, %v560
      %v623 = vpack.c.b16 %v563, %v561
      %v624 = vpack.c.b16 %v566, %v564
      %v625 = vpack.c.b16 %v567, %v565
      %v626 = vpack.c.b16 %v570, %v568
      %v627 = vpack.c.b16 %v571, %v569
      %v628 = vpack.c.b16 %v574, %v572
      %v629 = vpack.c.b16 %v575, %v573
      %v630 = vpack.c.b16 %v578, %v576
      %v631 = vpack.c.b16 %v579, %v577
      %v632 = vpack.c.b16 %v582, %v580
      %v633 = vpack.c.b16 %v583, %v581
      %v634 = vpack.c.b16 %v586, %v584
      %v635 = vpack.c.b16 %v587, %v585
      %v636 = vpack.c.b16 %v590, %v588
      %v637 = vpack.c.b16 %v591, %v589
      %v638 = vpack.c.b16 %v594, %v592
      %v639 = vpack.c.b16 %v595, %v593
      %v640 = vpack.c.b16 %v598, %v596
      %v641 = vpack.c.b16 %v599, %v597
      %v642 = vpack.c.b16 %v602, %v600
      %v643 = vpack.c.b16 %v603, %v601
      %v644 = vpack.c.b16 %v606, %v604
      %v645 = vpack.c.b16 %v607, %v605
      %v646 = vpack.c.b16 %v610, %v608
      %v647 = vpack.c.b16 %v611, %v609
      %v648 = vpack.c.b16 %v614, %v612
      %v649 = vpack.c.b16 %v615, %v613
      %v650 = vpack.c.b16 %v618, %v616
      %v651 = vpack.c.b16 %v619, %v617
      %v716 = vunpack.c.l.b16 %v492
      %v717 = vunpack.c.l.b16 %v493
      %v718 = vunpack.c.l.b16 %v494
      %v719 = vunpack.c.l.b16 %v495
      %v720 = vunpack.c.l.b16 %v496
      %v721 = vunpack.c.l.b16 %v497
      %v722 = vunpack.c.l.b16 %v498
      %v723 = vunpack.c.l.b16 %v499
      %v724 = vunpack.c.l.b16 %v500
      %v725 = vunpack.c.l.b16 %v501
      %v726 = vunpack.c.l.b16 %v502
      %v727 = vunpack.c.l.b16 %v503
      %v728 = vunpack.c.l.b16 %v504
      %v729 = vunpack.c.l.b16 %v505
      %v730 = vunpack.c.l.b16 %v506
      %v731 = vunpack.c.l.b16 %v507
      %v732 = vunpack.c.l.b16 %v508
      %v733 = vunpack.c.l.b16 %v509
      %v734 = vunpack.c.l.b16 %v510
      %v735 = vunpack.c.l.b16 %v511
      %v736 = vunpack.c.l.b16 %v512
      %v737 = vunpack.c.l.b16 %v513
      %v738 = vunpack.c.l.b16 %v514
      %v739 = vunpack.c.l.b16 %v515
      %v740 = vunpack.c.l.b16 %v516
      %v741 = vunpack.c.l.b16 %v517
      %v742 = vunpack.c.l.b16 %v518
      %v743 = vunpack.c.l.b16 %v519
      %v744 = vunpack.c.l.b16 %v520
      %v745 = vunpack.c.l.b16 %v521
      %v746 = vunpack.c.l.b16 %v522
      %v747 = vunpack.c.l.b16 %v523
      %v748 = vpack.c.b16 %v717, %v716
      %v749 = vpack.c.b16 %v719, %v718
      %v750 = vpack.c.b16 %v721, %v720
      %v751 = vpack.c.b16 %v723, %v722
      %v752 = vpack.c.b16 %v725, %v724
      %v753 = vpack.c.b16 %v727, %v726
      %v754 = vpack.c.b16 %v729, %v728
      %v755 = vpack.c.b16 %v731, %v730
      %v756 = vpack.c.b16 %v733, %v732
      %v757 = vpack.c.b16 %v735, %v734
      %v758 = vpack.c.b16 %v737, %v736
      %v759 = vpack.c.b16 %v739, %v738
      %v760 = vpack.c.b16 %v741, %v740
      %v761 = vpack.c.b16 %v743, %v742
      %v762 = vpack.c.b16 %v745, %v744
      %v763 = vpack.c.b16 %v747, %v746
      %780 = vmatpush.bf16.msra.mxu0 %v755
      %781 = vmatpush.bf16.msra.mxu0 %v754
      %782 = vmatpush.bf16.msra.mxu0 %v753
      %783 = vmatpush.bf16.msra.mxu0 %v752
      %784 = vmatpush.bf16.msra.mxu0 %v751
      %785 = vmatpush.bf16.msra.mxu0 %v750
      %786 = vmatpush.bf16.msra.mxu0 %v749
      %787 = vmatpush.bf16.msra.mxu0 %v748
      %788 = vmatmul.bf16.gmra.mxu0 %v620
      %v789 = vpop.f32.mrf.mxu0
      %v790 = vadd.f32 0.0, %v789
      %v791 = vpop.f32.mrf.mxu0
      %v792 = vadd.f32 0.0, %v791
      %793 = vmatmul.bf16.gmra.mxu0 %v622
      %v794 = vpop.f32.mrf.mxu0
      %v795 = vadd.f32 0.0, %v794
      %v796 = vpop.f32.mrf.mxu0
      %v797 = vadd.f32 0.0, %v796
      %798 = vmatmul.bf16.gmra.mxu0 %v624
      %v799 = vpop.f32.mrf.mxu0
      %v800 = vadd.f32 0.0, %v799
      %v801 = vpop.f32.mrf.mxu0
      %v802 = vadd.f32 0.0, %v801
      %803 = vmatmul.bf16.gmra.mxu0 %v626
      %v804 = vpop.f32.mrf.mxu0
      %v805 = vadd.f32 0.0, %v804
      %v806 = vpop.f32.mrf.mxu0
      %v807 = vadd.f32 0.0, %v806
      %808 = vmatmul.bf16.gmra.mxu0 %v628
      %v809 = vpop.f32.mrf.mxu0
      %v810 = vadd.f32 0.0, %v809
      %v811 = vpop.f32.mrf.mxu0
      %v812 = vadd.f32 0.0, %v811
      %813 = vmatmul.bf16.gmra.mxu0 %v630
      %v814 = vpop.f32.mrf.mxu0
      %v815 = vadd.f32 0.0, %v814
      %v816 = vpop.f32.mrf.mxu0
      %v817 = vadd.f32 0.0, %v816
      %818 = vmatmul.bf16.gmra.mxu0 %v632
      %v819 = vpop.f32.mrf.mxu0
      %v820 = vadd.f32 0.0, %v819
      %v821 = vpop.f32.mrf.mxu0
      %v822 = vadd.f32 0.0, %v821
      %823 = vmatmul.bf16.gmra.mxu0 %v634
      %v824 = vpop.f32.mrf.mxu0
      %v825 = vadd.f32 0.0, %v824
      %v826 = vpop.f32.mrf.mxu0
      %v827 = vadd.f32 0.0, %v826
      %828 = vmatmul.bf16.gmra.mxu0 %v636
      %v829 = vpop.f32.mrf.mxu0
      %v830 = vadd.f32 0.0, %v829
      %v831 = vpop.f32.mrf.mxu0
      %v832 = vadd.f32 0.0, %v831
      %833 = vmatmul.bf16.gmra.mxu0 %v638
      %v834 = vpop.f32.mrf.mxu0
      %v835 = vadd.f32 0.0, %v834
      %v836 = vpop.f32.mrf.mxu0
      %v837 = vadd.f32 0.0, %v836
      %838 = vmatmul.bf16.gmra.mxu0 %v640
      %v839 = vpop.f32.mrf.mxu0
      %v840 = vadd.f32 0.0, %v839
      %v841 = vpop.f32.mrf.mxu0
      %v842 = vadd.f32 0.0, %v841
      %843 = vmatmul.bf16.gmra.mxu0 %v642
      %v844 = vpop.f32.mrf.mxu0
      %v845 = vadd.f32 0.0, %v844
      %v846 = vpop.f32.mrf.mxu0
      %v847 = vadd.f32 0.0, %v846
      %848 = vmatmul.bf16.gmra.mxu0 %v644
      %v849 = vpop.f32.mrf.mxu0
      %v850 = vadd.f32 0.0, %v849
      %v851 = vpop.f32.mrf.mxu0
      %v852 = vadd.f32 0.0, %v851
      %853 = vmatmul.bf16.gmra.mxu0 %v646
      %v854 = vpop.f32.mrf.mxu0
      %v855 = vadd.f32 0.0, %v854
      %v856 = vpop.f32.mrf.mxu0
      %v857 = vadd.f32 0.0, %v856
      %858 = vmatmul.bf16.gmra.mxu0 %v648
      %v859 = vpop.f32.mrf.mxu0
      %v860 = vadd.f32 0.0, %v859
      %v861 = vpop.f32.mrf.mxu0
      %v862 = vadd.f32 0.0, %v861
      %863 = vmatmul.bf16.gmra.mxu0 %v650
      %v864 = vpop.f32.mrf.mxu0
      %v865 = vadd.f32 0.0, %v864
      %v866 = vpop.f32.mrf.mxu0
      %v867 = vadd.f32 0.0, %v866
      %868 = vdwg.mxu0
      %869 = vmatpush.bf16.msra.mxu0 %v763
      %870 = vmatpush.bf16.msra.mxu0 %v762
      %871 = vmatpush.bf16.msra.mxu0 %v761
      %872 = vmatpush.bf16.msra.mxu0 %v760
      %873 = vmatpush.bf16.msra.mxu0 %v759
      %874 = vmatpush.bf16.msra.mxu0 %v758
      %875 = vmatpush.bf16.msra.mxu0 %v757
      %876 = vmatpush.bf16.msra.mxu0 %v756
      %877 = vmatmul.bf16.gmra.mxu0 %v621
      %v878 = vpop.f32.mrf.mxu0
      %v879 = vadd.f32 %v790, %v878
      %v880 = vpop.f32.mrf.mxu0
      %v881 = vadd.f32 %v792, %v880
      %882 = vmatmul.bf16.gmra.mxu0 %v623
      %v883 = vpop.f32.mrf.mxu0
      %v884 = vadd.f32 %v795, %v883
      %v885 = vpop.f32.mrf.mxu0
      %v886 = vadd.f32 %v797, %v885
      %887 = vmatmul.bf16.gmra.mxu0 %v625
      %v888 = vpop.f32.mrf.mxu0
      %v889 = vadd.f32 %v800, %v888
      %v890 = vpop.f32.mrf.mxu0
      %v891 = vadd.f32 %v802, %v890
      %892 = vmatmul.bf16.gmra.mxu0 %v627
      %v893 = vpop.f32.mrf.mxu0
      %v894 = vadd.f32 %v805, %v893
      %v895 = vpop.f32.mrf.mxu0
      %v896 = vadd.f32 %v807, %v895
      %897 = vmatmul.bf16.gmra.mxu0 %v629
      %v898 = vpop.f32.mrf.mxu0
      %v899 = vadd.f32 %v810, %v898
      %v900 = vpop.f32.mrf.mxu0
      %v901 = vadd.f32 %v812, %v900
      %902 = vmatmul.bf16.gmra.mxu0 %v631
      %v903 = vpop.f32.mrf.mxu0
      %v904 = vadd.f32 %v815, %v903
      %v905 = vpop.f32.mrf.mxu0
      %v906 = vadd.f32 %v817, %v905
      %907 = vmatmul.bf16.gmra.mxu0 %v633
      %v908 = vpop.f32.mrf.mxu0
      %v909 = vadd.f32 %v820, %v908
      %v910 = vpop.f32.mrf.mxu0
      %v911 = vadd.f32 %v822, %v910
      %912 = vmatmul.bf16.gmra.mxu0 %v635
      %v913 = vpop.f32.mrf.mxu0
      %v914 = vadd.f32 %v825, %v913
      %v915 = vpop.f32.mrf.mxu0
      %v916 = vadd.f32 %v827, %v915
      %917 = vmatmul.bf16.gmra.mxu0 %v637
      %v918 = vpop.f32.mrf.mxu0
      %v919 = vadd.f32 %v830, %v918
      %v920 = vpop.f32.mrf.mxu0
      %v921 = vadd.f32 %v832, %v920
      %922 = vmatmul.bf16.gmra.mxu0 %v639
      %v923 = vpop.f32.mrf.mxu0
      %v924 = vadd.f32 %v835, %v923
      %v925 = vpop.f32.mrf.mxu0
      %v926 = vadd.f32 %v837, %v925
      %927 = vmatmul.bf16.gmra.mxu0 %v641
      %v928 = vpop.f32.mrf.mxu0
      %v929 = vadd.f32 %v840, %v928
      %v930 = vpop.f32.mrf.mxu0
      %v931 = vadd.f32 %v842, %v930
      %932 = vmatmul.bf16.gmra.mxu0 %v643
      %v933 = vpop.f32.mrf.mxu0
      %v934 = vadd.f32 %v845, %v933
      %v935 = vpop.f32.mrf.mxu0
      %v936 = vadd.f32 %v847, %v935
      %937 = vmatmul.bf16.gmra.mxu0 %v645
      %v938 = vpop.f32.mrf.mxu0
      %v939 = vadd.f32 %v850, %v938
      %v940 = vpop.f32.mrf.mxu0
      %v941 = vadd.f32 %v852, %v940
      %942 = vmatmul.bf16.gmra.mxu0 %v647
      %v943 = vpop.f32.mrf.mxu0
      %v944 = vadd.f32 %v855, %v943
      %v945 = vpop.f32.mrf.mxu0
      %v946 = vadd.f32 %v857, %v945
      %947 = vmatmul.bf16.gmra.mxu0 %v649
      %v948 = vpop.f32.mrf.mxu0
      %v949 = vadd.f32 %v860, %v948
      %v950 = vpop.f32.mrf.mxu0
      %v951 = vadd.f32 %v862, %v950
      %952 = vmatmul.bf16.gmra.mxu0 %v651
      %v953 = vpop.f32.mrf.mxu0
      %v954 = vadd.f32 %v865, %v953
      %v955 = vpop.f32.mrf.mxu0
      %v956 = vadd.f32 %v867, %v955
      %957 = vdwg.mxu0
      %v958 = vadd.f32 %v428, %v879
      %v959 = vadd.f32 %v429, %v881
      %v960 = vadd.f32 %v430, %v884
      %v961 = vadd.f32 %v431, %v886
      %v962 = vadd.f32 %v432, %v889
      %v963 = vadd.f32 %v433, %v891
      %v964 = vadd.f32 %v434, %v894
      %v965 = vadd.f32 %v435, %v896
      %v966 = vadd.f32 %v436, %v899
      %v967 = vadd.f32 %v437, %v901
      %v968 = vadd.f32 %v438, %v904
      %v969 = vadd.f32 %v439, %v906
      %v970 = vadd.f32 %v440, %v909
      %v971 = vadd.f32 %v441, %v911
      %v972 = vadd.f32 %v442, %v914
      %v973 = vadd.f32 %v443, %v916
      %v974 = vadd.f32 %v444, %v919
      %v975 = vadd.f32 %v445, %v921
      %v976 = vadd.f32 %v446, %v924
      %v977 = vadd.f32 %v447, %v926
      %v978 = vadd.f32 %v448, %v929
      %v979 = vadd.f32 %v449, %v931
      %v980 = vadd.f32 %v450, %v934
      %v981 = vadd.f32 %v451, %v936
      %v982 = vadd.f32 %v452, %v939
      %v983 = vadd.f32 %v453, %v941
      %v984 = vadd.f32 %v454, %v944
      %v985 = vadd.f32 %v455, %v946
      %v986 = vadd.f32 %v456, %v949
      %v987 = vadd.f32 %v457, %v951
      %v988 = vadd.f32 %v458, %v954
      %v989 = vadd.f32 %v459, %v956
      %990 = vst [vmem:[#allocation2] sm:$0xff] %v958
      %991 = vst [vmem:[#allocation2 + $0x8] sm:$0xff] %v959
      %992 = vst [vmem:[#allocation2 + $0x10] sm:$0xff] %v960
      %993 = vst [vmem:[#allocation2 + $0x18] sm:$0xff] %v961
      %994 = vst [vmem:[#allocation2 + $0x20] sm:$0xff] %v962
      %995 = vst [vmem:[#allocation2 + $0x28] sm:$0xff] %v963
      %996 = vst [vmem:[#allocation2 + $0x30] sm:$0xff] %v964
      %997 = vst [vmem:[#allocation2 + $0x38] sm:$0xff] %v965
      %998 = vst [vmem:[#allocation2 + $0x40] sm:$0xff] %v966
      %999 = vst [vmem:[#allocation2 + $0x48] sm:$0xff] %v967
      %1000 = vst [vmem:[#allocation2 + $0x50] sm:$0xff] %v968
      %1001 = vst [vmem:[#allocation2 + $0x58] sm:$0xff] %v969
      %1002 = vst [vmem:[#allocation2 + $0x60] sm:$0xff] %v970
      %1003 = vst [vmem:[#allocation2 + $0x68] sm:$0xff] %v971
      %1004 = vst [vmem:[#allocation2 + $0x70] sm:$0xff] %v972
      %1005 = vst [vmem:[#allocation2 + $0x78] sm:$0xff] %v973
      %1006 = vst [vmem:[#allocation2 + $0x80] sm:$0xff] %v974
      %1007 = vst [vmem:[#allocation2 + $0x88] sm:$0xff] %v975
      %1008 = vst [vmem:[#allocation2 + $0x90] sm:$0xff] %v976
      %1009 = vst [vmem:[#allocation2 + $0x98] sm:$0xff] %v977
      %1010 = vst [vmem:[#allocation2 + $0xa0] sm:$0xff] %v978
      %1011 = vst [vmem:[#allocation2 + $0xa8] sm:$0xff] %v979
      %1012 = vst [vmem:[#allocation2 + $0xb0] sm:$0xff] %v980
      %1013 = vst [vmem:[#allocation2 + $0xb8] sm:$0xff] %v981
      %1014 = vst [vmem:[#allocation2 + $0xc0] sm:$0xff] %v982
      %1015 = vst [vmem:[#allocation2 + $0xc8] sm:$0xff] %v983
      %1016 = vst [vmem:[#allocation2 + $0xd0] sm:$0xff] %v984
      %1017 = vst [vmem:[#allocation2 + $0xd8] sm:$0xff] %v985
      %1018 = vst [vmem:[#allocation2 + $0xe0] sm:$0xff] %v986
      %1019 = vst [vmem:[#allocation2 + $0xe8] sm:$0xff] %v987
      %1020 = vst [vmem:[#allocation2 + $0xf0] sm:$0xff] %v988
      %1021 = vst [vmem:[#allocation2 + $0xf8] sm:$0xff] %v989
      // Predicated region
      $region41: #{resnet_generator_forward.19} parent=31 // pred_check
        %p1022 = pneg %p385
      $region42: #{resnet_generator_forward.19} parent=31 // pred_check_branch
        %1024 = sbr.rel (%p1022) target = $region44
      $region43: #{resnet_generator_forward.19} parent=31 // pred_region
        %v1025 = vld [vmem:[#allocation2] sm:$0xff]
        %v1026 = vld [vmem:[#allocation2 + $0x8] sm:$0xff]
        %v1027 = vld [vmem:[#allocation2 + $0x10] sm:$0xff]
        %v1028 = vld [vmem:[#allocation2 + $0x18] sm:$0xff]
        %v1029 = vld [vmem:[#allocation2 + $0x20] sm:$0xff]
        %v1030 = vld [vmem:[#allocation2 + $0x28] sm:$0xff]
        %v1031 = vld [vmem:[#allocation2 + $0x30] sm:$0xff]
        %v1032 = vld [vmem:[#allocation2 + $0x38] sm:$0xff]
        %v1033 = vld [vmem:[#allocation2 + $0x40] sm:$0xff]
        %v1034 = vld [vmem:[#allocation2 + $0x48] sm:$0xff]
        %v1035 = vld [vmem:[#allocation2 + $0x50] sm:$0xff]
        %v1036 = vld [vmem:[#allocation2 + $0x58] sm:$0xff]
        %v1037 = vld [vmem:[#allocation2 + $0x60] sm:$0xff]
        %v1038 = vld [vmem:[#allocation2 + $0x68] sm:$0xff]
        %v1039 = vld [vmem:[#allocation2 + $0x70] sm:$0xff]
        %v1040 = vld [vmem:[#allocation2 + $0x78] sm:$0xff]
        %v1041 = vld [vmem:[#allocation2 + $0x80] sm:$0xff]
        %v1042 = vld [vmem:[#allocation2 + $0x88] sm:$0xff]
        %v1043 = vld [vmem:[#allocation2 + $0x90] sm:$0xff]
        %v1044 = vld [vmem:[#allocation2 + $0x98] sm:$0xff]
        %v1045 = vld [vmem:[#allocation2 + $0xa0] sm:$0xff]
        %v1046 = vld [vmem:[#allocation2 + $0xa8] sm:$0xff]
        %v1047 = vld [vmem:[#allocation2 + $0xb0] sm:$0xff]
        %v1048 = vld [vmem:[#allocation2 + $0xb8] sm:$0xff]
        %v1049 = vld [vmem:[#allocation2 + $0xc0] sm:$0xff]
        %v1050 = vld [vmem:[#allocation2 + $0xc8] sm:$0xff]
        %v1051 = vld [vmem:[#allocation2 + $0xd0] sm:$0xff]
        %v1052 = vld [vmem:[#allocation2 + $0xd8] sm:$0xff]
        %v1053 = vld [vmem:[#allocation2 + $0xe0] sm:$0xff]
        %v1054 = vld [vmem:[#allocation2 + $0xe8] sm:$0xff]
        %v1055 = vld [vmem:[#allocation2 + $0xf0] sm:$0xff]
        %v1056 = vld [vmem:[#allocation2 + $0xf8] sm:$0xff]
        %v1057 = vld [vmem:[%s359] sm:$0x1]
        %v1059 = vperm.slane %v1057, 0
        %v1061 = vadd.f32 %v1025, %v1059
        %v1062 = vadd.f32 %v1026, %v1059
        %v1063 = vadd.f32 %v1027, %v1059
        %v1064 = vadd.f32 %v1028, %v1059
        %v1065 = vadd.f32 %v1029, %v1059
        %v1066 = vadd.f32 %v1030, %v1059
        %v1067 = vadd.f32 %v1031, %v1059
        %v1068 = vadd.f32 %v1032, %v1059
        %v1069 = vadd.f32 %v1033, %v1059
        %v1070 = vadd.f32 %v1034, %v1059
        %v1071 = vadd.f32 %v1035, %v1059
        %v1072 = vadd.f32 %v1036, %v1059
        %v1073 = vadd.f32 %v1037, %v1059
        %v1074 = vadd.f32 %v1038, %v1059
        %v1075 = vadd.f32 %v1039, %v1059
        %v1076 = vadd.f32 %v1040, %v1059
        %v1077 = vadd.f32 %v1041, %v1059
        %v1078 = vadd.f32 %v1042, %v1059
        %v1079 = vadd.f32 %v1043, %v1059
        %v1080 = vadd.f32 %v1044, %v1059
        %v1081 = vadd.f32 %v1045, %v1059
        %v1082 = vadd.f32 %v1046, %v1059
        %v1083 = vadd.f32 %v1047, %v1059
        %v1084 = vadd.f32 %v1048, %v1059
        %v1085 = vadd.f32 %v1049, %v1059
        %v1086 = vadd.f32 %v1050, %v1059
        %v1087 = vadd.f32 %v1051, %v1059
        %v1088 = vadd.f32 %v1052, %v1059
        %v1089 = vadd.f32 %v1053, %v1059
        %v1090 = vadd.f32 %v1054, %v1059
        %v1091 = vadd.f32 %v1055, %v1059
        %v1092 = vadd.f32 %v1056, %v1059
        %v1093 = vld [vmem:[%s378] sm:$0x1]
        %v1094 = vadd.f32 %v1061, %v1062
        %v1095 = vadd.f32 %v1094, %v1063
        %v1096 = vadd.f32 %v1095, %v1064
        %v1097 = vadd.f32 %v1096, %v1065
        %v1098 = vadd.f32 %v1097, %v1066
        %v1099 = vadd.f32 %v1098, %v1067
        %v1100 = vadd.f32 %v1099, %v1068
        %v1101 = vadd.f32 %v1100, %v1069
        %v1102 = vadd.f32 %v1101, %v1070
        %v1103 = vadd.f32 %v1102, %v1071
        %v1104 = vadd.f32 %v1103, %v1072
        %v1105 = vadd.f32 %v1104, %v1073
        %v1106 = vadd.f32 %v1105, %v1074
        %v1107 = vadd.f32 %v1106, %v1075
        %v1108 = vadd.f32 %v1107, %v1076
        %v1109 = vadd.f32 %v1108, %v1077
        %v1110 = vadd.f32 %v1109, %v1078
        %v1111 = vadd.f32 %v1110, %v1079
        %v1112 = vadd.f32 %v1111, %v1080
        %v1113 = vadd.f32 %v1112, %v1081
        %v1114 = vadd.f32 %v1113, %v1082
        %v1115 = vadd.f32 %v1114, %v1083
        %v1116 = vadd.f32 %v1115, %v1084
        %v1117 = vadd.f32 %v1116, %v1085
        %v1118 = vadd.f32 %v1117, %v1086
        %v1119 = vadd.f32 %v1118, %v1087
        %v1120 = vadd.f32 %v1119, %v1088
        %v1121 = vadd.f32 %v1120, %v1089
        %v1122 = vadd.f32 %v1121, %v1090
        %v1123 = vadd.f32 %v1122, %v1091
        %v1124 = vadd.f32 %v1123, %v1092
        %v1125 = vrot.slane %v1124, 4
        %v1126 = vadd.f32 %v1124, %v1125
        %v1127 = vrot.slane %v1126, 2
        %v1128 = vadd.f32 %v1126, %v1127
        %v1129 = vrot.slane %v1128, 1
        %v1130 = vadd.f32 %v1128, %v1129
        %v1131 = vadd.f32 %v1093, %v1130
        %1132 = vst [vmem:[%s378] sm:$0x1] %v1131
        %v1133 = vld [vmem:[%s384] sm:$0x1]
        %v1134 = vmul.f32 %v1061, %v1061
        %v1135 = vmul.f32 %v1062, %v1062
        %v1136 = vmul.f32 %v1063, %v1063
        %v1137 = vmul.f32 %v1064, %v1064
        %v1138 = vmul.f32 %v1065, %v1065
        %v1139 = vmul.f32 %v1066, %v1066
        %v1140 = vmul.f32 %v1067, %v1067
        %v1141 = vmul.f32 %v1068, %v1068
        %v1142 = vmul.f32 %v1069, %v1069
        %v1143 = vmul.f32 %v1070, %v1070
        %v1144 = vmul.f32 %v1071, %v1071
        %v1145 = vmul.f32 %v1072, %v1072
        %v1146 = vmul.f32 %v1073, %v1073
        %v1147 = vmul.f32 %v1074, %v1074
        %v1148 = vmul.f32 %v1075, %v1075
        %v1149 = vmul.f32 %v1076, %v1076
        %v1150 = vmul.f32 %v1077, %v1077
        %v1151 = vmul.f32 %v1078, %v1078
        %v1152 = vmul.f32 %v1079, %v1079
        %v1153 = vmul.f32 %v1080, %v1080
        %v1154 = vmul.f32 %v1081, %v1081
        %v1155 = vmul.f32 %v1082, %v1082
        %v1156 = vmul.f32 %v1083, %v1083
        %v1157 = vmul.f32 %v1084, %v1084
        %v1158 = vmul.f32 %v1085, %v1085
        %v1159 = vmul.f32 %v1086, %v1086
        %v1160 = vmul.f32 %v1087, %v1087
        %v1161 = vmul.f32 %v1088, %v1088
        %v1162 = vmul.f32 %v1089, %v1089
        %v1163 = vmul.f32 %v1090, %v1090
        %v1164 = vmul.f32 %v1091, %v1091
        %v1165 = vmul.f32 %v1092, %v1092
        %v1166 = vadd.f32 %v1134, %v1135
        %v1167 = vadd.f32 %v1166, %v1136
        %v1168 = vadd.f32 %v1167, %v1137
        %v1169 = vadd.f32 %v1168, %v1138
        %v1170 = vadd.f32 %v1169, %v1139
        %v1171 = vadd.f32 %v1170, %v1140
        %v1172 = vadd.f32 %v1171, %v1141
        %v1173 = vadd.f32 %v1172, %v1142
        %v1174 = vadd.f32 %v1173, %v1143
        %v1175 = vadd.f32 %v1174, %v1144
        %v1176 = vadd.f32 %v1175, %v1145
        %v1177 = vadd.f32 %v1176, %v1146
        %v1178 = vadd.f32 %v1177, %v1147
        %v1179 = vadd.f32 %v1178, %v1148
        %v1180 = vadd.f32 %v1179, %v1149
        %v1181 = vadd.f32 %v1180, %v1150
        %v1182 = vadd.f32 %v1181, %v1151
        %v1183 = vadd.f32 %v1182, %v1152
        %v1184 = vadd.f32 %v1183, %v1153
        %v1185 = vadd.f32 %v1184, %v1154
        %v1186 = vadd.f32 %v1185, %v1155
        %v1187 = vadd.f32 %v1186, %v1156
        %v1188 = vadd.f32 %v1187, %v1157
        %v1189 = vadd.f32 %v1188, %v1158
        %v1190 = vadd.f32 %v1189, %v1159
        %v1191 = vadd.f32 %v1190, %v1160
        %v1192 = vadd.f32 %v1191, %v1161
        %v1193 = vadd.f32 %v1192, %v1162
        %v1194 = vadd.f32 %v1193, %v1163
        %v1195 = vadd.f32 %v1194, %v1164
        %v1196 = vadd.f32 %v1195, %v1165
        %v1197 = vrot.slane %v1196, 4
        %v1198 = vadd.f32 %v1196, %v1197
        %v1199 = vrot.slane %v1198, 2
        %v1200 = vadd.f32 %v1198, %v1199
        %v1201 = vrot.slane %v1200, 1
        %v1202 = vadd.f32 %v1200, %v1201
        %v1203 = vadd.f32 %v1133, %v1202
        %1204 = vst [vmem:[%s384] sm:$0x1] %v1203
        %1205 = vst [vmem:[%s371] sm:$0xff] %v1061
        %1206 = vst [vmem:[%s371 + $0x8] sm:$0xff] %v1062
        %1207 = vst [vmem:[%s371 + $0x10] sm:$0xff] %v1063
        %1208 = vst [vmem:[%s371 + $0x18] sm:$0xff] %v1064
        %1209 = vst [vmem:[%s371 + $0x20] sm:$0xff] %v1065
        %1210 = vst [vmem:[%s371 + $0x28] sm:$0xff] %v1066
        %1211 = vst [vmem:[%s371 + $0x30] sm:$0xff] %v1067
        %1212 = vst [vmem:[%s371 + $0x38] sm:$0xff] %v1068
        %1213 = vst [vmem:[%s371 + $0x40] sm:$0xff] %v1069
        %1214 = vst [vmem:[%s371 + $0x48] sm:$0xff] %v1070
        %1215 = vst [vmem:[%s371 + $0x50] sm:$0xff] %v1071
        %1216 = vst [vmem:[%s371 + $0x58] sm:$0xff] %v1072
        %1217 = vst [vmem:[%s371 + $0x60] sm:$0xff] %v1073
        %1218 = vst [vmem:[%s371 + $0x68] sm:$0xff] %v1074
        %1219 = vst [vmem:[%s371 + $0x70] sm:$0xff] %v1075
        %1220 = vst [vmem:[%s371 + $0x78] sm:$0xff] %v1076
        %1221 = vst [vmem:[%s371 + $0x80] sm:$0xff] %v1077
        %1222 = vst [vmem:[%s371 + $0x88] sm:$0xff] %v1078
        %1223 = vst [vmem:[%s371 + $0x90] sm:$0xff] %v1079
        %1224 = vst [vmem:[%s371 + $0x98] sm:$0xff] %v1080
        %1225 = vst [vmem:[%s371 + $0xa0] sm:$0xff] %v1081
        %1226 = vst [vmem:[%s371 + $0xa8] sm:$0xff] %v1082
        %1227 = vst [vmem:[%s371 + $0xb0] sm:$0xff] %v1083
        %1228 = vst [vmem:[%s371 + $0xb8] sm:$0xff] %v1084
        %1229 = vst [vmem:[%s371 + $0xc0] sm:$0xff] %v1085
        %1230 = vst [vmem:[%s371 + $0xc8] sm:$0xff] %v1086
        %1231 = vst [vmem:[%s371 + $0xd0] sm:$0xff] %v1087
        %1232 = vst [vmem:[%s371 + $0xd8] sm:$0xff] %v1088
        %1233 = vst [vmem:[%s371 + $0xe0] sm:$0xff] %v1089
        %1234 = vst [vmem:[%s371 + $0xe8] sm:$0xff] %v1090
        %1235 = vst [vmem:[%s371 + $0xf0] sm:$0xff] %v1091
        %1236 = vst [vmem:[%s371 + $0xf8] sm:$0xff] %v1092
      $region44: #{resnet_generator_forward.19} parent=31 // pred_fallthru
        _
      %s1237 = smul.u32 32, %s25
      %p1238 = scmp.lt.s32.totalorder %s23, 1
      %s1239 = scalar_select %p1238, %s23, 1
      %p1240 = scmp.lt.s32.totalorder %s1237, 31
      %s1241 = scalar_select %p1240, %s1237, 31
      %p1242 = scmp.lt.s32.totalorder %s24, 0
      %s1243 = scalar_select %p1242, %s24, 0
      %s1244 = sadd.s32 %s1243, %s1241
      %s1245 = smul.addr %s1239, 32
      %s1246 = sadd.s32 %s1244, %s1245
      %s1247 = smul.addr %s1246, 8
      %s1248 = scalar_lea.vmem %s3, %s1247
      %p1249 = scmp.lt.s32.totalorder %s23, 1
      %s1250 = scalar_select %p1249, %s23, 1
      %p1251 = scmp.lt.s32.totalorder %s24, 0
      %s1252 = scalar_select %p1251, %s24, 0
      %s1253 = sadd.s32 %s1252, %s1250
      %s1254 = scalar_lea.vmem %s4, %s1253
      %p1255 = scmp.lt.s32.totalorder %s23, 1
      %s1256 = scalar_select %p1255, %s23, 1
      %p1257 = scmp.lt.s32.totalorder %s24, 0
      %s1258 = scalar_select %p1257, %s24, 0
      %s1259 = sadd.s32 %s1258, %s1256
      %s1260 = scalar_lea.vmem %s5, %s1259
      // Predicated region
      $region45: #{resnet_generator_forward.19} parent=31 // pred_check
        %p1261 = pneg %p149
      $region46: #{resnet_generator_forward.19} parent=31 // pred_check_branch
        %1263 = sbr.rel (%p1261) target = $region48
      $region47: #{resnet_generator_forward.19} parent=31 // pred_region
        %s1264 = smul.u32 32, %s25
      $region48: #{resnet_generator_forward.19} parent=31 // pred_fallthru
        _
      // Predicated region
      $region49: #{resnet_generator_forward.19} parent=31 // pred_check
        %p1265 = pneg %p177
      $region50: #{resnet_generator_forward.19} parent=31 // pred_check_branch
        %1267 = sbr.rel (%p1265) target = $region52
      $region51: #{resnet_generator_forward.19} parent=31 // pred_region
        _
      $region52: #{resnet_generator_forward.19} parent=31 // pred_fallthru
        _
      // Predicated region
      $region53: #{resnet_generator_forward.19} parent=31 // pred_check
        %p1268 = pneg %p205
      $region54: #{resnet_generator_forward.19} parent=31 // pred_check_branch
        %1270 = sbr.rel (%p1268) target = $region56
      $region55: #{resnet_generator_forward.19} parent=31 // pred_region
        _
      $region56: #{resnet_generator_forward.19} parent=31 // pred_fallthru
        _
    $region32: #{resnet_generator_forward.19} parent=5 // pred_fallthru
      _
    %p1271 = scmp.le.s32.totalorder 2, %s12
    // Predicated region
    $region57: #{resnet_generator_forward.19} parent=5 // pred_check
      %p1272 = pneg %p1271
    $region58: #{resnet_generator_forward.19} parent=5 // pred_check_branch
      %1274 = sbr.rel (%p1272) target = $region60
    $region59: #{resnet_generator_forward.19} parent=5 // pred_region
      %s1275 = ssub.s32 %s12, 2
      // Predicated region
      $region61: #{resnet_generator_forward.19} parent=59 // pred_check
        %p1276 = pneg %p155
      $region62: #{resnet_generator_forward.19} parent=59 // pred_check_branch
        %1278 = sbr.rel (%p1276) target = $region64
      $region63: #{resnet_generator_forward.19} parent=59 // pred_region
        %s1279 = smul.u32 32, %s29
        %p1280 = scmp.lt.s32.totalorder %s27, 1
        %s1281 = scalar_select %p1280, %s27, 1
        %p1282 = scmp.lt.s32.totalorder %s1279, 31
        %s1283 = scalar_select %p1282, %s1279, 31
        %p1284 = scmp.lt.s32.totalorder %s28, 0
        %s1285 = scalar_select %p1284, %s28, 0
        %s1286 = sadd.s32 %s1285, %s1283
        %s1287 = smul.addr %s1281, 32
        %s1288 = sadd.s32 %s1286, %s1287
        %s1289 = smul.addr %s1288, 8
        %s1290 = scalar_lea.vmem %s3, %s1289
      $region64: #{resnet_generator_forward.19} parent=59 // pred_fallthru
        _
      // Predicated region
      $region65: #{resnet_generator_forward.19} parent=59 // pred_check
        %p1291 = pneg %p183
      $region66: #{resnet_generator_forward.19} parent=59 // pred_check_branch
        %1293 = sbr.rel (%p1291) target = $region68
      $region67: #{resnet_generator_forward.19} parent=59 // pred_region
        %p1294 = scmp.lt.s32.totalorder %s27, 1
        %s1295 = scalar_select %p1294, %s27, 1
        %p1296 = scmp.lt.s32.totalorder %s28, 0
        %s1297 = scalar_select %p1296, %s28, 0
        %s1298 = sadd.s32 %s1297, %s1295
        %s1299 = scalar_lea.vmem %s4, %s1298
      $region68: #{resnet_generator_forward.19} parent=59 // pred_fallthru
        _
      // Predicated region
      $region69: #{resnet_generator_forward.19} parent=59 // pred_check
        %p1300 = pneg %p211
      $region70: #{resnet_generator_forward.19} parent=59 // pred_check_branch
        %1302 = sbr.rel (%p1300) target = $region72
      $region71: #{resnet_generator_forward.19} parent=59 // pred_region
        %p1303 = scmp.lt.s32.totalorder %s27, 1
        %s1304 = scalar_select %p1303, %s27, 1
        %p1305 = scmp.lt.s32.totalorder %s28, 0
        %s1306 = scalar_select %p1305, %s28, 0
        %s1307 = sadd.s32 %s1306, %s1304
        %s1308 = scalar_lea.vmem %s5, %s1307
      $region72: #{resnet_generator_forward.19} parent=59 // pred_fallthru
        _
    $region60: #{resnet_generator_forward.19} parent=5 // pred_fallthru
      _
  $region6: #{resnet_generator_forward.19} parent=0 // loop_footer
    %s16 = sadd.s32 1, %s12
  $region7: #{resnet_generator_forward.19} parent=0 // loop_footer_branch
    %11 = sbr.rel target = $region3
  $region8: #{resnet_generator_forward.19} parent=0 // loop_exit
    _

// kernel: resnet_generator_forward.22
$region0: #{resnet_generator_forward.22}
  #allocation0 [shape = 'u32[]', space=smem, size = 0x4, offset = 0x4, fixed_abs, tag = 'smem constant byte address 0x4 - core index']
  #allocation1 [shape = 'u32[72,128]{1,0:T(1,128)}', space=vmem, size = 0x9000, scoped, tag = 'internal scratch']
  %s0 = inlined_call_operand.vmem [shape: f32[2,64,128], index: 0, kind: input, shape index: {}]
  %s1 = inlined_call_operand.vmem [shape: f32[2,1,128], index: 1, kind: input, shape index: {}]
  %s2 = inlined_call_operand.vmem [shape: f32[2,1,128], index: 2, kind: input, shape index: {}]
  %s3 = inlined_call_operand.vmem [shape: f32[2,64,128], index: 3, kind: output, shape index: {}]
  %s4 = sld [smem:[#allocation0]]
  $region45: #{resnet_generator_forward.22} parent=0
    _
  %s6 = ssub.s32 1, %s4
  %s7 = scalar_select 0, %s6, %s4
  loop: start=0, step=1, limit=4
  $region2: #{resnet_generator_forward.22} parent=0 // loop_pre_header
    _
  $region3: #{resnet_generator_forward.22} parent=0 // loop_header
    %s9 = sphi 0, %s13
    %p10 = scmp.ge.s32.totalorder %s9, 4
    %s16 = sphi 0, %s35
    %s17 = sphi 0, %s31
    %s18 = sphi 0, %s27
    %s19 = sphi 0, %s16
    %s20 = sphi 0, %s17
    %s21 = sphi 0, %s18
    %s22 = sphi 0, %s19
    %s23 = sphi 0, %s20
    %s24 = sphi 0, %s21
    %s42 = sphi 0, %s44
    %s45 = sphi 0, %s42
    %s46 = sphi 0, %s45
    %s62 = sphi 0, %s46
    %s70 = sphi 0, %s72
    %s73 = sphi 0, %s70
    %s74 = sphi 0, %s73
    %s90 = sphi 0, %s74
    %s98 = sphi 0, %s100
    %s101 = sphi 0, %s98
    %s102 = sphi 0, %s101
    %s118 = sphi 0, %s102
    %s128 = sphi 0, %s130
    %s131 = sphi 0, %s128
    %s132 = sphi 0, %s131
    %s148 = sphi 0, %s132
  $region4: #{resnet_generator_forward.22} parent=0 // loop_header_branch
    %12 = sbr.rel (%p10) target = $region8
  $region5: #{resnet_generator_forward.22} parent=0 // loop_body
    %s14 = ssub.s32 %s9, 1
    %s15 = ssub.s32 %s9, 2
    %s25 = sadd.s32 1, %s18
    %p26 = scmp.ge.s32.totalorder %s25, 1
    %s27 = scalar_select %p26, 0, %s25
    %s28 = sadd.s32 1, %s17
    %s29 = scalar_select %p26, %s28, %s17
    %p30 = scmp.ge.s32.totalorder %s29, 1
    %s31 = scalar_select %p30, 0, %s29
    %s32 = sadd.s32 1, %s16
    %s33 = scalar_select %p30, %s32, %s16
    %p34 = scmp.ge.s32.totalorder %s33, 2
    %s35 = scalar_select %p34, 0, %s33
    %s36 = ssub.s32 %s16, %s35
    %s37 = ssub.s32 %s17, %s31
    %s38 = sor.u32 %s36, %s37
    %s39 = ssub.s32 %s18, %s27
    %s40 = sor.u32 %s38, %s39
    %p41 = scmp.eq.s32.totalorder %s40, 0
    %s43 = sadd.s32 %s42, 1
    %s44 = scalar_select %p41, %s42, %s43
    %p47 = pneg %p41
    %p48 = scmp.eq.s32.totalorder %s9, 1
    %p49 = por %p47, %p48
    %p50 = scmp.ne.s32.totalorder %s42, %s45
    %p51 = scmp.eq.s32.totalorder %s9, 0
    %p52 = por %p50, %p51
    %p53 = scmp.ne.s32.totalorder %s42, %s45
    %p54 = scmp.eq.s32.totalorder %s14, 1
    %p55 = por %p53, %p54
    %p56 = scmp.ne.s32.totalorder %s45, %s46
    %p57 = scmp.eq.s32.totalorder %s14, 0
    %p58 = por %p56, %p57
    %p59 = scmp.ne.s32.totalorder %s45, %s46
    %p60 = scmp.eq.s32.totalorder %s15, 1
    %p61 = por %p59, %p60
    %p63 = scmp.ne.s32.totalorder %s46, %s62
    %p64 = scmp.eq.s32.totalorder %s15, 0
    %p65 = por %p63, %p64
    %s66 = ssub.s32 %s16, %s35
    %s67 = ssub.s32 %s18, %s27
    %s68 = sor.u32 %s66, %s67
    %p69 = scmp.eq.s32.totalorder %s68, 0
    %s71 = sadd.s32 %s70, 1
    %s72 = scalar_select %p69, %s70, %s71
    %p75 = pneg %p69
    %p76 = scmp.eq.s32.totalorder %s9, 1
    %p77 = por %p75, %p76
    %p78 = scmp.ne.s32.totalorder %s70, %s73
    %p79 = scmp.eq.s32.totalorder %s9, 0
    %p80 = por %p78, %p79
    %p81 = scmp.ne.s32.totalorder %s70, %s73
    %p82 = scmp.eq.s32.totalorder %s14, 1
    %p83 = por %p81, %p82
    %p84 = scmp.ne.s32.totalorder %s73, %s74
    %p85 = scmp.eq.s32.totalorder %s14, 0
    %p86 = por %p84, %p85
    %p87 = scmp.ne.s32.totalorder %s73, %s74
    %p88 = scmp.eq.s32.totalorder %s15, 1
    %p89 = por %p87, %p88
    %p91 = scmp.ne.s32.totalorder %s74, %s90
    %p92 = scmp.eq.s32.totalorder %s15, 0
    %p93 = por %p91, %p92
    %s94 = ssub.s32 %s16, %s35
    %s95 = ssub.s32 %s18, %s27
    %s96 = sor.u32 %s94, %s95
    %p97 = scmp.eq.s32.totalorder %s96, 0
    %s99 = sadd.s32 %s98, 1
    %s100 = scalar_select %p97, %s98, %s99
    %p103 = pneg %p97
    %p104 = scmp.eq.s32.totalorder %s9, 1
    %p105 = por %p103, %p104
    %p106 = scmp.ne.s32.totalorder %s98, %s101
    %p107 = scmp.eq.s32.totalorder %s9, 0
    %p108 = por %p106, %p107
    %p109 = scmp.ne.s32.totalorder %s98, %s101
    %p110 = scmp.eq.s32.totalorder %s14, 1
    %p111 = por %p109, %p110
    %p112 = scmp.ne.s32.totalorder %s101, %s102
    %p113 = scmp.eq.s32.totalorder %s14, 0
    %p114 = por %p112, %p113
    %p115 = scmp.ne.s32.totalorder %s101, %s102
    %p116 = scmp.eq.s32.totalorder %s15, 1
    %p117 = por %p115, %p116
    %p119 = scmp.ne.s32.totalorder %s102, %s118
    %p120 = scmp.eq.s32.totalorder %s15, 0
    %p121 = por %p119, %p120
    %s122 = ssub.s32 %s16, %s35
    %s123 = ssub.s32 %s17, %s31
    %s124 = sor.u32 %s122, %s123
    %s125 = ssub.s32 %s18, %s27
    %s126 = sor.u32 %s124, %s125
    %p127 = scmp.eq.s32.totalorder %s126, 0
    %s129 = sadd.s32 %s128, 1
    %s130 = scalar_select %p127, %s128, %s129
    %p133 = pneg %p127
    %p134 = scmp.eq.s32.totalorder %s9, 1
    %p135 = por %p133, %p134
    %p136 = scmp.ne.s32.totalorder %s128, %s131
    %p137 = scmp.eq.s32.totalorder %s9, 0
    %p138 = por %p136, %p137
    %p139 = scmp.ne.s32.totalorder %s128, %s131
    %p140 = scmp.eq.s32.totalorder %s14, 1
    %p141 = por %p139, %p140
    %p142 = scmp.ne.s32.totalorder %s131, %s132
    %p143 = scmp.eq.s32.totalorder %s14, 0
    %p144 = por %p142, %p143
    %p145 = scmp.ne.s32.totalorder %s131, %s132
    %p146 = scmp.eq.s32.totalorder %s15, 1
    %p147 = por %p145, %p146
    %p149 = scmp.ne.s32.totalorder %s132, %s148
    %p150 = scmp.eq.s32.totalorder %s15, 0
    %p151 = por %p149, %p150
    %p152 = scmp.le.s32.totalorder 1, %s9
    %p153 = scmp.lt.s32.totalorder %s9, 3
    %p154 = pnand %p152, %p153
    %p155 = pneg %p154
    // Predicated region
    $region9: #{resnet_generator_forward.22} parent=5 // pred_check
      _
    $region10: #{resnet_generator_forward.22} parent=5 // pred_check_branch
      %157 = sbr.rel (%p154) target = $region12
    $region11: #{resnet_generator_forward.22} parent=5 // pred_region
      %s158 = ssub.s32 %s9, 1
    $region12: #{resnet_generator_forward.22} parent=5 // pred_fallthru
      _
    %p159 = scmp.lt.s32.totalorder %s9, 2
    // Predicated region
    $region13: #{resnet_generator_forward.22} parent=5 // pred_check
      %p160 = pneg %p159
    $region14: #{resnet_generator_forward.22} parent=5 // pred_check_branch
      %162 = sbr.rel (%p160) target = $region16
    $region15: #{resnet_generator_forward.22} parent=5 // pred_region
      // Predicated region
      $region17: #{resnet_generator_forward.22} parent=15 // pred_check
        %p163 = pneg %p52
      $region18: #{resnet_generator_forward.22} parent=15 // pred_check_branch
        %165 = sbr.rel (%p163) target = $region20
      $region19: #{resnet_generator_forward.22} parent=15 // pred_region
        %s166 = smul.u32 8, %s17
        %p167 = scmp.lt.s32.totalorder %s16, 1
        %s168 = scalar_select %p167, %s16, 1
        %p169 = scmp.lt.s32.totalorder %s166, 7
        %s170 = scalar_select %p169, %s166, 7
        %p171 = scmp.lt.s32.totalorder %s18, 0
        %s172 = scalar_select %p171, %s18, 0
        %s173 = sadd.s32 %s172, %s170
        %s174 = smul.addr %s168, 8
        %s175 = sadd.s32 %s173, %s174
        %s176 = smul.addr %s175, 8
        %s177 = scalar_lea.vmem %s0, %s176
        %s178 = smul.u32 8, %s17
      $region20: #{resnet_generator_forward.22} parent=15 // pred_fallthru
        _
      // Predicated region
      $region21: #{resnet_generator_forward.22} parent=15 // pred_check
        %p179 = pneg %p80
      $region22: #{resnet_generator_forward.22} parent=15 // pred_check_branch
        %181 = sbr.rel (%p179) target = $region24
      $region23: #{resnet_generator_forward.22} parent=15 // pred_region
        %p182 = scmp.lt.s32.totalorder %s16, 1
        %s183 = scalar_select %p182, %s16, 1
        %p184 = scmp.lt.s32.totalorder %s18, 0
        %s185 = scalar_select %p184, %s18, 0
        %s186 = sadd.s32 %s185, %s183
        %s187 = scalar_lea.vmem %s1, %s186
      $region24: #{resnet_generator_forward.22} parent=15 // pred_fallthru
        _
      // Predicated region
      $region25: #{resnet_generator_forward.22} parent=15 // pred_check
        %p188 = pneg %p108
      $region26: #{resnet_generator_forward.22} parent=15 // pred_check_branch
        %190 = sbr.rel (%p188) target = $region28
      $region27: #{resnet_generator_forward.22} parent=15 // pred_region
        %p191 = scmp.lt.s32.totalorder %s16, 1
        %s192 = scalar_select %p191, %s16, 1
        %p193 = scmp.lt.s32.totalorder %s18, 0
        %s194 = scalar_select %p193, %s18, 0
        %s195 = sadd.s32 %s194, %s192
        %s196 = scalar_lea.vmem %s2, %s195
      $region28: #{resnet_generator_forward.22} parent=15 // pred_fallthru
        _
    $region16: #{resnet_generator_forward.22} parent=5 // pred_fallthru
      _
    %p197 = scmp.le.s32.totalorder 1, %s9
    %p198 = scmp.lt.s32.totalorder %s9, 3
    %p199 = pnand %p197, %p198
    %p200 = pneg %p199
    // Predicated region
    $region29: #{resnet_generator_forward.22} parent=5 // pred_check
      _
    $region30: #{resnet_generator_forward.22} parent=5 // pred_check_branch
      %202 = sbr.rel (%p199) target = $region32
    $region31: #{resnet_generator_forward.22} parent=5 // pred_region
      %s203 = ssub.s32 %s9, 1
      %s204 = smul.u32 8, %s20
      %p205 = scmp.lt.s32.totalorder %s19, 1
      %s206 = scalar_select %p205, %s19, 1
      %p207 = scmp.lt.s32.totalorder %s204, 7
      %s208 = scalar_select %p207, %s204, 7
      %p209 = scmp.lt.s32.totalorder %s21, 0
      %s210 = scalar_select %p209, %s21, 0
      %s211 = sadd.s32 %s210, %s208
      %s212 = smul.addr %s206, 8
      %s213 = sadd.s32 %s211, %s212
      %s214 = smul.addr %s213, 8
      %s215 = scalar_lea.vmem %s0, %s214
      %p216 = pneg %p58
      %p217 = pneg %p55
      %p218 = scmp.lt.s32.totalorder %s19, 1
      %s219 = scalar_select %p218, %s19, 1
      %p220 = scmp.lt.s32.totalorder %s21, 0
      %s221 = scalar_select %p220, %s21, 0
      %s222 = sadd.s32 %s221, %s219
      %s223 = scalar_lea.vmem %s1, %s222
      %p224 = pneg %p86
      %p225 = pneg %p83
      %p226 = scmp.lt.s32.totalorder %s19, 1
      %s227 = scalar_select %p226, %s19, 1
      %p228 = scmp.lt.s32.totalorder %s21, 0
      %s229 = scalar_select %p228, %s21, 0
      %s230 = sadd.s32 %s229, %s227
      %s231 = scalar_lea.vmem %s2, %s230
      %p232 = pneg %p114
      %p233 = pneg %p111
      %p234 = pneg %p144
      %p235 = pneg %p141
      %s236 = smul.u32 8, %s20
      %p237 = scmp.lt.s32.totalorder %s19, 1
      %s238 = scalar_select %p237, %s19, 1
      %p239 = scmp.lt.s32.totalorder %s236, 7
      %s240 = scalar_select %p239, %s236, 7
      %p241 = scmp.lt.s32.totalorder %s21, 0
      %s242 = scalar_select %p241, %s21, 0
      %s243 = sadd.s32 %s242, %s240
      %s244 = smul.addr %s238, 8
      %s245 = sadd.s32 %s243, %s244
      %s246 = smul.addr %s245, 8
      %s247 = scalar_lea.vmem %s3, %s246
      %s248 = smul.u32 8, %s20
      %p249 = scmp.lt.s32.totalorder %s19, 1
      %s250 = scalar_select %p249, %s19, 1
      %p251 = scmp.lt.s32.totalorder %s248, 7
      %s252 = scalar_select %p251, %s248, 7
      %p253 = scmp.lt.s32.totalorder %s21, 0
      %s254 = scalar_select %p253, %s21, 0
      %s255 = sadd.s32 %s254, %s252
      %s256 = smul.addr %s250, 8
      %s257 = sadd.s32 %s255, %s256
      %s258 = smul.addr %s257, 8
      %s259 = scalar_lea.vmem %s0, %s258
      %s260 = smul.u32 8, %s20
      %p261 = scmp.lt.s32.totalorder %s19, 1
      %s262 = scalar_select %p261, %s19, 1
      %p263 = scmp.lt.s32.totalorder %s21, 0
      %s264 = scalar_select %p263, %s21, 0
      %s265 = sadd.s32 %s264, %s262
      %s266 = scalar_lea.vmem %s1, %s265
      %p267 = scmp.lt.s32.totalorder %s19, 1
      %s268 = scalar_select %p267, %s19, 1
      %p269 = scmp.lt.s32.totalorder %s21, 0
      %s270 = scalar_select %p269, %s21, 0
      %s271 = sadd.s32 %s270, %s268
      %s272 = scalar_lea.vmem %s2, %s271
      %s273 = smul.u32 8, %s20
      %p274 = scmp.lt.s32.totalorder %s19, 1
      %s275 = scalar_select %p274, %s19, 1
      %p276 = scmp.lt.s32.totalorder %s273, 7
      %s277 = scalar_select %p276, %s273, 7
      %p278 = scmp.lt.s32.totalorder %s21, 0
      %s279 = scalar_select %p278, %s21, 0
      %s280 = sadd.s32 %s279, %s277
      %s281 = smul.addr %s275, 8
      %s282 = sadd.s32 %s280, %s281
      %s283 = smul.addr %s282, 8
      %s284 = scalar_lea.vmem %s3, %s283
      %s285 = smul.u32 8, %s20
      %v286 = vld [vmem:[%s266] sm:$0x1]
      %v287 = vmul.f32 %v286, 0.015625
      %v288 = vld [vmem:[%s272] sm:$0x1]
      %v289 = vmul.f32 %v288, 0.015625
      %v290 = vmul.f32 %v287, %v287
      %v291 = vsub.f32 %v289, %v290
      %v292 = vmax.f32 %v291, 0.0
      %v293 = vld [vmem:[%s259] sm:$0xff]
      %v294 = vld [vmem:[%s259 + $0x8] sm:$0xff]
      %v295 = vld [vmem:[%s259 + $0x10] sm:$0xff]
      %v296 = vld [vmem:[%s259 + $0x18] sm:$0xff]
      %v297 = vld [vmem:[%s259 + $0x20] sm:$0xff]
      %v298 = vld [vmem:[%s259 + $0x28] sm:$0xff]
      %v299 = vld [vmem:[%s259 + $0x30] sm:$0xff]
      %v300 = vld [vmem:[%s259 + $0x38] sm:$0xff]
      %v302 = vperm.slane %v287, 0
      %v304 = vsub.f32 %v293, %v302
      %v305 = vsub.f32 %v294, %v302
      %v306 = vsub.f32 %v295, %v302
      %v307 = vsub.f32 %v296, %v302
      %v308 = vsub.f32 %v297, %v302
      %v309 = vsub.f32 %v298, %v302
      %v310 = vsub.f32 %v299, %v302
      %v311 = vsub.f32 %v300, %v302
      %v312 = vadd.f32 %v292, 1e-05
      %v313 = vrsqrt.pop %v312
      %v314 = vmul.f32 %v313, %v312
      %v315 = vmul.f32 %v314, %v313
      %v316 = vmul.f32 0.5, %v315
      %v317 = vsub.f32 1.5, %v316
      %v318 = vmul.f32 %v313, %v317
      %vm319 = vweird.f32 %v312
      %vm320 = vweird.f32 %v313
      %vm321 = vmor %vm319, %vm320
      %v322 = vsel %vm321, %v313, %v318
      %v324 = vperm.slane %v322, 0
      %v326 = vmul.f32 %v304, %v324
      %v327 = vmul.f32 %v305, %v324
      %v328 = vmul.f32 %v306, %v324
      %v329 = vmul.f32 %v307, %v324
      %v330 = vmul.f32 %v308, %v324
      %v331 = vmul.f32 %v309, %v324
      %v332 = vmul.f32 %v310, %v324
      %v333 = vmul.f32 %v311, %v324
      %v334 = vmax.f32 %v326, 0.0
      %v335 = vmax.f32 %v327, 0.0
      %v336 = vmax.f32 %v328, 0.0
      %v337 = vmax.f32 %v329, 0.0
      %v338 = vmax.f32 %v330, 0.0
      %v339 = vmax.f32 %v331, 0.0
      %v340 = vmax.f32 %v332, 0.0
      %v341 = vmax.f32 %v333, 0.0
      %342 = vst [vmem:[%s284] sm:$0xff] %v334
      %343 = vst [vmem:[%s284 + $0x8] sm:$0xff] %v335
      %344 = vst [vmem:[%s284 + $0x10] sm:$0xff] %v336
      %345 = vst [vmem:[%s284 + $0x18] sm:$0xff] %v337
      %346 = vst [vmem:[%s284 + $0x20] sm:$0xff] %v338
      %347 = vst [vmem:[%s284 + $0x28] sm:$0xff] %v339
      %348 = vst [vmem:[%s284 + $0x30] sm:$0xff] %v340
      %349 = vst [vmem:[%s284 + $0x38] sm:$0xff] %v341
      %s350 = smul.u32 8, %s20
      %p351 = scmp.lt.s32.totalorder %s19, 1
      %s352 = scalar_select %p351, %s19, 1
      %p353 = scmp.lt.s32.totalorder %s350, 7
      %s354 = scalar_select %p353, %s350, 7
      %p355 = scmp.lt.s32.totalorder %s21, 0
      %s356 = scalar_select %p355, %s21, 0
      %s357 = sadd.s32 %s356, %s354
      %s358 = smul.addr %s352, 8
      %s359 = sadd.s32 %s357, %s358
      %s360 = smul.addr %s359, 8
      %s361 = scalar_lea.vmem %s3, %s360
      // Predicated region
      $region33: #{resnet_generator_forward.22} parent=31 // pred_check
        %p362 = pneg %p141
      $region34: #{resnet_generator_forward.22} parent=31 // pred_check_branch
        %364 = sbr.rel (%p362) target = $region36
      $region35: #{resnet_generator_forward.22} parent=31 // pred_region
        %s365 = smul.u32 8, %s20
      $region36: #{resnet_generator_forward.22} parent=31 // pred_fallthru
        _
    $region32: #{resnet_generator_forward.22} parent=5 // pred_fallthru
      _
    %p366 = scmp.le.s32.totalorder 2, %s9
    // Predicated region
    $region37: #{resnet_generator_forward.22} parent=5 // pred_check
      %p367 = pneg %p366
    $region38: #{resnet_generator_forward.22} parent=5 // pred_check_branch
      %369 = sbr.rel (%p367) target = $region40
    $region39: #{resnet_generator_forward.22} parent=5 // pred_region
      %s370 = ssub.s32 %s9, 2
      // Predicated region
      $region41: #{resnet_generator_forward.22} parent=39 // pred_check
        %p371 = pneg %p147
      $region42: #{resnet_generator_forward.22} parent=39 // pred_check_branch
        %373 = sbr.rel (%p371) target = $region44
      $region43: #{resnet_generator_forward.22} parent=39 // pred_region
        %s374 = smul.u32 8, %s23
        %p375 = scmp.lt.s32.totalorder %s22, 1
        %s376 = scalar_select %p375, %s22, 1
        %p377 = scmp.lt.s32.totalorder %s374, 7
        %s378 = scalar_select %p377, %s374, 7
        %p379 = scmp.lt.s32.totalorder %s24, 0
        %s380 = scalar_select %p379, %s24, 0
        %s381 = sadd.s32 %s380, %s378
        %s382 = smul.addr %s376, 8
        %s383 = sadd.s32 %s381, %s382
        %s384 = smul.addr %s383, 8
        %s385 = scalar_lea.vmem %s3, %s384
      $region44: #{resnet_generator_forward.22} parent=39 // pred_fallthru
        _
    $region40: #{resnet_generator_forward.22} parent=5 // pred_fallthru
      _
  $region6: #{resnet_generator_forward.22} parent=0 // loop_footer
    %s13 = sadd.s32 1, %s9
  $region7: #{resnet_generator_forward.22} parent=0 // loop_footer_branch
    %8 = sbr.rel target = $region3
  $region8: #{resnet_generator_forward.22} parent=0 // loop_exit
    _

// kernel: resnet_generator_forward.21
$region0: #{resnet_generator_forward.21}
  #allocation0 [shape = 'u32[]', space=smem, size = 0x4, offset = 0x4, fixed_abs, tag = 'smem constant byte address 0x4 - core index']
  #allocation1 [shape = 'u32[72,128]{1,0:T(1,128)}', space=vmem, size = 0x9000, scoped, tag = 'internal scratch']
  #allocation2 [shape = 'f32[64,128]{1,0:T(8,128)}', space=vmem, size = 0x8000, scoped, tag = 'scratch operand']
  %s0 = inlined_call_operand.vmem [shape: bf16[2,64,1152], index: 0, kind: input, shape index: {}]
  %s1 = inlined_call_operand.vmem [shape: bf16[1152,128], index: 1, kind: input, shape index: {}]
  %s2 = inlined_call_operand.vmem [shape: f32[1,128], index: 2, kind: input, shape index: {}]
  %s3 = inlined_call_operand.vmem [shape: f32[2,64,128], index: 3, kind: output, shape index: {0}]
  %s4 = inlined_call_operand.vmem [shape: f32[2,1,128], index: 4, kind: output, shape index: {1}]
  %s5 = inlined_call_operand.vmem [shape: f32[2,1,128], index: 5, kind: output, shape index: {2}]
  %6 = xla_tuple %s3, %s4, %s5
  %s7 = sld [smem:[#allocation0]]
  $region99: #{resnet_generator_forward.21} parent=0
    _
  %s9 = ssub.s32 1, %s7
  %s10 = scalar_select 0, %s9, %s7
  $region1: #{resnet_generator_forward.21} parent=0
    #allocation3 [shape = 'u8[98304]{0}', space=vmem, size = 0x18000, scoped, tag = 'input window, operand 0']
    loop: start=0, step=1, limit=8
    $region2: #{resnet_generator_forward.21} parent=1 // loop_pre_header
      _
    $region3: #{resnet_generator_forward.21} parent=1 // loop_header
      %s12 = sphi 0, %s16
      %p13 = scmp.ge.s32.totalorder %s12, 8
      %s19 = sphi 0, %s45
      %s20 = sphi 0, %s41
      %s21 = sphi 0, %s37
      %s22 = sphi 0, %s33
      %s23 = sphi 0, %s19
      %s24 = sphi 0, %s20
      %s25 = sphi 0, %s21
      %s26 = sphi 0, %s22
      %s27 = sphi 0, %s23
      %s28 = sphi 0, %s24
      %s29 = sphi 0, %s25
      %s30 = sphi 0, %s26
      %s52 = sphi 0, %s54
      %s55 = sphi 0, %s52
      %s56 = sphi 0, %s55
      %s72 = sphi 0, %s56
      %s80 = sphi 0, %s82
      %s83 = sphi 0, %s80
      %s84 = sphi 0, %s83
      %s100 = sphi 0, %s84
      %s106 = sphi 0, %s108
      %s109 = sphi 0, %s106
      %s110 = sphi 0, %s109
      %s126 = sphi 0, %s110
      %s136 = sphi 0, %s138
      %s139 = sphi 0, %s136
      %s140 = sphi 0, %s139
      %s156 = sphi 0, %s140
      %s164 = sphi 0, %s166
      %s167 = sphi 0, %s164
      %s168 = sphi 0, %s167
      %s184 = sphi 0, %s168
      %s192 = sphi 0, %s194
      %s195 = sphi 0, %s192
      %s196 = sphi 0, %s195
      %s212 = sphi 0, %s196
    $region4: #{resnet_generator_forward.21} parent=1 // loop_header_branch
      %15 = sbr.rel (%p13) target = $region8
    $region5: #{resnet_generator_forward.21} parent=1 // loop_body
      %s17 = ssub.s32 %s12, 1
      %s18 = ssub.s32 %s12, 2
      %s31 = sadd.s32 1, %s22
      %p32 = scmp.ge.s32.totalorder %s31, 3
      %s33 = scalar_select %p32, 0, %s31
      %s34 = sadd.s32 1, %s21
      %s35 = scalar_select %p32, %s34, %s21
      %p36 = scmp.ge.s32.totalorder %s35, 1
      %s37 = scalar_select %p36, 0, %s35
      %s38 = sadd.s32 1, %s20
      %s39 = scalar_select %p36, %s38, %s20
      %p40 = scmp.ge.s32.totalorder %s39, 1
      %s41 = scalar_select %p40, 0, %s39
      %s42 = sadd.s32 1, %s19
      %s43 = scalar_select %p40, %s42, %s19
      %p44 = scmp.ge.s32.totalorder %s43, 2
      %s45 = scalar_select %p44, 0, %s43
      %s46 = ssub.s32 %s19, %s45
      %s47 = ssub.s32 %s21, %s37
      %s48 = sor.u32 %s46, %s47
      %s49 = ssub.s32 %s22, %s33
      %s50 = sor.u32 %s48, %s49
      %p51 = scmp.eq.s32.totalorder %s50, 0
      %s53 = sadd.s32 %s52, 1
      %s54 = scalar_select %p51, %s52, %s53
      %p57 = pneg %p51
      %p58 = scmp.eq.s32.totalorder %s12, 5
      %p59 = por %p57, %p58
      %p60 = scmp.ne.s32.totalorder %s52, %s55
      %p61 = scmp.eq.s32.totalorder %s12, 0
      %p62 = por %p60, %p61
      %p63 = scmp.ne.s32.totalorder %s52, %s55
      %p64 = scmp.eq.s32.totalorder %s17, 5
      %p65 = por %p63, %p64
      %p66 = scmp.ne.s32.totalorder %s55, %s56
      %p67 = scmp.eq.s32.totalorder %s17, 0
      %p68 = por %p66, %p67
      %p69 = scmp.ne.s32.totalorder %s55, %s56
      %p70 = scmp.eq.s32.totalorder %s18, 5
      %p71 = por %p69, %p70
      %p73 = scmp.ne.s32.totalorder %s56, %s72
      %p74 = scmp.eq.s32.totalorder %s18, 0
      %p75 = por %p73, %p74
      %s76 = ssub.s32 %s22, %s33
      %s77 = ssub.s32 %s20, %s41
      %s78 = sor.u32 %s76, %s77
      %p79 = scmp.eq.s32.totalorder %s78, 0
      %s81 = sadd.s32 %s80, 1
      %s82 = scalar_select %p79, %s80, %s81
      %p85 = pneg %p79
      %p86 = scmp.eq.s32.totalorder %s12, 5
      %p87 = por %p85, %p86
      %p88 = scmp.ne.s32.totalorder %s80, %s83
      %p89 = scmp.eq.s32.totalorder %s12, 0
      %p90 = por %p88, %p89
      %p91 = scmp.ne.s32.totalorder %s80, %s83
      %p92 = scmp.eq.s32.totalorder %s17, 5
      %p93 = por %p91, %p92
      %p94 = scmp.ne.s32.totalorder %s83, %s84
      %p95 = scmp.eq.s32.totalorder %s17, 0
      %p96 = por %p94, %p95
      %p97 = scmp.ne.s32.totalorder %s83, %s84
      %p98 = scmp.eq.s32.totalorder %s18, 5
      %p99 = por %p97, %p98
      %p101 = scmp.ne.s32.totalorder %s84, %s100
      %p102 = scmp.eq.s32.totalorder %s18, 0
      %p103 = por %p101, %p102
      %s104 = ssub.s32 %s20, %s41
      %p105 = scmp.eq.s32.totalorder %s104, 0
      %s107 = sadd.s32 %s106, 1
      %s108 = scalar_select %p105, %s106, %s107
      %p111 = pneg %p105
      %p112 = scmp.eq.s32.totalorder %s12, 5
      %p113 = por %p111, %p112
      %p114 = scmp.ne.s32.totalorder %s106, %s109
      %p115 = scmp.eq.s32.totalorder %s12, 0
      %p116 = por %p114, %p115
      %p117 = scmp.ne.s32.totalorder %s106, %s109
      %p118 = scmp.eq.s32.totalorder %s17, 5
      %p119 = por %p117, %p118
      %p120 = scmp.ne.s32.totalorder %s109, %s110
      %p121 = scmp.eq.s32.totalorder %s17, 0
      %p122 = por %p120, %p121
      %p123 = scmp.ne.s32.totalorder %s109, %s110
      %p124 = scmp.eq.s32.totalorder %s18, 5
      %p125 = por %p123, %p124
      %p127 = scmp.ne.s32.totalorder %s110, %s126
      %p128 = scmp.eq.s32.totalorder %s18, 0
      %p129 = por %p127, %p128
      %s130 = ssub.s32 %s19, %s45
      %s131 = ssub.s32 %s21, %s37
      %s132 = sor.u32 %s130, %s131
      %s133 = ssub.s32 %s20, %s41
      %s134 = sor.u32 %s132, %s133
      %p135 = scmp.eq.s32.totalorder %s134, 0
      %s137 = sadd.s32 %s136, 1
      %s138 = scalar_select %p135, %s136, %s137
      %p141 = pneg %p135
      %p142 = scmp.eq.s32.totalorder %s12, 5
      %p143 = por %p141, %p142
      %p144 = scmp.ne.s32.totalorder %s136, %s139
      %p145 = scmp.eq.s32.totalorder %s12, 0
      %p146 = por %p144, %p145
      %p147 = scmp.ne.s32.totalorder %s136, %s139
      %p148 = scmp.eq.s32.totalorder %s17, 5
      %p149 = por %p147, %p148
      %p150 = scmp.ne.s32.totalorder %s139, %s140
      %p151 = scmp.eq.s32.totalorder %s17, 0
      %p152 = por %p150, %p151
      %p153 = scmp.ne.s32.totalorder %s139, %s140
      %p154 = scmp.eq.s32.totalorder %s18, 5
      %p155 = por %p153, %p154
      %p157 = scmp.ne.s32.totalorder %s140, %s156
      %p158 = scmp.eq.s32.totalorder %s18, 0
      %p159 = por %p157, %p158
      %s160 = ssub.s32 %s19, %s45
      %s161 = ssub.s32 %s20, %s41
      %s162 = sor.u32 %s160, %s161
      %p163 = scmp.eq.s32.totalorder %s162, 0
      %s165 = sadd.s32 %s164, 1
      %s166 = scalar_select %p163, %s164, %s165
      %p169 = pneg %p163
      %p170 = scmp.eq.s32.totalorder %s12, 5
      %p171 = por %p169, %p170
      %p172 = scmp.ne.s32.totalorder %s164, %s167
      %p173 = scmp.eq.s32.totalorder %s12, 0
      %p174 = por %p172, %p173
      %p175 = scmp.ne.s32.totalorder %s164, %s167
      %p176 = scmp.eq.s32.totalorder %s17, 5
      %p177 = por %p175, %p176
      %p178 = scmp.ne.s32.totalorder %s167, %s168
      %p179 = scmp.eq.s32.totalorder %s17, 0
      %p180 = por %p178, %p179
      %p181 = scmp.ne.s32.totalorder %s167, %s168
      %p182 = scmp.eq.s32.totalorder %s18, 5
      %p183 = por %p181, %p182
      %p185 = scmp.ne.s32.totalorder %s168, %s184
      %p186 = scmp.eq.s32.totalorder %s18, 0
      %p187 = por %p185, %p186
      %s188 = ssub.s32 %s19, %s45
      %s189 = ssub.s32 %s20, %s41
      %s190 = sor.u32 %s188, %s189
      %p191 = scmp.eq.s32.totalorder %s190, 0
      %s193 = sadd.s32 %s192, 1
      %s194 = scalar_select %p191, %s192, %s193
      %p197 = pneg %p191
      %p198 = scmp.eq.s32.totalorder %s12, 5
      %p199 = por %p197, %p198
      %p200 = scmp.ne.s32.totalorder %s192, %s195
      %p201 = scmp.eq.s32.totalorder %s12, 0
      %p202 = por %p200, %p201
      %p203 = scmp.ne.s32.totalorder %s192, %s195
      %p204 = scmp.eq.s32.totalorder %s17, 5
      %p205 = por %p203, %p204
      %p206 = scmp.ne.s32.totalorder %s195, %s196
      %p207 = scmp.eq.s32.totalorder %s17, 0
      %p208 = por %p206, %p207
      %p209 = scmp.ne.s32.totalorder %s195, %s196
      %p210 = scmp.eq.s32.totalorder %s18, 5
      %p211 = por %p209, %p210
      %p213 = scmp.ne.s32.totalorder %s196, %s212
      %p214 = scmp.eq.s32.totalorder %s18, 0
      %p215 = por %p213, %p214
      %p216 = scmp.le.s32.totalorder 1, %s12
      %p217 = scmp.lt.s32.totalorder %s12, 7
      %p218 = pnand %p216, %p217
      %p219 = pneg %p218
      // Predicated region
      $region9: #{resnet_generator_forward.21} parent=5 // pred_check
        _
      $region10: #{resnet_generator_forward.21} parent=5 // pred_check_branch
        %221 = sbr.rel (%p218) target = $region12
      $region11: #{resnet_generator_forward.21} parent=5 // pred_region
        %s222 = ssub.s32 %s12, 1
        // Predicated region
        $region13: #{resnet_generator_forward.21} parent=11 // pred_check
          %p223 = pneg %p122
        $region14: #{resnet_generator_forward.21} parent=11 // pred_check_branch
          %225 = sbr.rel (%p223) target = $region16
        $region15: #{resnet_generator_forward.21} parent=11 // pred_region
          %p226 = scmp.lt.s32.totalorder %s24, 0
          %s227 = scalar_select %p226, %s24, 0
          %s228 = scalar_lea.vmem %s2, %s227
        $region16: #{resnet_generator_forward.21} parent=11 // pred_fallthru
          _
      $region12: #{resnet_generator_forward.21} parent=5 // pred_fallthru
        _
      %p229 = scmp.lt.s32.totalorder %s12, 6
      // Predicated region
      $region17: #{resnet_generator_forward.21} parent=5 // pred_check
        %p230 = pneg %p229
      $region18: #{resnet_generator_forward.21} parent=5 // pred_check_branch
        %232 = sbr.rel (%p230) target = $region20
      $region19: #{resnet_generator_forward.21} parent=5 // pred_region
        // Predicated region
        $region21: #{resnet_generator_forward.21} parent=19 // pred_check
          %p233 = pneg %p62
        $region22: #{resnet_generator_forward.21} parent=19 // pred_check_branch
          %235 = sbr.rel (%p233) target = $region24
        $region23: #{resnet_generator_forward.21} parent=19 // pred_region
          %s236 = sand.u32 %s52, 1
          %s237 = sand.u32 %s52, 1
          %s238 = smul.addr %s237, 96
          %s239 = scalar_lea.vmem [#allocation3], %s238
          %s240 = smul.u32 8, %s21
          %s241 = smul.u32 3, %s22
          %s242 = smul.addr %s240, 9
          %s243 = sadd.s32 %s241, %s242
          %s244 = smul.addr %s19, 72
          %s245 = sadd.s32 %s243, %s244
          %s246 = smul.addr %s245, 4
          %s247 = scalar_lea.vmem %s0, %s246
          // Predicated region
          $region25: #{resnet_generator_forward.21} parent=23 // pred_check
            _
          $region26: #{resnet_generator_forward.21} parent=23 // pred_check_branch
            %249 = sbr.rel (0) target = $region28
          $region27: #{resnet_generator_forward.21} parent=23 // pred_region
            // Predicated region
            $region29: #{resnet_generator_forward.21} parent=27 // pred_check
              _
            $region30: #{resnet_generator_forward.21} parent=27 // pred_check_branch
              %251 = sbr.rel (0) target = $region32
            $region31: #{resnet_generator_forward.21} parent=27 // pred_region
              %s252 = scalar_lea.vmem %s247, 8
              %s253 = scalar_lea.vmem %s239, 8 [#allocation3]
              loop: start=0, step=1, limit=1
              $region33: #{resnet_generator_forward.21} parent=31 // loop_pre_header
                _
              $region34: #{resnet_generator_forward.21} parent=31 // loop_header
                %s255 = sphi 0, %s259
                %p256 = scmp.ge.s32.totalorder %s255, 1
                %s260 = sphi %s247, %s247
                %s261 = sphi %s239, %s239
              $region35: #{resnet_generator_forward.21} parent=31 // loop_header_branch
                %258 = sbr.rel (%p256) target = $region39
              $region36: #{resnet_generator_forward.21} parent=31 // loop_body
                %v262 = vld [vmem:[%s260] sm:$0xff]
                %263 = vst [vmem:[%s261] sm:$0xff] %v262
                %v264 = vld [vmem:[%s260 + $0x24] sm:$0xff]
                %265 = vst [vmem:[%s261 + $0xc] sm:$0xff] %v264
                %v266 = vld [vmem:[%s260 + $0x48] sm:$0xff]
                %267 = vst [vmem:[%s261 + $0x18] sm:$0xff] %v266
                %v268 = vld [vmem:[%s260 + $0x6c] sm:$0xff]
                %269 = vst [vmem:[%s261 + $0x24] sm:$0xff] %v268
                %v270 = vld [vmem:[%s260 + $0x90] sm:$0xff]
                %271 = vst [vmem:[%s261 + $0x30] sm:$0xff] %v270
                %v272 = vld [vmem:[%s260 + $0xb4] sm:$0xff]
                %273 = vst [vmem:[%s261 + $0x3c] sm:$0xff] %v272
                %v274 = vld [vmem:[%s260 + $0xd8] sm:$0xff]
                %275 = vst [vmem:[%s261 + $0x48] sm:$0xff] %v274
                %v276 = vld [vmem:[%s260 + $0xfc] sm:$0xff]
                %277 = vst [vmem:[%s261 + $0x54] sm:$0xff] %v276
              $region37: #{resnet_generator_forward.21} parent=31 // loop_footer
                %s259 = sadd.s32 1, %s255
              $region38: #{resnet_generator_forward.21} parent=31 // loop_footer_branch
                %254 = sbr.rel target = $region34
              $region39: #{resnet_generator_forward.21} parent=31 // loop_exit
                _
              %s279 = ssub.s32 16, 1
              loop: start=0, step=1, limit=1
              $region40: #{resnet_generator_forward.21} parent=31 // loop_pre_header
                _
              $region41: #{resnet_generator_forward.21} parent=31 // loop_header
                %s281 = sphi 0, %s285
                %p282 = scmp.ge.s32.totalorder %s281, 1
                %s286 = sphi %s252, %s252
                %s287 = sphi %s253, %s253
              $region42: #{resnet_generator_forward.21} parent=31 // loop_header_branch
                %284 = sbr.rel (%p282) target = $region46
              $region43: #{resnet_generator_forward.21} parent=31 // loop_body
                %v288 = vld [vmem:[%s286] sm:%s279]
                %289 = vst [vmem:[%s287] sm:%s279] %v288
                %v290 = vld [vmem:[%s286 + $0x24] sm:%s279]
                %291 = vst [vmem:[%s287 + $0xc] sm:%s279] %v290
                %v292 = vld [vmem:[%s286 + $0x48] sm:%s279]
                %293 = vst [vmem:[%s287 + $0x18] sm:%s279] %v292
                %v294 = vld [vmem:[%s286 + $0x6c] sm:%s279]
                %295 = vst [vmem:[%s287 + $0x24] sm:%s279] %v294
                %v296 = vld [vmem:[%s286 + $0x90] sm:%s279]
                %297 = vst [vmem:[%s287 + $0x30] sm:%s279] %v296
                %v298 = vld [vmem:[%s286 + $0xb4] sm:%s279]
                %299 = vst [vmem:[%s287 + $0x3c] sm:%s279] %v298
                %v300 = vld [vmem:[%s286 + $0xd8] sm:%s279]
                %301 = vst [vmem:[%s287 + $0x48] sm:%s279] %v300
                %v302 = vld [vmem:[%s286 + $0xfc] sm:%s279]
                %303 = vst [vmem:[%s287 + $0x54] sm:%s279] %v302
              $region44: #{resnet_generator_forward.21} parent=31 // loop_footer
                %s285 = sadd.s32 1, %s281
              $region45: #{resnet_generator_forward.21} parent=31 // loop_footer_branch
                %280 = sbr.rel target = $region41
              $region46: #{resnet_generator_forward.21} parent=31 // loop_exit
                _
            $region32: #{resnet_generator_forward.21} parent=27 // pred_fallthru
              _
          $region28: #{resnet_generator_forward.21} parent=23 // pred_fallthru
            _
          %304 = vnop
        $region24: #{resnet_generator_forward.21} parent=19 // pred_fallthru
          _
        // Predicated region
        $region47: #{resnet_generator_forward.21} parent=19 // pred_check
          %p305 = pneg %p90
        $region48: #{resnet_generator_forward.21} parent=19 // pred_check_branch
          %307 = sbr.rel (%p305) target = $region50
        $region49: #{resnet_generator_forward.21} parent=19 // pred_region
          %s308 = smul.u32 48, %s22
          %p309 = scmp.lt.s32.totalorder %s308, 143
          %s310 = scalar_select %p309, %s308, 143
          %p311 = scmp.lt.s32.totalorder %s20, 0
          %s312 = scalar_select %p311, %s20, 0
          %s313 = sadd.s32 %s312, %s310
          %s314 = smul.addr %s313, 4
          %s315 = scalar_lea.vmem %s1, %s314
          %s316 = smul.u32 48, %s22
        $region50: #{resnet_generator_forward.21} parent=19 // pred_fallthru
          _
      $region20: #{resnet_generator_forward.21} parent=5 // pred_fallthru
        _
      %p317 = scmp.le.s32.totalorder 1, %s12
      %p318 = scmp.lt.s32.totalorder %s12, 7
      %p319 = pnand %p317, %p318
      %p320 = pneg %p319
      // Predicated region
      $region51: #{resnet_generator_forward.21} parent=5 // pred_check
        _
      $region52: #{resnet_generator_forward.21} parent=5 // pred_check_branch
        %322 = sbr.rel (%p319) target = $region54
      $region53: #{resnet_generator_forward.21} parent=5 // pred_region
        %s323 = ssub.s32 %s12, 1
        %s324 = sand.u32 %s55, 1
        %s325 = sand.u32 %s55, 1
        %s326 = smul.addr %s325, 96
        %s327 = scalar_lea.vmem [#allocation3], %s326
        // Predicated region
        $region55: #{resnet_generator_forward.21} parent=53 // pred_check
          %p328 = pneg %p68
        $region56: #{resnet_generator_forward.21} parent=53 // pred_check_branch
          %330 = sbr.rel (%p328) target = $region58
        $region57: #{resnet_generator_forward.21} parent=53 // pred_region
          _
        $region58: #{resnet_generator_forward.21} parent=53 // pred_fallthru
          _
        %s331 = sand.u32 %s55, 1
        %s332 = sand.u32 %s55, 1
        %s333 = smul.addr %s332, 96
        %s334 = scalar_lea.vmem [#allocation3], %s333
        %p335 = pneg %p68
        %p336 = pneg %p65
        %s337 = smul.u32 48, %s26
        %p338 = scmp.lt.s32.totalorder %s337, 143
        %s339 = scalar_select %p338, %s337, 143
        %p340 = scmp.lt.s32.totalorder %s24, 0
        %s341 = scalar_select %p340, %s24, 0
        %s342 = sadd.s32 %s341, %s339
        %s343 = smul.addr %s342, 4
        %s344 = scalar_lea.vmem %s1, %s343
        %p345 = pneg %p96
        %p346 = pneg %p93
        %p347 = scmp.lt.s32.totalorder %s24, 0
        %s348 = scalar_select %p347, %s24, 0
        %s349 = scalar_lea.vmem %s2, %s348
        %p350 = pneg %p122
        %p351 = pneg %p119
        %p352 = pneg %p152
        %p353 = pneg %p149
        %s354 = smul.u32 8, %s25
        %p355 = scmp.lt.s32.totalorder %s23, 1
        %s356 = scalar_select %p355, %s23, 1
        %p357 = scmp.lt.s32.totalorder %s354, 7
        %s358 = scalar_select %p357, %s354, 7
        %p359 = scmp.lt.s32.totalorder %s24, 0
        %s360 = scalar_select %p359, %s24, 0
        %s361 = sadd.s32 %s360, %s358
        %s362 = smul.addr %s356, 8
        %s363 = sadd.s32 %s361, %s362
        %s364 = smul.addr %s363, 8
        %s365 = scalar_lea.vmem %s3, %s364
        %p366 = pneg %p180
        %p367 = pneg %p177
        %p368 = scmp.lt.s32.totalorder %s23, 1
        %s369 = scalar_select %p368, %s23, 1
        %p370 = scmp.lt.s32.totalorder %s24, 0
        %s371 = scalar_select %p370, %s24, 0
        %s372 = sadd.s32 %s371, %s369
        %s373 = scalar_lea.vmem %s4, %s372
        %p374 = pneg %p208
        %p375 = pneg %p205
        %p376 = scmp.lt.s32.totalorder %s23, 1
        %s377 = scalar_select %p376, %s23, 1
        %p378 = scmp.lt.s32.totalorder %s24, 0
        %s379 = scalar_select %p378, %s24, 0
        %s380 = sadd.s32 %s379, %s377
        %s381 = scalar_lea.vmem %s5, %s380
        %s382 = smul.u32 8, %s25
        %s383 = smul.u32 3, %s26
        %s384 = smul.u32 48, %s26
        %p385 = scmp.lt.s32.totalorder %s384, 143
        %s386 = scalar_select %p385, %s384, 143
        %p387 = scmp.lt.s32.totalorder %s24, 0
        %s388 = scalar_select %p387, %s24, 0
        %s389 = sadd.s32 %s388, %s386
        %s390 = smul.addr %s389, 4
        %s391 = scalar_lea.vmem %s1, %s390
        %s392 = smul.u32 48, %s26
        %p393 = scmp.lt.s32.totalorder %s24, 0
        %s394 = scalar_select %p393, %s24, 0
        %s395 = scalar_lea.vmem %s2, %s394
        %s396 = smul.u32 8, %s25
        %p397 = scmp.lt.s32.totalorder %s23, 1
        %s398 = scalar_select %p397, %s23, 1
        %p399 = scmp.lt.s32.totalorder %s396, 7
        %s400 = scalar_select %p399, %s396, 7
        %p401 = scmp.lt.s32.totalorder %s24, 0
        %s402 = scalar_select %p401, %s24, 0
        %s403 = sadd.s32 %s402, %s400
        %s404 = smul.addr %s398, 8
        %s405 = sadd.s32 %s403, %s404
        %s406 = smul.addr %s405, 8
        %s407 = scalar_lea.vmem %s3, %s406
        %s408 = smul.u32 8, %s25
        %p409 = scmp.lt.s32.totalorder %s23, 1
        %s410 = scalar_select %p409, %s23, 1
        %p411 = scmp.lt.s32.totalorder %s24, 0
        %s412 = scalar_select %p411, %s24, 0
        %s413 = sadd.s32 %s412, %s410
        %s414 = scalar_lea.vmem %s4, %s413
        %p415 = scmp.lt.s32.totalorder %s23, 1
        %s416 = scalar_select %p415, %s23, 1
        %p417 = scmp.lt.s32.totalorder %s24, 0
        %s418 = scalar_select %p417, %s24, 0
        %s419 = sadd.s32 %s418, %s416
        %s420 = scalar_lea.vmem %s5, %s419
        %p421 = scmp.eq.s32.totalorder %s26, 0
        // Predicated region
        $region59: #{resnet_generator_forward.21} parent=53 // pred_check
          %p422 = pneg %p421
        $region60: #{resnet_generator_forward.21} parent=53 // pred_check_branch
          %424 = sbr.rel (%p422) target = $region62
        $region61: #{resnet_generator_forward.21} parent=53 // pred_region
          %425 = vst [vmem:[#allocation2] sm:$0xff] 0.0
          %426 = vst [vmem:[#allocation2 + $0x8] sm:$0xff] 0.0
          %427 = vst [vmem:[#allocation2 + $0x10] sm:$0xff] 0.0
          %428 = vst [vmem:[#allocation2 + $0x18] sm:$0xff] 0.0
          %429 = vst [vmem:[#allocation2 + $0x20] sm:$0xff] 0.0
          %430 = vst [vmem:[#allocation2 + $0x28] sm:$0xff] 0.0
          %431 = vst [vmem:[#allocation2 + $0x30] sm:$0xff] 0.0
          %432 = vst [vmem:[#allocation2 + $0x38] sm:$0xff] 0.0
        $region62: #{resnet_generator_forward.21} parent=53 // pred_fallthru
          _
        %p433 = scmp.eq.s32.totalorder %s25, 0
        %p434 = pnand %p433, %p421
        %p435 = pneg %p434
        // Predicated region
        $region63: #{resnet_generator_forward.21} parent=53 // pred_check
          _
        $region64: #{resnet_generator_forward.21} parent=53 // pred_check_branch
          %437 = sbr.rel (%p434) target = $region66
        $region65: #{resnet_generator_forward.21} parent=53 // pred_region
          %438 = vst [vmem:[%s414] sm:$0x1] 0.0
          %439 = vst [vmem:[%s420] sm:$0x1] 0.0
        $region66: #{resnet_generator_forward.21} parent=53 // pred_fallthru
          _
        %v440 = vld [vmem:[#allocation2] sm:$0xff]
        %v441 = vld [vmem:[#allocation2 + $0x8] sm:$0xff]
        %v442 = vld [vmem:[#allocation2 + $0x10] sm:$0xff]
        %v443 = vld [vmem:[#allocation2 + $0x18] sm:$0xff]
        %v444 = vld [vmem:[#allocation2 + $0x20] sm:$0xff]
        %v445 = vld [vmem:[#allocation2 + $0x28] sm:$0xff]
        %v446 = vld [vmem:[#allocation2 + $0x30] sm:$0xff]
        %v447 = vld [vmem:[#allocation2 + $0x38] sm:$0xff]
        %v448 = vld [vmem:[%s327] sm:$0xff]
        %v449 = vld [vmem:[%s327 + $0x8] sm:$0xf]
        %v450 = vld [vmem:[%s327 + $0xc] sm:$0xff]
        %v451 = vld [vmem:[%s327 + $0x14] sm:$0xf]
        %v452 = vld [vmem:[%s327 + $0x18] sm:$0xff]
        %v453 = vld [vmem:[%s327 + $0x20] sm:$0xf]
        %v454 = vld [vmem:[%s327 + $0x24] sm:$0xff]
        %v455 = vld [vmem:[%s327 + $0x2c] sm:$0xf]
        %v456 = vld [vmem:[%s327 + $0x30] sm:$0xff]
        %v457 = vld [vmem:[%s327 + $0x38] sm:$0xf]
        %v458 = vld [vmem:[%s327 + $0x3c] sm:$0xff]
        %v459 = vld [vmem:[%s327 + $0x44] sm:$0xf]
        %v460 = vld [vmem:[%s327 + $0x48] sm:$0xff]
        %v461 = vld [vmem:[%s327 + $0x50] sm:$0xf]
        %v462 = vld [vmem:[%s327 + $0x54] sm:$0xff]
        %v463 = vld [vmem:[%s327 + $0x5c] sm:$0xf]
        %v464 = vld [vmem:[%s391] sm:$0xf]
        %v465 = vld [vmem:[%s391 + $0x4] sm:$0xf]
        %v466 = vld [vmem:[%s391 + $0x8] sm:$0xf]
        %v467 = vld [vmem:[%s391 + $0xc] sm:$0xf]
        %v468 = vld [vmem:[%s391 + $0x10] sm:$0xf]
        %v469 = vld [vmem:[%s391 + $0x14] sm:$0xf]
        %v470 = vld [vmem:[%s391 + $0x18] sm:$0xf]
        %v471 = vld [vmem:[%s391 + $0x1c] sm:$0xf]
        %v472 = vld [vmem:[%s391 + $0x20] sm:$0xf]
        %v473 = vld [vmem:[%s391 + $0x24] sm:$0xf]
        %v474 = vld [vmem:[%s391 + $0x28] sm:$0xf]
        %v475 = vld [vmem:[%s391 + $0x2c] sm:$0xf]
        %v476 = vld [vmem:[%s391 + $0x30] sm:$0xf]
        %v477 = vld [vmem:[%s391 + $0x34] sm:$0xf]
        %v478 = vld [vmem:[%s391 + $0x38] sm:$0xf]
        %v479 = vld [vmem:[%s391 + $0x3c] sm:$0xf]
        %v480 = vld [vmem:[%s391 + $0x40] sm:$0xf]
        %v481 = vld [vmem:[%s391 + $0x44] sm:$0xf]
        %v482 = vld [vmem:[%s391 + $0x48] sm:$0xf]
        %v483 = vld [vmem:[%s391 + $0x4c] sm:$0xf]
        %v484 = vld [vmem:[%s391 + $0x50] sm:$0xf]
        %v485 = vld [vmem:[%s391 + $0x54] sm:$0xf]
        %v486 = vld [vmem:[%s391 + $0x58] sm:$0xf]
        %v487 = vld [vmem:[%s391 + $0x5c] sm:$0xf]
        %v488 = vld [vmem:[%s391 + $0x60] sm:$0xf]
        %v489 = vld [vmem:[%s391 + $0x64] sm:$0xf]
        %v490 = vld [vmem:[%s391 + $0x68] sm:$0xf]
        %v491 = vld [vmem:[%s391 + $0x6c] sm:$0xf]
        %v492 = vld [vmem:[%s391 + $0x70] sm:$0xf]
        %v493 = vld [vmem:[%s391 + $0x74] sm:$0xf]
        %v494 = vld [vmem:[%s391 + $0x78] sm:$0xf]
        %v495 = vld [vmem:[%s391 + $0x7c] sm:$0xf]
        %v496 = vld [vmem:[%s391 + $0x80] sm:$0xf]
        %v497 = vld [vmem:[%s391 + $0x84] sm:$0xf]
        %v498 = vld [vmem:[%s391 + $0x88] sm:$0xf]
        %v499 = vld [vmem:[%s391 + $0x8c] sm:$0xf]
        %v500 = vld [vmem:[%s391 + $0x90] sm:$0xf]
        %v501 = vld [vmem:[%s391 + $0x94] sm:$0xf]
        %v502 = vld [vmem:[%s391 + $0x98] sm:$0xf]
        %v503 = vld [vmem:[%s391 + $0x9c] sm:$0xf]
        %v504 = vld [vmem:[%s391 + $0xa0] sm:$0xf]
        %v505 = vld [vmem:[%s391 + $0xa4] sm:$0xf]
        %v506 = vld [vmem:[%s391 + $0xa8] sm:$0xf]
        %v507 = vld [vmem:[%s391 + $0xac] sm:$0xf]
        %v508 = vld [vmem:[%s391 + $0xb0] sm:$0xf]
        %v509 = vld [vmem:[%s391 + $0xb4] sm:$0xf]
        %v510 = vld [vmem:[%s391 + $0xb8] sm:$0xf]
        %v511 = vld [vmem:[%s391 + $0xbc] sm:$0xf]
        %v528 = vunpack.c.l.b16 %v448
        %v529 = vunpack.c.h.b16 %v448
        %v530 = vunpack.c.l.b16 %v449
        %v531 = vunpack.c.l.b16 %v450
        %v532 = vunpack.c.h.b16 %v450
        %v533 = vunpack.c.l.b16 %v451
        %v534 = vunpack.c.l.b16 %v452
        %v535 = vunpack.c.h.b16 %v452
        %v536 = vunpack.c.l.b16 %v453
        %v537 = vunpack.c.l.b16 %v454
        %v538 = vunpack.c.h.b16 %v454
        %v539 = vunpack.c.l.b16 %v455
        %v540 = vunpack.c.l.b16 %v456
        %v541 = vunpack.c.h.b16 %v456
        %v542 = vunpack.c.l.b16 %v457
        %v543 = vunpack.c.l.b16 %v458
        %v544 = vunpack.c.h.b16 %v458
        %v545 = vunpack.c.l.b16 %v459
        %v546 = vunpack.c.l.b16 %v460
        %v547 = vunpack.c.h.b16 %v460
        %v548 = vunpack.c.l.b16 %v461
        %v549 = vunpack.c.l.b16 %v462
        %v550 = vunpack.c.h.b16 %v462
        %v551 = vunpack.c.l.b16 %v463
        %v552 = vpack.c.b16 %v531, %v528
        %v553 = vpack.c.b16 %v532, %v529
        %v554 = vpack.c.b16 %v533, %v530
        %v555 = vpack.c.b16 %v537, %v534
        %v556 = vpack.c.b16 %v538, %v535
        %v557 = vpack.c.b16 %v539, %v536
        %v558 = vpack.c.b16 %v543, %v540
        %v559 = vpack.c.b16 %v544, %v541
        %v560 = vpack.c.b16 %v545, %v542
        %v561 = vpack.c.b16 %v549, %v546
        %v562 = vpack.c.b16 %v550, %v547
        %v563 = vpack.c.b16 %v551, %v548
        %v624 = vunpack.c.l.b16 %v464
        %v625 = vunpack.c.l.b16 %v465
        %v626 = vunpack.c.l.b16 %v466
        %v627 = vunpack.c.l.b16 %v467
        %v628 = vunpack.c.l.b16 %v468
        %v629 = vunpack.c.l.b16 %v469
        %v630 = vunpack.c.l.b16 %v470
        %v631 = vunpack.c.l.b16 %v471
        %v632 = vunpack.c.l.b16 %v472
        %v633 = vunpack.c.l.b16 %v473
        %v634 = vunpack.c.l.b16 %v474
        %v635 = vunpack.c.l.b16 %v475
        %v636 = vunpack.c.l.b16 %v476
        %v637 = vunpack.c.l.b16 %v477
        %v638 = vunpack.c.l.b16 %v478
        %v639 = vunpack.c.l.b16 %v479
        %v640 = vunpack.c.l.b16 %v480
        %v641 = vunpack.c.l.b16 %v481
        %v642 = vunpack.c.l.b16 %v482
        %v643 = vunpack.c.l.b16 %v483
        %v644 = vunpack.c.l.b16 %v484
        %v645 = vunpack.c.l.b16 %v485
        %v646 = vunpack.c.l.b16 %v486
        %v647 = vunpack.c.l.b16 %v487
        %v648 = vunpack.c.l.b16 %v488
        %v649 = vunpack.c.l.b16 %v489
        %v650 = vunpack.c.l.b16 %v490
        %v651 = vunpack.c.l.b16 %v491
        %v652 = vunpack.c.l.b16 %v492
        %v653 = vunpack.c.l.b16 %v493
        %v654 = vunpack.c.l.b16 %v494
        %v655 = vunpack.c.l.b16 %v495
        %v656 = vunpack.c.l.b16 %v496
        %v657 = vunpack.c.l.b16 %v497
        %v658 = vunpack.c.l.b16 %v498
        %v659 = vunpack.c.l.b16 %v499
        %v660 = vunpack.c.l.b16 %v500
        %v661 = vunpack.c.l.b16 %v501
        %v662 = vunpack.c.l.b16 %v502
        %v663 = vunpack.c.l.b16 %v503
        %v664 = vunpack.c.l.b16 %v504
        %v665 = vunpack.c.l.b16 %v505
        %v666 = vunpack.c.l.b16 %v506
        %v667 = vunpack.c.l.b16 %v507
        %v668 = vunpack.c.l.b16 %v508
        %v669 = vunpack.c.l.b16 %v509
        %v670 = vunpack.c.l.b16 %v510
        %v671 = vunpack.c.l.b16 %v511
        %v672 = vpack.c.b16 %v625, %v624
        %v673 = vpack.c.b16 %v627, %v626
        %v674 = vpack.c.b16 %v629, %v628
        %v675 = vpack.c.b16 %v631, %v630
        %v676 = vpack.c.b16 %v633, %v632
        %v677 = vpack.c.b16 %v635, %v634
        %v678 = vpack.c.b16 %v637, %v636
        %v679 = vpack.c.b16 %v639, %v638
        %v680 = vpack.c.b16 %v641, %v640
        %v681 = vpack.c.b16 %v643, %v642
        %v682 = vpack.c.b16 %v645, %v644
        %v683 = vpack.c.b16 %v647, %v646
        %v684 = vpack.c.b16 %v649, %v648
        %v685 = vpack.c.b16 %v651, %v650
        %v686 = vpack.c.b16 %v653, %v652
        %v687 = vpack.c.b16 %v655, %v654
        %v688 = vpack.c.b16 %v657, %v656
        %v689 = vpack.c.b16 %v659, %v658
        %v690 = vpack.c.b16 %v661, %v660
        %v691 = vpack.c.b16 %v663, %v662
        %v692 = vpack.c.b16 %v665, %v664
        %v693 = vpack.c.b16 %v667, %v666
        %v694 = vpack.c.b16 %v669, %v668
        %v695 = vpack.c.b16 %v671, %v670
        %720 = vmatpush.bf16.msra.mxu0 %v679
        %721 = vmatpush.bf16.msra.mxu0 %v678
        %722 = vmatpush.bf16.msra.mxu0 %v677
        %723 = vmatpush.bf16.msra.mxu0 %v676
        %724 = vmatpush.bf16.msra.mxu0 %v675
        %725 = vmatpush.bf16.msra.mxu0 %v674
        %726 = vmatpush.bf16.msra.mxu0 %v673
        %727 = vmatpush.bf16.msra.mxu0 %v672
        %728 = vmatmul.bf16.gmra.mxu0 %v552
        %v729 = vpop.f32.mrf.mxu0
        %v730 = vadd.f32 0.0, %v729
        %v731 = vpop.f32.mrf.mxu0
        %v732 = vadd.f32 0.0, %v731
        %733 = vmatmul.bf16.gmra.mxu0 %v555
        %v734 = vpop.f32.mrf.mxu0
        %v735 = vadd.f32 0.0, %v734
        %v736 = vpop.f32.mrf.mxu0
        %v737 = vadd.f32 0.0, %v736
        %738 = vmatmul.bf16.gmra.mxu0 %v558
        %v739 = vpop.f32.mrf.mxu0
        %v740 = vadd.f32 0.0, %v739
        %v741 = vpop.f32.mrf.mxu0
        %v742 = vadd.f32 0.0, %v741
        %743 = vmatmul.bf16.gmra.mxu0 %v561
        %v744 = vpop.f32.mrf.mxu0
        %v745 = vadd.f32 0.0, %v744
        %v746 = vpop.f32.mrf.mxu0
        %v747 = vadd.f32 0.0, %v746
        %748 = vdwg.mxu0
        %749 = vmatpush.bf16.msra.mxu0 %v687
        %750 = vmatpush.bf16.msra.mxu0 %v686
        %751 = vmatpush.bf16.msra.mxu0 %v685
        %752 = vmatpush.bf16.msra.mxu0 %v684
        %753 = vmatpush.bf16.msra.mxu0 %v683
        %754 = vmatpush.bf16.msra.mxu0 %v682
        %755 = vmatpush.bf16.msra.mxu0 %v681
        %756 = vmatpush.bf16.msra.mxu0 %v680
        %757 = vmatmul.bf16.gmra.mxu0 %v553
        %v758 = vpop.f32.mrf.mxu0
        %v759 = vadd.f32 %v730, %v758
        %v760 = vpop.f32.mrf.mxu0
        %v761 = vadd.f32 %v732, %v760
        %762 = vmatmul.bf16.gmra.mxu0 %v556
        %v763 = vpop.f32.mrf.mxu0
        %v764 = vadd.f32 %v735, %v763
        %v765 = vpop.f32.mrf.mxu0
        %v766 = vadd.f32 %v737, %v765
        %767 = vmatmul.bf16.gmra.mxu0 %v559
        %v768 = vpop.f32.mrf.mxu0
        %v769 = vadd.f32 %v740, %v768
        %v770 = vpop.f32.mrf.mxu0
        %v771 = vadd.f32 %v742, %v770
        %772 = vmatmul.bf16.gmra.mxu0 %v562
        %v773 = vpop.f32.mrf.mxu0
        %v774 = vadd.f32 %v745, %v773
        %v775 = vpop.f32.mrf.mxu0
        %v776 = vadd.f32 %v747, %v775
        %777 = vdwg.mxu0
        %778 = vmatpush.bf16.msra.mxu0 %v695
        %779 = vmatpush.bf16.msra.mxu0 %v694
        %780 = vmatpush.bf16.msra.mxu0 %v693
        %781 = vmatpush.bf16.msra.mxu0 %v692
        %782 = vmatpush.bf16.msra.mxu0 %v691
        %783 = vmatpush.bf16.msra.mxu0 %v690
        %784 = vmatpush.bf16.msra.mxu0 %v689
        %785 = vmatpush.bf16.msra.mxu0 %v688
        %786 = vmatmul.bf16.gmra.mxu0 %v554
        %v787 = vpop.f32.mrf.mxu0
        %v788 = vadd.f32 %v759, %v787
        %v789 = vpop.f32.mrf.mxu0
        %v790 = vadd.f32 %v761, %v789
        %791 = vmatmul.bf16.gmra.mxu0 %v557
        %v792 = vpop.f32.mrf.mxu0
        %v793 = vadd.f32 %v764, %v792
        %v794 = vpop.f32.mrf.mxu0
        %v795 = vadd.f32 %v766, %v794
        %796 = vmatmul.bf16.gmra.mxu0 %v560
        %v797 = vpop.f32.mrf.mxu0
        %v798 = vadd.f32 %v769, %v797
        %v799 = vpop.f32.mrf.mxu0
        %v800 = vadd.f32 %v771, %v799
        %801 = vmatmul.bf16.gmra.mxu0 %v563
        %v802 = vpop.f32.mrf.mxu0
        %v803 = vadd.f32 %v774, %v802
        %v804 = vpop.f32.mrf.mxu0
        %v805 = vadd.f32 %v776, %v804
        %806 = vdwg.mxu0
        %v807 = vadd.f32 %v440, %v788
        %v808 = vadd.f32 %v441, %v790
        %v809 = vadd.f32 %v442, %v793
        %v810 = vadd.f32 %v443, %v795
        %v811 = vadd.f32 %v444, %v798
        %v812 = vadd.f32 %v445, %v800
        %v813 = vadd.f32 %v446, %v803
        %v814 = vadd.f32 %v447, %v805
        %815 = vst [vmem:[#allocation2] sm:$0xff] %v807
        %816 = vst [vmem:[#allocation2 + $0x8] sm:$0xff] %v808
        %817 = vst [vmem:[#allocation2 + $0x10] sm:$0xff] %v809
        %818 = vst [vmem:[#allocation2 + $0x18] sm:$0xff] %v810
        %819 = vst [vmem:[#allocation2 + $0x20] sm:$0xff] %v811
        %820 = vst [vmem:[#allocation2 + $0x28] sm:$0xff] %v812
        %821 = vst [vmem:[#allocation2 + $0x30] sm:$0xff] %v813
        %822 = vst [vmem:[#allocation2 + $0x38] sm:$0xff] %v814
        %p823 = scmp.eq.s32.totalorder %s26, 2
        // Predicated region
        $region67: #{resnet_generator_forward.21} parent=53 // pred_check
          %p824 = pneg %p823
        $region68: #{resnet_generator_forward.21} parent=53 // pred_check_branch
          %826 = sbr.rel (%p824) target = $region70
        $region69: #{resnet_generator_forward.21} parent=53 // pred_region
          %v827 = vld [vmem:[#allocation2] sm:$0xff]
          %v828 = vld [vmem:[#allocation2 + $0x8] sm:$0xff]
          %v829 = vld [vmem:[#allocation2 + $0x10] sm:$0xff]
          %v830 = vld [vmem:[#allocation2 + $0x18] sm:$0xff]
          %v831 = vld [vmem:[#allocation2 + $0x20] sm:$0xff]
          %v832 = vld [vmem:[#allocation2 + $0x28] sm:$0xff]
          %v833 = vld [vmem:[#allocation2 + $0x30] sm:$0xff]
          %v834 = vld [vmem:[#allocation2 + $0x38] sm:$0xff]
          %v835 = vld [vmem:[%s395] sm:$0x1]
          %v837 = vperm.slane %v835, 0
          %v839 = vadd.f32 %v827, %v837
          %v840 = vadd.f32 %v828, %v837
          %v841 = vadd.f32 %v829, %v837
          %v842 = vadd.f32 %v830, %v837
          %v843 = vadd.f32 %v831, %v837
          %v844 = vadd.f32 %v832, %v837
          %v845 = vadd.f32 %v833, %v837
          %v846 = vadd.f32 %v834, %v837
          %v847 = vld [vmem:[%s414] sm:$0x1]
          %v848 = vadd.f32 %v839, %v840
          %v849 = vadd.f32 %v848, %v841
          %v850 = vadd.f32 %v849, %v842
          %v851 = vadd.f32 %v850, %v843
          %v852 = vadd.f32 %v851, %v844
          %v853 = vadd.f32 %v852, %v845
          %v854 = vadd.f32 %v853, %v846
          %v855 = vrot.slane %v854, 4
          %v856 = vadd.f32 %v854, %v855
          %v857 = vrot.slane %v856, 2
          %v858 = vadd.f32 %v856, %v857
          %v859 = vrot.slane %v858, 1
          %v860 = vadd.f32 %v858, %v859
          %v861 = vadd.f32 %v847, %v860
          %862 = vst [vmem:[%s414] sm:$0x1] %v861
          %v863 = vld [vmem:[%s420] sm:$0x1]
          %v864 = vmul.f32 %v839, %v839
          %v865 = vmul.f32 %v840, %v840
          %v866 = vmul.f32 %v841, %v841
          %v867 = vmul.f32 %v842, %v842
          %v868 = vmul.f32 %v843, %v843
          %v869 = vmul.f32 %v844, %v844
          %v870 = vmul.f32 %v845, %v845
          %v871 = vmul.f32 %v846, %v846
          %v872 = vadd.f32 %v864, %v865
          %v873 = vadd.f32 %v872, %v866
          %v874 = vadd.f32 %v873, %v867
          %v875 = vadd.f32 %v874, %v868
          %v876 = vadd.f32 %v875, %v869
          %v877 = vadd.f32 %v876, %v870
          %v878 = vadd.f32 %v877, %v871
          %v879 = vrot.slane %v878, 4
          %v880 = vadd.f32 %v878, %v879
          %v881 = vrot.slane %v880, 2
          %v882 = vadd.f32 %v880, %v881
          %v883 = vrot.slane %v882, 1
          %v884 = vadd.f32 %v882, %v883
          %v885 = vadd.f32 %v863, %v884
          %886 = vst [vmem:[%s420] sm:$0x1] %v885
          %887 = vst [vmem:[%s407] sm:$0xff] %v839
          %888 = vst [vmem:[%s407 + $0x8] sm:$0xff] %v840
          %889 = vst [vmem:[%s407 + $0x10] sm:$0xff] %v841
          %890 = vst [vmem:[%s407 + $0x18] sm:$0xff] %v842
          %891 = vst [vmem:[%s407 + $0x20] sm:$0xff] %v843
          %892 = vst [vmem:[%s407 + $0x28] sm:$0xff] %v844
          %893 = vst [vmem:[%s407 + $0x30] sm:$0xff] %v845
          %894 = vst [vmem:[%s407 + $0x38] sm:$0xff] %v846
        $region70: #{resnet_generator_forward.21} parent=53 // pred_fallthru
          _
        %s895 = smul.u32 8, %s25
        %p896 = scmp.lt.s32.totalorder %s23, 1
        %s897 = scalar_select %p896, %s23, 1
        %p898 = scmp.lt.s32.totalorder %s895, 7
        %s899 = scalar_select %p898, %s895, 7
        %p900 = scmp.lt.s32.totalorder %s24, 0
        %s901 = scalar_select %p900, %s24, 0
        %s902 = sadd.s32 %s901, %s899
        %s903 = smul.addr %s897, 8
        %s904 = sadd.s32 %s902, %s903
        %s905 = smul.addr %s904, 8
        %s906 = scalar_lea.vmem %s3, %s905
        %p907 = scmp.lt.s32.totalorder %s23, 1
        %s908 = scalar_select %p907, %s23, 1
        %p909 = scmp.lt.s32.totalorder %s24, 0
        %s910 = scalar_select %p909, %s24, 0
        %s911 = sadd.s32 %s910, %s908
        %s912 = scalar_lea.vmem %s4, %s911
        %p913 = scmp.lt.s32.totalorder %s23, 1
        %s914 = scalar_select %p913, %s23, 1
        %p915 = scmp.lt.s32.totalorder %s24, 0
        %s916 = scalar_select %p915, %s24, 0
        %s917 = sadd.s32 %s916, %s914
        %s918 = scalar_lea.vmem %s5, %s917
        // Predicated region
        $region71: #{resnet_generator_forward.21} parent=53 // pred_check
          %p919 = pneg %p149
        $region72: #{resnet_generator_forward.21} parent=53 // pred_check_branch
          %921 = sbr.rel (%p919) target = $region74
        $region73: #{resnet_generator_forward.21} parent=53 // pred_region
          %s922 = smul.u32 8, %s25
        $region74: #{resnet_generator_forward.21} parent=53 // pred_fallthru
          _
        // Predicated region
        $region75: #{resnet_generator_forward.21} parent=53 // pred_check
          %p923 = pneg %p177
        $region76: #{resnet_generator_forward.21} parent=53 // pred_check_branch
          %925 = sbr.rel (%p923) target = $region78
        $region77: #{resnet_generator_forward.21} parent=53 // pred_region
          _
        $region78: #{resnet_generator_forward.21} parent=53 // pred_fallthru
          _
        // Predicated region
        $region79: #{resnet_generator_forward.21} parent=53 // pred_check
          %p926 = pneg %p205
        $region80: #{resnet_generator_forward.21} parent=53 // pred_check_branch
          %928 = sbr.rel (%p926) target = $region82
        $region81: #{resnet_generator_forward.21} parent=53 // pred_region
          _
        $region82: #{resnet_generator_forward.21} parent=53 // pred_fallthru
          _
      $region54: #{resnet_generator_forward.21} parent=5 // pred_fallthru
        _
      %p929 = scmp.le.s32.totalorder 2, %s12
      // Predicated region
      $region83: #{resnet_generator_forward.21} parent=5 // pred_check
        %p930 = pneg %p929
      $region84: #{resnet_generator_forward.21} parent=5 // pred_check_branch
        %932 = sbr.rel (%p930) target = $region86
      $region85: #{resnet_generator_forward.21} parent=5 // pred_region
        %s933 = ssub.s32 %s12, 2
        // Predicated region
        $region87: #{resnet_generator_forward.21} parent=85 // pred_check
          %p934 = pneg %p155
        $region88: #{resnet_generator_forward.21} parent=85 // pred_check_branch
          %936 = sbr.rel (%p934) target = $region90
        $region89: #{resnet_generator_forward.21} parent=85 // pred_region
          %s937 = smul.u32 8, %s29
          %p938 = scmp.lt.s32.totalorder %s27, 1
          %s939 = scalar_select %p938, %s27, 1
          %p940 = scmp.lt.s32.totalorder %s937, 7
          %s941 = scalar_select %p940, %s937, 7
          %p942 = scmp.lt.s32.totalorder %s28, 0
          %s943 = scalar_select %p942, %s28, 0
          %s944 = sadd.s32 %s943, %s941
          %s945 = smul.addr %s939, 8
          %s946 = sadd.s32 %s944, %s945
          %s947 = smul.addr %s946, 8
          %s948 = scalar_lea.vmem %s3, %s947
        $region90: #{resnet_generator_forward.21} parent=85 // pred_fallthru
          _
        // Predicated region
        $region91: #{resnet_generator_forward.21} parent=85 // pred_check
          %p949 = pneg %p183
        $region92: #{resnet_generator_forward.21} parent=85 // pred_check_branch
          %951 = sbr.rel (%p949) target = $region94
        $region93: #{resnet_generator_forward.21} parent=85 // pred_region
          %p952 = scmp.lt.s32.totalorder %s27, 1
          %s953 = scalar_select %p952, %s27, 1
          %p954 = scmp.lt.s32.totalorder %s28, 0
          %s955 = scalar_select %p954, %s28, 0
          %s956 = sadd.s32 %s955, %s953
          %s957 = scalar_lea.vmem %s4, %s956
        $region94: #{resnet_generator_forward.21} parent=85 // pred_fallthru
          _
        // Predicated region
        $region95: #{resnet_generator_forward.21} parent=85 // pred_check
          %p958 = pneg %p211
        $region96: #{resnet_generator_forward.21} parent=85 // pred_check_branch
          %960 = sbr.rel (%p958) target = $region98
        $region97: #{resnet_generator_forward.21} parent=85 // pred_region
          %p961 = scmp.lt.s32.totalorder %s27, 1
          %s962 = scalar_select %p961, %s27, 1
          %p963 = scmp.lt.s32.totalorder %s28, 0
          %s964 = scalar_select %p963, %s28, 0
          %s965 = sadd.s32 %s964, %s962
          %s966 = scalar_lea.vmem %s5, %s965
        $region98: #{resnet_generator_forward.21} parent=85 // pred_fallthru
          _
      $region86: #{resnet_generator_forward.21} parent=5 // pred_fallthru
        _
    $region6: #{resnet_generator_forward.21} parent=1 // loop_footer
      %s16 = sadd.s32 1, %s12
    $region7: #{resnet_generator_forward.21} parent=1 // loop_footer_branch
      %11 = sbr.rel target = $region3
    $region8: #{resnet_generator_forward.21} parent=1 // loop_exit
      _

// kernel: resnet_generator_forward.24
$region0: #{resnet_generator_forward.24}
  #allocation0 [shape = 'u32[]', space=smem, size = 0x4, offset = 0x4, fixed_abs, tag = 'smem constant byte address 0x4 - core index']
  #allocation1 [shape = 'u32[72,128]{1,0:T(1,128)}', space=vmem, size = 0x9000, scoped, tag = 'internal scratch']
  %s0 = inlined_call_operand.vmem [shape: f32[2,16,128], index: 0, kind: input, shape index: {}]
  %s1 = inlined_call_operand.vmem [shape: f32[2,1,128], index: 1, kind: input, shape index: {}]
  %s2 = inlined_call_operand.vmem [shape: f32[2,1,128], index: 2, kind: input, shape index: {}]
  %s3 = inlined_call_operand.vmem [shape: f32[2,16,128], index: 3, kind: output, shape index: {}]
  %s4 = sld [smem:[#allocation0]]
  $region45: #{resnet_generator_forward.24} parent=0
    _
  %s6 = ssub.s32 1, %s4
  %s7 = scalar_select 0, %s6, %s4
  loop: start=0, step=1, limit=4
  $region2: #{resnet_generator_forward.24} parent=0 // loop_pre_header
    _
  $region3: #{resnet_generator_forward.24} parent=0 // loop_header
    %s9 = sphi 0, %s13
    %p10 = scmp.ge.s32.totalorder %s9, 4
    %s16 = sphi 0, %s35
    %s17 = sphi 0, %s31
    %s18 = sphi 0, %s27
    %s19 = sphi 0, %s16
    %s20 = sphi 0, %s17
    %s21 = sphi 0, %s18
    %s22 = sphi 0, %s19
    %s23 = sphi 0, %s20
    %s24 = sphi 0, %s21
    %s42 = sphi 0, %s44
    %s45 = sphi 0, %s42
    %s46 = sphi 0, %s45
    %s62 = sphi 0, %s46
    %s70 = sphi 0, %s72
    %s73 = sphi 0, %s70
    %s74 = sphi 0, %s73
    %s90 = sphi 0, %s74
    %s98 = sphi 0, %s100
    %s101 = sphi 0, %s98
    %s102 = sphi 0, %s101
    %s118 = sphi 0, %s102
    %s128 = sphi 0, %s130
    %s131 = sphi 0, %s128
    %s132 = sphi 0, %s131
    %s148 = sphi 0, %s132
  $region4: #{resnet_generator_forward.24} parent=0 // loop_header_branch
    %12 = sbr.rel (%p10) target = $region8
  $region5: #{resnet_generator_forward.24} parent=0 // loop_body
    %s14 = ssub.s32 %s9, 1
    %s15 = ssub.s32 %s9, 2
    %s25 = sadd.s32 1, %s18
    %p26 = scmp.ge.s32.totalorder %s25, 1
    %s27 = scalar_select %p26, 0, %s25
    %s28 = sadd.s32 1, %s17
    %s29 = scalar_select %p26, %s28, %s17
    %p30 = scmp.ge.s32.totalorder %s29, 1
    %s31 = scalar_select %p30, 0, %s29
    %s32 = sadd.s32 1, %s16
    %s33 = scalar_select %p30, %s32, %s16
    %p34 = scmp.ge.s32.totalorder %s33, 2
    %s35 = scalar_select %p34, 0, %s33
    %s36 = ssub.s32 %s16, %s35
    %s37 = ssub.s32 %s17, %s31
    %s38 = sor.u32 %s36, %s37
    %s39 = ssub.s32 %s18, %s27
    %s40 = sor.u32 %s38, %s39
    %p41 = scmp.eq.s32.totalorder %s40, 0
    %s43 = sadd.s32 %s42, 1
    %s44 = scalar_select %p41, %s42, %s43
    %p47 = pneg %p41
    %p48 = scmp.eq.s32.totalorder %s9, 1
    %p49 = por %p47, %p48
    %p50 = scmp.ne.s32.totalorder %s42, %s45
    %p51 = scmp.eq.s32.totalorder %s9, 0
    %p52 = por %p50, %p51
    %p53 = scmp.ne.s32.totalorder %s42, %s45
    %p54 = scmp.eq.s32.totalorder %s14, 1
    %p55 = por %p53, %p54
    %p56 = scmp.ne.s32.totalorder %s45, %s46
    %p57 = scmp.eq.s32.totalorder %s14, 0
    %p58 = por %p56, %p57
    %p59 = scmp.ne.s32.totalorder %s45, %s46
    %p60 = scmp.eq.s32.totalorder %s15, 1
    %p61 = por %p59, %p60
    %p63 = scmp.ne.s32.totalorder %s46, %s62
    %p64 = scmp.eq.s32.totalorder %s15, 0
    %p65 = por %p63, %p64
    %s66 = ssub.s32 %s16, %s35
    %s67 = ssub.s32 %s18, %s27
    %s68 = sor.u32 %s66, %s67
    %p69 = scmp.eq.s32.totalorder %s68, 0
    %s71 = sadd.s32 %s70, 1
    %s72 = scalar_select %p69, %s70, %s71
    %p75 = pneg %p69
    %p76 = scmp.eq.s32.totalorder %s9, 1
    %p77 = por %p75, %p76
    %p78 = scmp.ne.s32.totalorder %s70, %s73
    %p79 = scmp.eq.s32.totalorder %s9, 0
    %p80 = por %p78, %p79
    %p81 = scmp.ne.s32.totalorder %s70, %s73
    %p82 = scmp.eq.s32.totalorder %s14, 1
    %p83 = por %p81, %p82
    %p84 = scmp.ne.s32.totalorder %s73, %s74
    %p85 = scmp.eq.s32.totalorder %s14, 0
    %p86 = por %p84, %p85
    %p87 = scmp.ne.s32.totalorder %s73, %s74
    %p88 = scmp.eq.s32.totalorder %s15, 1
    %p89 = por %p87, %p88
    %p91 = scmp.ne.s32.totalorder %s74, %s90
    %p92 = scmp.eq.s32.totalorder %s15, 0
    %p93 = por %p91, %p92
    %s94 = ssub.s32 %s16, %s35
    %s95 = ssub.s32 %s18, %s27
    %s96 = sor.u32 %s94, %s95
    %p97 = scmp.eq.s32.totalorder %s96, 0
    %s99 = sadd.s32 %s98, 1
    %s100 = scalar_select %p97, %s98, %s99
    %p103 = pneg %p97
    %p104 = scmp.eq.s32.totalorder %s9, 1
    %p105 = por %p103, %p104
    %p106 = scmp.ne.s32.totalorder %s98, %s101
    %p107 = scmp.eq.s32.totalorder %s9, 0
    %p108 = por %p106, %p107
    %p109 = scmp.ne.s32.totalorder %s98, %s101
    %p110 = scmp.eq.s32.totalorder %s14, 1
    %p111 = por %p109, %p110
    %p112 = scmp.ne.s32.totalorder %s101, %s102
    %p113 = scmp.eq.s32.totalorder %s14, 0
    %p114 = por %p112, %p113
    %p115 = scmp.ne.s32.totalorder %s101, %s102
    %p116 = scmp.eq.s32.totalorder %s15, 1
    %p117 = por %p115, %p116
    %p119 = scmp.ne.s32.totalorder %s102, %s118
    %p120 = scmp.eq.s32.totalorder %s15, 0
    %p121 = por %p119, %p120
    %s122 = ssub.s32 %s16, %s35
    %s123 = ssub.s32 %s17, %s31
    %s124 = sor.u32 %s122, %s123
    %s125 = ssub.s32 %s18, %s27
    %s126 = sor.u32 %s124, %s125
    %p127 = scmp.eq.s32.totalorder %s126, 0
    %s129 = sadd.s32 %s128, 1
    %s130 = scalar_select %p127, %s128, %s129
    %p133 = pneg %p127
    %p134 = scmp.eq.s32.totalorder %s9, 1
    %p135 = por %p133, %p134
    %p136 = scmp.ne.s32.totalorder %s128, %s131
    %p137 = scmp.eq.s32.totalorder %s9, 0
    %p138 = por %p136, %p137
    %p139 = scmp.ne.s32.totalorder %s128, %s131
    %p140 = scmp.eq.s32.totalorder %s14, 1
    %p141 = por %p139, %p140
    %p142 = scmp.ne.s32.totalorder %s131, %s132
    %p143 = scmp.eq.s32.totalorder %s14, 0
    %p144 = por %p142, %p143
    %p145 = scmp.ne.s32.totalorder %s131, %s132
    %p146 = scmp.eq.s32.totalorder %s15, 1
    %p147 = por %p145, %p146
    %p149 = scmp.ne.s32.totalorder %s132, %s148
    %p150 = scmp.eq.s32.totalorder %s15, 0
    %p151 = por %p149, %p150
    %p152 = scmp.le.s32.totalorder 1, %s9
    %p153 = scmp.lt.s32.totalorder %s9, 3
    %p154 = pnand %p152, %p153
    %p155 = pneg %p154
    // Predicated region
    $region9: #{resnet_generator_forward.24} parent=5 // pred_check
      _
    $region10: #{resnet_generator_forward.24} parent=5 // pred_check_branch
      %157 = sbr.rel (%p154) target = $region12
    $region11: #{resnet_generator_forward.24} parent=5 // pred_region
      %s158 = ssub.s32 %s9, 1
    $region12: #{resnet_generator_forward.24} parent=5 // pred_fallthru
      _
    %p159 = scmp.lt.s32.totalorder %s9, 2
    // Predicated region
    $region13: #{resnet_generator_forward.24} parent=5 // pred_check
      %p160 = pneg %p159
    $region14: #{resnet_generator_forward.24} parent=5 // pred_check_branch
      %162 = sbr.rel (%p160) target = $region16
    $region15: #{resnet_generator_forward.24} parent=5 // pred_region
      // Predicated region
      $region17: #{resnet_generator_forward.24} parent=15 // pred_check
        %p163 = pneg %p52
      $region18: #{resnet_generator_forward.24} parent=15 // pred_check_branch
        %165 = sbr.rel (%p163) target = $region20
      $region19: #{resnet_generator_forward.24} parent=15 // pred_region
        %s166 = smul.u32 2, %s17
        %p167 = scmp.lt.s32.totalorder %s16, 1
        %s168 = scalar_select %p167, %s16, 1
        %p169 = scmp.lt.s32.totalorder %s166, 1
        %s170 = scalar_select %p169, %s166, 1
        %p171 = scmp.lt.s32.totalorder %s18, 0
        %s172 = scalar_select %p171, %s18, 0
        %s173 = sadd.s32 %s172, %s170
        %s174 = smul.addr %s168, 2
        %s175 = sadd.s32 %s173, %s174
        %s176 = smul.addr %s175, 8
        %s177 = scalar_lea.vmem %s0, %s176
        %s178 = smul.u32 2, %s17
      $region20: #{resnet_generator_forward.24} parent=15 // pred_fallthru
        _
      // Predicated region
      $region21: #{resnet_generator_forward.24} parent=15 // pred_check
        %p179 = pneg %p80
      $region22: #{resnet_generator_forward.24} parent=15 // pred_check_branch
        %181 = sbr.rel (%p179) target = $region24
      $region23: #{resnet_generator_forward.24} parent=15 // pred_region
        %p182 = scmp.lt.s32.totalorder %s16, 1
        %s183 = scalar_select %p182, %s16, 1
        %p184 = scmp.lt.s32.totalorder %s18, 0
        %s185 = scalar_select %p184, %s18, 0
        %s186 = sadd.s32 %s185, %s183
        %s187 = scalar_lea.vmem %s1, %s186
      $region24: #{resnet_generator_forward.24} parent=15 // pred_fallthru
        _
      // Predicated region
      $region25: #{resnet_generator_forward.24} parent=15 // pred_check
        %p188 = pneg %p108
      $region26: #{resnet_generator_forward.24} parent=15 // pred_check_branch
        %190 = sbr.rel (%p188) target = $region28
      $region27: #{resnet_generator_forward.24} parent=15 // pred_region
        %p191 = scmp.lt.s32.totalorder %s16, 1
        %s192 = scalar_select %p191, %s16, 1
        %p193 = scmp.lt.s32.totalorder %s18, 0
        %s194 = scalar_select %p193, %s18, 0
        %s195 = sadd.s32 %s194, %s192
        %s196 = scalar_lea.vmem %s2, %s195
      $region28: #{resnet_generator_forward.24} parent=15 // pred_fallthru
        _
    $region16: #{resnet_generator_forward.24} parent=5 // pred_fallthru
      _
    %p197 = scmp.le.s32.totalorder 1, %s9
    %p198 = scmp.lt.s32.totalorder %s9, 3
    %p199 = pnand %p197, %p198
    %p200 = pneg %p199
    // Predicated region
    $region29: #{resnet_generator_forward.24} parent=5 // pred_check
      _
    $region30: #{resnet_generator_forward.24} parent=5 // pred_check_branch
      %202 = sbr.rel (%p199) target = $region32
    $region31: #{resnet_generator_forward.24} parent=5 // pred_region
      %s203 = ssub.s32 %s9, 1
      %s204 = smul.u32 2, %s20
      %p205 = scmp.lt.s32.totalorder %s19, 1
      %s206 = scalar_select %p205, %s19, 1
      %p207 = scmp.lt.s32.totalorder %s204, 1
      %s208 = scalar_select %p207, %s204, 1
      %p209 = scmp.lt.s32.totalorder %s21, 0
      %s210 = scalar_select %p209, %s21, 0
      %s211 = sadd.s32 %s210, %s208
      %s212 = smul.addr %s206, 2
      %s213 = sadd.s32 %s211, %s212
      %s214 = smul.addr %s213, 8
      %s215 = scalar_lea.vmem %s0, %s214
      %p216 = pneg %p58
      %p217 = pneg %p55
      %p218 = scmp.lt.s32.totalorder %s19, 1
      %s219 = scalar_select %p218, %s19, 1
      %p220 = scmp.lt.s32.totalorder %s21, 0
      %s221 = scalar_select %p220, %s21, 0
      %s222 = sadd.s32 %s221, %s219
      %s223 = scalar_lea.vmem %s1, %s222
      %p224 = pneg %p86
      %p225 = pneg %p83
      %p226 = scmp.lt.s32.totalorder %s19, 1
      %s227 = scalar_select %p226, %s19, 1
      %p228 = scmp.lt.s32.totalorder %s21, 0
      %s229 = scalar_select %p228, %s21, 0
      %s230 = sadd.s32 %s229, %s227
      %s231 = scalar_lea.vmem %s2, %s230
      %p232 = pneg %p114
      %p233 = pneg %p111
      %p234 = pneg %p144
      %p235 = pneg %p141
      %s236 = smul.u32 2, %s20
      %p237 = scmp.lt.s32.totalorder %s19, 1
      %s238 = scalar_select %p237, %s19, 1
      %p239 = scmp.lt.s32.totalorder %s236, 1
      %s240 = scalar_select %p239, %s236, 1
      %p241 = scmp.lt.s32.totalorder %s21, 0
      %s242 = scalar_select %p241, %s21, 0
      %s243 = sadd.s32 %s242, %s240
      %s244 = smul.addr %s238, 2
      %s245 = sadd.s32 %s243, %s244
      %s246 = smul.addr %s245, 8
      %s247 = scalar_lea.vmem %s3, %s246
      %s248 = smul.u32 2, %s20
      %p249 = scmp.lt.s32.totalorder %s19, 1
      %s250 = scalar_select %p249, %s19, 1
      %p251 = scmp.lt.s32.totalorder %s248, 1
      %s252 = scalar_select %p251, %s248, 1
      %p253 = scmp.lt.s32.totalorder %s21, 0
      %s254 = scalar_select %p253, %s21, 0
      %s255 = sadd.s32 %s254, %s252
      %s256 = smul.addr %s250, 2
      %s257 = sadd.s32 %s255, %s256
      %s258 = smul.addr %s257, 8
      %s259 = scalar_lea.vmem %s0, %s258
      %s260 = smul.u32 2, %s20
      %p261 = scmp.lt.s32.totalorder %s19, 1
      %s262 = scalar_select %p261, %s19, 1
      %p263 = scmp.lt.s32.totalorder %s21, 0
      %s264 = scalar_select %p263, %s21, 0
      %s265 = sadd.s32 %s264, %s262
      %s266 = scalar_lea.vmem %s1, %s265
      %p267 = scmp.lt.s32.totalorder %s19, 1
      %s268 = scalar_select %p267, %s19, 1
      %p269 = scmp.lt.s32.totalorder %s21, 0
      %s270 = scalar_select %p269, %s21, 0
      %s271 = sadd.s32 %s270, %s268
      %s272 = scalar_lea.vmem %s2, %s271
      %s273 = smul.u32 2, %s20
      %p274 = scmp.lt.s32.totalorder %s19, 1
      %s275 = scalar_select %p274, %s19, 1
      %p276 = scmp.lt.s32.totalorder %s273, 1
      %s277 = scalar_select %p276, %s273, 1
      %p278 = scmp.lt.s32.totalorder %s21, 0
      %s279 = scalar_select %p278, %s21, 0
      %s280 = sadd.s32 %s279, %s277
      %s281 = smul.addr %s275, 2
      %s282 = sadd.s32 %s280, %s281
      %s283 = smul.addr %s282, 8
      %s284 = scalar_lea.vmem %s3, %s283
      %s285 = smul.u32 2, %s20
      %v286 = vld [vmem:[%s266] sm:$0x1]
      %v287 = vmul.f32 %v286, 0.0625
      %v288 = vld [vmem:[%s272] sm:$0x1]
      %v289 = vmul.f32 %v288, 0.0625
      %v290 = vmul.f32 %v287, %v287
      %v291 = vsub.f32 %v289, %v290
      %v292 = vmax.f32 %v291, 0.0
      %v293 = vld [vmem:[%s259] sm:$0xff]
      %v294 = vld [vmem:[%s259 + $0x8] sm:$0xff]
      %v296 = vperm.slane %v287, 0
      %v298 = vsub.f32 %v293, %v296
      %v299 = vsub.f32 %v294, %v296
      %v300 = vadd.f32 %v292, 1e-05
      %v301 = vrsqrt.pop %v300
      %v302 = vmul.f32 %v301, %v300
      %v303 = vmul.f32 %v302, %v301
      %v304 = vmul.f32 0.5, %v303
      %v305 = vsub.f32 1.5, %v304
      %v306 = vmul.f32 %v301, %v305
      %vm307 = vweird.f32 %v300
      %vm308 = vweird.f32 %v301
      %vm309 = vmor %vm307, %vm308
      %v310 = vsel %vm309, %v301, %v306
      %v312 = vperm.slane %v310, 0
      %v314 = vmul.f32 %v298, %v312
      %v315 = vmul.f32 %v299, %v312
      %v316 = vmax.f32 %v314, 0.0
      %v317 = vmax.f32 %v315, 0.0
      %318 = vst [vmem:[%s284] sm:$0xff] %v316
      %319 = vst [vmem:[%s284 + $0x8] sm:$0xff] %v317
      %s320 = smul.u32 2, %s20
      %p321 = scmp.lt.s32.totalorder %s19, 1
      %s322 = scalar_select %p321, %s19, 1
      %p323 = scmp.lt.s32.totalorder %s320, 1
      %s324 = scalar_select %p323, %s320, 1
      %p325 = scmp.lt.s32.totalorder %s21, 0
      %s326 = scalar_select %p325, %s21, 0
      %s327 = sadd.s32 %s326, %s324
      %s328 = smul.addr %s322, 2
      %s329 = sadd.s32 %s327, %s328
      %s330 = smul.addr %s329, 8
      %s331 = scalar_lea.vmem %s3, %s330
      // Predicated region
      $region33: #{resnet_generator_forward.24} parent=31 // pred_check
        %p332 = pneg %p141
      $region34: #{resnet_generator_forward.24} parent=31 // pred_check_branch
        %334 = sbr.rel (%p332) target = $region36
      $region35: #{resnet_generator_forward.24} parent=31 // pred_region
        %s335 = smul.u32 2, %s20
      $region36: #{resnet_generator_forward.24} parent=31 // pred_fallthru
        _
    $region32: #{resnet_generator_forward.24} parent=5 // pred_fallthru
      _
    %p336 = scmp.le.s32.totalorder 2, %s9
    // Predicated region
    $region37: #{resnet_generator_forward.24} parent=5 // pred_check
      %p337 = pneg %p336
    $region38: #{resnet_generator_forward.24} parent=5 // pred_check_branch
      %339 = sbr.rel (%p337) target = $region40
    $region39: #{resnet_generator_forward.24} parent=5 // pred_region
      %s340 = ssub.s32 %s9, 2
      // Predicated region
      $region41: #{resnet_generator_forward.24} parent=39 // pred_check
        %p341 = pneg %p147
      $region42: #{resnet_generator_forward.24} parent=39 // pred_check_branch
        %343 = sbr.rel (%p341) target = $region44
      $region43: #{resnet_generator_forward.24} parent=39 // pred_region
        %s344 = smul.u32 2, %s23
        %p345 = scmp.lt.s32.totalorder %s22, 1
        %s346 = scalar_select %p345, %s22, 1
        %p347 = scmp.lt.s32.totalorder %s344, 1
        %s348 = scalar_select %p347, %s344, 1
        %p349 = scmp.lt.s32.totalorder %s24, 0
        %s350 = scalar_select %p349, %s24, 0
        %s351 = sadd.s32 %s350, %s348
        %s352 = smul.addr %s346, 2
        %s353 = sadd.s32 %s351, %s352
        %s354 = smul.addr %s353, 8
        %s355 = scalar_lea.vmem %s3, %s354
      $region44: #{resnet_generator_forward.24} parent=39 // pred_fallthru
        _
    $region40: #{resnet_generator_forward.24} parent=5 // pred_fallthru
      _
  $region6: #{resnet_generator_forward.24} parent=0 // loop_footer
    %s13 = sadd.s32 1, %s9
  $region7: #{resnet_generator_forward.24} parent=0 // loop_footer_branch
    %8 = sbr.rel target = $region3
  $region8: #{resnet_generator_forward.24} parent=0 // loop_exit
    _

// kernel: resnet_generator_forward.23
$region0: #{resnet_generator_forward.23}
  #allocation0 [shape = 'u32[]', space=smem, size = 0x4, offset = 0x4, fixed_abs, tag = 'smem constant byte address 0x4 - core index']
  #allocation1 [shape = 'u32[72,128]{1,0:T(1,128)}', space=vmem, size = 0x9000, scoped, tag = 'internal scratch']
  #allocation2 [shape = 'f32[16,128]{1,0:T(8,128)}', space=vmem, size = 0x2000, scoped, tag = 'scratch operand']
  %s0 = inlined_call_operand.vmem [shape: bf16[2,16,1152], index: 0, kind: input, shape index: {}]
  %s1 = inlined_call_operand.vmem [shape: bf16[1152,128], index: 1, kind: input, shape index: {}]
  %s2 = inlined_call_operand.vmem [shape: f32[1,128], index: 2, kind: input, shape index: {}]
  %s3 = inlined_call_operand.vmem [shape: f32[2,16,128], index: 3, kind: output, shape index: {0}]
  %s4 = inlined_call_operand.vmem [shape: f32[2,1,128], index: 4, kind: output, shape index: {1}]
  %s5 = inlined_call_operand.vmem [shape: f32[2,1,128], index: 5, kind: output, shape index: {2}]
  %6 = xla_tuple %s3, %s4, %s5
  %s7 = sld [smem:[#allocation0]]
  $region99: #{resnet_generator_forward.23} parent=0
    _
  %s9 = ssub.s32 1, %s7
  %s10 = scalar_select 0, %s9, %s7
  $region1: #{resnet_generator_forward.23} parent=0
    #allocation3 [shape = 'u8[24576]{0}', space=vmem, size = 0x6000, scoped, tag = 'input window, operand 0']
    loop: start=0, step=1, limit=8
    $region2: #{resnet_generator_forward.23} parent=1 // loop_pre_header
      _
    $region3: #{resnet_generator_forward.23} parent=1 // loop_header
      %s12 = sphi 0, %s16
      %p13 = scmp.ge.s32.totalorder %s12, 8
      %s19 = sphi 0, %s45
      %s20 = sphi 0, %s41
      %s21 = sphi 0, %s37
      %s22 = sphi 0, %s33
      %s23 = sphi 0, %s19
      %s24 = sphi 0, %s20
      %s25 = sphi 0, %s21
      %s26 = sphi 0, %s22
      %s27 = sphi 0, %s23
      %s28 = sphi 0, %s24
      %s29 = sphi 0, %s25
      %s30 = sphi 0, %s26
      %s52 = sphi 0, %s54
      %s55 = sphi 0, %s52
      %s56 = sphi 0, %s55
      %s72 = sphi 0, %s56
      %s80 = sphi 0, %s82
      %s83 = sphi 0, %s80
      %s84 = sphi 0, %s83
      %s100 = sphi 0, %s84
      %s106 = sphi 0, %s108
      %s109 = sphi 0, %s106
      %s110 = sphi 0, %s109
      %s126 = sphi 0, %s110
      %s136 = sphi 0, %s138
      %s139 = sphi 0, %s136
      %s140 = sphi 0, %s139
      %s156 = sphi 0, %s140
      %s164 = sphi 0, %s166
      %s167 = sphi 0, %s164
      %s168 = sphi 0, %s167
      %s184 = sphi 0, %s168
      %s192 = sphi 0, %s194
      %s195 = sphi 0, %s192
      %s196 = sphi 0, %s195
      %s212 = sphi 0, %s196
    $region4: #{resnet_generator_forward.23} parent=1 // loop_header_branch
      %15 = sbr.rel (%p13) target = $region8
    $region5: #{resnet_generator_forward.23} parent=1 // loop_body
      %s17 = ssub.s32 %s12, 1
      %s18 = ssub.s32 %s12, 2
      %s31 = sadd.s32 1, %s22
      %p32 = scmp.ge.s32.totalorder %s31, 3
      %s33 = scalar_select %p32, 0, %s31
      %s34 = sadd.s32 1, %s21
      %s35 = scalar_select %p32, %s34, %s21
      %p36 = scmp.ge.s32.totalorder %s35, 1
      %s37 = scalar_select %p36, 0, %s35
      %s38 = sadd.s32 1, %s20
      %s39 = scalar_select %p36, %s38, %s20
      %p40 = scmp.ge.s32.totalorder %s39, 1
      %s41 = scalar_select %p40, 0, %s39
      %s42 = sadd.s32 1, %s19
      %s43 = scalar_select %p40, %s42, %s19
      %p44 = scmp.ge.s32.totalorder %s43, 2
      %s45 = scalar_select %p44, 0, %s43
      %s46 = ssub.s32 %s19, %s45
      %s47 = ssub.s32 %s21, %s37
      %s48 = sor.u32 %s46, %s47
      %s49 = ssub.s32 %s22, %s33
      %s50 = sor.u32 %s48, %s49
      %p51 = scmp.eq.s32.totalorder %s50, 0
      %s53 = sadd.s32 %s52, 1
      %s54 = scalar_select %p51, %s52, %s53
      %p57 = pneg %p51
      %p58 = scmp.eq.s32.totalorder %s12, 5
      %p59 = por %p57, %p58
      %p60 = scmp.ne.s32.totalorder %s52, %s55
      %p61 = scmp.eq.s32.totalorder %s12, 0
      %p62 = por %p60, %p61
      %p63 = scmp.ne.s32.totalorder %s52, %s55
      %p64 = scmp.eq.s32.totalorder %s17, 5
      %p65 = por %p63, %p64
      %p66 = scmp.ne.s32.totalorder %s55, %s56
      %p67 = scmp.eq.s32.totalorder %s17, 0
      %p68 = por %p66, %p67
      %p69 = scmp.ne.s32.totalorder %s55, %s56
      %p70 = scmp.eq.s32.totalorder %s18, 5
      %p71 = por %p69, %p70
      %p73 = scmp.ne.s32.totalorder %s56, %s72
      %p74 = scmp.eq.s32.totalorder %s18, 0
      %p75 = por %p73, %p74
      %s76 = ssub.s32 %s22, %s33
      %s77 = ssub.s32 %s20, %s41
      %s78 = sor.u32 %s76, %s77
      %p79 = scmp.eq.s32.totalorder %s78, 0
      %s81 = sadd.s32 %s80, 1
      %s82 = scalar_select %p79, %s80, %s81
      %p85 = pneg %p79
      %p86 = scmp.eq.s32.totalorder %s12, 5
      %p87 = por %p85, %p86
      %p88 = scmp.ne.s32.totalorder %s80, %s83
      %p89 = scmp.eq.s32.totalorder %s12, 0
      %p90 = por %p88, %p89
      %p91 = scmp.ne.s32.totalorder %s80, %s83
      %p92 = scmp.eq.s32.totalorder %s17, 5
      %p93 = por %p91, %p92
      %p94 = scmp.ne.s32.totalorder %s83, %s84
      %p95 = scmp.eq.s32.totalorder %s17, 0
      %p96 = por %p94, %p95
      %p97 = scmp.ne.s32.totalorder %s83, %s84
      %p98 = scmp.eq.s32.totalorder %s18, 5
      %p99 = por %p97, %p98
      %p101 = scmp.ne.s32.totalorder %s84, %s100
      %p102 = scmp.eq.s32.totalorder %s18, 0
      %p103 = por %p101, %p102
      %s104 = ssub.s32 %s20, %s41
      %p105 = scmp.eq.s32.totalorder %s104, 0
      %s107 = sadd.s32 %s106, 1
      %s108 = scalar_select %p105, %s106, %s107
      %p111 = pneg %p105
      %p112 = scmp.eq.s32.totalorder %s12, 5
      %p113 = por %p111, %p112
      %p114 = scmp.ne.s32.totalorder %s106, %s109
      %p115 = scmp.eq.s32.totalorder %s12, 0
      %p116 = por %p114, %p115
      %p117 = scmp.ne.s32.totalorder %s106, %s109
      %p118 = scmp.eq.s32.totalorder %s17, 5
      %p119 = por %p117, %p118
      %p120 = scmp.ne.s32.totalorder %s109, %s110
      %p121 = scmp.eq.s32.totalorder %s17, 0
      %p122 = por %p120, %p121
      %p123 = scmp.ne.s32.totalorder %s109, %s110
      %p124 = scmp.eq.s32.totalorder %s18, 5
      %p125 = por %p123, %p124
      %p127 = scmp.ne.s32.totalorder %s110, %s126
      %p128 = scmp.eq.s32.totalorder %s18, 0
      %p129 = por %p127, %p128
      %s130 = ssub.s32 %s19, %s45
      %s131 = ssub.s32 %s21, %s37
      %s132 = sor.u32 %s130, %s131
      %s133 = ssub.s32 %s20, %s41
      %s134 = sor.u32 %s132, %s133
      %p135 = scmp.eq.s32.totalorder %s134, 0
      %s137 = sadd.s32 %s136, 1
      %s138 = scalar_select %p135, %s136, %s137
      %p141 = pneg %p135
      %p142 = scmp.eq.s32.totalorder %s12, 5
      %p143 = por %p141, %p142
      %p144 = scmp.ne.s32.totalorder %s136, %s139
      %p145 = scmp.eq.s32.totalorder %s12, 0
      %p146 = por %p144, %p145
      %p147 = scmp.ne.s32.totalorder %s136, %s139
      %p148 = scmp.eq.s32.totalorder %s17, 5
      %p149 = por %p147, %p148
      %p150 = scmp.ne.s32.totalorder %s139, %s140
      %p151 = scmp.eq.s32.totalorder %s17, 0
      %p152 = por %p150, %p151
      %p153 = scmp.ne.s32.totalorder %s139, %s140
      %p154 = scmp.eq.s32.totalorder %s18, 5
      %p155 = por %p153, %p154
      %p157 = scmp.ne.s32.totalorder %s140, %s156
      %p158 = scmp.eq.s32.totalorder %s18, 0
      %p159 = por %p157, %p158
      %s160 = ssub.s32 %s19, %s45
      %s161 = ssub.s32 %s20, %s41
      %s162 = sor.u32 %s160, %s161
      %p163 = scmp.eq.s32.totalorder %s162, 0
      %s165 = sadd.s32 %s164, 1
      %s166 = scalar_select %p163, %s164, %s165
      %p169 = pneg %p163
      %p170 = scmp.eq.s32.totalorder %s12, 5
      %p171 = por %p169, %p170
      %p172 = scmp.ne.s32.totalorder %s164, %s167
      %p173 = scmp.eq.s32.totalorder %s12, 0
      %p174 = por %p172, %p173
      %p175 = scmp.ne.s32.totalorder %s164, %s167
      %p176 = scmp.eq.s32.totalorder %s17, 5
      %p177 = por %p175, %p176
      %p178 = scmp.ne.s32.totalorder %s167, %s168
      %p179 = scmp.eq.s32.totalorder %s17, 0
      %p180 = por %p178, %p179
      %p181 = scmp.ne.s32.totalorder %s167, %s168
      %p182 = scmp.eq.s32.totalorder %s18, 5
      %p183 = por %p181, %p182
      %p185 = scmp.ne.s32.totalorder %s168, %s184
      %p186 = scmp.eq.s32.totalorder %s18, 0
      %p187 = por %p185, %p186
      %s188 = ssub.s32 %s19, %s45
      %s189 = ssub.s32 %s20, %s41
      %s190 = sor.u32 %s188, %s189
      %p191 = scmp.eq.s32.totalorder %s190, 0
      %s193 = sadd.s32 %s192, 1
      %s194 = scalar_select %p191, %s192, %s193
      %p197 = pneg %p191
      %p198 = scmp.eq.s32.totalorder %s12, 5
      %p199 = por %p197, %p198
      %p200 = scmp.ne.s32.totalorder %s192, %s195
      %p201 = scmp.eq.s32.totalorder %s12, 0
      %p202 = por %p200, %p201
      %p203 = scmp.ne.s32.totalorder %s192, %s195
      %p204 = scmp.eq.s32.totalorder %s17, 5
      %p205 = por %p203, %p204
      %p206 = scmp.ne.s32.totalorder %s195, %s196
      %p207 = scmp.eq.s32.totalorder %s17, 0
      %p208 = por %p206, %p207
      %p209 = scmp.ne.s32.totalorder %s195, %s196
      %p210 = scmp.eq.s32.totalorder %s18, 5
      %p211 = por %p209, %p210
      %p213 = scmp.ne.s32.totalorder %s196, %s212
      %p214 = scmp.eq.s32.totalorder %s18, 0
      %p215 = por %p213, %p214
      %p216 = scmp.le.s32.totalorder 1, %s12
      %p217 = scmp.lt.s32.totalorder %s12, 7
      %p218 = pnand %p216, %p217
      %p219 = pneg %p218
      // Predicated region
      $region9: #{resnet_generator_forward.23} parent=5 // pred_check
        _
      $region10: #{resnet_generator_forward.23} parent=5 // pred_check_branch
        %221 = sbr.rel (%p218) target = $region12
      $region11: #{resnet_generator_forward.23} parent=5 // pred_region
        %s222 = ssub.s32 %s12, 1
        // Predicated region
        $region13: #{resnet_generator_forward.23} parent=11 // pred_check
          %p223 = pneg %p122
        $region14: #{resnet_generator_forward.23} parent=11 // pred_check_branch
          %225 = sbr.rel (%p223) target = $region16
        $region15: #{resnet_generator_forward.23} parent=11 // pred_region
          %p226 = scmp.lt.s32.totalorder %s24, 0
          %s227 = scalar_select %p226, %s24, 0
          %s228 = scalar_lea.vmem %s2, %s227
        $region16: #{resnet_generator_forward.23} parent=11 // pred_fallthru
          _
      $region12: #{resnet_generator_forward.23} parent=5 // pred_fallthru
        _
      %p229 = scmp.lt.s32.totalorder %s12, 6
      // Predicated region
      $region17: #{resnet_generator_forward.23} parent=5 // pred_check
        %p230 = pneg %p229
      $region18: #{resnet_generator_forward.23} parent=5 // pred_check_branch
        %232 = sbr.rel (%p230) target = $region20
      $region19: #{resnet_generator_forward.23} parent=5 // pred_region
        // Predicated region
        $region21: #{resnet_generator_forward.23} parent=19 // pred_check
          %p233 = pneg %p62
        $region22: #{resnet_generator_forward.23} parent=19 // pred_check_branch
          %235 = sbr.rel (%p233) target = $region24
        $region23: #{resnet_generator_forward.23} parent=19 // pred_region
          %s236 = sand.u32 %s52, 1
          %s237 = sand.u32 %s52, 1
          %s238 = smul.addr %s237, 24
          %s239 = scalar_lea.vmem [#allocation3], %s238
          %s240 = smul.u32 2, %s21
          %s241 = smul.u32 3, %s22
          %s242 = smul.addr %s240, 9
          %s243 = sadd.s32 %s241, %s242
          %s244 = smul.addr %s19, 18
          %s245 = sadd.s32 %s243, %s244
          %s246 = smul.addr %s245, 4
          %s247 = scalar_lea.vmem %s0, %s246
          // Predicated region
          $region25: #{resnet_generator_forward.23} parent=23 // pred_check
            _
          $region26: #{resnet_generator_forward.23} parent=23 // pred_check_branch
            %249 = sbr.rel (0) target = $region28
          $region27: #{resnet_generator_forward.23} parent=23 // pred_region
            // Predicated region
            $region29: #{resnet_generator_forward.23} parent=27 // pred_check
              _
            $region30: #{resnet_generator_forward.23} parent=27 // pred_check_branch
              %251 = sbr.rel (0) target = $region32
            $region31: #{resnet_generator_forward.23} parent=27 // pred_region
              %s252 = scalar_lea.vmem %s247, 8
              %s253 = scalar_lea.vmem %s239, 8 [#allocation3]
              loop: start=0, step=1, limit=1
              $region33: #{resnet_generator_forward.23} parent=31 // loop_pre_header
                _
              $region34: #{resnet_generator_forward.23} parent=31 // loop_header
                %s255 = sphi 0, %s259
                %p256 = scmp.ge.s32.totalorder %s255, 1
                %s260 = sphi %s247, %s247
                %s261 = sphi %s239, %s239
              $region35: #{resnet_generator_forward.23} parent=31 // loop_header_branch
                %258 = sbr.rel (%p256) target = $region39
              $region36: #{resnet_generator_forward.23} parent=31 // loop_body
                %v262 = vld [vmem:[%s260] sm:$0xff]
                %263 = vst [vmem:[%s261] sm:$0xff] %v262
                %v264 = vld [vmem:[%s260 + $0x24] sm:$0xff]
                %265 = vst [vmem:[%s261 + $0xc] sm:$0xff] %v264
              $region37: #{resnet_generator_forward.23} parent=31 // loop_footer
                %s259 = sadd.s32 1, %s255
              $region38: #{resnet_generator_forward.23} parent=31 // loop_footer_branch
                %254 = sbr.rel target = $region34
              $region39: #{resnet_generator_forward.23} parent=31 // loop_exit
                _
              %s267 = ssub.s32 16, 1
              loop: start=0, step=1, limit=1
              $region40: #{resnet_generator_forward.23} parent=31 // loop_pre_header
                _
              $region41: #{resnet_generator_forward.23} parent=31 // loop_header
                %s269 = sphi 0, %s273
                %p270 = scmp.ge.s32.totalorder %s269, 1
                %s274 = sphi %s252, %s252
                %s275 = sphi %s253, %s253
              $region42: #{resnet_generator_forward.23} parent=31 // loop_header_branch
                %272 = sbr.rel (%p270) target = $region46
              $region43: #{resnet_generator_forward.23} parent=31 // loop_body
                %v276 = vld [vmem:[%s274] sm:%s267]
                %277 = vst [vmem:[%s275] sm:%s267] %v276
                %v278 = vld [vmem:[%s274 + $0x24] sm:%s267]
                %279 = vst [vmem:[%s275 + $0xc] sm:%s267] %v278
              $region44: #{resnet_generator_forward.23} parent=31 // loop_footer
                %s273 = sadd.s32 1, %s269
              $region45: #{resnet_generator_forward.23} parent=31 // loop_footer_branch
                %268 = sbr.rel target = $region41
              $region46: #{resnet_generator_forward.23} parent=31 // loop_exit
                _
            $region32: #{resnet_generator_forward.23} parent=27 // pred_fallthru
              _
          $region28: #{resnet_generator_forward.23} parent=23 // pred_fallthru
            _
          %280 = vnop
        $region24: #{resnet_generator_forward.23} parent=19 // pred_fallthru
          _
        // Predicated region
        $region47: #{resnet_generator_forward.23} parent=19 // pred_check
          %p281 = pneg %p90
        $region48: #{resnet_generator_forward.23} parent=19 // pred_check_branch
          %283 = sbr.rel (%p281) target = $region50
        $region49: #{resnet_generator_forward.23} parent=19 // pred_region
          %s284 = smul.u32 48, %s22
          %p285 = scmp.lt.s32.totalorder %s284, 143
          %s286 = scalar_select %p285, %s284, 143
          %p287 = scmp.lt.s32.totalorder %s20, 0
          %s288 = scalar_select %p287, %s20, 0
          %s289 = sadd.s32 %s288, %s286
          %s290 = smul.addr %s289, 4
          %s291 = scalar_lea.vmem %s1, %s290
          %s292 = smul.u32 48, %s22
        $region50: #{resnet_generator_forward.23} parent=19 // pred_fallthru
          _
      $region20: #{resnet_generator_forward.23} parent=5 // pred_fallthru
        _
      %p293 = scmp.le.s32.totalorder 1, %s12
      %p294 = scmp.lt.s32.totalorder %s12, 7
      %p295 = pnand %p293, %p294
      %p296 = pneg %p295
      // Predicated region
      $region51: #{resnet_generator_forward.23} parent=5 // pred_check
        _
      $region52: #{resnet_generator_forward.23} parent=5 // pred_check_branch
        %298 = sbr.rel (%p295) target = $region54
      $region53: #{resnet_generator_forward.23} parent=5 // pred_region
        %s299 = ssub.s32 %s12, 1
        %s300 = sand.u32 %s55, 1
        %s301 = sand.u32 %s55, 1
        %s302 = smul.addr %s301, 24
        %s303 = scalar_lea.vmem [#allocation3], %s302
        // Predicated region
        $region55: #{resnet_generator_forward.23} parent=53 // pred_check
          %p304 = pneg %p68
        $region56: #{resnet_generator_forward.23} parent=53 // pred_check_branch
          %306 = sbr.rel (%p304) target = $region58
        $region57: #{resnet_generator_forward.23} parent=53 // pred_region
          _
        $region58: #{resnet_generator_forward.23} parent=53 // pred_fallthru
          _
        %s307 = sand.u32 %s55, 1
        %s308 = sand.u32 %s55, 1
        %s309 = smul.addr %s308, 24
        %s310 = scalar_lea.vmem [#allocation3], %s309
        %p311 = pneg %p68
        %p312 = pneg %p65
        %s313 = smul.u32 48, %s26
        %p314 = scmp.lt.s32.totalorder %s313, 143
        %s315 = scalar_select %p314, %s313, 143
        %p316 = scmp.lt.s32.totalorder %s24, 0
        %s317 = scalar_select %p316, %s24, 0
        %s318 = sadd.s32 %s317, %s315
        %s319 = smul.addr %s318, 4
        %s320 = scalar_lea.vmem %s1, %s319
        %p321 = pneg %p96
        %p322 = pneg %p93
        %p323 = scmp.lt.s32.totalorder %s24, 0
        %s324 = scalar_select %p323, %s24, 0
        %s325 = scalar_lea.vmem %s2, %s324
        %p326 = pneg %p122
        %p327 = pneg %p119
        %p328 = pneg %p152
        %p329 = pneg %p149
        %s330 = smul.u32 2, %s25
        %p331 = scmp.lt.s32.totalorder %s23, 1
        %s332 = scalar_select %p331, %s23, 1
        %p333 = scmp.lt.s32.totalorder %s330, 1
        %s334 = scalar_select %p333, %s330, 1
        %p335 = scmp.lt.s32.totalorder %s24, 0
        %s336 = scalar_select %p335, %s24, 0
        %s337 = sadd.s32 %s336, %s334
        %s338 = smul.addr %s332, 2
        %s339 = sadd.s32 %s337, %s338
        %s340 = smul.addr %s339, 8
        %s341 = scalar_lea.vmem %s3, %s340
        %p342 = pneg %p180
        %p343 = pneg %p177
        %p344 = scmp.lt.s32.totalorder %s23, 1
        %s345 = scalar_select %p344, %s23, 1
        %p346 = scmp.lt.s32.totalorder %s24, 0
        %s347 = scalar_select %p346, %s24, 0
        %s348 = sadd.s32 %s347, %s345
        %s349 = scalar_lea.vmem %s4, %s348
        %p350 = pneg %p208
        %p351 = pneg %p205
        %p352 = scmp.lt.s32.totalorder %s23, 1
        %s353 = scalar_select %p352, %s23, 1
        %p354 = scmp.lt.s32.totalorder %s24, 0
        %s355 = scalar_select %p354, %s24, 0
        %s356 = sadd.s32 %s355, %s353
        %s357 = scalar_lea.vmem %s5, %s356
        %s358 = smul.u32 2, %s25
        %s359 = smul.u32 3, %s26
        %s360 = smul.u32 48, %s26
        %p361 = scmp.lt.s32.totalorder %s360, 143
        %s362 = scalar_select %p361, %s360, 143
        %p363 = scmp.lt.s32.totalorder %s24, 0
        %s364 = scalar_select %p363, %s24, 0
        %s365 = sadd.s32 %s364, %s362
        %s366 = smul.addr %s365, 4
        %s367 = scalar_lea.vmem %s1, %s366
        %s368 = smul.u32 48, %s26
        %p369 = scmp.lt.s32.totalorder %s24, 0
        %s370 = scalar_select %p369, %s24, 0
        %s371 = scalar_lea.vmem %s2, %s370
        %s372 = smul.u32 2, %s25
        %p373 = scmp.lt.s32.totalorder %s23, 1
        %s374 = scalar_select %p373, %s23, 1
        %p375 = scmp.lt.s32.totalorder %s372, 1
        %s376 = scalar_select %p375, %s372, 1
        %p377 = scmp.lt.s32.totalorder %s24, 0
        %s378 = scalar_select %p377, %s24, 0
        %s379 = sadd.s32 %s378, %s376
        %s380 = smul.addr %s374, 2
        %s381 = sadd.s32 %s379, %s380
        %s382 = smul.addr %s381, 8
        %s383 = scalar_lea.vmem %s3, %s382
        %s384 = smul.u32 2, %s25
        %p385 = scmp.lt.s32.totalorder %s23, 1
        %s386 = scalar_select %p385, %s23, 1
        %p387 = scmp.lt.s32.totalorder %s24, 0
        %s388 = scalar_select %p387, %s24, 0
        %s389 = sadd.s32 %s388, %s386
        %s390 = scalar_lea.vmem %s4, %s389
        %p391 = scmp.lt.s32.totalorder %s23, 1
        %s392 = scalar_select %p391, %s23, 1
        %p393 = scmp.lt.s32.totalorder %s24, 0
        %s394 = scalar_select %p393, %s24, 0
        %s395 = sadd.s32 %s394, %s392
        %s396 = scalar_lea.vmem %s5, %s395
        %p397 = scmp.eq.s32.totalorder %s26, 0
        // Predicated region
        $region59: #{resnet_generator_forward.23} parent=53 // pred_check
          %p398 = pneg %p397
        $region60: #{resnet_generator_forward.23} parent=53 // pred_check_branch
          %400 = sbr.rel (%p398) target = $region62
        $region61: #{resnet_generator_forward.23} parent=53 // pred_region
          %401 = vst [vmem:[#allocation2] sm:$0xff] 0.0
          %402 = vst [vmem:[#allocation2 + $0x8] sm:$0xff] 0.0
        $region62: #{resnet_generator_forward.23} parent=53 // pred_fallthru
          _
        %p403 = scmp.eq.s32.totalorder %s25, 0
        %p404 = pnand %p403, %p397
        %p405 = pneg %p404
        // Predicated region
        $region63: #{resnet_generator_forward.23} parent=53 // pred_check
          _
        $region64: #{resnet_generator_forward.23} parent=53 // pred_check_branch
          %407 = sbr.rel (%p404) target = $region66
        $region65: #{resnet_generator_forward.23} parent=53 // pred_region
          %408 = vst [vmem:[%s390] sm:$0x1] 0.0
          %409 = vst [vmem:[%s396] sm:$0x1] 0.0
        $region66: #{resnet_generator_forward.23} parent=53 // pred_fallthru
          _
        %v410 = vld [vmem:[#allocation2] sm:$0xff]
        %v411 = vld [vmem:[#allocation2 + $0x8] sm:$0xff]
        %v412 = vld [vmem:[%s303] sm:$0xff]
        %v413 = vld [vmem:[%s303 + $0x8] sm:$0xf]
        %v414 = vld [vmem:[%s303 + $0xc] sm:$0xff]
        %v415 = vld [vmem:[%s303 + $0x14] sm:$0xf]
        %v416 = vld [vmem:[%s367] sm:$0xf]
        %v417 = vld [vmem:[%s367 + $0x4] sm:$0xf]
        %v418 = vld [vmem:[%s367 + $0x8] sm:$0xf]
        %v419 = vld [vmem:[%s367 + $0xc] sm:$0xf]
        %v420 = vld [vmem:[%s367 + $0x10] sm:$0xf]
        %v421 = vld [vmem:[%s367 + $0x14] sm:$0xf]
        %v422 = vld [vmem:[%s367 + $0x18] sm:$0xf]
        %v423 = vld [vmem:[%s367 + $0x1c] sm:$0xf]
        %v424 = vld [vmem:[%s367 + $0x20] sm:$0xf]
        %v425 = vld [vmem:[%s367 + $0x24] sm:$0xf]
        %v426 = vld [vmem:[%s367 + $0x28] sm:$0xf]
        %v427 = vld [vmem:[%s367 + $0x2c] sm:$0xf]
        %v428 = vld [vmem:[%s367 + $0x30] sm:$0xf]
        %v429 = vld [vmem:[%s367 + $0x34] sm:$0xf]
        %v430 = vld [vmem:[%s367 + $0x38] sm:$0xf]
        %v431 = vld [vmem:[%s367 + $0x3c] sm:$0xf]
        %v432 = vld [vmem:[%s367 + $0x40] sm:$0xf]
        %v433 = vld [vmem:[%s367 + $0x44] sm:$0xf]
        %v434 = vld [vmem:[%s367 + $0x48] sm:$0xf]
        %v435 = vld [vmem:[%s367 + $0x4c] sm:$0xf]
        %v436 = vld [vmem:[%s367 + $0x50] sm:$0xf]
        %v437 = vld [vmem:[%s367 + $0x54] sm:$0xf]
        %v438 = vld [vmem:[%s367 + $0x58] sm:$0xf]
        %v439 = vld [vmem:[%s367 + $0x5c] sm:$0xf]
        %v440 = vld [vmem:[%s367 + $0x60] sm:$0xf]
        %v441 = vld [vmem:[%s367 + $0x64] sm:$0xf]
        %v442 = vld [vmem:[%s367 + $0x68] sm:$0xf]
        %v443 = vld [vmem:[%s367 + $0x6c] sm:$0xf]
        %v444 = vld [vmem:[%s367 + $0x70] sm:$0xf]
        %v445 = vld [vmem:[%s367 + $0x74] sm:$0xf]
        %v446 = vld [vmem:[%s367 + $0x78] sm:$0xf]
        %v447 = vld [vmem:[%s367 + $0x7c] sm:$0xf]
        %v448 = vld [vmem:[%s367 + $0x80] sm:$0xf]
        %v449 = vld [vmem:[%s367 + $0x84] sm:$0xf]
        %v450 = vld [vmem:[%s367 + $0x88] sm:$0xf]
        %v451 = vld [vmem:[%s367 + $0x8c] sm:$0xf]
        %v452 = vld [vmem:[%s367 + $0x90] sm:$0xf]
        %v453 = vld [vmem:[%s367 + $0x94] sm:$0xf]
        %v454 = vld [vmem:[%s367 + $0x98] sm:$0xf]
        %v455 = vld [vmem:[%s367 + $0x9c] sm:$0xf]
        %v456 = vld [vmem:[%s367 + $0xa0] sm:$0xf]
        %v457 = vld [vmem:[%s367 + $0xa4] sm:$0xf]
        %v458 = vld [vmem:[%s367 + $0xa8] sm:$0xf]
        %v459 = vld [vmem:[%s367 + $0xac] sm:$0xf]
        %v460 = vld [vmem:[%s367 + $0xb0] sm:$0xf]
        %v461 = vld [vmem:[%s367 + $0xb4] sm:$0xf]
        %v462 = vld [vmem:[%s367 + $0xb8] sm:$0xf]
        %v463 = vld [vmem:[%s367 + $0xbc] sm:$0xf]
        %v468 = vunpack.c.l.b16 %v412
        %v469 = vunpack.c.h.b16 %v412
        %v470 = vunpack.c.l.b16 %v413
        %v471 = vunpack.c.l.b16 %v414
        %v472 = vunpack.c.h.b16 %v414
        %v473 = vunpack.c.l.b16 %v415
        %v474 = vpack.c.b16 %v471, %v468
        %v475 = vpack.c.b16 %v472, %v469
        %v476 = vpack.c.b16 %v473, %v470
        %v528 = vunpack.c.l.b16 %v416
        %v529 = vunpack.c.l.b16 %v417
        %v530 = vunpack.c.l.b16 %v418
        %v531 = vunpack.c.l.b16 %v419
        %v532 = vunpack.c.l.b16 %v420
        %v533 = vunpack.c.l.b16 %v421
        %v534 = vunpack.c.l.b16 %v422
        %v535 = vunpack.c.l.b16 %v423
        %v536 = vunpack.c.l.b16 %v424
        %v537 = vunpack.c.l.b16 %v425
        %v538 = vunpack.c.l.b16 %v426
        %v539 = vunpack.c.l.b16 %v427
        %v540 = vunpack.c.l.b16 %v428
        %v541 = vunpack.c.l.b16 %v429
        %v542 = vunpack.c.l.b16 %v430
        %v543 = vunpack.c.l.b16 %v431
        %v544 = vunpack.c.l.b16 %v432
        %v545 = vunpack.c.l.b16 %v433
        %v546 = vunpack.c.l.b16 %v434
        %v547 = vunpack.c.l.b16 %v435
        %v548 = vunpack.c.l.b16 %v436
        %v549 = vunpack.c.l.b16 %v437
        %v550 = vunpack.c.l.b16 %v438
        %v551 = vunpack.c.l.b16 %v439
        %v552 = vunpack.c.l.b16 %v440
        %v553 = vunpack.c.l.b16 %v441
        %v554 = vunpack.c.l.b16 %v442
        %v555 = vunpack.c.l.b16 %v443
        %v556 = vunpack.c.l.b16 %v444
        %v557 = vunpack.c.l.b16 %v445
        %v558 = vunpack.c.l.b16 %v446
        %v559 = vunpack.c.l.b16 %v447
        %v560 = vunpack.c.l.b16 %v448
        %v561 = vunpack.c.l.b16 %v449
        %v562 = vunpack.c.l.b16 %v450
        %v563 = vunpack.c.l.b16 %v451
        %v564 = vunpack.c.l.b16 %v452
        %v565 = vunpack.c.l.b16 %v453
        %v566 = vunpack.c.l.b16 %v454
        %v567 = vunpack.c.l.b16 %v455
        %v568 = vunpack.c.l.b16 %v456
        %v569 = vunpack.c.l.b16 %v457
        %v570 = vunpack.c.l.b16 %v458
        %v571 = vunpack.c.l.b16 %v459
        %v572 = vunpack.c.l.b16 %v460
        %v573 = vunpack.c.l.b16 %v461
        %v574 = vunpack.c.l.b16 %v462
        %v575 = vunpack.c.l.b16 %v463
        %v576 = vpack.c.b16 %v529, %v528
        %v577 = vpack.c.b16 %v531, %v530
        %v578 = vpack.c.b16 %v533, %v532
        %v579 = vpack.c.b16 %v535, %v534
        %v580 = vpack.c.b16 %v537, %v536
        %v581 = vpack.c.b16 %v539, %v538
        %v582 = vpack.c.b16 %v541, %v540
        %v583 = vpack.c.b16 %v543, %v542
        %v584 = vpack.c.b16 %v545, %v544
        %v585 = vpack.c.b16 %v547, %v546
        %v586 = vpack.c.b16 %v549, %v548
        %v587 = vpack.c.b16 %v551, %v550
        %v588 = vpack.c.b16 %v553, %v552
        %v589 = vpack.c.b16 %v555, %v554
        %v590 = vpack.c.b16 %v557, %v556
        %v591 = vpack.c.b16 %v559, %v558
        %v592 = vpack.c.b16 %v561, %v560
        %v593 = vpack.c.b16 %v563, %v562
        %v594 = vpack.c.b16 %v565, %v564
        %v595 = vpack.c.b16 %v567, %v566
        %v596 = vpack.c.b16 %v569, %v568
        %v597 = vpack.c.b16 %v571, %v570
        %v598 = vpack.c.b16 %v573, %v572
        %v599 = vpack.c.b16 %v575, %v574
        %624 = vmatpush.bf16.msra.mxu0 %v583
        %625 = vmatpush.bf16.msra.mxu0 %v582
        %626 = vmatpush.bf16.msra.mxu0 %v581
        %627 = vmatpush.bf16.msra.mxu0 %v580
        %628 = vmatpush.bf16.msra.mxu0 %v579
        %629 = vmatpush.bf16.msra.mxu0 %v578
        %630 = vmatpush.bf16.msra.mxu0 %v577
        %631 = vmatpush.bf16.msra.mxu0 %v576
        %632 = vmatmul.bf16.gmra.mxu0 %v474
        %v633 = vpop.f32.mrf.mxu0
        %v634 = vadd.f32 0.0, %v633
        %v635 = vpop.f32.mrf.mxu0
        %v636 = vadd.f32 0.0, %v635
        %637 = vdwg.mxu0
        %638 = vmatpush.bf16.msra.mxu0 %v591
        %639 = vmatpush.bf16.msra.mxu0 %v590
        %640 = vmatpush.bf16.msra.mxu0 %v589
        %641 = vmatpush.bf16.msra.mxu0 %v588
        %642 = vmatpush.bf16.msra.mxu0 %v587
        %643 = vmatpush.bf16.msra.mxu0 %v586
        %644 = vmatpush.bf16.msra.mxu0 %v585
        %645 = vmatpush.bf16.msra.mxu0 %v584
        %646 = vmatmul.bf16.gmra.mxu0 %v475
        %v647 = vpop.f32.mrf.mxu0
        %v648 = vadd.f32 %v634, %v647
        %v649 = vpop.f32.mrf.mxu0
        %v650 = vadd.f32 %v636, %v649
        %651 = vdwg.mxu0
        %652 = vmatpush.bf16.msra.mxu0 %v599
        %653 = vmatpush.bf16.msra.mxu0 %v598
        %654 = vmatpush.bf16.msra.mxu0 %v597
        %655 = vmatpush.bf16.msra.mxu0 %v596
        %656 = vmatpush.bf16.msra.mxu0 %v595
        %657 = vmatpush.bf16.msra.mxu0 %v594
        %658 = vmatpush.bf16.msra.mxu0 %v593
        %659 = vmatpush.bf16.msra.mxu0 %v592
        %660 = vmatmul.bf16.gmra.mxu0 %v476
        %v661 = vpop.f32.mrf.mxu0
        %v662 = vadd.f32 %v648, %v661
        %v663 = vpop.f32.mrf.mxu0
        %v664 = vadd.f32 %v650, %v663
        %665 = vdwg.mxu0
        %v666 = vadd.f32 %v410, %v662
        %v667 = vadd.f32 %v411, %v664
        %668 = vst [vmem:[#allocation2] sm:$0xff] %v666
        %669 = vst [vmem:[#allocation2 + $0x8] sm:$0xff] %v667
        %p670 = scmp.eq.s32.totalorder %s26, 2
        // Predicated region
        $region67: #{resnet_generator_forward.23} parent=53 // pred_check
          %p671 = pneg %p670
        $region68: #{resnet_generator_forward.23} parent=53 // pred_check_branch
          %673 = sbr.rel (%p671) target = $region70
        $region69: #{resnet_generator_forward.23} parent=53 // pred_region
          %v674 = vld [vmem:[#allocation2] sm:$0xff]
          %v675 = vld [vmem:[#allocation2 + $0x8] sm:$0xff]
          %v676 = vld [vmem:[%s371] sm:$0x1]
          %v678 = vperm.slane %v676, 0
          %v680 = vadd.f32 %v674, %v678
          %v681 = vadd.f32 %v675, %v678
          %v682 = vld [vmem:[%s390] sm:$0x1]
          %v683 = vadd.f32 %v680, %v681
          %v684 = vrot.slane %v683, 4
          %v685 = vadd.f32 %v683, %v684
          %v686 = vrot.slane %v685, 2
          %v687 = vadd.f32 %v685, %v686
          %v688 = vrot.slane %v687, 1
          %v689 = vadd.f32 %v687, %v688
          %v690 = vadd.f32 %v682, %v689
          %691 = vst [vmem:[%s390] sm:$0x1] %v690
          %v692 = vld [vmem:[%s396] sm:$0x1]
          %v693 = vmul.f32 %v680, %v680
          %v694 = vmul.f32 %v681, %v681
          %v695 = vadd.f32 %v693, %v694
          %v696 = vrot.slane %v695, 4
          %v697 = vadd.f32 %v695, %v696
          %v698 = vrot.slane %v697, 2
          %v699 = vadd.f32 %v697, %v698
          %v700 = vrot.slane %v699, 1
          %v701 = vadd.f32 %v699, %v700
          %v702 = vadd.f32 %v692, %v701
          %703 = vst [vmem:[%s396] sm:$0x1] %v702
          %704 = vst [vmem:[%s383] sm:$0xff] %v680
          %705 = vst [vmem:[%s383 + $0x8] sm:$0xff] %v681
        $region70: #{resnet_generator_forward.23} parent=53 // pred_fallthru
          _
        %s706 = smul.u32 2, %s25
        %p707 = scmp.lt.s32.totalorder %s23, 1
        %s708 = scalar_select %p707, %s23, 1
        %p709 = scmp.lt.s32.totalorder %s706, 1
        %s710 = scalar_select %p709, %s706, 1
        %p711 = scmp.lt.s32.totalorder %s24, 0
        %s712 = scalar_select %p711, %s24, 0
        %s713 = sadd.s32 %s712, %s710
        %s714 = smul.addr %s708, 2
        %s715 = sadd.s32 %s713, %s714
        %s716 = smul.addr %s715, 8
        %s717 = scalar_lea.vmem %s3, %s716
        %p718 = scmp.lt.s32.totalorder %s23, 1
        %s719 = scalar_select %p718, %s23, 1
        %p720 = scmp.lt.s32.totalorder %s24, 0
        %s721 = scalar_select %p720, %s24, 0
        %s722 = sadd.s32 %s721, %s719
        %s723 = scalar_lea.vmem %s4, %s722
        %p724 = scmp.lt.s32.totalorder %s23, 1
        %s725 = scalar_select %p724, %s23, 1
        %p726 = scmp.lt.s32.totalorder %s24, 0
        %s727 = scalar_select %p726, %s24, 0
        %s728 = sadd.s32 %s727, %s725
        %s729 = scalar_lea.vmem %s5, %s728
        // Predicated region
        $region71: #{resnet_generator_forward.23} parent=53 // pred_check
          %p730 = pneg %p149
        $region72: #{resnet_generator_forward.23} parent=53 // pred_check_branch
          %732 = sbr.rel (%p730) target = $region74
        $region73: #{resnet_generator_forward.23} parent=53 // pred_region
          %s733 = smul.u32 2, %s25
        $region74: #{resnet_generator_forward.23} parent=53 // pred_fallthru
          _
        // Predicated region
        $region75: #{resnet_generator_forward.23} parent=53 // pred_check
          %p734 = pneg %p177
        $region76: #{resnet_generator_forward.23} parent=53 // pred_check_branch
          %736 = sbr.rel (%p734) target = $region78
        $region77: #{resnet_generator_forward.23} parent=53 // pred_region
          _
        $region78: #{resnet_generator_forward.23} parent=53 // pred_fallthru
          _
        // Predicated region
        $region79: #{resnet_generator_forward.23} parent=53 // pred_check
          %p737 = pneg %p205
        $region80: #{resnet_generator_forward.23} parent=53 // pred_check_branch
          %739 = sbr.rel (%p737) target = $region82
        $region81: #{resnet_generator_forward.23} parent=53 // pred_region
          _
        $region82: #{resnet_generator_forward.23} parent=53 // pred_fallthru
          _
      $region54: #{resnet_generator_forward.23} parent=5 // pred_fallthru
        _
      %p740 = scmp.le.s32.totalorder 2, %s12
      // Predicated region
      $region83: #{resnet_generator_forward.23} parent=5 // pred_check
        %p741 = pneg %p740
      $region84: #{resnet_generator_forward.23} parent=5 // pred_check_branch
        %743 = sbr.rel (%p741) target = $region86
      $region85: #{resnet_generator_forward.23} parent=5 // pred_region
        %s744 = ssub.s32 %s12, 2
        // Predicated region
        $region87: #{resnet_generator_forward.23} parent=85 // pred_check
          %p745 = pneg %p155
        $region88: #{resnet_generator_forward.23} parent=85 // pred_check_branch
          %747 = sbr.rel (%p745) target = $region90
        $region89: #{resnet_generator_forward.23} parent=85 // pred_region
          %s748 = smul.u32 2, %s29
          %p749 = scmp.lt.s32.totalorder %s27, 1
          %s750 = scalar_select %p749, %s27, 1
          %p751 = scmp.lt.s32.totalorder %s748, 1
          %s752 = scalar_select %p751, %s748, 1
          %p753 = scmp.lt.s32.totalorder %s28, 0
          %s754 = scalar_select %p753, %s28, 0
          %s755 = sadd.s32 %s754, %s752
          %s756 = smul.addr %s750, 2
          %s757 = sadd.s32 %s755, %s756
          %s758 = smul.addr %s757, 8
          %s759 = scalar_lea.vmem %s3, %s758
        $region90: #{resnet_generator_forward.23} parent=85 // pred_fallthru
          _
        // Predicated region
        $region91: #{resnet_generator_forward.23} parent=85 // pred_check
          %p760 = pneg %p183
        $region92: #{resnet_generator_forward.23} parent=85 // pred_check_branch
          %762 = sbr.rel (%p760) target = $region94
        $region93: #{resnet_generator_forward.23} parent=85 // pred_region
          %p763 = scmp.lt.s32.totalorder %s27, 1
          %s764 = scalar_select %p763, %s27, 1
          %p765 = scmp.lt.s32.totalorder %s28, 0
          %s766 = scalar_select %p765, %s28, 0
          %s767 = sadd.s32 %s766, %s764
          %s768 = scalar_lea.vmem %s4, %s767
        $region94: #{resnet_generator_forward.23} parent=85 // pred_fallthru
          _
        // Predicated region
        $region95: #{resnet_generator_forward.23} parent=85 // pred_check
          %p769 = pneg %p211
        $region96: #{resnet_generator_forward.23} parent=85 // pred_check_branch
          %771 = sbr.rel (%p769) target = $region98
        $region97: #{resnet_generator_forward.23} parent=85 // pred_region
          %p772 = scmp.lt.s32.totalorder %s27, 1
          %s773 = scalar_select %p772, %s27, 1
          %p774 = scmp.lt.s32.totalorder %s28, 0
          %s775 = scalar_select %p774, %s28, 0
          %s776 = sadd.s32 %s775, %s773
          %s777 = scalar_lea.vmem %s5, %s776
        $region98: #{resnet_generator_forward.23} parent=85 // pred_fallthru
          _
      $region86: #{resnet_generator_forward.23} parent=5 // pred_fallthru
        _
    $region6: #{resnet_generator_forward.23} parent=1 // loop_footer
      %s16 = sadd.s32 1, %s12
    $region7: #{resnet_generator_forward.23} parent=1 // loop_footer_branch
      %11 = sbr.rel target = $region3
    $region8: #{resnet_generator_forward.23} parent=1 // loop_exit
      _

// kernel: resnet_generator_forward.28
$region0: #{resnet_generator_forward.28}
  #allocation0 [shape = 'u32[]', space=smem, size = 0x4, offset = 0x4, fixed_abs, tag = 'smem constant byte address 0x4 - core index']
  #allocation1 [shape = 'u32[72,128]{1,0:T(1,128)}', space=vmem, size = 0x9000, scoped, tag = 'internal scratch']
  %s0 = inlined_call_operand.vmem [shape: f32[2,16,128], index: 0, kind: input, shape index: {}]
  %s1 = inlined_call_operand.vmem [shape: f32[2,1,128], index: 1, kind: input, shape index: {}]
  %s2 = inlined_call_operand.vmem [shape: f32[2,1,128], index: 2, kind: input, shape index: {}]
  %s3 = inlined_call_operand.vmem [shape: f32[2,16,128], index: 3, kind: input, shape index: {}]
  %s4 = inlined_call_operand.vmem [shape: f32[2,16,128], index: 4, kind: output, shape index: {}]
  %s5 = sld [smem:[#allocation0]]
  $region49: #{resnet_generator_forward.28} parent=0
    _
  %s7 = ssub.s32 1, %s5
  %s8 = scalar_select 0, %s7, %s5
  loop: start=0, step=1, limit=4
  $region2: #{resnet_generator_forward.28} parent=0 // loop_pre_header
    _
  $region3: #{resnet_generator_forward.28} parent=0 // loop_header
    %s10 = sphi 0, %s14
    %p11 = scmp.ge.s32.totalorder %s10, 4
    %s17 = sphi 0, %s36
    %s18 = sphi 0, %s32
    %s19 = sphi 0, %s28
    %s20 = sphi 0, %s17
    %s21 = sphi 0, %s18
    %s22 = sphi 0, %s19
    %s23 = sphi 0, %s20
    %s24 = sphi 0, %s21
    %s25 = sphi 0, %s22
    %s43 = sphi 0, %s45
    %s46 = sphi 0, %s43
    %s47 = sphi 0, %s46
    %s63 = sphi 0, %s47
    %s71 = sphi 0, %s73
    %s74 = sphi 0, %s71
    %s75 = sphi 0, %s74
    %s91 = sphi 0, %s75
    %s99 = sphi 0, %s101
    %s102 = sphi 0, %s99
    %s103 = sphi 0, %s102
    %s119 = sphi 0, %s103
    %s129 = sphi 0, %s131
    %s132 = sphi 0, %s129
    %s133 = sphi 0, %s132
    %s149 = sphi 0, %s133
    %s159 = sphi 0, %s161
    %s162 = sphi 0, %s159
    %s163 = sphi 0, %s162
    %s179 = sphi 0, %s163
  $region4: #{resnet_generator_forward.28} parent=0 // loop_header_branch
    %13 = sbr.rel (%p11) target = $region8
  $region5: #{resnet_generator_forward.28} parent=0 // loop_body
    %s15 = ssub.s32 %s10, 1
    %s16 = ssub.s32 %s10, 2
    %s26 = sadd.s32 1, %s19
    %p27 = scmp.ge.s32.totalorder %s26, 1
    %s28 = scalar_select %p27, 0, %s26
    %s29 = sadd.s32 1, %s18
    %s30 = scalar_select %p27, %s29, %s18
    %p31 = scmp.ge.s32.totalorder %s30, 1
    %s32 = scalar_select %p31, 0, %s30
    %s33 = sadd.s32 1, %s17
    %s34 = scalar_select %p31, %s33, %s17
    %p35 = scmp.ge.s32.totalorder %s34, 2
    %s36 = scalar_select %p35, 0, %s34
    %s37 = ssub.s32 %s17, %s36
    %s38 = ssub.s32 %s18, %s32
    %s39 = sor.u32 %s37, %s38
    %s40 = ssub.s32 %s19, %s28
    %s41 = sor.u32 %s39, %s40
    %p42 = scmp.eq.s32.totalorder %s41, 0
    %s44 = sadd.s32 %s43, 1
    %s45 = scalar_select %p42, %s43, %s44
    %p48 = pneg %p42
    %p49 = scmp.eq.s32.totalorder %s10, 1
    %p50 = por %p48, %p49
    %p51 = scmp.ne.s32.totalorder %s43, %s46
    %p52 = scmp.eq.s32.totalorder %s10, 0
    %p53 = por %p51, %p52
    %p54 = scmp.ne.s32.totalorder %s43, %s46
    %p55 = scmp.eq.s32.totalorder %s15, 1
    %p56 = por %p54, %p55
    %p57 = scmp.ne.s32.totalorder %s46, %s47
    %p58 = scmp.eq.s32.totalorder %s15, 0
    %p59 = por %p57, %p58
    %p60 = scmp.ne.s32.totalorder %s46, %s47
    %p61 = scmp.eq.s32.totalorder %s16, 1
    %p62 = por %p60, %p61
    %p64 = scmp.ne.s32.totalorder %s47, %s63
    %p65 = scmp.eq.s32.totalorder %s16, 0
    %p66 = por %p64, %p65
    %s67 = ssub.s32 %s17, %s36
    %s68 = ssub.s32 %s19, %s28
    %s69 = sor.u32 %s67, %s68
    %p70 = scmp.eq.s32.totalorder %s69, 0
    %s72 = sadd.s32 %s71, 1
    %s73 = scalar_select %p70, %s71, %s72
    %p76 = pneg %p70
    %p77 = scmp.eq.s32.totalorder %s10, 1
    %p78 = por %p76, %p77
    %p79 = scmp.ne.s32.totalorder %s71, %s74
    %p80 = scmp.eq.s32.totalorder %s10, 0
    %p81 = por %p79, %p80
    %p82 = scmp.ne.s32.totalorder %s71, %s74
    %p83 = scmp.eq.s32.totalorder %s15, 1
    %p84 = por %p82, %p83
    %p85 = scmp.ne.s32.totalorder %s74, %s75
    %p86 = scmp.eq.s32.totalorder %s15, 0
    %p87 = por %p85, %p86
    %p88 = scmp.ne.s32.totalorder %s74, %s75
    %p89 = scmp.eq.s32.totalorder %s16, 1
    %p90 = por %p88, %p89
    %p92 = scmp.ne.s32.totalorder %s75, %s91
    %p93 = scmp.eq.s32.totalorder %s16, 0
    %p94 = por %p92, %p93
    %s95 = ssub.s32 %s17, %s36
    %s96 = ssub.s32 %s19, %s28
    %s97 = sor.u32 %s95, %s96
    %p98 = scmp.eq.s32.totalorder %s97, 0
    %s100 = sadd.s32 %s99, 1
    %s101 = scalar_select %p98, %s99, %s100
    %p104 = pneg %p98
    %p105 = scmp.eq.s32.totalorder %s10, 1
    %p106 = por %p104, %p105
    %p107 = scmp.ne.s32.totalorder %s99, %s102
    %p108 = scmp.eq.s32.totalorder %s10, 0
    %p109 = por %p107, %p108
    %p110 = scmp.ne.s32.totalorder %s99, %s102
    %p111 = scmp.eq.s32.totalorder %s15, 1
    %p112 = por %p110, %p111
    %p113 = scmp.ne.s32.totalorder %s102, %s103
    %p114 = scmp.eq.s32.totalorder %s15, 0
    %p115 = por %p113, %p114
    %p116 = scmp.ne.s32.totalorder %s102, %s103
    %p117 = scmp.eq.s32.totalorder %s16, 1
    %p118 = por %p116, %p117
    %p120 = scmp.ne.s32.totalorder %s103, %s119
    %p121 = scmp.eq.s32.totalorder %s16, 0
    %p122 = por %p120, %p121
    %s123 = ssub.s32 %s17, %s36
    %s124 = ssub.s32 %s18, %s32
    %s125 = sor.u32 %s123, %s124
    %s126 = ssub.s32 %s19, %s28
    %s127 = sor.u32 %s125, %s126
    %p128 = scmp.eq.s32.totalorder %s127, 0
    %s130 = sadd.s32 %s129, 1
    %s131 = scalar_select %p128, %s129, %s130
    %p134 = pneg %p128
    %p135 = scmp.eq.s32.totalorder %s10, 1
    %p136 = por %p134, %p135
    %p137 = scmp.ne.s32.totalorder %s129, %s132
    %p138 = scmp.eq.s32.totalorder %s10, 0
    %p139 = por %p137, %p138
    %p140 = scmp.ne.s32.totalorder %s129, %s132
    %p141 = scmp.eq.s32.totalorder %s15, 1
    %p142 = por %p140, %p141
    %p143 = scmp.ne.s32.totalorder %s132, %s133
    %p144 = scmp.eq.s32.totalorder %s15, 0
    %p145 = por %p143, %p144
    %p146 = scmp.ne.s32.totalorder %s132, %s133
    %p147 = scmp.eq.s32.totalorder %s16, 1
    %p148 = por %p146, %p147
    %p150 = scmp.ne.s32.totalorder %s133, %s149
    %p151 = scmp.eq.s32.totalorder %s16, 0
    %p152 = por %p150, %p151
    %s153 = ssub.s32 %s17, %s36
    %s154 = ssub.s32 %s18, %s32
    %s155 = sor.u32 %s153, %s154
    %s156 = ssub.s32 %s19, %s28
    %s157 = sor.u32 %s155, %s156
    %p158 = scmp.eq.s32.totalorder %s157, 0
    %s160 = sadd.s32 %s159, 1
    %s161 = scalar_select %p158, %s159, %s160
    %p164 = pneg %p158
    %p165 = scmp.eq.s32.totalorder %s10, 1
    %p166 = por %p164, %p165
    %p167 = scmp.ne.s32.totalorder %s159, %s162
    %p168 = scmp.eq.s32.totalorder %s10, 0
    %p169 = por %p167, %p168
    %p170 = scmp.ne.s32.totalorder %s159, %s162
    %p171 = scmp.eq.s32.totalorder %s15, 1
    %p172 = por %p170, %p171
    %p173 = scmp.ne.s32.totalorder %s162, %s163
    %p174 = scmp.eq.s32.totalorder %s15, 0
    %p175 = por %p173, %p174
    %p176 = scmp.ne.s32.totalorder %s162, %s163
    %p177 = scmp.eq.s32.totalorder %s16, 1
    %p178 = por %p176, %p177
    %p180 = scmp.ne.s32.totalorder %s163, %s179
    %p181 = scmp.eq.s32.totalorder %s16, 0
    %p182 = por %p180, %p181
    %p183 = scmp.le.s32.totalorder 1, %s10
    %p184 = scmp.lt.s32.totalorder %s10, 3
    %p185 = pnand %p183, %p184
    %p186 = pneg %p185
    // Predicated region
    $region9: #{resnet_generator_forward.28} parent=5 // pred_check
      _
    $region10: #{resnet_generator_forward.28} parent=5 // pred_check_branch
      %188 = sbr.rel (%p185) target = $region12
    $region11: #{resnet_generator_forward.28} parent=5 // pred_region
      %s189 = ssub.s32 %s10, 1
    $region12: #{resnet_generator_forward.28} parent=5 // pred_fallthru
      _
    %p190 = scmp.lt.s32.totalorder %s10, 2
    // Predicated region
    $region13: #{resnet_generator_forward.28} parent=5 // pred_check
      %p191 = pneg %p190
    $region14: #{resnet_generator_forward.28} parent=5 // pred_check_branch
      %193 = sbr.rel (%p191) target = $region16
    $region15: #{resnet_generator_forward.28} parent=5 // pred_region
      // Predicated region
      $region17: #{resnet_generator_forward.28} parent=15 // pred_check
        %p194 = pneg %p53
      $region18: #{resnet_generator_forward.28} parent=15 // pred_check_branch
        %196 = sbr.rel (%p194) target = $region20
      $region19: #{resnet_generator_forward.28} parent=15 // pred_region
        %s197 = smul.u32 2, %s18
        %p198 = scmp.lt.s32.totalorder %s17, 1
        %s199 = scalar_select %p198, %s17, 1
        %p200 = scmp.lt.s32.totalorder %s197, 1
        %s201 = scalar_select %p200, %s197, 1
        %p202 = scmp.lt.s32.totalorder %s19, 0
        %s203 = scalar_select %p202, %s19, 0
        %s204 = sadd.s32 %s203, %s201
        %s205 = smul.addr %s199, 2
        %s206 = sadd.s32 %s204, %s205
        %s207 = smul.addr %s206, 8
        %s208 = scalar_lea.vmem %s0, %s207
        %s209 = smul.u32 2, %s18
      $region20: #{resnet_generator_forward.28} parent=15 // pred_fallthru
        _
      // Predicated region
      $region21: #{resnet_generator_forward.28} parent=15 // pred_check
        %p210 = pneg %p81
      $region22: #{resnet_generator_forward.28} parent=15 // pred_check_branch
        %212 = sbr.rel (%p210) target = $region24
      $region23: #{resnet_generator_forward.28} parent=15 // pred_region
        %p213 = scmp.lt.s32.totalorder %s17, 1
        %s214 = scalar_select %p213, %s17, 1
        %p215 = scmp.lt.s32.totalorder %s19, 0
        %s216 = scalar_select %p215, %s19, 0
        %s217 = sadd.s32 %s216, %s214
        %s218 = scalar_lea.vmem %s1, %s217
      $region24: #{resnet_generator_forward.28} parent=15 // pred_fallthru
        _
      // Predicated region
      $region25: #{resnet_generator_forward.28} parent=15 // pred_check
        %p219 = pneg %p109
      $region26: #{resnet_generator_forward.28} parent=15 // pred_check_branch
        %221 = sbr.rel (%p219) target = $region28
      $region27: #{resnet_generator_forward.28} parent=15 // pred_region
        %p222 = scmp.lt.s32.totalorder %s17, 1
        %s223 = scalar_select %p222, %s17, 1
        %p224 = scmp.lt.s32.totalorder %s19, 0
        %s225 = scalar_select %p224, %s19, 0
        %s226 = sadd.s32 %s225, %s223
        %s227 = scalar_lea.vmem %s2, %s226
      $region28: #{resnet_generator_forward.28} parent=15 // pred_fallthru
        _
      // Predicated region
      $region29: #{resnet_generator_forward.28} parent=15 // pred_check
        %p228 = pneg %p139
      $region30: #{resnet_generator_forward.28} parent=15 // pred_check_branch
        %230 = sbr.rel (%p228) target = $region32
      $region31: #{resnet_generator_forward.28} parent=15 // pred_region
        %s231 = smul.u32 2, %s18
        %p232 = scmp.lt.s32.totalorder %s17, 1
        %s233 = scalar_select %p232, %s17, 1
        %p234 = scmp.lt.s32.totalorder %s231, 1
        %s235 = scalar_select %p234, %s231, 1
        %p236 = scmp.lt.s32.totalorder %s19, 0
        %s237 = scalar_select %p236, %s19, 0
        %s238 = sadd.s32 %s237, %s235
        %s239 = smul.addr %s233, 2
        %s240 = sadd.s32 %s238, %s239
        %s241 = smul.addr %s240, 8
        %s242 = scalar_lea.vmem %s3, %s241
        %s243 = smul.u32 2, %s18
      $region32: #{resnet_generator_forward.28} parent=15 // pred_fallthru
        _
    $region16: #{resnet_generator_forward.28} parent=5 // pred_fallthru
      _
    %p244 = scmp.le.s32.totalorder 1, %s10
    %p245 = scmp.lt.s32.totalorder %s10, 3
    %p246 = pnand %p244, %p245
    %p247 = pneg %p246
    // Predicated region
    $region33: #{resnet_generator_forward.28} parent=5 // pred_check
      _
    $region34: #{resnet_generator_forward.28} parent=5 // pred_check_branch
      %249 = sbr.rel (%p246) target = $region36
    $region35: #{resnet_generator_forward.28} parent=5 // pred_region
      %s250 = ssub.s32 %s10, 1
      %s251 = smul.u32 2, %s21
      %p252 = scmp.lt.s32.totalorder %s20, 1
      %s253 = scalar_select %p252, %s20, 1
      %p254 = scmp.lt.s32.totalorder %s251, 1
      %s255 = scalar_select %p254, %s251, 1
      %p256 = scmp.lt.s32.totalorder %s22, 0
      %s257 = scalar_select %p256, %s22, 0
      %s258 = sadd.s32 %s257, %s255
      %s259 = smul.addr %s253, 2
      %s260 = sadd.s32 %s258, %s259
      %s261 = smul.addr %s260, 8
      %s262 = scalar_lea.vmem %s0, %s261
      %p263 = pneg %p59
      %p264 = pneg %p56
      %p265 = scmp.lt.s32.totalorder %s20, 1
      %s266 = scalar_select %p265, %s20, 1
      %p267 = scmp.lt.s32.totalorder %s22, 0
      %s268 = scalar_select %p267, %s22, 0
      %s269 = sadd.s32 %s268, %s266
      %s270 = scalar_lea.vmem %s1, %s269
      %p271 = pneg %p87
      %p272 = pneg %p84
      %p273 = scmp.lt.s32.totalorder %s20, 1
      %s274 = scalar_select %p273, %s20, 1
      %p275 = scmp.lt.s32.totalorder %s22, 0
      %s276 = scalar_select %p275, %s22, 0
      %s277 = sadd.s32 %s276, %s274
      %s278 = scalar_lea.vmem %s2, %s277
      %p279 = pneg %p115
      %p280 = pneg %p112
      %s281 = smul.u32 2, %s21
      %p282 = scmp.lt.s32.totalorder %s20, 1
      %s283 = scalar_select %p282, %s20, 1
      %p284 = scmp.lt.s32.totalorder %s281, 1
      %s285 = scalar_select %p284, %s281, 1
      %p286 = scmp.lt.s32.totalorder %s22, 0
      %s287 = scalar_select %p286, %s22, 0
      %s288 = sadd.s32 %s287, %s285
      %s289 = smul.addr %s283, 2
      %s290 = sadd.s32 %s288, %s289
      %s291 = smul.addr %s290, 8
      %s292 = scalar_lea.vmem %s3, %s291
      %p293 = pneg %p145
      %p294 = pneg %p142
      %p295 = pneg %p175
      %p296 = pneg %p172
      %s297 = smul.u32 2, %s21
      %p298 = scmp.lt.s32.totalorder %s20, 1
      %s299 = scalar_select %p298, %s20, 1
      %p300 = scmp.lt.s32.totalorder %s297, 1
      %s301 = scalar_select %p300, %s297, 1
      %p302 = scmp.lt.s32.totalorder %s22, 0
      %s303 = scalar_select %p302, %s22, 0
      %s304 = sadd.s32 %s303, %s301
      %s305 = smul.addr %s299, 2
      %s306 = sadd.s32 %s304, %s305
      %s307 = smul.addr %s306, 8
      %s308 = scalar_lea.vmem %s4, %s307
      %s309 = smul.u32 2, %s21
      %p310 = scmp.lt.s32.totalorder %s20, 1
      %s311 = scalar_select %p310, %s20, 1
      %p312 = scmp.lt.s32.totalorder %s309, 1
      %s313 = scalar_select %p312, %s309, 1
      %p314 = scmp.lt.s32.totalorder %s22, 0
      %s315 = scalar_select %p314, %s22, 0
      %s316 = sadd.s32 %s315, %s313
      %s317 = smul.addr %s311, 2
      %s318 = sadd.s32 %s316, %s317
      %s319 = smul.addr %s318, 8
      %s320 = scalar_lea.vmem %s0, %s319
      %s321 = smul.u32 2, %s21
      %p322 = scmp.lt.s32.totalorder %s20, 1
      %s323 = scalar_select %p322, %s20, 1
      %p324 = scmp.lt.s32.totalorder %s22, 0
      %s325 = scalar_select %p324, %s22, 0
      %s326 = sadd.s32 %s325, %s323
      %s327 = scalar_lea.vmem %s1, %s326
      %p328 = scmp.lt.s32.totalorder %s20, 1
      %s329 = scalar_select %p328, %s20, 1
      %p330 = scmp.lt.s32.totalorder %s22, 0
      %s331 = scalar_select %p330, %s22, 0
      %s332 = sadd.s32 %s331, %s329
      %s333 = scalar_lea.vmem %s2, %s332
      %s334 = smul.u32 2, %s21
      %p335 = scmp.lt.s32.totalorder %s20, 1
      %s336 = scalar_select %p335, %s20, 1
      %p337 = scmp.lt.s32.totalorder %s334, 1
      %s338 = scalar_select %p337, %s334, 1
      %p339 = scmp.lt.s32.totalorder %s22, 0
      %s340 = scalar_select %p339, %s22, 0
      %s341 = sadd.s32 %s340, %s338
      %s342 = smul.addr %s336, 2
      %s343 = sadd.s32 %s341, %s342
      %s344 = smul.addr %s343, 8
      %s345 = scalar_lea.vmem %s3, %s344
      %s346 = smul.u32 2, %s21
      %s347 = smul.u32 2, %s21
      %p348 = scmp.lt.s32.totalorder %s20, 1
      %s349 = scalar_select %p348, %s20, 1
      %p350 = scmp.lt.s32.totalorder %s347, 1
      %s351 = scalar_select %p350, %s347, 1
      %p352 = scmp.lt.s32.totalorder %s22, 0
      %s353 = scalar_select %p352, %s22, 0
      %s354 = sadd.s32 %s353, %s351
      %s355 = smul.addr %s349, 2
      %s356 = sadd.s32 %s354, %s355
      %s357 = smul.addr %s356, 8
      %s358 = scalar_lea.vmem %s4, %s357
      %s359 = smul.u32 2, %s21
      %v360 = vld [vmem:[%s327] sm:$0x1]
      %v361 = vmul.f32 %v360, 0.0625
      %v362 = vld [vmem:[%s333] sm:$0x1]
      %v363 = vmul.f32 %v362, 0.0625
      %v364 = vmul.f32 %v361, %v361
      %v365 = vsub.f32 %v363, %v364
      %v366 = vmax.f32 %v365, 0.0
      %v367 = vld [vmem:[%s320] sm:$0xff]
      %v368 = vld [vmem:[%s320 + $0x8] sm:$0xff]
      %v370 = vperm.slane %v361, 0
      %v372 = vsub.f32 %v367, %v370
      %v373 = vsub.f32 %v368, %v370
      %v374 = vadd.f32 %v366, 1e-05
      %v375 = vrsqrt.pop %v374
      %v376 = vmul.f32 %v375, %v374
      %v377 = vmul.f32 %v376, %v375
      %v378 = vmul.f32 0.5, %v377
      %v379 = vsub.f32 1.5, %v378
      %v380 = vmul.f32 %v375, %v379
      %vm381 = vweird.f32 %v374
      %vm382 = vweird.f32 %v375
      %vm383 = vmor %vm381, %vm382
      %v384 = vsel %vm383, %v375, %v380
      %v386 = vperm.slane %v384, 0
      %v388 = vmul.f32 %v372, %v386
      %v389 = vmul.f32 %v373, %v386
      %v390 = vld [vmem:[%s345] sm:$0xff]
      %v391 = vld [vmem:[%s345 + $0x8] sm:$0xff]
      %v392 = vadd.f32 %v388, %v390
      %v393 = vadd.f32 %v389, %v391
      %394 = vst [vmem:[%s358] sm:$0xff] %v392
      %395 = vst [vmem:[%s358 + $0x8] sm:$0xff] %v393
      %s396 = smul.u32 2, %s21
      %p397 = scmp.lt.s32.totalorder %s20, 1
      %s398 = scalar_select %p397, %s20, 1
      %p399 = scmp.lt.s32.totalorder %s396, 1
      %s400 = scalar_select %p399, %s396, 1
      %p401 = scmp.lt.s32.totalorder %s22, 0
      %s402 = scalar_select %p401, %s22, 0
      %s403 = sadd.s32 %s402, %s400
      %s404 = smul.addr %s398, 2
      %s405 = sadd.s32 %s403, %s404
      %s406 = smul.addr %s405, 8
      %s407 = scalar_lea.vmem %s4, %s406
      // Predicated region
      $region37: #{resnet_generator_forward.28} parent=35 // pred_check
        %p408 = pneg %p172
      $region38: #{resnet_generator_forward.28} parent=35 // pred_check_branch
        %410 = sbr.rel (%p408) target = $region40
      $region39: #{resnet_generator_forward.28} parent=35 // pred_region
        %s411 = smul.u32 2, %s21
      $region40: #{resnet_generator_forward.28} parent=35 // pred_fallthru
        _
    $region36: #{resnet_generator_forward.28} parent=5 // pred_fallthru
      _
    %p412 = scmp.le.s32.totalorder 2, %s10
    // Predicated region
    $region41: #{resnet_generator_forward.28} parent=5 // pred_check
      %p413 = pneg %p412
    $region42: #{resnet_generator_forward.28} parent=5 // pred_check_branch
      %415 = sbr.rel (%p413) target = $region44
    $region43: #{resnet_generator_forward.28} parent=5 // pred_region
      %s416 = ssub.s32 %s10, 2
      // Predicated region
      $region45: #{resnet_generator_forward.28} parent=43 // pred_check
        %p417 = pneg %p178
      $region46: #{resnet_generator_forward.28} parent=43 // pred_check_branch
        %419 = sbr.rel (%p417) target = $region48
      $region47: #{resnet_generator_forward.28} parent=43 // pred_region
        %s420 = smul.u32 2, %s24
        %p421 = scmp.lt.s32.totalorder %s23, 1
        %s422 = scalar_select %p421, %s23, 1
        %p423 = scmp.lt.s32.totalorder %s420, 1
        %s424 = scalar_select %p423, %s420, 1
        %p425 = scmp.lt.s32.totalorder %s25, 0
        %s426 = scalar_select %p425, %s25, 0
        %s427 = sadd.s32 %s426, %s424
        %s428 = smul.addr %s422, 2
        %s429 = sadd.s32 %s427, %s428
        %s430 = smul.addr %s429, 8
        %s431 = scalar_lea.vmem %s4, %s430
      $region48: #{resnet_generator_forward.28} parent=43 // pred_fallthru
        _
    $region44: #{resnet_generator_forward.28} parent=5 // pred_fallthru
      _
  $region6: #{resnet_generator_forward.28} parent=0 // loop_footer
    %s14 = sadd.s32 1, %s10
  $region7: #{resnet_generator_forward.28} parent=0 // loop_footer_branch
    %9 = sbr.rel target = $region3
  $region8: #{resnet_generator_forward.28} parent=0 // loop_exit
    _

// kernel: resnet_generator_forward.35
$region0: #{resnet_generator_forward.35}
  #allocation0 [shape = 'u32[]', space=smem, size = 0x4, offset = 0x4, fixed_abs, tag = 'smem constant byte address 0x4 - core index']
  #allocation1 [shape = 'u32[72,128]{1,0:T(1,128)}', space=vmem, size = 0x9000, scoped, tag = 'internal scratch']
  #allocation2 [shape = 'f32[256,128]{1,0:T(8,128)}', space=vmem, size = 0x20000, scoped, tag = 'scratch operand']
  %s0 = inlined_call_operand.vmem [shape: bf16[2,256,1152], index: 0, kind: input, shape index: {}]
  %s1 = inlined_call_operand.vmem [shape: bf16[1152,128], index: 1, kind: input, shape index: {}]
  %s2 = inlined_call_operand.vmem [shape: f32[1,128], index: 2, kind: input, shape index: {}]
  %s3 = inlined_call_operand.vmem [shape: f32[2,256,128], index: 3, kind: output, shape index: {0}]
  %s4 = inlined_call_operand.vmem [shape: f32[2,1,128], index: 4, kind: output, shape index: {1}]
  %s5 = inlined_call_operand.vmem [shape: f32[2,1,128], index: 5, kind: output, shape index: {2}]
  %6 = xla_tuple %s3, %s4, %s5
  %s7 = sld [smem:[#allocation0]]
  $region99: #{resnet_generator_forward.35} parent=0
    _
  %s9 = ssub.s32 1, %s7
  %s10 = scalar_select 0, %s9, %s7
  $region1: #{resnet_generator_forward.35} parent=0
    #allocation3 [shape = 'u8[393216]{0}', space=vmem, size = 0x60000, scoped, tag = 'input window, operand 0']
    loop: start=0, step=1, limit=8
    $region2: #{resnet_generator_forward.35} parent=1 // loop_pre_header
      _
    $region3: #{resnet_generator_forward.35} parent=1 // loop_header
      %s12 = sphi 0, %s16
      %p13 = scmp.ge.s32.totalorder %s12, 8
      %s19 = sphi 0, %s45
      %s20 = sphi 0, %s41
      %s21 = sphi 0, %s37
      %s22 = sphi 0, %s33
      %s23 = sphi 0, %s19
      %s24 = sphi 0, %s20
      %s25 = sphi 0, %s21
      %s26 = sphi 0, %s22
      %s27 = sphi 0, %s23
      %s28 = sphi 0, %s24
      %s29 = sphi 0, %s25
      %s30 = sphi 0, %s26
      %s52 = sphi 0, %s54
      %s55 = sphi 0, %s52
      %s56 = sphi 0, %s55
      %s72 = sphi 0, %s56
      %s80 = sphi 0, %s82
      %s83 = sphi 0, %s80
      %s84 = sphi 0, %s83
      %s100 = sphi 0, %s84
      %s106 = sphi 0, %s108
      %s109 = sphi 0, %s106
      %s110 = sphi 0, %s109
      %s126 = sphi 0, %s110
      %s136 = sphi 0, %s138
      %s139 = sphi 0, %s136
      %s140 = sphi 0, %s139
      %s156 = sphi 0, %s140
      %s164 = sphi 0, %s166
      %s167 = sphi 0, %s164
      %s168 = sphi 0, %s167
      %s184 = sphi 0, %s168
      %s192 = sphi 0, %s194
      %s195 = sphi 0, %s192
      %s196 = sphi 0, %s195
      %s212 = sphi 0, %s196
    $region4: #{resnet_generator_forward.35} parent=1 // loop_header_branch
      %15 = sbr.rel (%p13) target = $region8
    $region5: #{resnet_generator_forward.35} parent=1 // loop_body
      %s17 = ssub.s32 %s12, 1
      %s18 = ssub.s32 %s12, 2
      %s31 = sadd.s32 1, %s22
      %p32 = scmp.ge.s32.totalorder %s31, 3
      %s33 = scalar_select %p32, 0, %s31
      %s34 = sadd.s32 1, %s21
      %s35 = scalar_select %p32, %s34, %s21
      %p36 = scmp.ge.s32.totalorder %s35, 1
      %s37 = scalar_select %p36, 0, %s35
      %s38 = sadd.s32 1, %s20
      %s39 = scalar_select %p36, %s38, %s20
      %p40 = scmp.ge.s32.totalorder %s39, 1
      %s41 = scalar_select %p40, 0, %s39
      %s42 = sadd.s32 1, %s19
      %s43 = scalar_select %p40, %s42, %s19
      %p44 = scmp.ge.s32.totalorder %s43, 2
      %s45 = scalar_select %p44, 0, %s43
      %s46 = ssub.s32 %s19, %s45
      %s47 = ssub.s32 %s21, %s37
      %s48 = sor.u32 %s46, %s47
      %s49 = ssub.s32 %s22, %s33
      %s50 = sor.u32 %s48, %s49
      %p51 = scmp.eq.s32.totalorder %s50, 0
      %s53 = sadd.s32 %s52, 1
      %s54 = scalar_select %p51, %s52, %s53
      %p57 = pneg %p51
      %p58 = scmp.eq.s32.totalorder %s12, 5
      %p59 = por %p57, %p58
      %p60 = scmp.ne.s32.totalorder %s52, %s55
      %p61 = scmp.eq.s32.totalorder %s12, 0
      %p62 = por %p60, %p61
      %p63 = scmp.ne.s32.totalorder %s52, %s55
      %p64 = scmp.eq.s32.totalorder %s17, 5
      %p65 = por %p63, %p64
      %p66 = scmp.ne.s32.totalorder %s55, %s56
      %p67 = scmp.eq.s32.totalorder %s17, 0
      %p68 = por %p66, %p67
      %p69 = scmp.ne.s32.totalorder %s55, %s56
      %p70 = scmp.eq.s32.totalorder %s18, 5
      %p71 = por %p69, %p70
      %p73 = scmp.ne.s32.totalorder %s56, %s72
      %p74 = scmp.eq.s32.totalorder %s18, 0
      %p75 = por %p73, %p74
      %s76 = ssub.s32 %s22, %s33
      %s77 = ssub.s32 %s20, %s41
      %s78 = sor.u32 %s76, %s77
      %p79 = scmp.eq.s32.totalorder %s78, 0
      %s81 = sadd.s32 %s80, 1
      %s82 = scalar_select %p79, %s80, %s81
      %p85 = pneg %p79
      %p86 = scmp.eq.s32.totalorder %s12, 5
      %p87 = por %p85, %p86
      %p88 = scmp.ne.s32.totalorder %s80, %s83
      %p89 = scmp.eq.s32.totalorder %s12, 0
      %p90 = por %p88, %p89
      %p91 = scmp.ne.s32.totalorder %s80, %s83
      %p92 = scmp.eq.s32.totalorder %s17, 5
      %p93 = por %p91, %p92
      %p94 = scmp.ne.s32.totalorder %s83, %s84
      %p95 = scmp.eq.s32.totalorder %s17, 0
      %p96 = por %p94, %p95
      %p97 = scmp.ne.s32.totalorder %s83, %s84
      %p98 = scmp.eq.s32.totalorder %s18, 5
      %p99 = por %p97, %p98
      %p101 = scmp.ne.s32.totalorder %s84, %s100
      %p102 = scmp.eq.s32.totalorder %s18, 0
      %p103 = por %p101, %p102
      %s104 = ssub.s32 %s20, %s41
      %p105 = scmp.eq.s32.totalorder %s104, 0
      %s107 = sadd.s32 %s106, 1
      %s108 = scalar_select %p105, %s106, %s107
      %p111 = pneg %p105
      %p112 = scmp.eq.s32.totalorder %s12, 5
      %p113 = por %p111, %p112
      %p114 = scmp.ne.s32.totalorder %s106, %s109
      %p115 = scmp.eq.s32.totalorder %s12, 0
      %p116 = por %p114, %p115
      %p117 = scmp.ne.s32.totalorder %s106, %s109
      %p118 = scmp.eq.s32.totalorder %s17, 5
      %p119 = por %p117, %p118
      %p120 = scmp.ne.s32.totalorder %s109, %s110
      %p121 = scmp.eq.s32.totalorder %s17, 0
      %p122 = por %p120, %p121
      %p123 = scmp.ne.s32.totalorder %s109, %s110
      %p124 = scmp.eq.s32.totalorder %s18, 5
      %p125 = por %p123, %p124
      %p127 = scmp.ne.s32.totalorder %s110, %s126
      %p128 = scmp.eq.s32.totalorder %s18, 0
      %p129 = por %p127, %p128
      %s130 = ssub.s32 %s19, %s45
      %s131 = ssub.s32 %s21, %s37
      %s132 = sor.u32 %s130, %s131
      %s133 = ssub.s32 %s20, %s41
      %s134 = sor.u32 %s132, %s133
      %p135 = scmp.eq.s32.totalorder %s134, 0
      %s137 = sadd.s32 %s136, 1
      %s138 = scalar_select %p135, %s136, %s137
      %p141 = pneg %p135
      %p142 = scmp.eq.s32.totalorder %s12, 5
      %p143 = por %p141, %p142
      %p144 = scmp.ne.s32.totalorder %s136, %s139
      %p145 = scmp.eq.s32.totalorder %s12, 0
      %p146 = por %p144, %p145
      %p147 = scmp.ne.s32.totalorder %s136, %s139
      %p148 = scmp.eq.s32.totalorder %s17, 5
      %p149 = por %p147, %p148
      %p150 = scmp.ne.s32.totalorder %s139, %s140
      %p151 = scmp.eq.s32.totalorder %s17, 0
      %p152 = por %p150, %p151
      %p153 = scmp.ne.s32.totalorder %s139, %s140
      %p154 = scmp.eq.s32.totalorder %s18, 5
      %p155 = por %p153, %p154
      %p157 = scmp.ne.s32.totalorder %s140, %s156
      %p158 = scmp.eq.s32.totalorder %s18, 0
      %p159 = por %p157, %p158
      %s160 = ssub.s32 %s19, %s45
      %s161 = ssub.s32 %s20, %s41
      %s162 = sor.u32 %s160, %s161
      %p163 = scmp.eq.s32.totalorder %s162, 0
      %s165 = sadd.s32 %s164, 1
      %s166 = scalar_select %p163, %s164, %s165
      %p169 = pneg %p163
      %p170 = scmp.eq.s32.totalorder %s12, 5
      %p171 = por %p169, %p170
      %p172 = scmp.ne.s32.totalorder %s164, %s167
      %p173 = scmp.eq.s32.totalorder %s12, 0
      %p174 = por %p172, %p173
      %p175 = scmp.ne.s32.totalorder %s164, %s167
      %p176 = scmp.eq.s32.totalorder %s17, 5
      %p177 = por %p175, %p176
      %p178 = scmp.ne.s32.totalorder %s167, %s168
      %p179 = scmp.eq.s32.totalorder %s17, 0
      %p180 = por %p178, %p179
      %p181 = scmp.ne.s32.totalorder %s167, %s168
      %p182 = scmp.eq.s32.totalorder %s18, 5
      %p183 = por %p181, %p182
      %p185 = scmp.ne.s32.totalorder %s168, %s184
      %p186 = scmp.eq.s32.totalorder %s18, 0
      %p187 = por %p185, %p186
      %s188 = ssub.s32 %s19, %s45
      %s189 = ssub.s32 %s20, %s41
      %s190 = sor.u32 %s188, %s189
      %p191 = scmp.eq.s32.totalorder %s190, 0
      %s193 = sadd.s32 %s192, 1
      %s194 = scalar_select %p191, %s192, %s193
      %p197 = pneg %p191
      %p198 = scmp.eq.s32.totalorder %s12, 5
      %p199 = por %p197, %p198
      %p200 = scmp.ne.s32.totalorder %s192, %s195
      %p201 = scmp.eq.s32.totalorder %s12, 0
      %p202 = por %p200, %p201
      %p203 = scmp.ne.s32.totalorder %s192, %s195
      %p204 = scmp.eq.s32.totalorder %s17, 5
      %p205 = por %p203, %p204
      %p206 = scmp.ne.s32.totalorder %s195, %s196
      %p207 = scmp.eq.s32.totalorder %s17, 0
      %p208 = por %p206, %p207
      %p209 = scmp.ne.s32.totalorder %s195, %s196
      %p210 = scmp.eq.s32.totalorder %s18, 5
      %p211 = por %p209, %p210
      %p213 = scmp.ne.s32.totalorder %s196, %s212
      %p214 = scmp.eq.s32.totalorder %s18, 0
      %p215 = por %p213, %p214
      %p216 = scmp.le.s32.totalorder 1, %s12
      %p217 = scmp.lt.s32.totalorder %s12, 7
      %p218 = pnand %p216, %p217
      %p219 = pneg %p218
      // Predicated region
      $region9: #{resnet_generator_forward.35} parent=5 // pred_check
        _
      $region10: #{resnet_generator_forward.35} parent=5 // pred_check_branch
        %221 = sbr.rel (%p218) target = $region12
      $region11: #{resnet_generator_forward.35} parent=5 // pred_region
        %s222 = ssub.s32 %s12, 1
        // Predicated region
        $region13: #{resnet_generator_forward.35} parent=11 // pred_check
          %p223 = pneg %p122
        $region14: #{resnet_generator_forward.35} parent=11 // pred_check_branch
          %225 = sbr.rel (%p223) target = $region16
        $region15: #{resnet_generator_forward.35} parent=11 // pred_region
          %p226 = scmp.lt.s32.totalorder %s24, 0
          %s227 = scalar_select %p226, %s24, 0
          %s228 = scalar_lea.vmem %s2, %s227
        $region16: #{resnet_generator_forward.35} parent=11 // pred_fallthru
          _
      $region12: #{resnet_generator_forward.35} parent=5 // pred_fallthru
        _
      %p229 = scmp.lt.s32.totalorder %s12, 6
      // Predicated region
      $region17: #{resnet_generator_forward.35} parent=5 // pred_check
        %p230 = pneg %p229
      $region18: #{resnet_generator_forward.35} parent=5 // pred_check_branch
        %232 = sbr.rel (%p230) target = $region20
      $region19: #{resnet_generator_forward.35} parent=5 // pred_region
        // Predicated region
        $region21: #{resnet_generator_forward.35} parent=19 // pred_check
          %p233 = pneg %p62
        $region22: #{resnet_generator_forward.35} parent=19 // pred_check_branch
          %235 = sbr.rel (%p233) target = $region24
        $region23: #{resnet_generator_forward.35} parent=19 // pred_region
          %s236 = sand.u32 %s52, 1
          %s237 = sand.u32 %s52, 1
          %s238 = smul.addr %s237, 384
          %s239 = scalar_lea.vmem [#allocation3], %s238
          %s240 = smul.u32 32, %s21
          %s241 = smul.u32 3, %s22
          %s242 = smul.addr %s240, 9
          %s243 = sadd.s32 %s241, %s242
          %s244 = smul.addr %s19, 288
          %s245 = sadd.s32 %s243, %s244
          %s246 = smul.addr %s245, 4
          %s247 = scalar_lea.vmem %s0, %s246
          // Predicated region
          $region25: #{resnet_generator_forward.35} parent=23 // pred_check
            _
          $region26: #{resnet_generator_forward.35} parent=23 // pred_check_branch
            %249 = sbr.rel (0) target = $region28
          $region27: #{resnet_generator_forward.35} parent=23 // pred_region
            // Predicated region
            $region29: #{resnet_generator_forward.35} parent=27 // pred_check
              _
            $region30: #{resnet_generator_forward.35} parent=27 // pred_check_branch
              %251 = sbr.rel (0) target = $region32
            $region31: #{resnet_generator_forward.35} parent=27 // pred_region
              %s252 = scalar_lea.vmem %s247, 8
              %s253 = scalar_lea.vmem %s239, 8 [#allocation3]
              loop: start=0, step=1, limit=1
              $region33: #{resnet_generator_forward.35} parent=31 // loop_pre_header
                _
              $region34: #{resnet_generator_forward.35} parent=31 // loop_header
                %s255 = sphi 0, %s259
                %p256 = scmp.ge.s32.totalorder %s255, 1
                %s260 = sphi %s247, %s247
                %s261 = sphi %s239, %s239
              $region35: #{resnet_generator_forward.35} parent=31 // loop_header_branch
                %258 = sbr.rel (%p256) target = $region39
              $region36: #{resnet_generator_forward.35} parent=31 // loop_body
                %v262 = vld [vmem:[%s260] sm:$0xff]
                %263 = vst [vmem:[%s261] sm:$0xff] %v262
                %v264 = vld [vmem:[%s260 + $0x24] sm:$0xff]
                %265 = vst [vmem:[%s261 + $0xc] sm:$0xff] %v264
                %v266 = vld [vmem:[%s260 + $0x48] sm:$0xff]
                %267 = vst [vmem:[%s261 + $0x18] sm:$0xff] %v266
                %v268 = vld [vmem:[%s260 + $0x6c] sm:$0xff]
                %269 = vst [vmem:[%s261 + $0x24] sm:$0xff] %v268
                %v270 = vld [vmem:[%s260 + $0x90] sm:$0xff]
                %271 = vst [vmem:[%s261 + $0x30] sm:$0xff] %v270
                %v272 = vld [vmem:[%s260 + $0xb4] sm:$0xff]
                %273 = vst [vmem:[%s261 + $0x3c] sm:$0xff] %v272
                %v274 = vld [vmem:[%s260 + $0xd8] sm:$0xff]
                %275 = vst [vmem:[%s261 + $0x48] sm:$0xff] %v274
                %v276 = vld [vmem:[%s260 + $0xfc] sm:$0xff]
                %277 = vst [vmem:[%s261 + $0x54] sm:$0xff] %v276
                %v278 = vld [vmem:[%s260 + $0x120] sm:$0xff]
                %279 = vst [vmem:[%s261 + $0x60] sm:$0xff] %v278
                %v280 = vld [vmem:[%s260 + $0x144] sm:$0xff]
                %281 = vst [vmem:[%s261 + $0x6c] sm:$0xff] %v280
                %v282 = vld [vmem:[%s260 + $0x168] sm:$0xff]
                %283 = vst [vmem:[%s261 + $0x78] sm:$0xff] %v282
                %v284 = vld [vmem:[%s260 + $0x18c] sm:$0xff]
                %285 = vst [vmem:[%s261 + $0x84] sm:$0xff] %v284
                %v286 = vld [vmem:[%s260 + $0x1b0] sm:$0xff]
                %287 = vst [vmem:[%s261 + $0x90] sm:$0xff] %v286
                %v288 = vld [vmem:[%s260 + $0x1d4] sm:$0xff]
                %289 = vst [vmem:[%s261 + $0x9c] sm:$0xff] %v288
                %v290 = vld [vmem:[%s260 + $0x1f8] sm:$0xff]
                %291 = vst [vmem:[%s261 + $0xa8] sm:$0xff] %v290
                %v292 = vld [vmem:[%s260 + $0x21c] sm:$0xff]
                %293 = vst [vmem:[%s261 + $0xb4] sm:$0xff] %v292
                %v294 = vld [vmem:[%s260 + $0x240] sm:$0xff]
                %295 = vst [vmem:[%s261 + $0xc0] sm:$0xff] %v294
                %v296 = vld [vmem:[%s260 + $0x264] sm:$0xff]
                %297 = vst [vmem:[%s261 + $0xcc] sm:$0xff] %v296
                %v298 = vld [vmem:[%s260 + $0x288] sm:$0xff]
                %299 = vst [vmem:[%s261 + $0xd8] sm:$0xff] %v298
                %v300 = vld [vmem:[%s260 + $0x2ac] sm:$0xff]
                %301 = vst [vmem:[%s261 + $0xe4] sm:$0xff] %v300
                %v302 = vld [vmem:[%s260 + $0x2d0] sm:$0xff]
                %303 = vst [vmem:[%s261 + $0xf0] sm:$0xff] %v302
                %v304 = vld [vmem:[%s260 + $0x2f4] sm:$0xff]
                %305 = vst [vmem:[%s261 + $0xfc] sm:$0xff] %v304
                %v306 = vld [vmem:[%s260 + $0x318] sm:$0xff]
                %307 = vst [vmem:[%s261 + $0x108] sm:$0xff] %v306
                %v308 = vld [vmem:[%s260 + $0x33c] sm:$0xff]
                %309 = vst [vmem:[%s261 + $0x114] sm:$0xff] %v308
                %v310 = vld [vmem:[%s260 + $0x360] sm:$0xff]
                %311 = vst [vmem:[%s261 + $0x120] sm:$0xff] %v310
                %v312 = vld [vmem:[%s260 + $0x384] sm:$0xff]
                %313 = vst [vmem:[%s261 + $0x12c] sm:$0xff] %v312
                %v314 = vld [vmem:[%s260 + $0x3a8] sm:$0xff]
                %315 = vst [vmem:[%s261 + $0x138] sm:$0xff] %v314
                %v316 = vld [vmem:[%s260 + $0x3cc] sm:$0xff]
                %317 = vst [vmem:[%s261 + $0x144] sm:$0xff] %v316
                %v318 = vld [vmem:[%s260 + $0x3f0] sm:$0xff]
                %319 = vst [vmem:[%s261 + $0x150] sm:$0xff] %v318
                %v320 = vld [vmem:[%s260 + $0x414] sm:$0xff]
                %321 = vst [vmem:[%s261 + $0x15c] sm:$0xff] %v320
                %v322 = vld [vmem:[%s260 + $0x438] sm:$0xff]
                %323 = vst [vmem:[%s261 + $0x168] sm:$0xff] %v322
                %v324 = vld [vmem:[%s260 + $0x45c] sm:$0xff]
                %325 = vst [vmem:[%s261 + $0x174] sm:$0xff] %v324
              $region37: #{resnet_generator_forward.35} parent=31 // loop_footer
                %s259 = sadd.s32 1, %s255
              $region38: #{resnet_generator_forward.35} parent=31 // loop_footer_branch
                %254 = sbr.rel target = $region34
              $region39: #{resnet_generator_forward.35} parent=31 // loop_exit
                _
              %s327 = ssub.s32 16, 1
              loop: start=0, step=1, limit=1
              $region40: #{resnet_generator_forward.35} parent=31 // loop_pre_header
                _
              $region41: #{resnet_generator_forward.35} parent=31 // loop_header
                %s329 = sphi 0, %s333
                %p330 = scmp.ge.s32.totalorder %s329, 1
                %s334 = sphi %s252, %s252
                %s335 = sphi %s253, %s253
              $region42: #{resnet_generator_forward.35} parent=31 // loop_header_branch
                %332 = sbr.rel (%p330) target = $region46
              $region43: #{resnet_generator_forward.35} parent=31 // loop_body
                %v336 = vld [vmem:[%s334] sm:%s327]
                %337 = vst [vmem:[%s335] sm:%s327] %v336
                %v338 = vld [vmem:[%s334 + $0x24] sm:%s327]
                %339 = vst [vmem:[%s335 + $0xc] sm:%s327] %v338
                %v340 = vld [vmem:[%s334 + $0x48] sm:%s327]
                %341 = vst [vmem:[%s335 + $0x18] sm:%s327] %v340
                %v342 = vld [vmem:[%s334 + $0x6c] sm:%s327]
                %343 = vst [vmem:[%s335 + $0x24] sm:%s327] %v342
                %v344 = vld [vmem:[%s334 + $0x90] sm:%s327]
                %345 = vst [vmem:[%s335 + $0x30] sm:%s327] %v344
                %v346 = vld [vmem:[%s334 + $0xb4] sm:%s327]
                %347 = vst [vmem:[%s335 + $0x3c] sm:%s327] %v346
                %v348 = vld [vmem:[%s334 + $0xd8] sm:%s327]
                %349 = vst [vmem:[%s335 + $0x48] sm:%s327] %v348
                %v350 = vld [vmem:[%s334 + $0xfc] sm:%s327]
                %351 = vst [vmem:[%s335 + $0x54] sm:%s327] %v350
                %v352 = vld [vmem:[%s334 + $0x120] sm:%s327]
                %353 = vst [vmem:[%s335 + $0x60] sm:%s327] %v352
                %v354 = vld [vmem:[%s334 + $0x144] sm:%s327]
                %355 = vst [vmem:[%s335 + $0x6c] sm:%s327] %v354
                %v356 = vld [vmem:[%s334 + $0x168] sm:%s327]
                %357 = vst [vmem:[%s335 + $0x78] sm:%s327] %v356
                %v358 = vld [vmem:[%s334 + $0x18c] sm:%s327]
                %359 = vst [vmem:[%s335 + $0x84] sm:%s327] %v358
                %v360 = vld [vmem:[%s334 + $0x1b0] sm:%s327]
                %361 = vst [vmem:[%s335 + $0x90] sm:%s327] %v360
                %v362 = vld [vmem:[%s334 + $0x1d4] sm:%s327]
                %363 = vst [vmem:[%s335 + $0x9c] sm:%s327] %v362
                %v364 = vld [vmem:[%s334 + $0x1f8] sm:%s327]
                %365 = vst [vmem:[%s335 + $0xa8] sm:%s327] %v364
                %v366 = vld [vmem:[%s334 + $0x21c] sm:%s327]
                %367 = vst [vmem:[%s335 + $0xb4] sm:%s327] %v366
                %v368 = vld [vmem:[%s334 + $0x240] sm:%s327]
                %369 = vst [vmem:[%s335 + $0xc0] sm:%s327] %v368
                %v370 = vld [vmem:[%s334 + $0x264] sm:%s327]
                %371 = vst [vmem:[%s335 + $0xcc] sm:%s327] %v370
                %v372 = vld [vmem:[%s334 + $0x288] sm:%s327]
                %373 = vst [vmem:[%s335 + $0xd8] sm:%s327] %v372
                %v374 = vld [vmem:[%s334 + $0x2ac] sm:%s327]
                %375 = vst [vmem:[%s335 + $0xe4] sm:%s327] %v374
                %v376 = vld [vmem:[%s334 + $0x2d0] sm:%s327]
                %377 = vst [vmem:[%s335 + $0xf0] sm:%s327] %v376
                %v378 = vld [vmem:[%s334 + $0x2f4] sm:%s327]
                %379 = vst [vmem:[%s335 + $0xfc] sm:%s327] %v378
                %v380 = vld [vmem:[%s334 + $0x318] sm:%s327]
                %381 = vst [vmem:[%s335 + $0x108] sm:%s327] %v380
                %v382 = vld [vmem:[%s334 + $0x33c] sm:%s327]
                %383 = vst [vmem:[%s335 + $0x114] sm:%s327] %v382
                %v384 = vld [vmem:[%s334 + $0x360] sm:%s327]
                %385 = vst [vmem:[%s335 + $0x120] sm:%s327] %v384
                %v386 = vld [vmem:[%s334 + $0x384] sm:%s327]
                %387 = vst [vmem:[%s335 + $0x12c] sm:%s327] %v386
                %v388 = vld [vmem:[%s334 + $0x3a8] sm:%s327]
                %389 = vst [vmem:[%s335 + $0x138] sm:%s327] %v388
                %v390 = vld [vmem:[%s334 + $0x3cc] sm:%s327]
                %391 = vst [vmem:[%s335 + $0x144] sm:%s327] %v390
                %v392 = vld [vmem:[%s334 + $0x3f0] sm:%s327]
                %393 = vst [vmem:[%s335 + $0x150] sm:%s327] %v392
                %v394 = vld [vmem:[%s334 + $0x414] sm:%s327]
                %395 = vst [vmem:[%s335 + $0x15c] sm:%s327] %v394
                %v396 = vld [vmem:[%s334 + $0x438] sm:%s327]
                %397 = vst [vmem:[%s335 + $0x168] sm:%s327] %v396
                %v398 = vld [vmem:[%s334 + $0x45c] sm:%s327]
                %399 = vst [vmem:[%s335 + $0x174] sm:%s327] %v398
              $region44: #{resnet_generator_forward.35} parent=31 // loop_footer
                %s333 = sadd.s32 1, %s329
              $region45: #{resnet_generator_forward.35} parent=31 // loop_footer_branch
                %328 = sbr.rel target = $region41
              $region46: #{resnet_generator_forward.35} parent=31 // loop_exit
                _
            $region32: #{resnet_generator_forward.35} parent=27 // pred_fallthru
              _
          $region28: #{resnet_generator_forward.35} parent=23 // pred_fallthru
            _
          %400 = vnop
        $region24: #{resnet_generator_forward.35} parent=19 // pred_fallthru
          _
        // Predicated region
        $region47: #{resnet_generator_forward.35} parent=19 // pred_check
          %p401 = pneg %p90
        $region48: #{resnet_generator_forward.35} parent=19 // pred_check_branch
          %403 = sbr.rel (%p401) target = $region50
        $region49: #{resnet_generator_forward.35} parent=19 // pred_region
          %s404 = smul.u32 48, %s22
          %p405 = scmp.lt.s32.totalorder %s404, 143
          %s406 = scalar_select %p405, %s404, 143
          %p407 = scmp.lt.s32.totalorder %s20, 0
          %s408 = scalar_select %p407, %s20, 0
          %s409 = sadd.s32 %s408, %s406
          %s410 = smul.addr %s409, 4
          %s411 = scalar_lea.vmem %s1, %s410
          %s412 = smul.u32 48, %s22
        $region50: #{resnet_generator_forward.35} parent=19 // pred_fallthru
          _
      $region20: #{resnet_generator_forward.35} parent=5 // pred_fallthru
        _
      %p413 = scmp.le.s32.totalorder 1, %s12
      %p414 = scmp.lt.s32.totalorder %s12, 7
      %p415 = pnand %p413, %p414
      %p416 = pneg %p415
      // Predicated region
      $region51: #{resnet_generator_forward.35} parent=5 // pred_check
        _
      $region52: #{resnet_generator_forward.35} parent=5 // pred_check_branch
        %418 = sbr.rel (%p415) target = $region54
      $region53: #{resnet_generator_forward.35} parent=5 // pred_region
        %s419 = ssub.s32 %s12, 1
        %s420 = sand.u32 %s55, 1
        %s421 = sand.u32 %s55, 1
        %s422 = smul.addr %s421, 384
        %s423 = scalar_lea.vmem [#allocation3], %s422
        // Predicated region
        $region55: #{resnet_generator_forward.35} parent=53 // pred_check
          %p424 = pneg %p68
        $region56: #{resnet_generator_forward.35} parent=53 // pred_check_branch
          %426 = sbr.rel (%p424) target = $region58
        $region57: #{resnet_generator_forward.35} parent=53 // pred_region
          _
        $region58: #{resnet_generator_forward.35} parent=53 // pred_fallthru
          _
        %s427 = sand.u32 %s55, 1
        %s428 = sand.u32 %s55, 1
        %s429 = smul.addr %s428, 384
        %s430 = scalar_lea.vmem [#allocation3], %s429
        %p431 = pneg %p68
        %p432 = pneg %p65
        %s433 = smul.u32 48, %s26
        %p434 = scmp.lt.s32.totalorder %s433, 143
        %s435 = scalar_select %p434, %s433, 143
        %p436 = scmp.lt.s32.totalorder %s24, 0
        %s437 = scalar_select %p436, %s24, 0
        %s438 = sadd.s32 %s437, %s435
        %s439 = smul.addr %s438, 4
        %s440 = scalar_lea.vmem %s1, %s439
        %p441 = pneg %p96
        %p442 = pneg %p93
        %p443 = scmp.lt.s32.totalorder %s24, 0
        %s444 = scalar_select %p443, %s24, 0
        %s445 = scalar_lea.vmem %s2, %s444
        %p446 = pneg %p122
        %p447 = pneg %p119
        %p448 = pneg %p152
        %p449 = pneg %p149
        %s450 = smul.u32 32, %s25
        %p451 = scmp.lt.s32.totalorder %s23, 1
        %s452 = scalar_select %p451, %s23, 1
        %p453 = scmp.lt.s32.totalorder %s450, 31
        %s454 = scalar_select %p453, %s450, 31
        %p455 = scmp.lt.s32.totalorder %s24, 0
        %s456 = scalar_select %p455, %s24, 0
        %s457 = sadd.s32 %s456, %s454
        %s458 = smul.addr %s452, 32
        %s459 = sadd.s32 %s457, %s458
        %s460 = smul.addr %s459, 8
        %s461 = scalar_lea.vmem %s3, %s460
        %p462 = pneg %p180
        %p463 = pneg %p177
        %p464 = scmp.lt.s32.totalorder %s23, 1
        %s465 = scalar_select %p464, %s23, 1
        %p466 = scmp.lt.s32.totalorder %s24, 0
        %s467 = scalar_select %p466, %s24, 0
        %s468 = sadd.s32 %s467, %s465
        %s469 = scalar_lea.vmem %s4, %s468
        %p470 = pneg %p208
        %p471 = pneg %p205
        %p472 = scmp.lt.s32.totalorder %s23, 1
        %s473 = scalar_select %p472, %s23, 1
        %p474 = scmp.lt.s32.totalorder %s24, 0
        %s475 = scalar_select %p474, %s24, 0
        %s476 = sadd.s32 %s475, %s473
        %s477 = scalar_lea.vmem %s5, %s476
        %s478 = smul.u32 32, %s25
        %s479 = smul.u32 3, %s26
        %s480 = smul.u32 48, %s26
        %p481 = scmp.lt.s32.totalorder %s480, 143
        %s482 = scalar_select %p481, %s480, 143
        %p483 = scmp.lt.s32.totalorder %s24, 0
        %s484 = scalar_select %p483, %s24, 0
        %s485 = sadd.s32 %s484, %s482
        %s486 = smul.addr %s485, 4
        %s487 = scalar_lea.vmem %s1, %s486
        %s488 = smul.u32 48, %s26
        %p489 = scmp.lt.s32.totalorder %s24, 0
        %s490 = scalar_select %p489, %s24, 0
        %s491 = scalar_lea.vmem %s2, %s490
        %s492 = smul.u32 32, %s25
        %p493 = scmp.lt.s32.totalorder %s23, 1
        %s494 = scalar_select %p493, %s23, 1
        %p495 = scmp.lt.s32.totalorder %s492, 31
        %s496 = scalar_select %p495, %s492, 31
        %p497 = scmp.lt.s32.totalorder %s24, 0
        %s498 = scalar_select %p497, %s24, 0
        %s499 = sadd.s32 %s498, %s496
        %s500 = smul.addr %s494, 32
        %s501 = sadd.s32 %s499, %s500
        %s502 = smul.addr %s501, 8
        %s503 = scalar_lea.vmem %s3, %s502
        %s504 = smul.u32 32, %s25
        %p505 = scmp.lt.s32.totalorder %s23, 1
        %s506 = scalar_select %p505, %s23, 1
        %p507 = scmp.lt.s32.totalorder %s24, 0
        %s508 = scalar_select %p507, %s24, 0
        %s509 = sadd.s32 %s508, %s506
        %s510 = scalar_lea.vmem %s4, %s509
        %p511 = scmp.lt.s32.totalorder %s23, 1
        %s512 = scalar_select %p511, %s23, 1
        %p513 = scmp.lt.s32.totalorder %s24, 0
        %s514 = scalar_select %p513, %s24, 0
        %s515 = sadd.s32 %s514, %s512
        %s516 = scalar_lea.vmem %s5, %s515
        %p517 = scmp.eq.s32.totalorder %s26, 0
        // Predicated region
        $region59: #{resnet_generator_forward.35} parent=53 // pred_check
          %p518 = pneg %p517
        $region60: #{resnet_generator_forward.35} parent=53 // pred_check_branch
          %520 = sbr.rel (%p518) target = $region62
        $region61: #{resnet_generator_forward.35} parent=53 // pred_region
          %521 = vst [vmem:[#allocation2] sm:$0xff] 0.0
          %522 = vst [vmem:[#allocation2 + $0x8] sm:$0xff] 0.0
          %523 = vst [vmem:[#allocation2 + $0x10] sm:$0xff] 0.0
          %524 = vst [vmem:[#allocation2 + $0x18] sm:$0xff] 0.0
          %525 = vst [vmem:[#allocation2 + $0x20] sm:$0xff] 0.0
          %526 = vst [vmem:[#allocation2 + $0x28] sm:$0xff] 0.0
          %527 = vst [vmem:[#allocation2 + $0x30] sm:$0xff] 0.0
          %528 = vst [vmem:[#allocation2 + $0x38] sm:$0xff] 0.0
          %529 = vst [vmem:[#allocation2 + $0x40] sm:$0xff] 0.0
          %530 = vst [vmem:[#allocation2 + $0x48] sm:$0xff] 0.0
          %531 = vst [vmem:[#allocation2 + $0x50] sm:$0xff] 0.0
          %532 = vst [vmem:[#allocation2 + $0x58] sm:$0xff] 0.0
          %533 = vst [vmem:[#allocation2 + $0x60] sm:$0xff] 0.0
          %534 = vst [vmem:[#allocation2 + $0x68] sm:$0xff] 0.0
          %535 = vst [vmem:[#allocation2 + $0x70] sm:$0xff] 0.0
          %536 = vst [vmem:[#allocation2 + $0x78] sm:$0xff] 0.0
          %537 = vst [vmem:[#allocation2 + $0x80] sm:$0xff] 0.0
          %538 = vst [vmem:[#allocation2 + $0x88] sm:$0xff] 0.0
          %539 = vst [vmem:[#allocation2 + $0x90] sm:$0xff] 0.0
          %540 = vst [vmem:[#allocation2 + $0x98] sm:$0xff] 0.0
          %541 = vst [vmem:[#allocation2 + $0xa0] sm:$0xff] 0.0
          %542 = vst [vmem:[#allocation2 + $0xa8] sm:$0xff] 0.0
          %543 = vst [vmem:[#allocation2 + $0xb0] sm:$0xff] 0.0
          %544 = vst [vmem:[#allocation2 + $0xb8] sm:$0xff] 0.0
          %545 = vst [vmem:[#allocation2 + $0xc0] sm:$0xff] 0.0
          %546 = vst [vmem:[#allocation2 + $0xc8] sm:$0xff] 0.0
          %547 = vst [vmem:[#allocation2 + $0xd0] sm:$0xff] 0.0
          %548 = vst [vmem:[#allocation2 + $0xd8] sm:$0xff] 0.0
          %549 = vst [vmem:[#allocation2 + $0xe0] sm:$0xff] 0.0
          %550 = vst [vmem:[#allocation2 + $0xe8] sm:$0xff] 0.0
          %551 = vst [vmem:[#allocation2 + $0xf0] sm:$0xff] 0.0
          %552 = vst [vmem:[#allocation2 + $0xf8] sm:$0xff] 0.0
        $region62: #{resnet_generator_forward.35} parent=53 // pred_fallthru
          _
        %p553 = scmp.eq.s32.totalorder %s25, 0
        %p554 = pnand %p553, %p517
        %p555 = pneg %p554
        // Predicated region
        $region63: #{resnet_generator_forward.35} parent=53 // pred_check
          _
        $region64: #{resnet_generator_forward.35} parent=53 // pred_check_branch
          %557 = sbr.rel (%p554) target = $region66
        $region65: #{resnet_generator_forward.35} parent=53 // pred_region
          %558 = vst [vmem:[%s510] sm:$0x1] 0.0
          %559 = vst [vmem:[%s516] sm:$0x1] 0.0
        $region66: #{resnet_generator_forward.35} parent=53 // pred_fallthru
          _
        %v560 = vld [vmem:[#allocation2] sm:$0xff]
        %v561 = vld [vmem:[#allocation2 + $0x8] sm:$0xff]
        %v562 = vld [vmem:[#allocation2 + $0x10] sm:$0xff]
        %v563 = vld [vmem:[#allocation2 + $0x18] sm:$0xff]
        %v564 = vld [vmem:[#allocation2 + $0x20] sm:$0xff]
        %v565 = vld [vmem:[#allocation2 + $0x28] sm:$0xff]
        %v566 = vld [vmem:[#allocation2 + $0x30] sm:$0xff]
        %v567 = vld [vmem:[#allocation2 + $0x38] sm:$0xff]
        %v568 = vld [vmem:[#allocation2 + $0x40] sm:$0xff]
        %v569 = vld [vmem:[#allocation2 + $0x48] sm:$0xff]
        %v570 = vld [vmem:[#allocation2 + $0x50] sm:$0xff]
        %v571 = vld [vmem:[#allocation2 + $0x58] sm:$0xff]
        %v572 = vld [vmem:[#allocation2 + $0x60] sm:$0xff]
        %v573 = vld [vmem:[#allocation2 + $0x68] sm:$0xff]
        %v574 = vld [vmem:[#allocation2 + $0x70] sm:$0xff]
        %v575 = vld [vmem:[#allocation2 + $0x78] sm:$0xff]
        %v576 = vld [vmem:[#allocation2 + $0x80] sm:$0xff]
        %v577 = vld [vmem:[#allocation2 + $0x88] sm:$0xff]
        %v578 = vld [vmem:[#allocation2 + $0x90] sm:$0xff]
        %v579 = vld [vmem:[#allocation2 + $0x98] sm:$0xff]
        %v580 = vld [vmem:[#allocation2 + $0xa0] sm:$0xff]
        %v581 = vld [vmem:[#allocation2 + $0xa8] sm:$0xff]
        %v582 = vld [vmem:[#allocation2 + $0xb0] sm:$0xff]
        %v583 = vld [vmem:[#allocation2 + $0xb8] sm:$0xff]
        %v584 = vld [vmem:[#allocation2 + $0xc0] sm:$0xff]
        %v585 = vld [vmem:[#allocation2 + $0xc8] sm:$0xff]
        %v586 = vld [vmem:[#allocation2 + $0xd0] sm:$0xff]
        %v587 = vld [vmem:[#allocation2 + $0xd8] sm:$0xff]
        %v588 = vld [vmem:[#allocation2 + $0xe0] sm:$0xff]
        %v589 = vld [vmem:[#allocation2 + $0xe8] sm:$0xff]
        %v590 = vld [vmem:[#allocation2 + $0xf0] sm:$0xff]
        %v591 = vld [vmem:[#allocation2 + $0xf8] sm:$0xff]
        %v592 = vld [vmem:[%s423] sm:$0xff]
        %v593 = vld [vmem:[%s423 + $0x8] sm:$0xf]
        %v594 = vld [vmem:[%s423 + $0xc] sm:$0xff]
        %v595 = vld [vmem:[%s423 + $0x14] sm:$0xf]
        %v596 = vld [vmem:[%s423 + $0x18] sm:$0xff]
        %v597 = vld [vmem:[%s423 + $0x20] sm:$0xf]
        %v598 = vld [vmem:[%s423 + $0x24] sm:$0xff]
        %v599 = vld [vmem:[%s423 + $0x2c] sm:$0xf]
        %v600 = vld [vmem:[%s423 + $0x30] sm:$0xff]
        %v601 = vld [vmem:[%s423 + $0x38] sm:$0xf]
        %v602 = vld [vmem:[%s423 + $0x3c] sm:$0xff]
        %v603 = vld [vmem:[%s423 + $0x44] sm:$0xf]
        %v604 = vld [vmem:[%s423 + $0x48] sm:$0xff]
        %v605 = vld [vmem:[%s423 + $0x50] sm:$0xf]
        %v606 = vld [vmem:[%s423 + $0x54] sm:$0xff]
        %v607 = vld [vmem:[%s423 + $0x5c] sm:$0xf]
        %v608 = vld [vmem:[%s423 + $0x60] sm:$0xff]
        %v609 = vld [vmem:[%s423 + $0x68] sm:$0xf]
        %v610 = vld [vmem:[%s423 + $0x6c] sm:$0xff]
        %v611 = vld [vmem:[%s423 + $0x74] sm:$0xf]
        %v612 = vld [vmem:[%s423 + $0x78] sm:$0xff]
        %v613 = vld [vmem:[%s423 + $0x80] sm:$0xf]
        %v614 = vld [vmem:[%s423 + $0x84] sm:$0xff]
        %v615 = vld [vmem:[%s423 + $0x8c] sm:$0xf]
        %v616 = vld [vmem:[%s423 + $0x90] sm:$0xff]
        %v617 = vld [vmem:[%s423 + $0x98] sm:$0xf]
        %v618 = vld [vmem:[%s423 + $0x9c] sm:$0xff]
        %v619 = vld [vmem:[%s423 + $0xa4] sm:$0xf]
        %v620 = vld [vmem:[%s423 + $0xa8] sm:$0xff]
        %v621 = vld [vmem:[%s423 + $0xb0] sm:$0xf]
        %v622 = vld [vmem:[%s423 + $0xb4] sm:$0xff]
        %v623 = vld [vmem:[%s423 + $0xbc] sm:$0xf]
        %v624 = vld [vmem:[%s423 + $0xc0] sm:$0xff]
        %v625 = vld [vmem:[%s423 + $0xc8] sm:$0xf]
        %v626 = vld [vmem:[%s423 + $0xcc] sm:$0xff]
        %v627 = vld [vmem:[%s423 + $0xd4] sm:$0xf]
        %v628 = vld [vmem:[%s423 + $0xd8] sm:$0xff]
        %v629 = vld [vmem:[%s423 + $0xe0] sm:$0xf]
        %v630 = vld [vmem:[%s423 + $0xe4] sm:$0xff]
        %v631 = vld [vmem:[%s423 + $0xec] sm:$0xf]
        %v632 = vld [vmem:[%s423 + $0xf0] sm:$0xff]
        %v633 = vld [vmem:[%s423 + $0xf8] sm:$0xf]
        %v634 = vld [vmem:[%s423 + $0xfc] sm:$0xff]
        %v635 = vld [vmem:[%s423 + $0x104] sm:$0xf]
        %v636 = vld [vmem:[%s423 + $0x108] sm:$0xff]
        %v637 = vld [vmem:[%s423 + $0x110] sm:$0xf]
        %v638 = vld [vmem:[%s423 + $0x114] sm:$0xff]
        %v639 = vld [vmem:[%s423 + $0x11c] sm:$0xf]
        %v640 = vld [vmem:[%s423 + $0x120] sm:$0xff]
        %v641 = vld [vmem:[%s423 + $0x128] sm:$0xf]
        %v642 = vld [vmem:[%s423 + $0x12c] sm:$0xff]
        %v643 = vld [vmem:[%s423 + $0x134] sm:$0xf]
        %v644 = vld [vmem:[%s423 + $0x138] sm:$0xff]
        %v645 = vld [vmem:[%s423 + $0x140] sm:$0xf]
        %v646 = vld [vmem:[%s423 + $0x144] sm:$0xff]
        %v647 = vld [vmem:[%s423 + $0x14c] sm:$0xf]
        %v648 = vld [vmem:[%s423 + $0x150] sm:$0xff]
        %v649 = vld [vmem:[%s423 + $0x158] sm:$0xf]
        %v650 = vld [vmem:[%s423 + $0x15c] sm:$0xff]
        %v651 = vld [vmem:[%s423 + $0x164] sm:$0xf]
        %v652 = vld [vmem:[%s423 + $0x168] sm:$0xff]
        %v653 = vld [vmem:[%s423 + $0x170] sm:$0xf]
        %v654 = vld [vmem:[%s423 + $0x174] sm:$0xff]
        %v655 = vld [vmem:[%s423 + $0x17c] sm:$0xf]
        %v656 = vld [vmem:[%s487] sm:$0xf]
        %v657 = vld [vmem:[%s487 + $0x4] sm:$0xf]
        %v658 = vld [vmem:[%s487 + $0x8] sm:$0xf]
        %v659 = vld [vmem:[%s487 + $0xc] sm:$0xf]
        %v660 = vld [vmem:[%s487 + $0x10] sm:$0xf]
        %v661 = vld [vmem:[%s487 + $0x14] sm:$0xf]
        %v662 = vld [vmem:[%s487 + $0x18] sm:$0xf]
        %v663 = vld [vmem:[%s487 + $0x1c] sm:$0xf]
        %v664 = vld [vmem:[%s487 + $0x20] sm:$0xf]
        %v665 = vld [vmem:[%s487 + $0x24] sm:$0xf]
        %v666 = vld [vmem:[%s487 + $0x28] sm:$0xf]
        %v667 = vld [vmem:[%s487 + $0x2c] sm:$0xf]
        %v668 = vld [vmem:[%s487 + $0x30] sm:$0xf]
        %v669 = vld [vmem:[%s487 + $0x34] sm:$0xf]
        %v670 = vld [vmem:[%s487 + $0x38] sm:$0xf]
        %v671 = vld [vmem:[%s487 + $0x3c] sm:$0xf]
        %v672 = vld [vmem:[%s487 + $0x40] sm:$0xf]
        %v673 = vld [vmem:[%s487 + $0x44] sm:$0xf]
        %v674 = vld [vmem:[%s487 + $0x48] sm:$0xf]
        %v675 = vld [vmem:[%s487 + $0x4c] sm:$0xf]
        %v676 = vld [vmem:[%s487 + $0x50] sm:$0xf]
        %v677 = vld [vmem:[%s487 + $0x54] sm:$0xf]
        %v678 = vld [vmem:[%s487 + $0x58] sm:$0xf]
        %v679 = vld [vmem:[%s487 + $0x5c] sm:$0xf]
        %v680 = vld [vmem:[%s487 + $0x60] sm:$0xf]
        %v681 = vld [vmem:[%s487 + $0x64] sm:$0xf]
        %v682 = vld [vmem:[%s487 + $0x68] sm:$0xf]
        %v683 = vld [vmem:[%s487 + $0x6c] sm:$0xf]
        %v684 = vld [vmem:[%s487 + $0x70] sm:$0xf]
        %v685 = vld [vmem:[%s487 + $0x74] sm:$0xf]
        %v686 = vld [vmem:[%s487 + $0x78] sm:$0xf]
        %v687 = vld [vmem:[%s487 + $0x7c] sm:$0xf]
        %v688 = vld [vmem:[%s487 + $0x80] sm:$0xf]
        %v689 = vld [vmem:[%s487 + $0x84] sm:$0xf]
        %v690 = vld [vmem:[%s487 + $0x88] sm:$0xf]
        %v691 = vld [vmem:[%s487 + $0x8c] sm:$0xf]
        %v692 = vld [vmem:[%s487 + $0x90] sm:$0xf]
        %v693 = vld [vmem:[%s487 + $0x94] sm:$0xf]
        %v694 = vld [vmem:[%s487 + $0x98] sm:$0xf]
        %v695 = vld [vmem:[%s487 + $0x9c] sm:$0xf]
        %v696 = vld [vmem:[%s487 + $0xa0] sm:$0xf]
        %v697 = vld [vmem:[%s487 + $0xa4] sm:$0xf]
        %v698 = vld [vmem:[%s487 + $0xa8] sm:$0xf]
        %v699 = vld [vmem:[%s487 + $0xac] sm:$0xf]
        %v700 = vld [vmem:[%s487 + $0xb0] sm:$0xf]
        %v701 = vld [vmem:[%s487 + $0xb4] sm:$0xf]
        %v702 = vld [vmem:[%s487 + $0xb8] sm:$0xf]
        %v703 = vld [vmem:[%s487 + $0xbc] sm:$0xf]
        %v768 = vunpack.c.l.b16 %v592
        %v769 = vunpack.c.h.b16 %v592
        %v770 = vunpack.c.l.b16 %v593
        %v771 = vunpack.c.l.b16 %v594
        %v772 = vunpack.c.h.b16 %v594
        %v773 = vunpack.c.l.b16 %v595
        %v774 = vunpack.c.l.b16 %v596
        %v775 = vunpack.c.h.b16 %v596
        %v776 = vunpack.c.l.b16 %v597
        %v777 = vunpack.c.l.b16 %v598
        %v778 = vunpack.c.h.b16 %v598
        %v779 = vunpack.c.l.b16 %v599
        %v780 = vunpack.c.l.b16 %v600
        %v781 = vunpack.c.h.b16 %v600
        %v782 = vunpack.c.l.b16 %v601
        %v783 = vunpack.c.l.b16 %v602
        %v784 = vunpack.c.h.b16 %v602
        %v785 = vunpack.c.l.b16 %v603
        %v786 = vunpack.c.l.b16 %v604
        %v787 = vunpack.c.h.b16 %v604
        %v788 = vunpack.c.l.b16 %v605
        %v789 = vunpack.c.l.b16 %v606
        %v790 = vunpack.c.h.b16 %v606
        %v791 = vunpack.c.l.b16 %v607
        %v792 = vunpack.c.l.b16 %v608
        %v793 = vunpack.c.h.b16 %v608
        %v794 = vunpack.c.l.b16 %v609
        %v795 = vunpack.c.l.b16 %v610
        %v796 = vunpack.c.h.b16 %v610
        %v797 = vunpack.c.l.b16 %v611
        %v798 = vunpack.c.l.b16 %v612
        %v799 = vunpack.c.h.b16 %v612
        %v800 = vunpack.c.l.b16 %v613
        %v801 = vunpack.c.l.b16 %v614
        %v802 = vunpack.c.h.b16 %v614
        %v803 = vunpack.c.l.b16 %v615
        %v804 = vunpack.c.l.b16 %v616
        %v805 = vunpack.c.h.b16 %v616
        %v806 = vunpack.c.l.b16 %v617
        %v807 = vunpack.c.l.b16 %v618
        %v808 = vunpack.c.h.b16 %v618
        %v809 = vunpack.c.l.b16 %v619
        %v810 = vunpack.c.l.b16 %v620
        %v811 = vunpack.c.h.b16 %v620
        %v812 = vunpack.c.l.b16 %v621
        %v813 = vunpack.c.l.b16 %v622
        %v814 = vunpack.c.h.b16 %v622
        %v815 = vunpack.c.l.b16 %v623
        %v816 = vunpack.c.l.b16 %v624
        %v817 = vunpack.c.h.b16 %v624
        %v818 = vunpack.c.l.b16 %v625
        %v819 = vunpack.c.l.b16 %v626
        %v820 = vunpack.c.h.b16 %v626
        %v821 = vunpack.c.l.b16 %v627
        %v822 = vunpack.c.l.b16 %v628
        %v823 = vunpack.c.h.b16 %v628
        %v824 = vunpack.c.l.b16 %v629
        %v825 = vunpack.c.l.b16 %v630
        %v826 = vunpack.c.h.b16 %v630
        %v827 = vunpack.c.l.b16 %v631
        %v828 = vunpack.c.l.b16 %v632
        %v829 = vunpack.c.h.b16 %v632
        %v830 = vunpack.c.l.b16 %v633
        %v831 = vunpack.c.l.b16 %v634
        %v832 = vunpack.c.h.b16 %v634
        %v833 = vunpack.c.l.b16 %v635
        %v834 = vunpack.c.l.b16 %v636
        %v835 = vunpack.c.h.b16 %v636
        %v836 = vunpack.c.l.b16 %v637
        %v837 = vunpack.c.l.b16 %v638
        %v838 = vunpack.c.h.b16 %v638
        %v839 = vunpack.c.l.b16 %v639
        %v840 = vunpack.c.l.b16 %v640
        %v841 = vunpack.c.h.b16 %v640
        %v842 = vunpack.c.l.b16 %v641
        %v843 = vunpack.c.l.b16 %v642
        %v844 = vunpack.c.h.b16 %v642
        %v845 = vunpack.c.l.b16 %v643
        %v846 = vunpack.c.l.b16 %v644
        %v847 = vunpack.c.h.b16 %v644
        %v848 = vunpack.c.l.b16 %v645
        %v849 = vunpack.c.l.b16 %v646
        %v850 = vunpack.c.h.b16 %v646
        %v851 = vunpack.c.l.b16 %v647
        %v852 = vunpack.c.l.b16 %v648
        %v853 = vunpack.c.h.b16 %v648
        %v854 = vunpack.c.l.b16 %v649
        %v855 = vunpack.c.l.b16 %v650
        %v856 = vunpack.c.h.b16 %v650
        %v857 = vunpack.c.l.b16 %v651
        %v858 = vunpack.c.l.b16 %v652
        %v859 = vunpack.c.h.b16 %v652
        %v860 = vunpack.c.l.b16 %v653
        %v861 = vunpack.c.l.b16 %v654
        %v862 = vunpack.c.h.b16 %v654
        %v863 = vunpack.c.l.b16 %v655
        %v864 = vpack.c.b16 %v771, %v768
        %v865 = vpack.c.b16 %v772, %v769
        %v866 = vpack.c.b16 %v773, %v770
        %v867 = vpack.c.b16 %v777, %v774
        %v868 = vpack.c.b16 %v778, %v775
        %v869 = vpack.c.b16 %v779, %v776
        %v870 = vpack.c.b16 %v783, %v780
        %v871 = vpack.c.b16 %v784, %v781
        %v872 = vpack.c.b16 %v785, %v782
        %v873 = vpack.c.b16 %v789, %v786
        %v874 = vpack.c.b16 %v790, %v787
        %v875 = vpack.c.b16 %v791, %v788
        %v876 = vpack.c.b16 %v795, %v792
        %v877 = vpack.c.b16 %v796, %v793
        %v878 = vpack.c.b16 %v797, %v794
        %v879 = vpack.c.b16 %v801, %v798
        %v880 = vpack.c.b16 %v802, %v799
        %v881 = vpack.c.b16 %v803, %v800
        %v882 = vpack.c.b16 %v807, %v804
        %v883 = vpack.c.b16 %v808, %v805
        %v884 = vpack.c.b16 %v809, %v806
        %v885 = vpack.c.b16 %v813, %v810
        %v886 = vpack.c.b16 %v814, %v811
        %v887 = vpack.c.b16 %v815, %v812
        %v888 = vpack.c.b16 %v819, %v816
        %v889 = vpack.c.b16 %v820, %v817
        %v890 = vpack.c.b16 %v821, %v818
        %v891 = vpack.c.b16 %v825, %v822
        %v892 = vpack.c.b16 %v826, %v823
        %v893 = vpack.c.b16 %v827, %v824
        %v894 = vpack.c.b16 %v831, %v828
        %v895 = vpack.c.b16 %v832, %v829
        %v896 = vpack.c.b16 %v833, %v830
        %v897 = vpack.c.b16 %v837, %v834
        %v898 = vpack.c.b16 %v838, %v835
        %v899 = vpack.c.b16 %v839, %v836
        %v900 = vpack.c.b16 %v843, %v840
        %v901 = vpack.c.b16 %v844, %v841
        %v902 = vpack.c.b16 %v845, %v842
        %v903 = vpack.c.b16 %v849, %v846
        %v904 = vpack.c.b16 %v850, %v847
        %v905 = vpack.c.b16 %v851, %v848
        %v906 = vpack.c.b16 %v855, %v852
        %v907 = vpack.c.b16 %v856, %v853
        %v908 = vpack.c.b16 %v857, %v854
        %v909 = vpack.c.b16 %v861, %v858
        %v910 = vpack.c.b16 %v862, %v859
        %v911 = vpack.c.b16 %v863, %v860
        %v1008 = vunpack.c.l.b16 %v656
        %v1009 = vunpack.c.l.b16 %v657
        %v1010 = vunpack.c.l.b16 %v658
        %v1011 = vunpack.c.l.b16 %v659
        %v1012 = vunpack.c.l.b16 %v660
        %v1013 = vunpack.c.l.b16 %v661
        %v1014 = vunpack.c.l.b16 %v662
        %v1015 = vunpack.c.l.b16 %v663
        %v1016 = vunpack.c.l.b16 %v664
        %v1017 = vunpack.c.l.b16 %v665
        %v1018 = vunpack.c.l.b16 %v666
        %v1019 = vunpack.c.l.b16 %v667
        %v1020 = vunpack.c.l.b16 %v668
        %v1021 = vunpack.c.l.b16 %v669
        %v1022 = vunpack.c.l.b16 %v670
        %v1023 = vunpack.c.l.b16 %v671
        %v1024 = vunpack.c.l.b16 %v672
        %v1025 = vunpack.c.l.b16 %v673
        %v1026 = vunpack.c.l.b16 %v674
        %v1027 = vunpack.c.l.b16 %v675
        %v1028 = vunpack.c.l.b16 %v676
        %v1029 = vunpack.c.l.b16 %v677
        %v1030 = vunpack.c.l.b16 %v678
        %v1031 = vunpack.c.l.b16 %v679
        %v1032 = vunpack.c.l.b16 %v680
        %v1033 = vunpack.c.l.b16 %v681
        %v1034 = vunpack.c.l.b16 %v682
        %v1035 = vunpack.c.l.b16 %v683
        %v1036 = vunpack.c.l.b16 %v684
        %v1037 = vunpack.c.l.b16 %v685
        %v1038 = vunpack.c.l.b16 %v686
        %v1039 = vunpack.c.l.b16 %v687
        %v1040 = vunpack.c.l.b16 %v688
        %v1041 = vunpack.c.l.b16 %v689
        %v1042 = vunpack.c.l.b16 %v690
        %v1043 = vunpack.c.l.b16 %v691
        %v1044 = vunpack.c.l.b16 %v692
        %v1045 = vunpack.c.l.b16 %v693
        %v1046 = vunpack.c.l.b16 %v694
        %v1047 = vunpack.c.l.b16 %v695
        %v1048 = vunpack.c.l.b16 %v696
        %v1049 = vunpack.c.l.b16 %v697
        %v1050 = vunpack.c.l.b16 %v698
        %v1051 = vunpack.c.l.b16 %v699
        %v1052 = vunpack.c.l.b16 %v700
        %v1053 = vunpack.c.l.b16 %v701
        %v1054 = vunpack.c.l.b16 %v702
        %v1055 = vunpack.c.l.b16 %v703
        %v1056 = vpack.c.b16 %v1009, %v1008
        %v1057 = vpack.c.b16 %v1011, %v1010
        %v1058 = vpack.c.b16 %v1013, %v1012
        %v1059 = vpack.c.b16 %v1015, %v1014
        %v1060 = vpack.c.b16 %v1017, %v1016
        %v1061 = vpack.c.b16 %v1019, %v1018
        %v1062 = vpack.c.b16 %v1021, %v1020
        %v1063 = vpack.c.b16 %v1023, %v1022
        %v1064 = vpack.c.b16 %v1025, %v1024
        %v1065 = vpack.c.b16 %v1027, %v1026
        %v1066 = vpack.c.b16 %v1029, %v1028
        %v1067 = vpack.c.b16 %v1031, %v1030
        %v1068 = vpack.c.b16 %v1033, %v1032
        %v1069 = vpack.c.b16 %v1035, %v1034
        %v1070 = vpack.c.b16 %v1037, %v1036
        %v1071 = vpack.c.b16 %v1039, %v1038
        %v1072 = vpack.c.b16 %v1041, %v1040
        %v1073 = vpack.c.b16 %v1043, %v1042
        %v1074 = vpack.c.b16 %v1045, %v1044
        %v1075 = vpack.c.b16 %v1047, %v1046
        %v1076 = vpack.c.b16 %v1049, %v1048
        %v1077 = vpack.c.b16 %v1051, %v1050
        %v1078 = vpack.c.b16 %v1053, %v1052
        %v1079 = vpack.c.b16 %v1055, %v1054
        %1104 = vmatpush.bf16.msra.mxu0 %v1063
        %1105 = vmatpush.bf16.msra.mxu0 %v1062
        %1106 = vmatpush.bf16.msra.mxu0 %v1061
        %1107 = vmatpush.bf16.msra.mxu0 %v1060
        %1108 = vmatpush.bf16.msra.mxu0 %v1059
        %1109 = vmatpush.bf16.msra.mxu0 %v1058
        %1110 = vmatpush.bf16.msra.mxu0 %v1057
        %1111 = vmatpush.bf16.msra.mxu0 %v1056
        %1112 = vmatmul.bf16.gmra.mxu0 %v864
        %v1113 = vpop.f32.mrf.mxu0
        %v1114 = vadd.f32 0.0, %v1113
        %v1115 = vpop.f32.mrf.mxu0
        %v1116 = vadd.f32 0.0, %v1115
        %1117 = vmatmul.bf16.gmra.mxu0 %v867
        %v1118 = vpop.f32.mrf.mxu0
        %v1119 = vadd.f32 0.0, %v1118
        %v1120 = vpop.f32.mrf.mxu0
        %v1121 = vadd.f32 0.0, %v1120
        %1122 = vmatmul.bf16.gmra.mxu0 %v870
        %v1123 = vpop.f32.mrf.mxu0
        %v1124 = vadd.f32 0.0, %v1123
        %v1125 = vpop.f32.mrf.mxu0
        %v1126 = vadd.f32 0.0, %v1125
        %1127 = vmatmul.bf16.gmra.mxu0 %v873
        %v1128 = vpop.f32.mrf.mxu0
        %v1129 = vadd.f32 0.0, %v1128
        %v1130 = vpop.f32.mrf.mxu0
        %v1131 = vadd.f32 0.0, %v1130
        %1132 = vmatmul.bf16.gmra.mxu0 %v876
        %v1133 = vpop.f32.mrf.mxu0
        %v1134 = vadd.f32 0.0, %v1133
        %v1135 = vpop.f32.mrf.mxu0
        %v1136 = vadd.f32 0.0, %v1135
        %1137 = vmatmul.bf16.gmra.mxu0 %v879
        %v1138 = vpop.f32.mrf.mxu0
        %v1139 = vadd.f32 0.0, %v1138
        %v1140 = vpop.f32.mrf.mxu0
        %v1141 = vadd.f32 0.0, %v1140
        %1142 = vmatmul.bf16.gmra.mxu0 %v882
        %v1143 = vpop.f32.mrf.mxu0
        %v1144 = vadd.f32 0.0, %v1143
        %v1145 = vpop.f32.mrf.mxu0
        %v1146 = vadd.f32 0.0, %v1145
        %1147 = vmatmul.bf16.gmra.mxu0 %v885
        %v1148 = vpop.f32.mrf.mxu0
        %v1149 = vadd.f32 0.0, %v1148
        %v1150 = vpop.f32.mrf.mxu0
        %v1151 = vadd.f32 0.0, %v1150
        %1152 = vmatmul.bf16.gmra.mxu0 %v888
        %v1153 = vpop.f32.mrf.mxu0
        %v1154 = vadd.f32 0.0, %v1153
        %v1155 = vpop.f32.mrf.mxu0
        %v1156 = vadd.f32 0.0, %v1155
        %1157 = vmatmul.bf16.gmra.mxu0 %v891
        %v1158 = vpop.f32.mrf.mxu0
        %v1159 = vadd.f32 0.0, %v1158
        %v1160 = vpop.f32.mrf.mxu0
        %v1161 = vadd.f32 0.0, %v1160
        %1162 = vmatmul.bf16.gmra.mxu0 %v894
        %v1163 = vpop.f32.mrf.mxu0
        %v1164 = vadd.f32 0.0, %v1163
        %v1165 = vpop.f32.mrf.mxu0
        %v1166 = vadd.f32 0.0, %v1165
        %1167 = vmatmul.bf16.gmra.mxu0 %v897
        %v1168 = vpop.f32.mrf.mxu0
        %v1169 = vadd.f32 0.0, %v1168
        %v1170 = vpop.f32.mrf.mxu0
        %v1171 = vadd.f32 0.0, %v1170
        %1172 = vmatmul.bf16.gmra.mxu0 %v900
        %v1173 = vpop.f32.mrf.mxu0
        %v1174 = vadd.f32 0.0, %v1173
        %v1175 = vpop.f32.mrf.mxu0
        %v1176 = vadd.f32 0.0, %v1175
        %1177 = vmatmul.bf16.gmra.mxu0 %v903
        %v1178 = vpop.f32.mrf.mxu0
        %v1179 = vadd.f32 0.0, %v1178
        %v1180 = vpop.f32.mrf.mxu0
        %v1181 = vadd.f32 0.0, %v1180
        %1182 = vmatmul.bf16.gmra.mxu0 %v906
        %v1183 = vpop.f32.mrf.mxu0
        %v1184 = vadd.f32 0.0, %v1183
        %v1185 = vpop.f32.mrf.mxu0
        %v1186 = vadd.f32 0.0, %v1185
        %1187 = vmatmul.bf16.gmra.mxu0 %v909
        %v1188 = vpop.f32.mrf.mxu0
        %v1189 = vadd.f32 0.0, %v1188
        %v1190 = vpop.f32.mrf.mxu0
        %v1191 = vadd.f32 0.0, %v1190
        %1192 = vdwg.mxu0
        %1193 = vmatpush.bf16.msra.mxu0 %v1071
        %1194 = vmatpush.bf16.msra.mxu0 %v1070
        %1195 = vmatpush.bf16.msra.mxu0 %v1069
        %1196 = vmatpush.bf16.msra.mxu0 %v1068
        %1197 = vmatpush.bf16.msra.mxu0 %v1067
        %1198 = vmatpush.bf16.msra.mxu0 %v1066
        %1199 = vmatpush.bf16.msra.mxu0 %v1065
        %1200 = vmatpush.bf16.msra.mxu0 %v1064
        %1201 = vmatmul.bf16.gmra.mxu0 %v865
        %v1202 = vpop.f32.mrf.mxu0
        %v1203 = vadd.f32 %v1114, %v1202
        %v1204 = vpop.f32.mrf.mxu0
        %v1205 = vadd.f32 %v1116, %v1204
        %1206 = vmatmul.bf16.gmra.mxu0 %v868
        %v1207 = vpop.f32.mrf.mxu0
        %v1208 = vadd.f32 %v1119, %v1207
        %v1209 = vpop.f32.mrf.mxu0
        %v1210 = vadd.f32 %v1121, %v1209
        %1211 = vmatmul.bf16.gmra.mxu0 %v871
        %v1212 = vpop.f32.mrf.mxu0
        %v1213 = vadd.f32 %v1124, %v1212
        %v1214 = vpop.f32.mrf.mxu0
        %v1215 = vadd.f32 %v1126, %v1214
        %1216 = vmatmul.bf16.gmra.mxu0 %v874
        %v1217 = vpop.f32.mrf.mxu0
        %v1218 = vadd.f32 %v1129, %v1217
        %v1219 = vpop.f32.mrf.mxu0
        %v1220 = vadd.f32 %v1131, %v1219
        %1221 = vmatmul.bf16.gmra.mxu0 %v877
        %v1222 = vpop.f32.mrf.mxu0
        %v1223 = vadd.f32 %v1134, %v1222
        %v1224 = vpop.f32.mrf.mxu0
        %v1225 = vadd.f32 %v1136, %v1224
        %1226 = vmatmul.bf16.gmra.mxu0 %v880
        %v1227 = vpop.f32.mrf.mxu0
        %v1228 = vadd.f32 %v1139, %v1227
        %v1229 = vpop.f32.mrf.mxu0
        %v1230 = vadd.f32 %v1141, %v1229
        %1231 = vmatmul.bf16.gmra.mxu0 %v883
        %v1232 = vpop.f32.mrf.mxu0
        %v1233 = vadd.f32 %v1144, %v1232
        %v1234 = vpop.f32.mrf.mxu0
        %v1235 = vadd.f32 %v1146, %v1234
        %1236 = vmatmul.bf16.gmra.mxu0 %v886
        %v1237 = vpop.f32.mrf.mxu0
        %v1238 = vadd.f32 %v1149, %v1237
        %v1239 = vpop.f32.mrf.mxu0
        %v1240 = vadd.f32 %v1151, %v1239
        %1241 = vmatmul.bf16.gmra.mxu0 %v889
        %v1242 = vpop.f32.mrf.mxu0
        %v1243 = vadd.f32 %v1154, %v1242
        %v1244 = vpop.f32.mrf.mxu0
        %v1245 = vadd.f32 %v1156, %v1244
        %1246 = vmatmul.bf16.gmra.mxu0 %v892
        %v1247 = vpop.f32.mrf.mxu0
        %v1248 = vadd.f32 %v1159, %v1247
        %v1249 = vpop.f32.mrf.mxu0
        %v1250 = vadd.f32 %v1161, %v1249
        %1251 = vmatmul.bf16.gmra.mxu0 %v895
        %v1252 = vpop.f32.mrf.mxu0
        %v1253 = vadd.f32 %v1164, %v1252
        %v1254 = vpop.f32.mrf.mxu0
        %v1255 = vadd.f32 %v1166, %v1254
        %1256 = vmatmul.bf16.gmra.mxu0 %v898
        %v1257 = vpop.f32.mrf.mxu0
        %v1258 = vadd.f32 %v1169, %v1257
        %v1259 = vpop.f32.mrf.mxu0
        %v1260 = vadd.f32 %v1171, %v1259
        %1261 = vmatmul.bf16.gmra.mxu0 %v901
        %v1262 = vpop.f32.mrf.mxu0
        %v1263 = vadd.f32 %v1174, %v1262
        %v1264 = vpop.f32.mrf.mxu0
        %v1265 = vadd.f32 %v1176, %v1264
        %1266 = vmatmul.bf16.gmra.mxu0 %v904
        %v1267 = vpop.f32.mrf.mxu0
        %v1268 = vadd.f32 %v1179, %v1267
        %v1269 = vpop.f32.mrf.mxu0
        %v1270 = vadd.f32 %v1181, %v1269
        %1271 = vmatmul.bf16.gmra.mxu0 %v907
        %v1272 = vpop.f32.mrf.mxu0
        %v1273 = vadd.f32 %v1184, %v1272
        %v1274 = vpop.f32.mrf.mxu0
        %v1275 = vadd.f32 %v1186, %v1274
        %1276 = vmatmul.bf16.gmra.mxu0 %v910
        %v1277 = vpop.f32.mrf.mxu0
        %v1278 = vadd.f32 %v1189, %v1277
        %v1279 = vpop.f32.mrf.mxu0
        %v1280 = vadd.f32 %v1191, %v1279
        %1281 = vdwg.mxu0
        %1282 = vmatpush.bf16.msra.mxu0 %v1079
        %1283 = vmatpush.bf16.msra.mxu0 %v1078
        %1284 = vmatpush.bf16.msra.mxu0 %v1077
        %1285 = vmatpush.bf16.msra.mxu0 %v1076
        %1286 = vmatpush.bf16.msra.mxu0 %v1075
        %1287 = vmatpush.bf16.msra.mxu0 %v1074
        %1288 = vmatpush.bf16.msra.mxu0 %v1073
        %1289 = vmatpush.bf16.msra.mxu0 %v1072
        %1290 = vmatmul.bf16.gmra.mxu0 %v866
        %v1291 = vpop.f32.mrf.mxu0
        %v1292 = vadd.f32 %v1203, %v1291
        %v1293 = vpop.f32.mrf.mxu0
        %v1294 = vadd.f32 %v1205, %v1293
        %1295 = vmatmul.bf16.gmra.mxu0 %v869
        %v1296 = vpop.f32.mrf.mxu0
        %v1297 = vadd.f32 %v1208, %v1296
        %v1298 = vpop.f32.mrf.mxu0
        %v1299 = vadd.f32 %v1210, %v1298
        %1300 = vmatmul.bf16.gmra.mxu0 %v872
        %v1301 = vpop.f32.mrf.mxu0
        %v1302 = vadd.f32 %v1213, %v1301
        %v1303 = vpop.f32.mrf.mxu0
        %v1304 = vadd.f32 %v1215, %v1303
        %1305 = vmatmul.bf16.gmra.mxu0 %v875
        %v1306 = vpop.f32.mrf.mxu0
        %v1307 = vadd.f32 %v1218, %v1306
        %v1308 = vpop.f32.mrf.mxu0
        %v1309 = vadd.f32 %v1220, %v1308
        %1310 = vmatmul.bf16.gmra.mxu0 %v878
        %v1311 = vpop.f32.mrf.mxu0
        %v1312 = vadd.f32 %v1223, %v1311
        %v1313 = vpop.f32.mrf.mxu0
        %v1314 = vadd.f32 %v1225, %v1313
        %1315 = vmatmul.bf16.gmra.mxu0 %v881
        %v1316 = vpop.f32.mrf.mxu0
        %v1317 = vadd.f32 %v1228, %v1316
        %v1318 = vpop.f32.mrf.mxu0
        %v1319 = vadd.f32 %v1230, %v1318
        %1320 = vmatmul.bf16.gmra.mxu0 %v884
        %v1321 = vpop.f32.mrf.mxu0
        %v1322 = vadd.f32 %v1233, %v1321
        %v1323 = vpop.f32.mrf.mxu0
        %v1324 = vadd.f32 %v1235, %v1323
        %1325 = vmatmul.bf16.gmra.mxu0 %v887
        %v1326 = vpop.f32.mrf.mxu0
        %v1327 = vadd.f32 %v1238, %v1326
        %v1328 = vpop.f32.mrf.mxu0
        %v1329 = vadd.f32 %v1240, %v1328
        %1330 = vmatmul.bf16.gmra.mxu0 %v890
        %v1331 = vpop.f32.mrf.mxu0
        %v1332 = vadd.f32 %v1243, %v1331
        %v1333 = vpop.f32.mrf.mxu0
        %v1334 = vadd.f32 %v1245, %v1333
        %1335 = vmatmul.bf16.gmra.mxu0 %v893
        %v1336 = vpop.f32.mrf.mxu0
        %v1337 = vadd.f32 %v1248, %v1336
        %v1338 = vpop.f32.mrf.mxu0
        %v1339 = vadd.f32 %v1250, %v1338
        %1340 = vmatmul.bf16.gmra.mxu0 %v896
        %v1341 = vpop.f32.mrf.mxu0
        %v1342 = vadd.f32 %v1253, %v1341
        %v1343 = vpop.f32.mrf.mxu0
        %v1344 = vadd.f32 %v1255, %v1343
        %1345 = vmatmul.bf16.gmra.mxu0 %v899
        %v1346 = vpop.f32.mrf.mxu0
        %v1347 = vadd.f32 %v1258, %v1346
        %v1348 = vpop.f32.mrf.mxu0
        %v1349 = vadd.f32 %v1260, %v1348
        %1350 = vmatmul.bf16.gmra.mxu0 %v902
        %v1351 = vpop.f32.mrf.mxu0
        %v1352 = vadd.f32 %v1263, %v1351
        %v1353 = vpop.f32.mrf.mxu0
        %v1354 = vadd.f32 %v1265, %v1353
        %1355 = vmatmul.bf16.gmra.mxu0 %v905
        %v1356 = vpop.f32.mrf.mxu0
        %v1357 = vadd.f32 %v1268, %v1356
        %v1358 = vpop.f32.mrf.mxu0
        %v1359 = vadd.f32 %v1270, %v1358
        %1360 = vmatmul.bf16.gmra.mxu0 %v908
        %v1361 = vpop.f32.mrf.mxu0
        %v1362 = vadd.f32 %v1273, %v1361
        %v1363 = vpop.f32.mrf.mxu0
        %v1364 = vadd.f32 %v1275, %v1363
        %1365 = vmatmul.bf16.gmra.mxu0 %v911
        %v1366 = vpop.f32.mrf.mxu0
        %v1367 = vadd.f32 %v1278, %v1366
        %v1368 = vpop.f32.mrf.mxu0
        %v1369 = vadd.f32 %v1280, %v1368
        %1370 = vdwg.mxu0
        %v1371 = vadd.f32 %v560, %v1292
        %v1372 = vadd.f32 %v561, %v1294
        %v1373 = vadd.f32 %v562, %v1297
        %v1374 = vadd.f32 %v563, %v1299
        %v1375 = vadd.f32 %v564, %v1302
        %v1376 = vadd.f32 %v565, %v1304
        %v1377 = vadd.f32 %v566, %v1307
        %v1378 = vadd.f32 %v567, %v1309
        %v1379 = vadd.f32 %v568, %v1312
        %v1380 = vadd.f32 %v569, %v1314
        %v1381 = vadd.f32 %v570, %v1317
        %v1382 = vadd.f32 %v571, %v1319
        %v1383 = vadd.f32 %v572, %v1322
        %v1384 = vadd.f32 %v573, %v1324
        %v1385 = vadd.f32 %v574, %v1327
        %v1386 = vadd.f32 %v575, %v1329
        %v1387 = vadd.f32 %v576, %v1332
        %v1388 = vadd.f32 %v577, %v1334
        %v1389 = vadd.f32 %v578, %v1337
        %v1390 = vadd.f32 %v579, %v1339
        %v1391 = vadd.f32 %v580, %v1342
        %v1392 = vadd.f32 %v581, %v1344
        %v1393 = vadd.f32 %v582, %v1347
        %v1394 = vadd.f32 %v583, %v1349
        %v1395 = vadd.f32 %v584, %v1352
        %v1396 = vadd.f32 %v585, %v1354
        %v1397 = vadd.f32 %v586, %v1357
        %v1398 = vadd.f32 %v587, %v1359
        %v1399 = vadd.f32 %v588, %v1362
        %v1400 = vadd.f32 %v589, %v1364
        %v1401 = vadd.f32 %v590, %v1367
        %v1402 = vadd.f32 %v591, %v1369
        %1403 = vst [vmem:[#allocation2] sm:$0xff] %v1371
        %1404 = vst [vmem:[#allocation2 + $0x8] sm:$0xff] %v1372
        %1405 = vst [vmem:[#allocation2 + $0x10] sm:$0xff] %v1373
        %1406 = vst [vmem:[#allocation2 + $0x18] sm:$0xff] %v1374
        %1407 = vst [vmem:[#allocation2 + $0x20] sm:$0xff] %v1375
        %1408 = vst [vmem:[#allocation2 + $0x28] sm:$0xff] %v1376
        %1409 = vst [vmem:[#allocation2 + $0x30] sm:$0xff] %v1377
        %1410 = vst [vmem:[#allocation2 + $0x38] sm:$0xff] %v1378
        %1411 = vst [vmem:[#allocation2 + $0x40] sm:$0xff] %v1379
        %1412 = vst [vmem:[#allocation2 + $0x48] sm:$0xff] %v1380
        %1413 = vst [vmem:[#allocation2 + $0x50] sm:$0xff] %v1381
        %1414 = vst [vmem:[#allocation2 + $0x58] sm:$0xff] %v1382
        %1415 = vst [vmem:[#allocation2 + $0x60] sm:$0xff] %v1383
        %1416 = vst [vmem:[#allocation2 + $0x68] sm:$0xff] %v1384
        %1417 = vst [vmem:[#allocation2 + $0x70] sm:$0xff] %v1385
        %1418 = vst [vmem:[#allocation2 + $0x78] sm:$0xff] %v1386
        %1419 = vst [vmem:[#allocation2 + $0x80] sm:$0xff] %v1387
        %1420 = vst [vmem:[#allocation2 + $0x88] sm:$0xff] %v1388
        %1421 = vst [vmem:[#allocation2 + $0x90] sm:$0xff] %v1389
        %1422 = vst [vmem:[#allocation2 + $0x98] sm:$0xff] %v1390
        %1423 = vst [vmem:[#allocation2 + $0xa0] sm:$0xff] %v1391
        %1424 = vst [vmem:[#allocation2 + $0xa8] sm:$0xff] %v1392
        %1425 = vst [vmem:[#allocation2 + $0xb0] sm:$0xff] %v1393
        %1426 = vst [vmem:[#allocation2 + $0xb8] sm:$0xff] %v1394
        %1427 = vst [vmem:[#allocation2 + $0xc0] sm:$0xff] %v1395
        %1428 = vst [vmem:[#allocation2 + $0xc8] sm:$0xff] %v1396
        %1429 = vst [vmem:[#allocation2 + $0xd0] sm:$0xff] %v1397
        %1430 = vst [vmem:[#allocation2 + $0xd8] sm:$0xff] %v1398
        %1431 = vst [vmem:[#allocation2 + $0xe0] sm:$0xff] %v1399
        %1432 = vst [vmem:[#allocation2 + $0xe8] sm:$0xff] %v1400
        %1433 = vst [vmem:[#allocation2 + $0xf0] sm:$0xff] %v1401
        %1434 = vst [vmem:[#allocation2 + $0xf8] sm:$0xff] %v1402
        %p1435 = scmp.eq.s32.totalorder %s26, 2
        // Predicated region
        $region67: #{resnet_generator_forward.35} parent=53 // pred_check
          %p1436 = pneg %p1435
        $region68: #{resnet_generator_forward.35} parent=53 // pred_check_branch
          %1438 = sbr.rel (%p1436) target = $region70
        $region69: #{resnet_generator_forward.35} parent=53 // pred_region
          %v1439 = vld [vmem:[#allocation2] sm:$0xff]
          %v1440 = vld [vmem:[#allocation2 + $0x8] sm:$0xff]
          %v1441 = vld [vmem:[#allocation2 + $0x10] sm:$0xff]
          %v1442 = vld [vmem:[#allocation2 + $0x18] sm:$0xff]
          %v1443 = vld [vmem:[#allocation2 + $0x20] sm:$0xff]
          %v1444 = vld [vmem:[#allocation2 + $0x28] sm:$0xff]
          %v1445 = vld [vmem:[#allocation2 + $0x30] sm:$0xff]
          %v1446 = vld [vmem:[#allocation2 + $0x38] sm:$0xff]
          %v1447 = vld [vmem:[#allocation2 + $0x40] sm:$0xff]
          %v1448 = vld [vmem:[#allocation2 + $0x48] sm:$0xff]
          %v1449 = vld [vmem:[#allocation2 + $0x50] sm:$0xff]
          %v1450 = vld [vmem:[#allocation2 + $0x58] sm:$0xff]
          %v1451 = vld [vmem:[#allocation2 + $0x60] sm:$0xff]
          %v1452 = vld [vmem:[#allocation2 + $0x68] sm:$0xff]
          %v1453 = vld [vmem:[#allocation2 + $0x70] sm:$0xff]
          %v1454 = vld [vmem:[#allocation2 + $0x78] sm:$0xff]
          %v1455 = vld [vmem:[#allocation2 + $0x80] sm:$0xff]
          %v1456 = vld [vmem:[#allocation2 + $0x88] sm:$0xff]
          %v1457 = vld [vmem:[#allocation2 + $0x90] sm:$0xff]
          %v1458 = vld [vmem:[#allocation2 + $0x98] sm:$0xff]
          %v1459 = vld [vmem:[#allocation2 + $0xa0] sm:$0xff]
          %v1460 = vld [vmem:[#allocation2 + $0xa8] sm:$0xff]
          %v1461 = vld [vmem:[#allocation2 + $0xb0] sm:$0xff]
          %v1462 = vld [vmem:[#allocation2 + $0xb8] sm:$0xff]
          %v1463 = vld [vmem:[#allocation2 + $0xc0] sm:$0xff]
          %v1464 = vld [vmem:[#allocation2 + $0xc8] sm:$0xff]
          %v1465 = vld [vmem:[#allocation2 + $0xd0] sm:$0xff]
          %v1466 = vld [vmem:[#allocation2 + $0xd8] sm:$0xff]
          %v1467 = vld [vmem:[#allocation2 + $0xe0] sm:$0xff]
          %v1468 = vld [vmem:[#allocation2 + $0xe8] sm:$0xff]
          %v1469 = vld [vmem:[#allocation2 + $0xf0] sm:$0xff]
          %v1470 = vld [vmem:[#allocation2 + $0xf8] sm:$0xff]
          %v1471 = vld [vmem:[%s491] sm:$0x1]
          %v1473 = vperm.slane %v1471, 0
          %v1475 = vadd.f32 %v1439, %v1473
          %v1476 = vadd.f32 %v1440, %v1473
          %v1477 = vadd.f32 %v1441, %v1473
          %v1478 = vadd.f32 %v1442, %v1473
          %v1479 = vadd.f32 %v1443, %v1473
          %v1480 = vadd.f32 %v1444, %v1473
          %v1481 = vadd.f32 %v1445, %v1473
          %v1482 = vadd.f32 %v1446, %v1473
          %v1483 = vadd.f32 %v1447, %v1473
          %v1484 = vadd.f32 %v1448, %v1473
          %v1485 = vadd.f32 %v1449, %v1473
          %v1486 = vadd.f32 %v1450, %v1473
          %v1487 = vadd.f32 %v1451, %v1473
          %v1488 = vadd.f32 %v1452, %v1473
          %v1489 = vadd.f32 %v1453, %v1473
          %v1490 = vadd.f32 %v1454, %v1473
          %v1491 = vadd.f32 %v1455, %v1473
          %v1492 = vadd.f32 %v1456, %v1473
          %v1493 = vadd.f32 %v1457, %v1473
          %v1494 = vadd.f32 %v1458, %v1473
          %v1495 = vadd.f32 %v1459, %v1473
          %v1496 = vadd.f32 %v1460, %v1473
          %v1497 = vadd.f32 %v1461, %v1473
          %v1498 = vadd.f32 %v1462, %v1473
          %v1499 = vadd.f32 %v1463, %v1473
          %v1500 = vadd.f32 %v1464, %v1473
          %v1501 = vadd.f32 %v1465, %v1473
          %v1502 = vadd.f32 %v1466, %v1473
          %v1503 = vadd.f32 %v1467, %v1473
          %v1504 = vadd.f32 %v1468, %v1473
          %v1505 = vadd.f32 %v1469, %v1473
          %v1506 = vadd.f32 %v1470, %v1473
          %v1507 = vld [vmem:[%s510] sm:$0x1]
          %v1508 = vadd.f32 %v1475, %v1476
          %v1509 = vadd.f32 %v1508, %v1477
          %v1510 = vadd.f32 %v1509, %v1478
          %v1511 = vadd.f32 %v1510, %v1479
          %v1512 = vadd.f32 %v1511, %v1480
          %v1513 = vadd.f32 %v1512, %v1481
          %v1514 = vadd.f32 %v1513, %v1482
          %v1515 = vadd.f32 %v1514, %v1483
          %v1516 = vadd.f32 %v1515, %v1484
          %v1517 = vadd.f32 %v1516, %v1485
          %v1518 = vadd.f32 %v1517, %v1486
          %v1519 = vadd.f32 %v1518, %v1487
          %v1520 = vadd.f32 %v1519, %v1488
          %v1521 = vadd.f32 %v1520, %v1489
          %v1522 = vadd.f32 %v1521, %v1490
          %v1523 = vadd.f32 %v1522, %v1491
          %v1524 = vadd.f32 %v1523, %v1492
          %v1525 = vadd.f32 %v1524, %v1493
          %v1526 = vadd.f32 %v1525, %v1494
          %v1527 = vadd.f32 %v1526, %v1495
          %v1528 = vadd.f32 %v1527, %v1496
          %v1529 = vadd.f32 %v1528, %v1497
          %v1530 = vadd.f32 %v1529, %v1498
          %v1531 = vadd.f32 %v1530, %v1499
          %v1532 = vadd.f32 %v1531, %v1500
          %v1533 = vadd.f32 %v1532, %v1501
          %v1534 = vadd.f32 %v1533, %v1502
          %v1535 = vadd.f32 %v1534, %v1503
          %v1536 = vadd.f32 %v1535, %v1504
          %v1537 = vadd.f32 %v1536, %v1505
          %v1538 = vadd.f32 %v1537, %v1506
          %v1539 = vrot.slane %v1538, 4
          %v1540 = vadd.f32 %v1538, %v1539
          %v1541 = vrot.slane %v1540, 2
          %v1542 = vadd.f32 %v1540, %v1541
          %v1543 = vrot.slane %v1542, 1
          %v1544 = vadd.f32 %v1542, %v1543
          %v1545 = vadd.f32 %v1507, %v1544
          %1546 = vst [vmem:[%s510] sm:$0x1] %v1545
          %v1547 = vld [vmem:[%s516] sm:$0x1]
          %v1548 = vmul.f32 %v1475, %v1475
          %v1549 = vmul.f32 %v1476, %v1476
          %v1550 = vmul.f32 %v1477, %v1477
          %v1551 = vmul.f32 %v1478, %v1478
          %v1552 = vmul.f32 %v1479, %v1479
          %v1553 = vmul.f32 %v1480, %v1480
          %v1554 = vmul.f32 %v1481, %v1481
          %v1555 = vmul.f32 %v1482, %v1482
          %v1556 = vmul.f32 %v1483, %v1483
          %v1557 = vmul.f32 %v1484, %v1484
          %v1558 = vmul.f32 %v1485, %v1485
          %v1559 = vmul.f32 %v1486, %v1486
          %v1560 = vmul.f32 %v1487, %v1487
          %v1561 = vmul.f32 %v1488, %v1488
          %v1562 = vmul.f32 %v1489, %v1489
          %v1563 = vmul.f32 %v1490, %v1490
          %v1564 = vmul.f32 %v1491, %v1491
          %v1565 = vmul.f32 %v1492, %v1492
          %v1566 = vmul.f32 %v1493, %v1493
          %v1567 = vmul.f32 %v1494, %v1494
          %v1568 = vmul.f32 %v1495, %v1495
          %v1569 = vmul.f32 %v1496, %v1496
          %v1570 = vmul.f32 %v1497, %v1497
          %v1571 = vmul.f32 %v1498, %v1498
          %v1572 = vmul.f32 %v1499, %v1499
          %v1573 = vmul.f32 %v1500, %v1500
          %v1574 = vmul.f32 %v1501, %v1501
          %v1575 = vmul.f32 %v1502, %v1502
          %v1576 = vmul.f32 %v1503, %v1503
          %v1577 = vmul.f32 %v1504, %v1504
          %v1578 = vmul.f32 %v1505, %v1505
          %v1579 = vmul.f32 %v1506, %v1506
          %v1580 = vadd.f32 %v1548, %v1549
          %v1581 = vadd.f32 %v1580, %v1550
          %v1582 = vadd.f32 %v1581, %v1551
          %v1583 = vadd.f32 %v1582, %v1552
          %v1584 = vadd.f32 %v1583, %v1553
          %v1585 = vadd.f32 %v1584, %v1554
          %v1586 = vadd.f32 %v1585, %v1555
          %v1587 = vadd.f32 %v1586, %v1556
          %v1588 = vadd.f32 %v1587, %v1557
          %v1589 = vadd.f32 %v1588, %v1558
          %v1590 = vadd.f32 %v1589, %v1559
          %v1591 = vadd.f32 %v1590, %v1560
          %v1592 = vadd.f32 %v1591, %v1561
          %v1593 = vadd.f32 %v1592, %v1562
          %v1594 = vadd.f32 %v1593, %v1563
          %v1595 = vadd.f32 %v1594, %v1564
          %v1596 = vadd.f32 %v1595, %v1565
          %v1597 = vadd.f32 %v1596, %v1566
          %v1598 = vadd.f32 %v1597, %v1567
          %v1599 = vadd.f32 %v1598, %v1568
          %v1600 = vadd.f32 %v1599, %v1569
          %v1601 = vadd.f32 %v1600, %v1570
          %v1602 = vadd.f32 %v1601, %v1571
          %v1603 = vadd.f32 %v1602, %v1572
          %v1604 = vadd.f32 %v1603, %v1573
          %v1605 = vadd.f32 %v1604, %v1574
          %v1606 = vadd.f32 %v1605, %v1575
          %v1607 = vadd.f32 %v1606, %v1576
          %v1608 = vadd.f32 %v1607, %v1577
          %v1609 = vadd.f32 %v1608, %v1578
          %v1610 = vadd.f32 %v1609, %v1579
          %v1611 = vrot.slane %v1610, 4
          %v1612 = vadd.f32 %v1610, %v1611
          %v1613 = vrot.slane %v1612, 2
          %v1614 = vadd.f32 %v1612, %v1613
          %v1615 = vrot.slane %v1614, 1
          %v1616 = vadd.f32 %v1614, %v1615
          %v1617 = vadd.f32 %v1547, %v1616
          %1618 = vst [vmem:[%s516] sm:$0x1] %v1617
          %1619 = vst [vmem:[%s503] sm:$0xff] %v1475
          %1620 = vst [vmem:[%s503 + $0x8] sm:$0xff] %v1476
          %1621 = vst [vmem:[%s503 + $0x10] sm:$0xff] %v1477
          %1622 = vst [vmem:[%s503 + $0x18] sm:$0xff] %v1478
          %1623 = vst [vmem:[%s503 + $0x20] sm:$0xff] %v1479
          %1624 = vst [vmem:[%s503 + $0x28] sm:$0xff] %v1480
          %1625 = vst [vmem:[%s503 + $0x30] sm:$0xff] %v1481
          %1626 = vst [vmem:[%s503 + $0x38] sm:$0xff] %v1482
          %1627 = vst [vmem:[%s503 + $0x40] sm:$0xff] %v1483
          %1628 = vst [vmem:[%s503 + $0x48] sm:$0xff] %v1484
          %1629 = vst [vmem:[%s503 + $0x50] sm:$0xff] %v1485
          %1630 = vst [vmem:[%s503 + $0x58] sm:$0xff] %v1486
          %1631 = vst [vmem:[%s503 + $0x60] sm:$0xff] %v1487
          %1632 = vst [vmem:[%s503 + $0x68] sm:$0xff] %v1488
          %1633 = vst [vmem:[%s503 + $0x70] sm:$0xff] %v1489
          %1634 = vst [vmem:[%s503 + $0x78] sm:$0xff] %v1490
          %1635 = vst [vmem:[%s503 + $0x80] sm:$0xff] %v1491
          %1636 = vst [vmem:[%s503 + $0x88] sm:$0xff] %v1492
          %1637 = vst [vmem:[%s503 + $0x90] sm:$0xff] %v1493
          %1638 = vst [vmem:[%s503 + $0x98] sm:$0xff] %v1494
          %1639 = vst [vmem:[%s503 + $0xa0] sm:$0xff] %v1495
          %1640 = vst [vmem:[%s503 + $0xa8] sm:$0xff] %v1496
          %1641 = vst [vmem:[%s503 + $0xb0] sm:$0xff] %v1497
          %1642 = vst [vmem:[%s503 + $0xb8] sm:$0xff] %v1498
          %1643 = vst [vmem:[%s503 + $0xc0] sm:$0xff] %v1499
          %1644 = vst [vmem:[%s503 + $0xc8] sm:$0xff] %v1500
          %1645 = vst [vmem:[%s503 + $0xd0] sm:$0xff] %v1501
          %1646 = vst [vmem:[%s503 + $0xd8] sm:$0xff] %v1502
          %1647 = vst [vmem:[%s503 + $0xe0] sm:$0xff] %v1503
          %1648 = vst [vmem:[%s503 + $0xe8] sm:$0xff] %v1504
          %1649 = vst [vmem:[%s503 + $0xf0] sm:$0xff] %v1505
          %1650 = vst [vmem:[%s503 + $0xf8] sm:$0xff] %v1506
        $region70: #{resnet_generator_forward.35} parent=53 // pred_fallthru
          _
        %s1651 = smul.u32 32, %s25
        %p1652 = scmp.lt.s32.totalorder %s23, 1
        %s1653 = scalar_select %p1652, %s23, 1
        %p1654 = scmp.lt.s32.totalorder %s1651, 31
        %s1655 = scalar_select %p1654, %s1651, 31
        %p1656 = scmp.lt.s32.totalorder %s24, 0
        %s1657 = scalar_select %p1656, %s24, 0
        %s1658 = sadd.s32 %s1657, %s1655
        %s1659 = smul.addr %s1653, 32
        %s1660 = sadd.s32 %s1658, %s1659
        %s1661 = smul.addr %s1660, 8
        %s1662 = scalar_lea.vmem %s3, %s1661
        %p1663 = scmp.lt.s32.totalorder %s23, 1
        %s1664 = scalar_select %p1663, %s23, 1
        %p1665 = scmp.lt.s32.totalorder %s24, 0
        %s1666 = scalar_select %p1665, %s24, 0
        %s1667 = sadd.s32 %s1666, %s1664
        %s1668 = scalar_lea.vmem %s4, %s1667
        %p1669 = scmp.lt.s32.totalorder %s23, 1
        %s1670 = scalar_select %p1669, %s23, 1
        %p1671 = scmp.lt.s32.totalorder %s24, 0
        %s1672 = scalar_select %p1671, %s24, 0
        %s1673 = sadd.s32 %s1672, %s1670
        %s1674 = scalar_lea.vmem %s5, %s1673
        // Predicated region
        $region71: #{resnet_generator_forward.35} parent=53 // pred_check
          %p1675 = pneg %p149
        $region72: #{resnet_generator_forward.35} parent=53 // pred_check_branch
          %1677 = sbr.rel (%p1675) target = $region74
        $region73: #{resnet_generator_forward.35} parent=53 // pred_region
          %s1678 = smul.u32 32, %s25
        $region74: #{resnet_generator_forward.35} parent=53 // pred_fallthru
          _
        // Predicated region
        $region75: #{resnet_generator_forward.35} parent=53 // pred_check
          %p1679 = pneg %p177
        $region76: #{resnet_generator_forward.35} parent=53 // pred_check_branch
          %1681 = sbr.rel (%p1679) target = $region78
        $region77: #{resnet_generator_forward.35} parent=53 // pred_region
          _
        $region78: #{resnet_generator_forward.35} parent=53 // pred_fallthru
          _
        // Predicated region
        $region79: #{resnet_generator_forward.35} parent=53 // pred_check
          %p1682 = pneg %p205
        $region80: #{resnet_generator_forward.35} parent=53 // pred_check_branch
          %1684 = sbr.rel (%p1682) target = $region82
        $region81: #{resnet_generator_forward.35} parent=53 // pred_region
          _
        $region82: #{resnet_generator_forward.35} parent=53 // pred_fallthru
          _
      $region54: #{resnet_generator_forward.35} parent=5 // pred_fallthru
        _
      %p1685 = scmp.le.s32.totalorder 2, %s12
      // Predicated region
      $region83: #{resnet_generator_forward.35} parent=5 // pred_check
        %p1686 = pneg %p1685
      $region84: #{resnet_generator_forward.35} parent=5 // pred_check_branch
        %1688 = sbr.rel (%p1686) target = $region86
      $region85: #{resnet_generator_forward.35} parent=5 // pred_region
        %s1689 = ssub.s32 %s12, 2
        // Predicated region
        $region87: #{resnet_generator_forward.35} parent=85 // pred_check
          %p1690 = pneg %p155
        $region88: #{resnet_generator_forward.35} parent=85 // pred_check_branch
          %1692 = sbr.rel (%p1690) target = $region90
        $region89: #{resnet_generator_forward.35} parent=85 // pred_region
          %s1693 = smul.u32 32, %s29
          %p1694 = scmp.lt.s32.totalorder %s27, 1
          %s1695 = scalar_select %p1694, %s27, 1
          %p1696 = scmp.lt.s32.totalorder %s1693, 31
          %s1697 = scalar_select %p1696, %s1693, 31
          %p1698 = scmp.lt.s32.totalorder %s28, 0
          %s1699 = scalar_select %p1698, %s28, 0
          %s1700 = sadd.s32 %s1699, %s1697
          %s1701 = smul.addr %s1695, 32
          %s1702 = sadd.s32 %s1700, %s1701
          %s1703 = smul.addr %s1702, 8
          %s1704 = scalar_lea.vmem %s3, %s1703
        $region90: #{resnet_generator_forward.35} parent=85 // pred_fallthru
          _
        // Predicated region
        $region91: #{resnet_generator_forward.35} parent=85 // pred_check
          %p1705 = pneg %p183
        $region92: #{resnet_generator_forward.35} parent=85 // pred_check_branch
          %1707 = sbr.rel (%p1705) target = $region94
        $region93: #{resnet_generator_forward.35} parent=85 // pred_region
          %p1708 = scmp.lt.s32.totalorder %s27, 1
          %s1709 = scalar_select %p1708, %s27, 1
          %p1710 = scmp.lt.s32.totalorder %s28, 0
          %s1711 = scalar_select %p1710, %s28, 0
          %s1712 = sadd.s32 %s1711, %s1709
          %s1713 = scalar_lea.vmem %s4, %s1712
        $region94: #{resnet_generator_forward.35} parent=85 // pred_fallthru
          _
        // Predicated region
        $region95: #{resnet_generator_forward.35} parent=85 // pred_check
          %p1714 = pneg %p211
        $region96: #{resnet_generator_forward.35} parent=85 // pred_check_branch
          %1716 = sbr.rel (%p1714) target = $region98
        $region97: #{resnet_generator_forward.35} parent=85 // pred_region
          %p1717 = scmp.lt.s32.totalorder %s27, 1
          %s1718 = scalar_select %p1717, %s27, 1
          %p1719 = scmp.lt.s32.totalorder %s28, 0
          %s1720 = scalar_select %p1719, %s28, 0
          %s1721 = sadd.s32 %s1720, %s1718
          %s1722 = scalar_lea.vmem %s5, %s1721
        $region98: #{resnet_generator_forward.35} parent=85 // pred_fallthru
          _
      $region86: #{resnet_generator_forward.35} parent=5 // pred_fallthru
        _
    $region6: #{resnet_generator_forward.35} parent=1 // loop_footer
      %s16 = sadd.s32 1, %s12
    $region7: #{resnet_generator_forward.35} parent=1 // loop_footer_branch
      %11 = sbr.rel target = $region3
    $region8: #{resnet_generator_forward.35} parent=1 // loop_exit
      _

// kernel: resnet_generator_forward.37
$region0: #{resnet_generator_forward.37}
  #allocation0 [shape = 'u32[]', space=smem, size = 0x4, offset = 0x4, fixed_abs, tag = 'smem constant byte address 0x4 - core index']
  #allocation1 [shape = 'u32[72,128]{1,0:T(1,128)}', space=vmem, size = 0x9000, scoped, tag = 'internal scratch']
  #allocation2 [shape = 'f32[256,128]{1,0:T(8,128)}', space=vmem, size = 0x20000, scoped, tag = 'scratch operand']
  %s0 = inlined_call_operand.vmem [shape: bf16[2,256,6272], index: 0, kind: input, shape index: {}]
  %s1 = inlined_call_operand.vmem [shape: bf16[6272,128], index: 1, kind: input, shape index: {}]
  %s2 = inlined_call_operand.vmem [shape: f32[1,128], index: 2, kind: input, shape index: {}]
  %s3 = inlined_call_operand.vmem [shape: f32[2,256,128], index: 3, kind: output, shape index: {}]
  %s4 = sld [smem:[#allocation0]]
  $region79: #{resnet_generator_forward.37} parent=0
    _
  %s6 = ssub.s32 1, %s4
  %s7 = scalar_select 0, %s6, %s4
  $region1: #{resnet_generator_forward.37} parent=0
    #allocation3 [shape = 'u8[917504]{0}', space=vmem, size = 0xe0000, scoped, tag = 'input window, operand 0']
    loop: start=0, step=1, limit=16
    $region2: #{resnet_generator_forward.37} parent=1 // loop_pre_header
      _
    $region3: #{resnet_generator_forward.37} parent=1 // loop_header
      %s9 = sphi 0, %s13
      %p10 = scmp.ge.s32.totalorder %s9, 16
      %s16 = sphi 0, %s42
      %s17 = sphi 0, %s38
      %s18 = sphi 0, %s34
      %s19 = sphi 0, %s30
      %s20 = sphi 0, %s16
      %s21 = sphi 0, %s17
      %s22 = sphi 0, %s18
      %s23 = sphi 0, %s19
      %s24 = sphi 0, %s20
      %s25 = sphi 0, %s21
      %s26 = sphi 0, %s22
      %s27 = sphi 0, %s23
      %s49 = sphi 0, %s51
      %s52 = sphi 0, %s49
      %s53 = sphi 0, %s52
      %s69 = sphi 0, %s53
      %s77 = sphi 0, %s79
      %s80 = sphi 0, %s77
      %s81 = sphi 0, %s80
      %s97 = sphi 0, %s81
      %s103 = sphi 0, %s105
      %s106 = sphi 0, %s103
      %s107 = sphi 0, %s106
      %s123 = sphi 0, %s107
      %s133 = sphi 0, %s135
      %s136 = sphi 0, %s133
      %s137 = sphi 0, %s136
      %s153 = sphi 0, %s137
    $region4: #{resnet_generator_forward.37} parent=1 // loop_header_branch
      %12 = sbr.rel (%p10) target = $region8
    $region5: #{resnet_generator_forward.37} parent=1 // loop_body
      %s14 = ssub.s32 %s9, 1
      %s15 = ssub.s32 %s9, 2
      %s28 = sadd.s32 1, %s19
      %p29 = scmp.ge.s32.totalorder %s28, 7
      %s30 = scalar_select %p29, 0, %s28
      %s31 = sadd.s32 1, %s18
      %s32 = scalar_select %p29, %s31, %s18
      %p33 = scmp.ge.s32.totalorder %s32, 1
      %s34 = scalar_select %p33, 0, %s32
      %s35 = sadd.s32 1, %s17
      %s36 = scalar_select %p33, %s35, %s17
      %p37 = scmp.ge.s32.totalorder %s36, 1
      %s38 = scalar_select %p37, 0, %s36
      %s39 = sadd.s32 1, %s16
      %s40 = scalar_select %p37, %s39, %s16
      %p41 = scmp.ge.s32.totalorder %s40, 2
      %s42 = scalar_select %p41, 0, %s40
      %s43 = ssub.s32 %s16, %s42
      %s44 = ssub.s32 %s18, %s34
      %s45 = sor.u32 %s43, %s44
      %s46 = ssub.s32 %s19, %s30
      %s47 = sor.u32 %s45, %s46
      %p48 = scmp.eq.s32.totalorder %s47, 0
      %s50 = sadd.s32 %s49, 1
      %s51 = scalar_select %p48, %s49, %s50
      %p54 = pneg %p48
      %p55 = scmp.eq.s32.totalorder %s9, 13
      %p56 = por %p54, %p55
      %p57 = scmp.ne.s32.totalorder %s49, %s52
      %p58 = scmp.eq.s32.totalorder %s9, 0
      %p59 = por %p57, %p58
      %p60 = scmp.ne.s32.totalorder %s49, %s52
      %p61 = scmp.eq.s32.totalorder %s14, 13
      %p62 = por %p60, %p61
      %p63 = scmp.ne.s32.totalorder %s52, %s53
      %p64 = scmp.eq.s32.totalorder %s14, 0
      %p65 = por %p63, %p64
      %p66 = scmp.ne.s32.totalorder %s52, %s53
      %p67 = scmp.eq.s32.totalorder %s15, 13
      %p68 = por %p66, %p67
      %p70 = scmp.ne.s32.totalorder %s53, %s69
      %p71 = scmp.eq.s32.totalorder %s15, 0
      %p72 = por %p70, %p71
      %s73 = ssub.s32 %s19, %s30
      %s74 = ssub.s32 %s17, %s38
      %s75 = sor.u32 %s73, %s74
      %p76 = scmp.eq.s32.totalorder %s75, 0
      %s78 = sadd.s32 %s77, 1
      %s79 = scalar_select %p76, %s77, %s78
      %p82 = pneg %p76
      %p83 = scmp.eq.s32.totalorder %s9, 13
      %p84 = por %p82, %p83
      %p85 = scmp.ne.s32.totalorder %s77, %s80
      %p86 = scmp.eq.s32.totalorder %s9, 0
      %p87 = por %p85, %p86
      %p88 = scmp.ne.s32.totalorder %s77, %s80
      %p89 = scmp.eq.s32.totalorder %s14, 13
      %p90 = por %p88, %p89
      %p91 = scmp.ne.s32.totalorder %s80, %s81
      %p92 = scmp.eq.s32.totalorder %s14, 0
      %p93 = por %p91, %p92
      %p94 = scmp.ne.s32.totalorder %s80, %s81
      %p95 = scmp.eq.s32.totalorder %s15, 13
      %p96 = por %p94, %p95
      %p98 = scmp.ne.s32.totalorder %s81, %s97
      %p99 = scmp.eq.s32.totalorder %s15, 0
      %p100 = por %p98, %p99
      %s101 = ssub.s32 %s17, %s38
      %p102 = scmp.eq.s32.totalorder %s101, 0
      %s104 = sadd.s32 %s103, 1
      %s105 = scalar_select %p102, %s103, %s104
      %p108 = pneg %p102
      %p109 = scmp.eq.s32.totalorder %s9, 13
      %p110 = por %p108, %p109
      %p111 = scmp.ne.s32.totalorder %s103, %s106
      %p112 = scmp.eq.s32.totalorder %s9, 0
      %p113 = por %p111, %p112
      %p114 = scmp.ne.s32.totalorder %s103, %s106
      %p115 = scmp.eq.s32.totalorder %s14, 13
      %p116 = por %p114, %p115
      %p117 = scmp.ne.s32.totalorder %s106, %s107
      %p118 = scmp.eq.s32.totalorder %s14, 0
      %p119 = por %p117, %p118
      %p120 = scmp.ne.s32.totalorder %s106, %s107
      %p121 = scmp.eq.s32.totalorder %s15, 13
      %p122 = por %p120, %p121
      %p124 = scmp.ne.s32.totalorder %s107, %s123
      %p125 = scmp.eq.s32.totalorder %s15, 0
      %p126 = por %p124, %p125
      %s127 = ssub.s32 %s16, %s42
      %s128 = ssub.s32 %s18, %s34
      %s129 = sor.u32 %s127, %s128
      %s130 = ssub.s32 %s17, %s38
      %s131 = sor.u32 %s129, %s130
      %p132 = scmp.eq.s32.totalorder %s131, 0
      %s134 = sadd.s32 %s133, 1
      %s135 = scalar_select %p132, %s133, %s134
      %p138 = pneg %p132
      %p139 = scmp.eq.s32.totalorder %s9, 13
      %p140 = por %p138, %p139
      %p141 = scmp.ne.s32.totalorder %s133, %s136
      %p142 = scmp.eq.s32.totalorder %s9, 0
      %p143 = por %p141, %p142
      %p144 = scmp.ne.s32.totalorder %s133, %s136
      %p145 = scmp.eq.s32.totalorder %s14, 13
      %p146 = por %p144, %p145
      %p147 = scmp.ne.s32.totalorder %s136, %s137
      %p148 = scmp.eq.s32.totalorder %s14, 0
      %p149 = por %p147, %p148
      %p150 = scmp.ne.s32.totalorder %s136, %s137
      %p151 = scmp.eq.s32.totalorder %s15, 13
      %p152 = por %p150, %p151
      %p154 = scmp.ne.s32.totalorder %s137, %s153
      %p155 = scmp.eq.s32.totalorder %s15, 0
      %p156 = por %p154, %p155
      %p157 = scmp.le.s32.totalorder 1, %s9
      %p158 = scmp.lt.s32.totalorder %s9, 15
      %p159 = pnand %p157, %p158
      %p160 = pneg %p159
      // Predicated region
      $region9: #{resnet_generator_forward.37} parent=5 // pred_check
        _
      $region10: #{resnet_generator_forward.37} parent=5 // pred_check_branch
        %162 = sbr.rel (%p159) target = $region12
      $region11: #{resnet_generator_forward.37} parent=5 // pred_region
        %s163 = ssub.s32 %s9, 1
        // Predicated region
        $region13: #{resnet_generator_forward.37} parent=11 // pred_check
          %p164 = pneg %p119
        $region14: #{resnet_generator_forward.37} parent=11 // pred_check_branch
          %166 = sbr.rel (%p164) target = $region16
        $region15: #{resnet_generator_forward.37} parent=11 // pred_region
          %p167 = scmp.lt.s32.totalorder %s21, 0
          %s168 = scalar_select %p167, %s21, 0
          %s169 = scalar_lea.vmem %s2, %s168
        $region16: #{resnet_generator_forward.37} parent=11 // pred_fallthru
          _
      $region12: #{resnet_generator_forward.37} parent=5 // pred_fallthru
        _
      %p170 = scmp.lt.s32.totalorder %s9, 14
      // Predicated region
      $region17: #{resnet_generator_forward.37} parent=5 // pred_check
        %p171 = pneg %p170
      $region18: #{resnet_generator_forward.37} parent=5 // pred_check_branch
        %173 = sbr.rel (%p171) target = $region20
      $region19: #{resnet_generator_forward.37} parent=5 // pred_region
        // Predicated region
        $region21: #{resnet_generator_forward.37} parent=19 // pred_check
          %p174 = pneg %p59
        $region22: #{resnet_generator_forward.37} parent=19 // pred_check_branch
          %176 = sbr.rel (%p174) target = $region24
        $region23: #{resnet_generator_forward.37} parent=19 // pred_region
          %s177 = sand.u32 %s49, 1
          %s178 = sand.u32 %s49, 1
          %s179 = smul.addr %s178, 896
          %s180 = scalar_lea.vmem [#allocation3], %s179
          %s181 = smul.u32 32, %s18
          %s182 = smul.u32 7, %s19
          %s183 = smul.addr %s181, 49
          %s184 = sadd.s32 %s182, %s183
          %s185 = smul.addr %s16, 1568
          %s186 = sadd.s32 %s184, %s185
          %s187 = smul.addr %s186, 4
          %s188 = scalar_lea.vmem %s0, %s187
          // Predicated region
          $region25: #{resnet_generator_forward.37} parent=23 // pred_check
            _
          $region26: #{resnet_generator_forward.37} parent=23 // pred_check_branch
            %190 = sbr.rel (0) target = $region28
          $region27: #{resnet_generator_forward.37} parent=23 // pred_region
            // Predicated region
            $region29: #{resnet_generator_forward.37} parent=27 // pred_check
              _
            $region30: #{resnet_generator_forward.37} parent=27 // pred_check_branch
              %192 = sbr.rel (0) target = $region32
            $region31: #{resnet_generator_forward.37} parent=27 // pred_region
              %s193 = scalar_lea.vmem %s188, 24
              %s194 = scalar_lea.vmem %s180, 24 [#allocation3]
              loop: start=0, step=1, limit=1
              $region33: #{resnet_generator_forward.37} parent=31 // loop_pre_header
                _
              $region34: #{resnet_generator_forward.37} parent=31 // loop_header
                %s196 = sphi 0, %s200
                %p197 = scmp.ge.s32.totalorder %s196, 1
                %s201 = sphi %s188, %s188
                %s202 = sphi %s180, %s180
              $region35: #{resnet_generator_forward.37} parent=31 // loop_header_branch
                %199 = sbr.rel (%p197) target = $region39
              $region36: #{resnet_generator_forward.37} parent=31 // loop_body
                %v203 = vld [vmem:[%s201] sm:$0xff]
                %204 = vst [vmem:[%s202] sm:$0xff] %v203
                %v205 = vld [vmem:[%s201 + $0x8] sm:$0xff]
                %206 = vst [vmem:[%s202 + $0x8] sm:$0xff] %v205
                %v207 = vld [vmem:[%s201 + $0x10] sm:$0xff]
                %208 = vst [vmem:[%s202 + $0x10] sm:$0xff] %v207
                %v209 = vld [vmem:[%s201 + $0xc4] sm:$0xff]
                %210 = vst [vmem:[%s202 + $0x1c] sm:$0xff] %v209
                %v211 = vld [vmem:[%s201 + $0xcc] sm:$0xff]
                %212 = vst [vmem:[%s202 + $0x24] sm:$0xff] %v211
                %v213 = vld [vmem:[%s201 + $0xd4] sm:$0xff]
                %214 = vst [vmem:[%s202 + $0x2c] sm:$0xff] %v213
                %v215 = vld [vmem:[%s201 + $0x188] sm:$0xff]
                %216 = vst [vmem:[%s202 + $0x38] sm:$0xff] %v215
                %v217 = vld [vmem:[%s201 + $0x190] sm:$0xff]
                %218 = vst [vmem:[%s202 + $0x40] sm:$0xff] %v217
                %v219 = vld [vmem:[%s201 + $0x198] sm:$0xff]
                %220 = vst [vmem:[%s202 + $0x48] sm:$0xff] %v219
                %v221 = vld [vmem:[%s201 + $0x24c] sm:$0xff]
                %222 = vst [vmem:[%s202 + $0x54] sm:$0xff] %v221
                %v223 = vld [vmem:[%s201 + $0x254] sm:$0xff]
                %224 = vst [vmem:[%s202 + $0x5c] sm:$0xff] %v223
                %v225 = vld [vmem:[%s201 + $0x25c] sm:$0xff]
                %226 = vst [vmem:[%s202 + $0x64] sm:$0xff] %v225
                %v227 = vld [vmem:[%s201 + $0x310] sm:$0xff]
                %228 = vst [vmem:[%s202 + $0x70] sm:$0xff] %v227
                %v229 = vld [vmem:[%s201 + $0x318] sm:$0xff]
                %230 = vst [vmem:[%s202 + $0x78] sm:$0xff] %v229
                %v231 = vld [vmem:[%s201 + $0x320] sm:$0xff]
                %232 = vst [vmem:[%s202 + $0x80] sm:$0xff] %v231
                %v233 = vld [vmem:[%s201 + $0x3d4] sm:$0xff]
                %234 = vst [vmem:[%s202 + $0x8c] sm:$0xff] %v233
                %v235 = vld [vmem:[%s201 + $0x3dc] sm:$0xff]
                %236 = vst [vmem:[%s202 + $0x94] sm:$0xff] %v235
                %v237 = vld [vmem:[%s201 + $0x3e4] sm:$0xff]
                %238 = vst [vmem:[%s202 + $0x9c] sm:$0xff] %v237
                %v239 = vld [vmem:[%s201 + $0x498] sm:$0xff]
                %240 = vst [vmem:[%s202 + $0xa8] sm:$0xff] %v239
                %v241 = vld [vmem:[%s201 + $0x4a0] sm:$0xff]
                %242 = vst [vmem:[%s202 + $0xb0] sm:$0xff] %v241
                %v243 = vld [vmem:[%s201 + $0x4a8] sm:$0xff]
                %244 = vst [vmem:[%s202 + $0xb8] sm:$0xff] %v243
                %v245 = vld [vmem:[%s201 + $0x55c] sm:$0xff]
                %246 = vst [vmem:[%s202 + $0xc4] sm:$0xff] %v245
                %v247 = vld [vmem:[%s201 + $0x564] sm:$0xff]
                %248 = vst [vmem:[%s202 + $0xcc] sm:$0xff] %v247
                %v249 = vld [vmem:[%s201 + $0x56c] sm:$0xff]
                %250 = vst [vmem:[%s202 + $0xd4] sm:$0xff] %v249
                %v251 = vld [vmem:[%s201 + $0x620] sm:$0xff]
                %252 = vst [vmem:[%s202 + $0xe0] sm:$0xff] %v251
                %v253 = vld [vmem:[%s201 + $0x628] sm:$0xff]
                %254 = vst [vmem:[%s202 + $0xe8] sm:$0xff] %v253
                %v255 = vld [vmem:[%s201 + $0x630] sm:$0xff]
                %256 = vst [vmem:[%s202 + $0xf0] sm:$0xff] %v255
                %v257 = vld [vmem:[%s201 + $0x6e4] sm:$0xff]
                %258 = vst [vmem:[%s202 + $0xfc] sm:$0xff] %v257
                %v259 = vld [vmem:[%s201 + $0x6ec] sm:$0xff]
                %260 = vst [vmem:[%s202 + $0x104] sm:$0xff] %v259
                %v261 = vld [vmem:[%s201 + $0x6f4] sm:$0xff]
                %262 = vst [vmem:[%s202 + $0x10c] sm:$0xff] %v261
                %v263 = vld [vmem:[%s201 + $0x7a8] sm:$0xff]
                %264 = vst [vmem:[%s202 + $0x118] sm:$0xff] %v263
                %v265 = vld [vmem:[%s201 + $0x7b0] sm:$0xff]
                %266 = vst [vmem:[%s202 + $0x120] sm:$0xff] %v265
                %v267 = vld [vmem:[%s201 + $0x7b8] sm:$0xff]
                %268 = vst [vmem:[%s202 + $0x128] sm:$0xff] %v267
                %v269 = vld [vmem:[%s201 + $0x86c] sm:$0xff]
                %270 = vst [vmem:[%s202 + $0x134] sm:$0xff] %v269
                %v271 = vld [vmem:[%s201 + $0x874] sm:$0xff]
                %272 = vst [vmem:[%s202 + $0x13c] sm:$0xff] %v271
                %v273 = vld [vmem:[%s201 + $0x87c] sm:$0xff]
                %274 = vst [vmem:[%s202 + $0x144] sm:$0xff] %v273
                %v275 = vld [vmem:[%s201 + $0x930] sm:$0xff]
                %276 = vst [vmem:[%s202 + $0x150] sm:$0xff] %v275
                %v277 = vld [vmem:[%s201 + $0x938] sm:$0xff]
                %278 = vst [vmem:[%s202 + $0x158] sm:$0xff] %v277
                %v279 = vld [vmem:[%s201 + $0x940] sm:$0xff]
                %280 = vst [vmem:[%s202 + $0x160] sm:$0xff] %v279
                %v281 = vld [vmem:[%s201 + $0x9f4] sm:$0xff]
                %282 = vst [vmem:[%s202 + $0x16c] sm:$0xff] %v281
                %v283 = vld [vmem:[%s201 + $0x9fc] sm:$0xff]
                %284 = vst [vmem:[%s202 + $0x174] sm:$0xff] %v283
                %v285 = vld [vmem:[%s201 + $0xa04] sm:$0xff]
                %286 = vst [vmem:[%s202 + $0x17c] sm:$0xff] %v285
                %v287 = vld [vmem:[%s201 + $0xab8] sm:$0xff]
                %288 = vst [vmem:[%s202 + $0x188] sm:$0xff] %v287
                %v289 = vld [vmem:[%s201 + $0xac0] sm:$0xff]
                %290 = vst [vmem:[%s202 + $0x190] sm:$0xff] %v289
                %v291 = vld [vmem:[%s201 + $0xac8] sm:$0xff]
                %292 = vst [vmem:[%s202 + $0x198] sm:$0xff] %v291
                %v293 = vld [vmem:[%s201 + $0xb7c] sm:$0xff]
                %294 = vst [vmem:[%s202 + $0x1a4] sm:$0xff] %v293
                %v295 = vld [vmem:[%s201 + $0xb84] sm:$0xff]
                %296 = vst [vmem:[%s202 + $0x1ac] sm:$0xff] %v295
                %v297 = vld [vmem:[%s201 + $0xb8c] sm:$0xff]
                %298 = vst [vmem:[%s202 + $0x1b4] sm:$0xff] %v297
                %v299 = vld [vmem:[%s201 + $0xc40] sm:$0xff]
                %300 = vst [vmem:[%s202 + $0x1c0] sm:$0xff] %v299
                %v301 = vld [vmem:[%s201 + $0xc48] sm:$0xff]
                %302 = vst [vmem:[%s202 + $0x1c8] sm:$0xff] %v301
                %v303 = vld [vmem:[%s201 + $0xc50] sm:$0xff]
                %304 = vst [vmem:[%s202 + $0x1d0] sm:$0xff] %v303
                %v305 = vld [vmem:[%s201 + $0xd04] sm:$0xff]
                %306 = vst [vmem:[%s202 + $0x1dc] sm:$0xff] %v305
                %v307 = vld [vmem:[%s201 + $0xd0c] sm:$0xff]
                %308 = vst [vmem:[%s202 + $0x1e4] sm:$0xff] %v307
                %v309 = vld [vmem:[%s201 + $0xd14] sm:$0xff]
                %310 = vst [vmem:[%s202 + $0x1ec] sm:$0xff] %v309
                %v311 = vld [vmem:[%s201 + $0xdc8] sm:$0xff]
                %312 = vst [vmem:[%s202 + $0x1f8] sm:$0xff] %v311
                %v313 = vld [vmem:[%s201 + $0xdd0] sm:$0xff]
                %314 = vst [vmem:[%s202 + $0x200] sm:$0xff] %v313
                %v315 = vld [vmem:[%s201 + $0xdd8] sm:$0xff]
                %316 = vst [vmem:[%s202 + $0x208] sm:$0xff] %v315
                %v317 = vld [vmem:[%s201 + $0xe8c] sm:$0xff]
                %318 = vst [vmem:[%s202 + $0x214] sm:$0xff] %v317
                %v319 = vld [vmem:[%s201 + $0xe94] sm:$0xff]
                %320 = vst [vmem:[%s202 + $0x21c] sm:$0xff] %v319
                %v321 = vld [vmem:[%s201 + $0xe9c] sm:$0xff]
                %322 = vst [vmem:[%s202 + $0x224] sm:$0xff] %v321
                %v323 = vld [vmem:[%s201 + $0xf50] sm:$0xff]
                %324 = vst [vmem:[%s202 + $0x230] sm:$0xff] %v323
                %v325 = vld [vmem:[%s201 + $0xf58] sm:$0xff]
                %326 = vst [vmem:[%s202 + $0x238] sm:$0xff] %v325
                %v327 = vld [vmem:[%s201 + $0xf60] sm:$0xff]
                %328 = vst [vmem:[%s202 + $0x240] sm:$0xff] %v327
                %v329 = vld [vmem:[%s201 + $0x1014] sm:$0xff]
                %330 = vst [vmem:[%s202 + $0x24c] sm:$0xff] %v329
                %v331 = vld [vmem:[%s201 + $0x101c] sm:$0xff]
                %332 = vst [vmem:[%s202 + $0x254] sm:$0xff] %v331
                %v333 = vld [vmem:[%s201 + $0x1024] sm:$0xff]
                %334 = vst [vmem:[%s202 + $0x25c] sm:$0xff] %v333
                %v335 = vld [vmem:[%s201 + $0x10d8] sm:$0xff]
                %336 = vst [vmem:[%s202 + $0x268] sm:$0xff] %v335
                %v337 = vld [vmem:[%s201 + $0x10e0] sm:$0xff]
                %338 = vst [vmem:[%s202 + $0x270] sm:$0xff] %v337
                %v339 = vld [vmem:[%s201 + $0x10e8] sm:$0xff]
                %340 = vst [vmem:[%s202 + $0x278] sm:$0xff] %v339
                %v341 = vld [vmem:[%s201 + $0x119c] sm:$0xff]
                %342 = vst [vmem:[%s202 + $0x284] sm:$0xff] %v341
                %v343 = vld [vmem:[%s201 + $0x11a4] sm:$0xff]
                %344 = vst [vmem:[%s202 + $0x28c] sm:$0xff] %v343
                %v345 = vld [vmem:[%s201 + $0x11ac] sm:$0xff]
                %346 = vst [vmem:[%s202 + $0x294] sm:$0xff] %v345
                %v347 = vld [vmem:[%s201 + $0x1260] sm:$0xff]
                %348 = vst [vmem:[%s202 + $0x2a0] sm:$0xff] %v347
                %v349 = vld [vmem:[%s201 + $0x1268] sm:$0xff]
                %350 = vst [vmem:[%s202 + $0x2a8] sm:$0xff] %v349
                %v351 = vld [vmem:[%s201 + $0x1270] sm:$0xff]
                %352 = vst [vmem:[%s202 + $0x2b0] sm:$0xff] %v351
                %v353 = vld [vmem:[%s201 + $0x1324] sm:$0xff]
                %354 = vst [vmem:[%s202 + $0x2bc] sm:$0xff] %v353
                %v355 = vld [vmem:[%s201 + $0x132c] sm:$0xff]
                %356 = vst [vmem:[%s202 + $0x2c4] sm:$0xff] %v355
                %v357 = vld [vmem:[%s201 + $0x1334] sm:$0xff]
                %358 = vst [vmem:[%s202 + $0x2cc] sm:$0xff] %v357
                %v359 = vld [vmem:[%s201 + $0x13e8] sm:$0xff]
                %360 = vst [vmem:[%s202 + $0x2d8] sm:$0xff] %v359
                %v361 = vld [vmem:[%s201 + $0x13f0] sm:$0xff]
                %362 = vst [vmem:[%s202 + $0x2e0] sm:$0xff] %v361
                %v363 = vld [vmem:[%s201 + $0x13f8] sm:$0xff]
                %364 = vst [vmem:[%s202 + $0x2e8] sm:$0xff] %v363
                %v365 = vld [vmem:[%s201 + $0x14ac] sm:$0xff]
                %366 = vst [vmem:[%s202 + $0x2f4] sm:$0xff] %v365
                %v367 = vld [vmem:[%s201 + $0x14b4] sm:$0xff]
                %368 = vst [vmem:[%s202 + $0x2fc] sm:$0xff] %v367
                %v369 = vld [vmem:[%s201 + $0x14bc] sm:$0xff]
                %370 = vst [vmem:[%s202 + $0x304] sm:$0xff] %v369
                %v371 = vld [vmem:[%s201 + $0x1570] sm:$0xff]
                %372 = vst [vmem:[%s202 + $0x310] sm:$0xff] %v371
                %v373 = vld [vmem:[%s201 + $0x1578] sm:$0xff]
                %374 = vst [vmem:[%s202 + $0x318] sm:$0xff] %v373
                %v375 = vld [vmem:[%s201 + $0x1580] sm:$0xff]
                %376 = vst [vmem:[%s202 + $0x320] sm:$0xff] %v375
                %v377 = vld [vmem:[%s201 + $0x1634] sm:$0xff]
                %378 = vst [vmem:[%s202 + $0x32c] sm:$0xff] %v377
                %v379 = vld [vmem:[%s201 + $0x163c] sm:$0xff]
                %380 = vst [vmem:[%s202 + $0x334] sm:$0xff] %v379
                %v381 = vld [vmem:[%s201 + $0x1644] sm:$0xff]
                %382 = vst [vmem:[%s202 + $0x33c] sm:$0xff] %v381
                %v383 = vld [vmem:[%s201 + $0x16f8] sm:$0xff]
                %384 = vst [vmem:[%s202 + $0x348] sm:$0xff] %v383
                %v385 = vld [vmem:[%s201 + $0x1700] sm:$0xff]
                %386 = vst [vmem:[%s202 + $0x350] sm:$0xff] %v385
                %v387 = vld [vmem:[%s201 + $0x1708] sm:$0xff]
                %388 = vst [vmem:[%s202 + $0x358] sm:$0xff] %v387
                %v389 = vld [vmem:[%s201 + $0x17bc] sm:$0xff]
                %390 = vst [vmem:[%s202 + $0x364] sm:$0xff] %v389
                %v391 = vld [vmem:[%s201 + $0x17c4] sm:$0xff]
                %392 = vst [vmem:[%s202 + $0x36c] sm:$0xff] %v391
                %v393 = vld [vmem:[%s201 + $0x17cc] sm:$0xff]
                %394 = vst [vmem:[%s202 + $0x374] sm:$0xff] %v393
              $region37: #{resnet_generator_forward.37} parent=31 // loop_footer
                %s200 = sadd.s32 1, %s196
              $region38: #{resnet_generator_forward.37} parent=31 // loop_footer_branch
                %195 = sbr.rel target = $region34
              $region39: #{resnet_generator_forward.37} parent=31 // loop_exit
                _
              %s396 = ssub.s32 16, 1
              loop: start=0, step=1, limit=1
              $region40: #{resnet_generator_forward.37} parent=31 // loop_pre_header
                _
              $region41: #{resnet_generator_forward.37} parent=31 // loop_header
                %s398 = sphi 0, %s402
                %p399 = scmp.ge.s32.totalorder %s398, 1
                %s403 = sphi %s193, %s193
                %s404 = sphi %s194, %s194
              $region42: #{resnet_generator_forward.37} parent=31 // loop_header_branch
                %401 = sbr.rel (%p399) target = $region46
              $region43: #{resnet_generator_forward.37} parent=31 // loop_body
                %v405 = vld [vmem:[%s403] sm:%s396]
                %406 = vst [vmem:[%s404] sm:%s396] %v405
                %v407 = vld [vmem:[%s403 + $0xc4] sm:%s396]
                %408 = vst [vmem:[%s404 + $0x1c] sm:%s396] %v407
                %v409 = vld [vmem:[%s403 + $0x188] sm:%s396]
                %410 = vst [vmem:[%s404 + $0x38] sm:%s396] %v409
                %v411 = vld [vmem:[%s403 + $0x24c] sm:%s396]
                %412 = vst [vmem:[%s404 + $0x54] sm:%s396] %v411
                %v413 = vld [vmem:[%s403 + $0x310] sm:%s396]
                %414 = vst [vmem:[%s404 + $0x70] sm:%s396] %v413
                %v415 = vld [vmem:[%s403 + $0x3d4] sm:%s396]
                %416 = vst [vmem:[%s404 + $0x8c] sm:%s396] %v415
                %v417 = vld [vmem:[%s403 + $0x498] sm:%s396]
                %418 = vst [vmem:[%s404 + $0xa8] sm:%s396] %v417
                %v419 = vld [vmem:[%s403 + $0x55c] sm:%s396]
                %420 = vst [vmem:[%s404 + $0xc4] sm:%s396] %v419
                %v421 = vld [vmem:[%s403 + $0x620] sm:%s396]
                %422 = vst [vmem:[%s404 + $0xe0] sm:%s396] %v421
                %v423 = vld [vmem:[%s403 + $0x6e4] sm:%s396]
                %424 = vst [vmem:[%s404 + $0xfc] sm:%s396] %v423
                %v425 = vld [vmem:[%s403 + $0x7a8] sm:%s396]
                %426 = vst [vmem:[%s404 + $0x118] sm:%s396] %v425
                %v427 = vld [vmem:[%s403 + $0x86c] sm:%s396]
                %428 = vst [vmem:[%s404 + $0x134] sm:%s396] %v427
                %v429 = vld [vmem:[%s403 + $0x930] sm:%s396]
                %430 = vst [vmem:[%s404 + $0x150] sm:%s396] %v429
                %v431 = vld [vmem:[%s403 + $0x9f4] sm:%s396]
                %432 = vst [vmem:[%s404 + $0x16c] sm:%s396] %v431
                %v433 = vld [vmem:[%s403 + $0xab8] sm:%s396]
                %434 = vst [vmem:[%s404 + $0x188] sm:%s396] %v433
                %v435 = vld [vmem:[%s403 + $0xb7c] sm:%s396]
                %436 = vst [vmem:[%s404 + $0x1a4] sm:%s396] %v435
                %v437 = vld [vmem:[%s403 + $0xc40] sm:%s396]
                %438 = vst [vmem:[%s404 + $0x1c0] sm:%s396] %v437
                %v439 = vld [vmem:[%s403 + $0xd04] sm:%s396]
                %440 = vst [vmem:[%s404 + $0x1dc] sm:%s396] %v439
                %v441 = vld [vmem:[%s403 + $0xdc8] sm:%s396]
                %442 = vst [vmem:[%s404 + $0x1f8] sm:%s396] %v441
                %v443 = vld [vmem:[%s403 + $0xe8c] sm:%s396]
                %444 = vst [vmem:[%s404 + $0x214] sm:%s396] %v443
                %v445 = vld [vmem:[%s403 + $0xf50] sm:%s396]
                %446 = vst [vmem:[%s404 + $0x230] sm:%s396] %v445
                %v447 = vld [vmem:[%s403 + $0x1014] sm:%s396]
                %448 = vst [vmem:[%s404 + $0x24c] sm:%s396] %v447
                %v449 = vld [vmem:[%s403 + $0x10d8] sm:%s396]
                %450 = vst [vmem:[%s404 + $0x268] sm:%s396] %v449
                %v451 = vld [vmem:[%s403 + $0x119c] sm:%s396]
                %452 = vst [vmem:[%s404 + $0x284] sm:%s396] %v451
                %v453 = vld [vmem:[%s403 + $0x1260] sm:%s396]
                %454 = vst [vmem:[%s404 + $0x2a0] sm:%s396] %v453
                %v455 = vld [vmem:[%s403 + $0x1324] sm:%s396]
                %456 = vst [vmem:[%s404 + $0x2bc] sm:%s396] %v455
                %v457 = vld [vmem:[%s403 + $0x13e8] sm:%s396]
                %458 = vst [vmem:[%s404 + $0x2d8] sm:%s396] %v457
                %v459 = vld [vmem:[%s403 + $0x14ac] sm:%s396]
                %460 = vst [vmem:[%s404 + $0x2f4] sm:%s396] %v459
                %v461 = vld [vmem:[%s403 + $0x1570] sm:%s396]
                %462 = vst [vmem:[%s404 + $0x310] sm:%s396] %v461
                %v463 = vld [vmem:[%s403 + $0x1634] sm:%s396]
                %464 = vst [vmem:[%s404 + $0x32c] sm:%s396] %v463
                %v465 = vld [vmem:[%s403 + $0x16f8] sm:%s396]
                %466 = vst [vmem:[%s404 + $0x348] sm:%s396] %v465
                %v467 = vld [vmem:[%s403 + $0x17bc] sm:%s396]
                %468 = vst [vmem:[%s404 + $0x364] sm:%s396] %v467
              $region44: #{resnet_generator_forward.37} parent=31 // loop_footer
                %s402 = sadd.s32 1, %s398
              $region45: #{resnet_generator_forward.37} parent=31 // loop_footer_branch
                %397 = sbr.rel target = $region41
              $region46: #{resnet_generator_forward.37} parent=31 // loop_exit
                _
            $region32: #{resnet_generator_forward.37} parent=27 // pred_fallthru
              _
          $region28: #{resnet_generator_forward.37} parent=23 // pred_fallthru
            _
          %469 = vnop
        $region24: #{resnet_generator_forward.37} parent=19 // pred_fallthru
          _
        // Predicated region
        $region47: #{resnet_generator_forward.37} parent=19 // pred_check
          %p470 = pneg %p87
        $region48: #{resnet_generator_forward.37} parent=19 // pred_check_branch
          %472 = sbr.rel (%p470) target = $region50
        $region49: #{resnet_generator_forward.37} parent=19 // pred_region
          %s473 = smul.u32 112, %s19
          %p474 = scmp.lt.s32.totalorder %s473, 783
          %s475 = scalar_select %p474, %s473, 783
          %p476 = scmp.lt.s32.totalorder %s17, 0
          %s477 = scalar_select %p476, %s17, 0
          %s478 = sadd.s32 %s477, %s475
          %s479 = smul.addr %s478, 4
          %s480 = scalar_lea.vmem %s1, %s479
          %s481 = smul.u32 112, %s19
        $region50: #{resnet_generator_forward.37} parent=19 // pred_fallthru
          _
      $region20: #{resnet_generator_forward.37} parent=5 // pred_fallthru
        _
      %p482 = scmp.le.s32.totalorder 1, %s9
      %p483 = scmp.lt.s32.totalorder %s9, 15
      %p484 = pnand %p482, %p483
      %p485 = pneg %p484
      // Predicated region
      $region51: #{resnet_generator_forward.37} parent=5 // pred_check
        _
      $region52: #{resnet_generator_forward.37} parent=5 // pred_check_branch
        %487 = sbr.rel (%p484) target = $region54
      $region53: #{resnet_generator_forward.37} parent=5 // pred_region
        %s488 = ssub.s32 %s9, 1
        %s489 = sand.u32 %s52, 1
        %s490 = sand.u32 %s52, 1
        %s491 = smul.addr %s490, 896
        %s492 = scalar_lea.vmem [#allocation3], %s491
        // Predicated region
        $region55: #{resnet_generator_forward.37} parent=53 // pred_check
          %p493 = pneg %p65
        $region56: #{resnet_generator_forward.37} parent=53 // pred_check_branch
          %495 = sbr.rel (%p493) target = $region58
        $region57: #{resnet_generator_forward.37} parent=53 // pred_region
          _
        $region58: #{resnet_generator_forward.37} parent=53 // pred_fallthru
          _
        %s496 = sand.u32 %s52, 1
        %s497 = sand.u32 %s52, 1
        %s498 = smul.addr %s497, 896
        %s499 = scalar_lea.vmem [#allocation3], %s498
        %p500 = pneg %p65
        %p501 = pneg %p62
        %s502 = smul.u32 112, %s23
        %p503 = scmp.lt.s32.totalorder %s502, 783
        %s504 = scalar_select %p503, %s502, 783
        %p505 = scmp.lt.s32.totalorder %s21, 0
        %s506 = scalar_select %p505, %s21, 0
        %s507 = sadd.s32 %s506, %s504
        %s508 = smul.addr %s507, 4
        %s509 = scalar_lea.vmem %s1, %s508
        %p510 = pneg %p93
        %p511 = pneg %p90
        %p512 = scmp.lt.s32.totalorder %s21, 0
        %s513 = scalar_select %p512, %s21, 0
        %s514 = scalar_lea.vmem %s2, %s513
        %p515 = pneg %p119
        %p516 = pneg %p116
        %p517 = pneg %p149
        %p518 = pneg %p146
        %s519 = smul.u32 32, %s22
        %p520 = scmp.lt.s32.totalorder %s20, 1
        %s521 = scalar_select %p520, %s20, 1
        %p522 = scmp.lt.s32.totalorder %s519, 31
        %s523 = scalar_select %p522, %s519, 31
        %p524 = scmp.lt.s32.totalorder %s21, 0
        %s525 = scalar_select %p524, %s21, 0
        %s526 = sadd.s32 %s525, %s523
        %s527 = smul.addr %s521, 32
        %s528 = sadd.s32 %s526, %s527
        %s529 = smul.addr %s528, 8
        %s530 = scalar_lea.vmem %s3, %s529
        %s531 = smul.u32 32, %s22
        %s532 = smul.u32 7, %s23
        %s533 = smul.u32 112, %s23
        %p534 = scmp.lt.s32.totalorder %s533, 783
        %s535 = scalar_select %p534, %s533, 783
        %p536 = scmp.lt.s32.totalorder %s21, 0
        %s537 = scalar_select %p536, %s21, 0
        %s538 = sadd.s32 %s537, %s535
        %s539 = smul.addr %s538, 4
        %s540 = scalar_lea.vmem %s1, %s539
        %s541 = smul.u32 112, %s23
        %p542 = scmp.lt.s32.totalorder %s21, 0
        %s543 = scalar_select %p542, %s21, 0
        %s544 = scalar_lea.vmem %s2, %s543
        %s545 = smul.u32 32, %s22
        %p546 = scmp.lt.s32.totalorder %s20, 1
        %s547 = scalar_select %p546, %s20, 1
        %p548 = scmp.lt.s32.totalorder %s545, 31
        %s549 = scalar_select %p548, %s545, 31
        %p550 = scmp.lt.s32.totalorder %s21, 0
        %s551 = scalar_select %p550, %s21, 0
        %s552 = sadd.s32 %s551, %s549
        %s553 = smul.addr %s547, 32
        %s554 = sadd.s32 %s552, %s553
        %s555 = smul.addr %s554, 8
        %s556 = scalar_lea.vmem %s3, %s555
        %s557 = smul.u32 32, %s22
        %p558 = scmp.eq.s32.totalorder %s23, 0
        // Predicated region
        $region59: #{resnet_generator_forward.37} parent=53 // pred_check
          %p559 = pneg %p558
        $region60: #{resnet_generator_forward.37} parent=53 // pred_check_branch
          %561 = sbr.rel (%p559) target = $region62
        $region61: #{resnet_generator_forward.37} parent=53 // pred_region
          %562 = vst [vmem:[#allocation2] sm:$0xff] 0.0
          %563 = vst [vmem:[#allocation2 + $0x8] sm:$0xff] 0.0
          %564 = vst [vmem:[#allocation2 + $0x10] sm:$0xff] 0.0
          %565 = vst [vmem:[#allocation2 + $0x18] sm:$0xff] 0.0
          %566 = vst [vmem:[#allocation2 + $0x20] sm:$0xff] 0.0
          %567 = vst [vmem:[#allocation2 + $0x28] sm:$0xff] 0.0
          %568 = vst [vmem:[#allocation2 + $0x30] sm:$0xff] 0.0
          %569 = vst [vmem:[#allocation2 + $0x38] sm:$0xff] 0.0
          %570 = vst [vmem:[#allocation2 + $0x40] sm:$0xff] 0.0
          %571 = vst [vmem:[#allocation2 + $0x48] sm:$0xff] 0.0
          %572 = vst [vmem:[#allocation2 + $0x50] sm:$0xff] 0.0
          %573 = vst [vmem:[#allocation2 + $0x58] sm:$0xff] 0.0
          %574 = vst [vmem:[#allocation2 + $0x60] sm:$0xff] 0.0
          %575 = vst [vmem:[#allocation2 + $0x68] sm:$0xff] 0.0
          %576 = vst [vmem:[#allocation2 + $0x70] sm:$0xff] 0.0
          %577 = vst [vmem:[#allocation2 + $0x78] sm:$0xff] 0.0
          %578 = vst [vmem:[#allocation2 + $0x80] sm:$0xff] 0.0
          %579 = vst [vmem:[#allocation2 + $0x88] sm:$0xff] 0.0
          %580 = vst [vmem:[#allocation2 + $0x90] sm:$0xff] 0.0
          %581 = vst [vmem:[#allocation2 + $0x98] sm:$0xff] 0.0
          %582 = vst [vmem:[#allocation2 + $0xa0] sm:$0xff] 0.0
          %583 = vst [vmem:[#allocation2 + $0xa8] sm:$0xff] 0.0
          %584 = vst [vmem:[#allocation2 + $0xb0] sm:$0xff] 0.0
          %585 = vst [vmem:[#allocation2 + $0xb8] sm:$0xff] 0.0
          %586 = vst [vmem:[#allocation2 + $0xc0] sm:$0xff] 0.0
          %587 = vst [vmem:[#allocation2 + $0xc8] sm:$0xff] 0.0
          %588 = vst [vmem:[#allocation2 + $0xd0] sm:$0xff] 0.0
          %589 = vst [vmem:[#allocation2 + $0xd8] sm:$0xff] 0.0
          %590 = vst [vmem:[#allocation2 + $0xe0] sm:$0xff] 0.0
          %591 = vst [vmem:[#allocation2 + $0xe8] sm:$0xff] 0.0
          %592 = vst [vmem:[#allocation2 + $0xf0] sm:$0xff] 0.0
          %593 = vst [vmem:[#allocation2 + $0xf8] sm:$0xff] 0.0
        $region62: #{resnet_generator_forward.37} parent=53 // pred_fallthru
          _
        %v594 = vld [vmem:[#allocation2] sm:$0xff]
        %v595 = vld [vmem:[#allocation2 + $0x8] sm:$0xff]
        %v596 = vld [vmem:[#allocation2 + $0x10] sm:$0xff]
        %v597 = vld [vmem:[#allocation2 + $0x18] sm:$0xff]
        %v598 = vld [vmem:[#allocation2 + $0x20] sm:$0xff]
        %v599 = vld [vmem:[#allocation2 + $0x28] sm:$0xff]
        %v600 = vld [vmem:[#allocation2 + $0x30] sm:$0xff]
        %v601 = vld [vmem:[#allocation2 + $0x38] sm:$0xff]
        %v602 = vld [vmem:[#allocation2 + $0x40] sm:$0xff]
        %v603 = vld [vmem:[#allocation2 + $0x48] sm:$0xff]
        %v604 = vld [vmem:[#allocation2 + $0x50] sm:$0xff]
        %v605 = vld [vmem:[#allocation2 + $0x58] sm:$0xff]
        %v606 = vld [vmem:[#allocation2 + $0x60] sm:$0xff]
        %v607 = vld [vmem:[#allocation2 + $0x68] sm:$0xff]
        %v608 = vld [vmem:[#allocation2 + $0x70] sm:$0xff]
        %v609 = vld [vmem:[#allocation2 + $0x78] sm:$0xff]
        %v610 = vld [vmem:[#allocation2 + $0x80] sm:$0xff]
        %v611 = vld [vmem:[#allocation2 + $0x88] sm:$0xff]
        %v612 = vld [vmem:[#allocation2 + $0x90] sm:$0xff]
        %v613 = vld [vmem:[#allocation2 + $0x98] sm:$0xff]
        %v614 = vld [vmem:[#allocation2 + $0xa0] sm:$0xff]
        %v615 = vld [vmem:[#allocation2 + $0xa8] sm:$0xff]
        %v616 = vld [vmem:[#allocation2 + $0xb0] sm:$0xff]
        %v617 = vld [vmem:[#allocation2 + $0xb8] sm:$0xff]
        %v618 = vld [vmem:[#allocation2 + $0xc0] sm:$0xff]
        %v619 = vld [vmem:[#allocation2 + $0xc8] sm:$0xff]
        %v620 = vld [vmem:[#allocation2 + $0xd0] sm:$0xff]
        %v621 = vld [vmem:[#allocation2 + $0xd8] sm:$0xff]
        %v622 = vld [vmem:[#allocation2 + $0xe0] sm:$0xff]
        %v623 = vld [vmem:[#allocation2 + $0xe8] sm:$0xff]
        %v624 = vld [vmem:[#allocation2 + $0xf0] sm:$0xff]
        %v625 = vld [vmem:[#allocation2 + $0xf8] sm:$0xff]
        %v626 = vld [vmem:[%s492] sm:$0xff]
        %v627 = vld [vmem:[%s492 + $0x8] sm:$0xff]
        %v628 = vld [vmem:[%s492 + $0x10] sm:$0xff]
        %v629 = vld [vmem:[%s492 + $0x18] sm:$0xf]
        %v630 = vld [vmem:[%s492 + $0x1c] sm:$0xff]
        %v631 = vld [vmem:[%s492 + $0x24] sm:$0xff]
        %v632 = vld [vmem:[%s492 + $0x2c] sm:$0xff]
        %v633 = vld [vmem:[%s492 + $0x34] sm:$0xf]
        %v634 = vld [vmem:[%s492 + $0x38] sm:$0xff]
        %v635 = vld [vmem:[%s492 + $0x40] sm:$0xff]
        %v636 = vld [vmem:[%s492 + $0x48] sm:$0xff]
        %v637 = vld [vmem:[%s492 + $0x50] sm:$0xf]
        %v638 = vld [vmem:[%s492 + $0x54] sm:$0xff]
        %v639 = vld [vmem:[%s492 + $0x5c] sm:$0xff]
        %v640 = vld [vmem:[%s492 + $0x64] sm:$0xff]
        %v641 = vld [vmem:[%s492 + $0x6c] sm:$0xf]
        %v642 = vld [vmem:[%s492 + $0x70] sm:$0xff]
        %v643 = vld [vmem:[%s492 + $0x78] sm:$0xff]
        %v644 = vld [vmem:[%s492 + $0x80] sm:$0xff]
        %v645 = vld [vmem:[%s492 + $0x88] sm:$0xf]
        %v646 = vld [vmem:[%s492 + $0x8c] sm:$0xff]
        %v647 = vld [vmem:[%s492 + $0x94] sm:$0xff]
        %v648 = vld [vmem:[%s492 + $0x9c] sm:$0xff]
        %v649 = vld [vmem:[%s492 + $0xa4] sm:$0xf]
        %v650 = vld [vmem:[%s492 + $0xa8] sm:$0xff]
        %v651 = vld [vmem:[%s492 + $0xb0] sm:$0xff]
        %v652 = vld [vmem:[%s492 + $0xb8] sm:$0xff]
        %v653 = vld [vmem:[%s492 + $0xc0] sm:$0xf]
        %v654 = vld [vmem:[%s492 + $0xc4] sm:$0xff]
        %v655 = vld [vmem:[%s492 + $0xcc] sm:$0xff]
        %v656 = vld [vmem:[%s492 + $0xd4] sm:$0xff]
        %v657 = vld [vmem:[%s492 + $0xdc] sm:$0xf]
        %v658 = vld [vmem:[%s492 + $0xe0] sm:$0xff]
        %v659 = vld [vmem:[%s492 + $0xe8] sm:$0xff]
        %v660 = vld [vmem:[%s492 + $0xf0] sm:$0xff]
        %v661 = vld [vmem:[%s492 + $0xf8] sm:$0xf]
        %v662 = vld [vmem:[%s492 + $0xfc] sm:$0xff]
        %v663 = vld [vmem:[%s492 + $0x104] sm:$0xff]
        %v664 = vld [vmem:[%s492 + $0x10c] sm:$0xff]
        %v665 = vld [vmem:[%s492 + $0x114] sm:$0xf]
        %v666 = vld [vmem:[%s492 + $0x118] sm:$0xff]
        %v667 = vld [vmem:[%s492 + $0x120] sm:$0xff]
        %v668 = vld [vmem:[%s492 + $0x128] sm:$0xff]
        %v669 = vld [vmem:[%s492 + $0x130] sm:$0xf]
        %v670 = vld [vmem:[%s492 + $0x134] sm:$0xff]
        %v671 = vld [vmem:[%s492 + $0x13c] sm:$0xff]
        %v672 = vld [vmem:[%s492 + $0x144] sm:$0xff]
        %v673 = vld [vmem:[%s492 + $0x14c] sm:$0xf]
        %v674 = vld [vmem:[%s492 + $0x150] sm:$0xff]
        %v675 = vld [vmem:[%s492 + $0x158] sm:$0xff]
        %v676 = vld [vmem:[%s492 + $0x160] sm:$0xff]
        %v677 = vld [vmem:[%s492 + $0x168] sm:$0xf]
        %v678 = vld [vmem:[%s492 + $0x16c] sm:$0xff]
        %v679 = vld [vmem:[%s492 + $0x174] sm:$0xff]
        %v680 = vld [vmem:[%s492 + $0x17c] sm:$0xff]
        %v681 = vld [vmem:[%s492 + $0x184] sm:$0xf]
        %v682 = vld [vmem:[%s492 + $0x188] sm:$0xff]
        %v683 = vld [vmem:[%s492 + $0x190] sm:$0xff]
        %v684 = vld [vmem:[%s492 + $0x198] sm:$0xff]
        %v685 = vld [vmem:[%s492 + $0x1a0] sm:$0xf]
        %v686 = vld [vmem:[%s492 + $0x1a4] sm:$0xff]
        %v687 = vld [vmem:[%s492 + $0x1ac] sm:$0xff]
        %v688 = vld [vmem:[%s492 + $0x1b4] sm:$0xff]
        %v689 = vld [vmem:[%s492 + $0x1bc] sm:$0xf]
        %v690 = vld [vmem:[%s492 + $0x1c0] sm:$0xff]
        %v691 = vld [vmem:[%s492 + $0x1c8] sm:$0xff]
        %v692 = vld [vmem:[%s492 + $0x1d0] sm:$0xff]
        %v693 = vld [vmem:[%s492 + $0x1d8] sm:$0xf]
        %v694 = vld [vmem:[%s492 + $0x1dc] sm:$0xff]
        %v695 = vld [vmem:[%s492 + $0x1e4] sm:$0xff]
        %v696 = vld [vmem:[%s492 + $0x1ec] sm:$0xff]
        %v697 = vld [vmem:[%s492 + $0x1f4] sm:$0xf]
        %v698 = vld [vmem:[%s492 + $0x1f8] sm:$0xff]
        %v699 = vld [vmem:[%s492 + $0x200] sm:$0xff]
        %v700 = vld [vmem:[%s492 + $0x208] sm:$0xff]
        %v701 = vld [vmem:[%s492 + $0x210] sm:$0xf]
        %v702 = vld [vmem:[%s492 + $0x214] sm:$0xff]
        %v703 = vld [vmem:[%s492 + $0x21c] sm:$0xff]
        %v704 = vld [vmem:[%s492 + $0x224] sm:$0xff]
        %v705 = vld [vmem:[%s492 + $0x22c] sm:$0xf]
        %v706 = vld [vmem:[%s492 + $0x230] sm:$0xff]
        %v707 = vld [vmem:[%s492 + $0x238] sm:$0xff]
        %v708 = vld [vmem:[%s492 + $0x240] sm:$0xff]
        %v709 = vld [vmem:[%s492 + $0x248] sm:$0xf]
        %v710 = vld [vmem:[%s492 + $0x24c] sm:$0xff]
        %v711 = vld [vmem:[%s492 + $0x254] sm:$0xff]
        %v712 = vld [vmem:[%s492 + $0x25c] sm:$0xff]
        %v713 = vld [vmem:[%s492 + $0x264] sm:$0xf]
        %v714 = vld [vmem:[%s492 + $0x268] sm:$0xff]
        %v715 = vld [vmem:[%s492 + $0x270] sm:$0xff]
        %v716 = vld [vmem:[%s492 + $0x278] sm:$0xff]
        %v717 = vld [vmem:[%s492 + $0x280] sm:$0xf]
        %v718 = vld [vmem:[%s492 + $0x284] sm:$0xff]
        %v719 = vld [vmem:[%s492 + $0x28c] sm:$0xff]
        %v720 = vld [vmem:[%s492 + $0x294] sm:$0xff]
        %v721 = vld [vmem:[%s492 + $0x29c] sm:$0xf]
        %v722 = vld [vmem:[%s492 + $0x2a0] sm:$0xff]
        %v723 = vld [vmem:[%s492 + $0x2a8] sm:$0xff]
        %v724 = vld [vmem:[%s492 + $0x2b0] sm:$0xff]
        %v725 = vld [vmem:[%s492 + $0x2b8] sm:$0xf]
        %v726 = vld [vmem:[%s492 + $0x2bc] sm:$0xff]
        %v727 = vld [vmem:[%s492 + $0x2c4] sm:$0xff]
        %v728 = vld [vmem:[%s492 + $0x2cc] sm:$0xff]
        %v729 = vld [vmem:[%s492 + $0x2d4] sm:$0xf]
        %v730 = vld [vmem:[%s492 + $0x2d8] sm:$0xff]
        %v731 = vld [vmem:[%s492 + $0x2e0] sm:$0xff]
        %v732 = vld [vmem:[%s492 + $0x2e8] sm:$0xff]
        %v733 = vld [vmem:[%s492 + $0x2f0] sm:$0xf]
        %v734 = vld [vmem:[%s492 + $0x2f4] sm:$0xff]
        %v735 = vld [vmem:[%s492 + $0x2fc] sm:$0xff]
        %v736 = vld [vmem:[%s492 + $0x304] sm:$0xff]
        %v737 = vld [vmem:[%s492 + $0x30c] sm:$0xf]
        %v738 = vld [vmem:[%s492 + $0x310] sm:$0xff]
        %v739 = vld [vmem:[%s492 + $0x318] sm:$0xff]
        %v740 = vld [vmem:[%s492 + $0x320] sm:$0xff]
        %v741 = vld [vmem:[%s492 + $0x328] sm:$0xf]
        %v742 = vld [vmem:[%s492 + $0x32c] sm:$0xff]
        %v743 = vld [vmem:[%s492 + $0x334] sm:$0xff]
        %v744 = vld [vmem:[%s492 + $0x33c] sm:$0xff]
        %v745 = vld [vmem:[%s492 + $0x344] sm:$0xf]
        %v746 = vld [vmem:[%s492 + $0x348] sm:$0xff]
        %v747 = vld [vmem:[%s492 + $0x350] sm:$0xff]
        %v748 = vld [vmem:[%s492 + $0x358] sm:$0xff]
        %v749 = vld [vmem:[%s492 + $0x360] sm:$0xf]
        %v750 = vld [vmem:[%s492 + $0x364] sm:$0xff]
        %v751 = vld [vmem:[%s492 + $0x36c] sm:$0xff]
        %v752 = vld [vmem:[%s492 + $0x374] sm:$0xff]
        %v753 = vld [vmem:[%s492 + $0x37c] sm:$0xf]
        %v754 = vld [vmem:[%s540] sm:$0xf]
        %v755 = vld [vmem:[%s540 + $0x4] sm:$0xf]
        %v756 = vld [vmem:[%s540 + $0x8] sm:$0xf]
        %v757 = vld [vmem:[%s540 + $0xc] sm:$0xf]
        %v758 = vld [vmem:[%s540 + $0x10] sm:$0xf]
        %v759 = vld [vmem:[%s540 + $0x14] sm:$0xf]
        %v760 = vld [vmem:[%s540 + $0x18] sm:$0xf]
        %v761 = vld [vmem:[%s540 + $0x1c] sm:$0xf]
        %v762 = vld [vmem:[%s540 + $0x20] sm:$0xf]
        %v763 = vld [vmem:[%s540 + $0x24] sm:$0xf]
        %v764 = vld [vmem:[%s540 + $0x28] sm:$0xf]
        %v765 = vld [vmem:[%s540 + $0x2c] sm:$0xf]
        %v766 = vld [vmem:[%s540 + $0x30] sm:$0xf]
        %v767 = vld [vmem:[%s540 + $0x34] sm:$0xf]
        %v768 = vld [vmem:[%s540 + $0x38] sm:$0xf]
        %v769 = vld [vmem:[%s540 + $0x3c] sm:$0xf]
        %v770 = vld [vmem:[%s540 + $0x40] sm:$0xf]
        %v771 = vld [vmem:[%s540 + $0x44] sm:$0xf]
        %v772 = vld [vmem:[%s540 + $0x48] sm:$0xf]
        %v773 = vld [vmem:[%s540 + $0x4c] sm:$0xf]
        %v774 = vld [vmem:[%s540 + $0x50] sm:$0xf]
        %v775 = vld [vmem:[%s540 + $0x54] sm:$0xf]
        %v776 = vld [vmem:[%s540 + $0x58] sm:$0xf]
        %v777 = vld [vmem:[%s540 + $0x5c] sm:$0xf]
        %v778 = vld [vmem:[%s540 + $0x60] sm:$0xf]
        %v779 = vld [vmem:[%s540 + $0x64] sm:$0xf]
        %v780 = vld [vmem:[%s540 + $0x68] sm:$0xf]
        %v781 = vld [vmem:[%s540 + $0x6c] sm:$0xf]
        %v782 = vld [vmem:[%s540 + $0x70] sm:$0xf]
        %v783 = vld [vmem:[%s540 + $0x74] sm:$0xf]
        %v784 = vld [vmem:[%s540 + $0x78] sm:$0xf]
        %v785 = vld [vmem:[%s540 + $0x7c] sm:$0xf]
        %v786 = vld [vmem:[%s540 + $0x80] sm:$0xf]
        %v787 = vld [vmem:[%s540 + $0x84] sm:$0xf]
        %v788 = vld [vmem:[%s540 + $0x88] sm:$0xf]
        %v789 = vld [vmem:[%s540 + $0x8c] sm:$0xf]
        %v790 = vld [vmem:[%s540 + $0x90] sm:$0xf]
        %v791 = vld [vmem:[%s540 + $0x94] sm:$0xf]
        %v792 = vld [vmem:[%s540 + $0x98] sm:$0xf]
        %v793 = vld [vmem:[%s540 + $0x9c] sm:$0xf]
        %v794 = vld [vmem:[%s540 + $0xa0] sm:$0xf]
        %v795 = vld [vmem:[%s540 + $0xa4] sm:$0xf]
        %v796 = vld [vmem:[%s540 + $0xa8] sm:$0xf]
        %v797 = vld [vmem:[%s540 + $0xac] sm:$0xf]
        %v798 = vld [vmem:[%s540 + $0xb0] sm:$0xf]
        %v799 = vld [vmem:[%s540 + $0xb4] sm:$0xf]
        %v800 = vld [vmem:[%s540 + $0xb8] sm:$0xf]
        %v801 = vld [vmem:[%s540 + $0xbc] sm:$0xf]
        %v802 = vld [vmem:[%s540 + $0xc0] sm:$0xf]
        %v803 = vld [vmem:[%s540 + $0xc4] sm:$0xf]
        %v804 = vld [vmem:[%s540 + $0xc8] sm:$0xf]
        %v805 = vld [vmem:[%s540 + $0xcc] sm:$0xf]
        %v806 = vld [vmem:[%s540 + $0xd0] sm:$0xf]
        %v807 = vld [vmem:[%s540 + $0xd4] sm:$0xf]
        %v808 = vld [vmem:[%s540 + $0xd8] sm:$0xf]
        %v809 = vld [vmem:[%s540 + $0xdc] sm:$0xf]
        %v810 = vld [vmem:[%s540 + $0xe0] sm:$0xf]
        %v811 = vld [vmem:[%s540 + $0xe4] sm:$0xf]
        %v812 = vld [vmem:[%s540 + $0xe8] sm:$0xf]
        %v813 = vld [vmem:[%s540 + $0xec] sm:$0xf]
        %v814 = vld [vmem:[%s540 + $0xf0] sm:$0xf]
        %v815 = vld [vmem:[%s540 + $0xf4] sm:$0xf]
        %v816 = vld [vmem:[%s540 + $0xf8] sm:$0xf]
        %v817 = vld [vmem:[%s540 + $0xfc] sm:$0xf]
        %v818 = vld [vmem:[%s540 + $0x100] sm:$0xf]
        %v819 = vld [vmem:[%s540 + $0x104] sm:$0xf]
        %v820 = vld [vmem:[%s540 + $0x108] sm:$0xf]
        %v821 = vld [vmem:[%s540 + $0x10c] sm:$0xf]
        %v822 = vld [vmem:[%s540 + $0x110] sm:$0xf]
        %v823 = vld [vmem:[%s540 + $0x114] sm:$0xf]
        %v824 = vld [vmem:[%s540 + $0x118] sm:$0xf]
        %v825 = vld [vmem:[%s540 + $0x11c] sm:$0xf]
        %v826 = vld [vmem:[%s540 + $0x120] sm:$0xf]
        %v827 = vld [vmem:[%s540 + $0x124] sm:$0xf]
        %v828 = vld [vmem:[%s540 + $0x128] sm:$0xf]
        %v829 = vld [vmem:[%s540 + $0x12c] sm:$0xf]
        %v830 = vld [vmem:[%s540 + $0x130] sm:$0xf]
        %v831 = vld [vmem:[%s540 + $0x134] sm:$0xf]
        %v832 = vld [vmem:[%s540 + $0x138] sm:$0xf]
        %v833 = vld [vmem:[%s540 + $0x13c] sm:$0xf]
        %v834 = vld [vmem:[%s540 + $0x140] sm:$0xf]
        %v835 = vld [vmem:[%s540 + $0x144] sm:$0xf]
        %v836 = vld [vmem:[%s540 + $0x148] sm:$0xf]
        %v837 = vld [vmem:[%s540 + $0x14c] sm:$0xf]
        %v838 = vld [vmem:[%s540 + $0x150] sm:$0xf]
        %v839 = vld [vmem:[%s540 + $0x154] sm:$0xf]
        %v840 = vld [vmem:[%s540 + $0x158] sm:$0xf]
        %v841 = vld [vmem:[%s540 + $0x15c] sm:$0xf]
        %v842 = vld [vmem:[%s540 + $0x160] sm:$0xf]
        %v843 = vld [vmem:[%s540 + $0x164] sm:$0xf]
        %v844 = vld [vmem:[%s540 + $0x168] sm:$0xf]
        %v845 = vld [vmem:[%s540 + $0x16c] sm:$0xf]
        %v846 = vld [vmem:[%s540 + $0x170] sm:$0xf]
        %v847 = vld [vmem:[%s540 + $0x174] sm:$0xf]
        %v848 = vld [vmem:[%s540 + $0x178] sm:$0xf]
        %v849 = vld [vmem:[%s540 + $0x17c] sm:$0xf]
        %v850 = vld [vmem:[%s540 + $0x180] sm:$0xf]
        %v851 = vld [vmem:[%s540 + $0x184] sm:$0xf]
        %v852 = vld [vmem:[%s540 + $0x188] sm:$0xf]
        %v853 = vld [vmem:[%s540 + $0x18c] sm:$0xf]
        %v854 = vld [vmem:[%s540 + $0x190] sm:$0xf]
        %v855 = vld [vmem:[%s540 + $0x194] sm:$0xf]
        %v856 = vld [vmem:[%s540 + $0x198] sm:$0xf]
        %v857 = vld [vmem:[%s540 + $0x19c] sm:$0xf]
        %v858 = vld [vmem:[%s540 + $0x1a0] sm:$0xf]
        %v859 = vld [vmem:[%s540 + $0x1a4] sm:$0xf]
        %v860 = vld [vmem:[%s540 + $0x1a8] sm:$0xf]
        %v861 = vld [vmem:[%s540 + $0x1ac] sm:$0xf]
        %v862 = vld [vmem:[%s540 + $0x1b0] sm:$0xf]
        %v863 = vld [vmem:[%s540 + $0x1b4] sm:$0xf]
        %v864 = vld [vmem:[%s540 + $0x1b8] sm:$0xf]
        %v865 = vld [vmem:[%s540 + $0x1bc] sm:$0xf]
        %v994 = vunpack.c.l.b16 %v626
        %v995 = vunpack.c.h.b16 %v626
        %v996 = vunpack.c.l.b16 %v627
        %v997 = vunpack.c.h.b16 %v627
        %v998 = vunpack.c.l.b16 %v628
        %v999 = vunpack.c.h.b16 %v628
        %v1000 = vunpack.c.l.b16 %v629
        %v1001 = vunpack.c.l.b16 %v630
        %v1002 = vunpack.c.h.b16 %v630
        %v1003 = vunpack.c.l.b16 %v631
        %v1004 = vunpack.c.h.b16 %v631
        %v1005 = vunpack.c.l.b16 %v632
        %v1006 = vunpack.c.h.b16 %v632
        %v1007 = vunpack.c.l.b16 %v633
        %v1008 = vunpack.c.l.b16 %v634
        %v1009 = vunpack.c.h.b16 %v634
        %v1010 = vunpack.c.l.b16 %v635
        %v1011 = vunpack.c.h.b16 %v635
        %v1012 = vunpack.c.l.b16 %v636
        %v1013 = vunpack.c.h.b16 %v636
        %v1014 = vunpack.c.l.b16 %v637
        %v1015 = vunpack.c.l.b16 %v638
        %v1016 = vunpack.c.h.b16 %v638
        %v1017 = vunpack.c.l.b16 %v639
        %v1018 = vunpack.c.h.b16 %v639
        %v1019 = vunpack.c.l.b16 %v640
        %v1020 = vunpack.c.h.b16 %v640
        %v1021 = vunpack.c.l.b16 %v641
        %v1022 = vunpack.c.l.b16 %v642
        %v1023 = vunpack.c.h.b16 %v642
        %v1024 = vunpack.c.l.b16 %v643
        %v1025 = vunpack.c.h.b16 %v643
        %v1026 = vunpack.c.l.b16 %v644
        %v1027 = vunpack.c.h.b16 %v644
        %v1028 = vunpack.c.l.b16 %v645
        %v1029 = vunpack.c.l.b16 %v646
        %v1030 = vunpack.c.h.b16 %v646
        %v1031 = vunpack.c.l.b16 %v647
        %v1032 = vunpack.c.h.b16 %v647
        %v1033 = vunpack.c.l.b16 %v648
        %v1034 = vunpack.c.h.b16 %v648
        %v1035 = vunpack.c.l.b16 %v649
        %v1036 = vunpack.c.l.b16 %v650
        %v1037 = vunpack.c.h.b16 %v650
        %v1038 = vunpack.c.l.b16 %v651
        %v1039 = vunpack.c.h.b16 %v651
        %v1040 = vunpack.c.l.b16 %v652
        %v1041 = vunpack.c.h.b16 %v652
        %v1042 = vunpack.c.l.b16 %v653
        %v1043 = vunpack.c.l.b16 %v654
        %v1044 = vunpack.c.h.b16 %v654
        %v1045 = vunpack.c.l.b16 %v655
        %v1046 = vunpack.c.h.b16 %v655
        %v1047 = vunpack.c.l.b16 %v656
        %v1048 = vunpack.c.h.b16 %v656
        %v1049 = vunpack.c.l.b16 %v657
        %v1050 = vunpack.c.l.b16 %v658
        %v1051 = vunpack.c.h.b16 %v658
        %v1052 = vunpack.c.l.b16 %v659
        %v1053 = vunpack.c.h.b16 %v659
        %v1054 = vunpack.c.l.b16 %v660
        %v1055 = vunpack.c.h.b16 %v660
        %v1056 = vunpack.c.l.b16 %v661
        %v1057 = vunpack.c.l.b16 %v662
        %v1058 = vunpack.c.h.b16 %v662
        %v1059 = vunpack.c.l.b16 %v663
        %v1060 = vunpack.c.h.b16 %v663
        %v1061 = vunpack.c.l.b16 %v664
        %v1062 = vunpack.c.h.b16 %v664
        %v1063 = vunpack.c.l.b16 %v665
        %v1064 = vunpack.c.l.b16 %v666
        %v1065 = vunpack.c.h.b16 %v666
        %v1066 = vunpack.c.l.b16 %v667
        %v1067 = vunpack.c.h.b16 %v667
        %v1068 = vunpack.c.l.b16 %v668
        %v1069 = vunpack.c.h.b16 %v668
        %v1070 = vunpack.c.l.b16 %v669
        %v1071 = vunpack.c.l.b16 %v670
        %v1072 = vunpack.c.h.b16 %v670
        %v1073 = vunpack.c.l.b16 %v671
        %v1074 = vunpack.c.h.b16 %v671
        %v1075 = vunpack.c.l.b16 %v672
        %v1076 = vunpack.c.h.b16 %v672
        %v1077 = vunpack.c.l.b16 %v673
        %v1078 = vunpack.c.l.b16 %v674
        %v1079 = vunpack.c.h.b16 %v674
        %v1080 = vunpack.c.l.b16 %v675
        %v1081 = vunpack.c.h.b16 %v675
        %v1082 = vunpack.c.l.b16 %v676
        %v1083 = vunpack.c.h.b16 %v676
        %v1084 = vunpack.c.l.b16 %v677
        %v1085 = vunpack.c.l.b16 %v678
        %v1086 = vunpack.c.h.b16 %v678
        %v1087 = vunpack.c.l.b16 %v679
        %v1088 = vunpack.c.h.b16 %v679
        %v1089 = vunpack.c.l.b16 %v680
        %v1090 = vunpack.c.h.b16 %v680
        %v1091 = vunpack.c.l.b16 %v681
        %v1092 = vunpack.c.l.b16 %v682
        %v1093 = vunpack.c.h.b16 %v682
        %v1094 = vunpack.c.l.b16 %v683
        %v1095 = vunpack.c.h.b16 %v683
        %v1096 = vunpack.c.l.b16 %v684
        %v1097 = vunpack.c.h.b16 %v684
        %v1098 = vunpack.c.l.b16 %v685
        %v1099 = vunpack.c.l.b16 %v686
        %v1100 = vunpack.c.h.b16 %v686
        %v1101 = vunpack.c.l.b16 %v687
        %v1102 = vunpack.c.h.b16 %v687
        %v1103 = vunpack.c.l.b16 %v688
        %v1104 = vunpack.c.h.b16 %v688
        %v1105 = vunpack.c.l.b16 %v689
        %v1106 = vunpack.c.l.b16 %v690
        %v1107 = vunpack.c.h.b16 %v690
        %v1108 = vunpack.c.l.b16 %v691
        %v1109 = vunpack.c.h.b16 %v691
        %v1110 = vunpack.c.l.b16 %v692
        %v1111 = vunpack.c.h.b16 %v692
        %v1112 = vunpack.c.l.b16 %v693
        %v1113 = vunpack.c.l.b16 %v694
        %v1114 = vunpack.c.h.b16 %v694
        %v1115 = vunpack.c.l.b16 %v695
        %v1116 = vunpack.c.h.b16 %v695
        %v1117 = vunpack.c.l.b16 %v696
        %v1118 = vunpack.c.h.b16 %v696
        %v1119 = vunpack.c.l.b16 %v697
        %v1120 = vunpack.c.l.b16 %v698
        %v1121 = vunpack.c.h.b16 %v698
        %v1122 = vunpack.c.l.b16 %v699
        %v1123 = vunpack.c.h.b16 %v699
        %v1124 = vunpack.c.l.b16 %v700
        %v1125 = vunpack.c.h.b16 %v700
        %v1126 = vunpack.c.l.b16 %v701
        %v1127 = vunpack.c.l.b16 %v702
        %v1128 = vunpack.c.h.b16 %v702
        %v1129 = vunpack.c.l.b16 %v703
        %v1130 = vunpack.c.h.b16 %v703
        %v1131 = vunpack.c.l.b16 %v704
        %v1132 = vunpack.c.h.b16 %v704
        %v1133 = vunpack.c.l.b16 %v705
        %v1134 = vunpack.c.l.b16 %v706
        %v1135 = vunpack.c.h.b16 %v706
        %v1136 = vunpack.c.l.b16 %v707
        %v1137 = vunpack.c.h.b16 %v707
        %v1138 = vunpack.c.l.b16 %v708
        %v1139 = vunpack.c.h.b16 %v708
        %v1140 = vunpack.c.l.b16 %v709
        %v1141 = vunpack.c.l.b16 %v710
        %v1142 = vunpack.c.h.b16 %v710
        %v1143 = vunpack.c.l.b16 %v711
        %v1144 = vunpack.c.h.b16 %v711
        %v1145 = vunpack.c.l.b16 %v712
        %v1146 = vunpack.c.h.b16 %v712
        %v1147 = vunpack.c.l.b16 %v713
        %v1148 = vunpack.c.l.b16 %v714
        %v1149 = vunpack.c.h.b16 %v714
        %v1150 = vunpack.c.l.b16 %v715
        %v1151 = vunpack.c.h.b16 %v715
        %v1152 = vunpack.c.l.b16 %v716
        %v1153 = vunpack.c.h.b16 %v716
        %v1154 = vunpack.c.l.b16 %v717
        %v1155 = vunpack.c.l.b16 %v718
        %v1156 = vunpack.c.h.b16 %v718
        %v1157 = vunpack.c.l.b16 %v719
        %v1158 = vunpack.c.h.b16 %v719
        %v1159 = vunpack.c.l.b16 %v720
        %v1160 = vunpack.c.h.b16 %v720
        %v1161 = vunpack.c.l.b16 %v721
        %v1162 = vunpack.c.l.b16 %v722
        %v1163 = vunpack.c.h.b16 %v722
        %v1164 = vunpack.c.l.b16 %v723
        %v1165 = vunpack.c.h.b16 %v723
        %v1166 = vunpack.c.l.b16 %v724
        %v1167 = vunpack.c.h.b16 %v724
        %v1168 = vunpack.c.l.b16 %v725
        %v1169 = vunpack.c.l.b16 %v726
        %v1170 = vunpack.c.h.b16 %v726
        %v1171 = vunpack.c.l.b16 %v727
        %v1172 = vunpack.c.h.b16 %v727
        %v1173 = vunpack.c.l.b16 %v728
        %v1174 = vunpack.c.h.b16 %v728
        %v1175 = vunpack.c.l.b16 %v729
        %v1176 = vunpack.c.l.b16 %v730
        %v1177 = vunpack.c.h.b16 %v730
        %v1178 = vunpack.c.l.b16 %v731
        %v1179 = vunpack.c.h.b16 %v731
        %v1180 = vunpack.c.l.b16 %v732
        %v1181 = vunpack.c.h.b16 %v732
        %v1182 = vunpack.c.l.b16 %v733
        %v1183 = vunpack.c.l.b16 %v734
        %v1184 = vunpack.c.h.b16 %v734
        %v1185 = vunpack.c.l.b16 %v735
        %v1186 = vunpack.c.h.b16 %v735
        %v1187 = vunpack.c.l.b16 %v736
        %v1188 = vunpack.c.h.b16 %v736
        %v1189 = vunpack.c.l.b16 %v737
        %v1190 = vunpack.c.l.b16 %v738
        %v1191 = vunpack.c.h.b16 %v738
        %v1192 = vunpack.c.l.b16 %v739
        %v1193 = vunpack.c.h.b16 %v739
        %v1194 = vunpack.c.l.b16 %v740
        %v1195 = vunpack.c.h.b16 %v740
        %v1196 = vunpack.c.l.b16 %v741
        %v1197 = vunpack.c.l.b16 %v742
        %v1198 = vunpack.c.h.b16 %v742
        %v1199 = vunpack.c.l.b16 %v743
        %v1200 = vunpack.c.h.b16 %v743
        %v1201 = vunpack.c.l.b16 %v744
        %v1202 = vunpack.c.h.b16 %v744
        %v1203 = vunpack.c.l.b16 %v745
        %v1204 = vunpack.c.l.b16 %v746
        %v1205 = vunpack.c.h.b16 %v746
        %v1206 = vunpack.c.l.b16 %v747
        %v1207 = vunpack.c.h.b16 %v747
        %v1208 = vunpack.c.l.b16 %v748
        %v1209 = vunpack.c.h.b16 %v748
        %v1210 = vunpack.c.l.b16 %v749
        %v1211 = vunpack.c.l.b16 %v750
        %v1212 = vunpack.c.h.b16 %v750
        %v1213 = vunpack.c.l.b16 %v751
        %v1214 = vunpack.c.h.b16 %v751
        %v1215 = vunpack.c.l.b16 %v752
        %v1216 = vunpack.c.h.b16 %v752
        %v1217 = vunpack.c.l.b16 %v753
        %v1218 = vpack.c.b16 %v1001, %v994
        %v1219 = vpack.c.b16 %v1002, %v995
        %v1220 = vpack.c.b16 %v1003, %v996
        %v1221 = vpack.c.b16 %v1004, %v997
        %v1222 = vpack.c.b16 %v1005, %v998
        %v1223 = vpack.c.b16 %v1006, %v999
        %v1224 = vpack.c.b16 %v1007, %v1000
        %v1225 = vpack.c.b16 %v1015, %v1008
        %v1226 = vpack.c.b16 %v1016, %v1009
        %v1227 = vpack.c.b16 %v1017, %v1010
        %v1228 = vpack.c.b16 %v1018, %v1011
        %v1229 = vpack.c.b16 %v1019, %v1012
        %v1230 = vpack.c.b16 %v1020, %v1013
        %v1231 = vpack.c.b16 %v1021, %v1014
        %v1232 = vpack.c.b16 %v1029, %v1022
        %v1233 = vpack.c.b16 %v1030, %v1023
        %v1234 = vpack.c.b16 %v1031, %v1024
        %v1235 = vpack.c.b16 %v1032, %v1025
        %v1236 = vpack.c.b16 %v1033, %v1026
        %v1237 = vpack.c.b16 %v1034, %v1027
        %v1238 = vpack.c.b16 %v1035, %v1028
        %v1239 = vpack.c.b16 %v1043, %v1036
        %v1240 = vpack.c.b16 %v1044, %v1037
        %v1241 = vpack.c.b16 %v1045, %v1038
        %v1242 = vpack.c.b16 %v1046, %v1039
        %v1243 = vpack.c.b16 %v1047, %v1040
        %v1244 = vpack.c.b16 %v1048, %v1041
        %v1245 = vpack.c.b16 %v1049, %v1042
        %v1246 = vpack.c.b16 %v1057, %v1050
        %v1247 = vpack.c.b16 %v1058, %v1051
        %v1248 = vpack.c.b16 %v1059, %v1052
        %v1249 = vpack.c.b16 %v1060, %v1053
        %v1250 = vpack.c.b16 %v1061, %v1054
        %v1251 = vpack.c.b16 %v1062, %v1055
        %v1252 = vpack.c.b16 %v1063, %v1056
        %v1253 = vpack.c.b16 %v1071, %v1064
        %v1254 = vpack.c.b16 %v1072, %v1065
        %v1255 = vpack.c.b16 %v1073, %v1066
        %v1256 = vpack.c.b16 %v1074, %v1067
        %v1257 = vpack.c.b16 %v1075, %v1068
        %v1258 = vpack.c.b16 %v1076, %v1069
        %v1259 = vpack.c.b16 %v1077, %v1070
        %v1260 = vpack.c.b16 %v1085, %v1078
        %v1261 = vpack.c.b16 %v1086, %v1079
        %v1262 = vpack.c.b16 %v1087, %v1080
        %v1263 = vpack.c.b16 %v1088, %v1081
        %v1264 = vpack.c.b16 %v1089, %v1082
        %v1265 = vpack.c.b16 %v1090, %v1083
        %v1266 = vpack.c.b16 %v1091, %v1084
        %v1267 = vpack.c.b16 %v1099, %v1092
        %v1268 = vpack.c.b16 %v1100, %v1093
        %v1269 = vpack.c.b16 %v1101, %v1094
        %v1270 = vpack.c.b16 %v1102, %v1095
        %v1271 = vpack.c.b16 %v1103, %v1096
        %v1272 = vpack.c.b16 %v1104, %v1097
        %v1273 = vpack.c.b16 %v1105, %v1098
        %v1274 = vpack.c.b16 %v1113, %v1106
        %v1275 = vpack.c.b16 %v1114, %v1107
        %v1276 = vpack.c.b16 %v1115, %v1108
        %v1277 = vpack.c.b16 %v1116, %v1109
        %v1278 = vpack.c.b16 %v1117, %v1110
        %v1279 = vpack.c.b16 %v1118, %v1111
        %v1280 = vpack.c.b16 %v1119, %v1112
        %v1281 = vpack.c.b16 %v1127, %v1120
        %v1282 = vpack.c.b16 %v1128, %v1121
        %v1283 = vpack.c.b16 %v1129, %v1122
        %v1284 = vpack.c.b16 %v1130, %v1123
        %v1285 = vpack.c.b16 %v1131, %v1124
        %v1286 = vpack.c.b16 %v1132, %v1125
        %v1287 = vpack.c.b16 %v1133, %v1126
        %v1288 = vpack.c.b16 %v1141, %v1134
        %v1289 = vpack.c.b16 %v1142, %v1135
        %v1290 = vpack.c.b16 %v1143, %v1136
        %v1291 = vpack.c.b16 %v1144, %v1137
        %v1292 = vpack.c.b16 %v1145, %v1138
        %v1293 = vpack.c.b16 %v1146, %v1139
        %v1294 = vpack.c.b16 %v1147, %v1140
        %v1295 = vpack.c.b16 %v1155, %v1148
        %v1296 = vpack.c.b16 %v1156, %v1149
        %v1297 = vpack.c.b16 %v1157, %v1150
        %v1298 = vpack.c.b16 %v1158, %v1151
        %v1299 = vpack.c.b16 %v1159, %v1152
        %v1300 = vpack.c.b16 %v1160, %v1153
        %v1301 = vpack.c.b16 %v1161, %v1154
        %v1302 = vpack.c.b16 %v1169, %v1162
        %v1303 = vpack.c.b16 %v1170, %v1163
        %v1304 = vpack.c.b16 %v1171, %v1164
        %v1305 = vpack.c.b16 %v1172, %v1165
        %v1306 = vpack.c.b16 %v1173, %v1166
        %v1307 = vpack.c.b16 %v1174, %v1167
        %v1308 = vpack.c.b16 %v1175, %v1168
        %v1309 = vpack.c.b16 %v1183, %v1176
        %v1310 = vpack.c.b16 %v1184, %v1177
        %v1311 = vpack.c.b16 %v1185, %v1178
        %v1312 = vpack.c.b16 %v1186, %v1179
        %v1313 = vpack.c.b16 %v1187, %v1180
        %v1314 = vpack.c.b16 %v1188, %v1181
        %v1315 = vpack.c.b16 %v1189, %v1182
        %v1316 = vpack.c.b16 %v1197, %v1190
        %v1317 = vpack.c.b16 %v1198, %v1191
        %v1318 = vpack.c.b16 %v1199, %v1192
        %v1319 = vpack.c.b16 %v1200, %v1193
        %v1320 = vpack.c.b16 %v1201, %v1194
        %v1321 = vpack.c.b16 %v1202, %v1195
        %v1322 = vpack.c.b16 %v1203, %v1196
        %v1323 = vpack.c.b16 %v1211, %v1204
        %v1324 = vpack.c.b16 %v1212, %v1205
        %v1325 = vpack.c.b16 %v1213, %v1206
        %v1326 = vpack.c.b16 %v1214, %v1207
        %v1327 = vpack.c.b16 %v1215, %v1208
        %v1328 = vpack.c.b16 %v1216, %v1209
        %v1329 = vpack.c.b16 %v1217, %v1210
        %v1554 = vunpack.c.l.b16 %v754
        %v1555 = vunpack.c.l.b16 %v755
        %v1556 = vunpack.c.l.b16 %v756
        %v1557 = vunpack.c.l.b16 %v757
        %v1558 = vunpack.c.l.b16 %v758
        %v1559 = vunpack.c.l.b16 %v759
        %v1560 = vunpack.c.l.b16 %v760
        %v1561 = vunpack.c.l.b16 %v761
        %v1562 = vunpack.c.l.b16 %v762
        %v1563 = vunpack.c.l.b16 %v763
        %v1564 = vunpack.c.l.b16 %v764
        %v1565 = vunpack.c.l.b16 %v765
        %v1566 = vunpack.c.l.b16 %v766
        %v1567 = vunpack.c.l.b16 %v767
        %v1568 = vunpack.c.l.b16 %v768
        %v1569 = vunpack.c.l.b16 %v769
        %v1570 = vunpack.c.l.b16 %v770
        %v1571 = vunpack.c.l.b16 %v771
        %v1572 = vunpack.c.l.b16 %v772
        %v1573 = vunpack.c.l.b16 %v773
        %v1574 = vunpack.c.l.b16 %v774
        %v1575 = vunpack.c.l.b16 %v775
        %v1576 = vunpack.c.l.b16 %v776
        %v1577 = vunpack.c.l.b16 %v777
        %v1578 = vunpack.c.l.b16 %v778
        %v1579 = vunpack.c.l.b16 %v779
        %v1580 = vunpack.c.l.b16 %v780
        %v1581 = vunpack.c.l.b16 %v781
        %v1582 = vunpack.c.l.b16 %v782
        %v1583 = vunpack.c.l.b16 %v783
        %v1584 = vunpack.c.l.b16 %v784
        %v1585 = vunpack.c.l.b16 %v785
        %v1586 = vunpack.c.l.b16 %v786
        %v1587 = vunpack.c.l.b16 %v787
        %v1588 = vunpack.c.l.b16 %v788
        %v1589 = vunpack.c.l.b16 %v789
        %v1590 = vunpack.c.l.b16 %v790
        %v1591 = vunpack.c.l.b16 %v791
        %v1592 = vunpack.c.l.b16 %v792
        %v1593 = vunpack.c.l.b16 %v793
        %v1594 = vunpack.c.l.b16 %v794
        %v1595 = vunpack.c.l.b16 %v795
        %v1596 = vunpack.c.l.b16 %v796
        %v1597 = vunpack.c.l.b16 %v797
        %v1598 = vunpack.c.l.b16 %v798
        %v1599 = vunpack.c.l.b16 %v799
        %v1600 = vunpack.c.l.b16 %v800
        %v1601 = vunpack.c.l.b16 %v801
        %v1602 = vunpack.c.l.b16 %v802
        %v1603 = vunpack.c.l.b16 %v803
        %v1604 = vunpack.c.l.b16 %v804
        %v1605 = vunpack.c.l.b16 %v805
        %v1606 = vunpack.c.l.b16 %v806
        %v1607 = vunpack.c.l.b16 %v807
        %v1608 = vunpack.c.l.b16 %v808
        %v1609 = vunpack.c.l.b16 %v809
        %v1610 = vunpack.c.l.b16 %v810
        %v1611 = vunpack.c.l.b16 %v811
        %v1612 = vunpack.c.l.b16 %v812
        %v1613 = vunpack.c.l.b16 %v813
        %v1614 = vunpack.c.l.b16 %v814
        %v1615 = vunpack.c.l.b16 %v815
        %v1616 = vunpack.c.l.b16 %v816
        %v1617 = vunpack.c.l.b16 %v817
        %v1618 = vunpack.c.l.b16 %v818
        %v1619 = vunpack.c.l.b16 %v819
        %v1620 = vunpack.c.l.b16 %v820
        %v1621 = vunpack.c.l.b16 %v821
        %v1622 = vunpack.c.l.b16 %v822
        %v1623 = vunpack.c.l.b16 %v823
        %v1624 = vunpack.c.l.b16 %v824
        %v1625 = vunpack.c.l.b16 %v825
        %v1626 = vunpack.c.l.b16 %v826
        %v1627 = vunpack.c.l.b16 %v827
        %v1628 = vunpack.c.l.b16 %v828
        %v1629 = vunpack.c.l.b16 %v829
        %v1630 = vunpack.c.l.b16 %v830
        %v1631 = vunpack.c.l.b16 %v831
        %v1632 = vunpack.c.l.b16 %v832
        %v1633 = vunpack.c.l.b16 %v833
        %v1634 = vunpack.c.l.b16 %v834
        %v1635 = vunpack.c.l.b16 %v835
        %v1636 = vunpack.c.l.b16 %v836
        %v1637 = vunpack.c.l.b16 %v837
        %v1638 = vunpack.c.l.b16 %v838
        %v1639 = vunpack.c.l.b16 %v839
        %v1640 = vunpack.c.l.b16 %v840
        %v1641 = vunpack.c.l.b16 %v841
        %v1642 = vunpack.c.l.b16 %v842
        %v1643 = vunpack.c.l.b16 %v843
        %v1644 = vunpack.c.l.b16 %v844
        %v1645 = vunpack.c.l.b16 %v845
        %v1646 = vunpack.c.l.b16 %v846
        %v1647 = vunpack.c.l.b16 %v847
        %v1648 = vunpack.c.l.b16 %v848
        %v1649 = vunpack.c.l.b16 %v849
        %v1650 = vunpack.c.l.b16 %v850
        %v1651 = vunpack.c.l.b16 %v851
        %v1652 = vunpack.c.l.b16 %v852
        %v1653 = vunpack.c.l.b16 %v853
        %v1654 = vunpack.c.l.b16 %v854
        %v1655 = vunpack.c.l.b16 %v855
        %v1656 = vunpack.c.l.b16 %v856
        %v1657 = vunpack.c.l.b16 %v857
        %v1658 = vunpack.c.l.b16 %v858
        %v1659 = vunpack.c.l.b16 %v859
        %v1660 = vunpack.c.l.b16 %v860
        %v1661 = vunpack.c.l.b16 %v861
        %v1662 = vunpack.c.l.b16 %v862
        %v1663 = vunpack.c.l.b16 %v863
        %v1664 = vunpack.c.l.b16 %v864
        %v1665 = vunpack.c.l.b16 %v865
        %v1666 = vpack.c.b16 %v1555, %v1554
        %v1667 = vpack.c.b16 %v1557, %v1556
        %v1668 = vpack.c.b16 %v1559, %v1558
        %v1669 = vpack.c.b16 %v1561, %v1560
        %v1670 = vpack.c.b16 %v1563, %v1562
        %v1671 = vpack.c.b16 %v1565, %v1564
        %v1672 = vpack.c.b16 %v1567, %v1566
        %v1673 = vpack.c.b16 %v1569, %v1568
        %v1674 = vpack.c.b16 %v1571, %v1570
        %v1675 = vpack.c.b16 %v1573, %v1572
        %v1676 = vpack.c.b16 %v1575, %v1574
        %v1677 = vpack.c.b16 %v1577, %v1576
        %v1678 = vpack.c.b16 %v1579, %v1578
        %v1679 = vpack.c.b16 %v1581, %v1580
        %v1680 = vpack.c.b16 %v1583, %v1582
        %v1681 = vpack.c.b16 %v1585, %v1584
        %v1682 = vpack.c.b16 %v1587, %v1586
        %v1683 = vpack.c.b16 %v1589, %v1588
        %v1684 = vpack.c.b16 %v1591, %v1590
        %v1685 = vpack.c.b16 %v1593, %v1592
        %v1686 = vpack.c.b16 %v1595, %v1594
        %v1687 = vpack.c.b16 %v1597, %v1596
        %v1688 = vpack.c.b16 %v1599, %v1598
        %v1689 = vpack.c.b16 %v1601, %v1600
        %v1690 = vpack.c.b16 %v1603, %v1602
        %v1691 = vpack.c.b16 %v1605, %v1604
        %v1692 = vpack.c.b16 %v1607, %v1606
        %v1693 = vpack.c.b16 %v1609, %v1608
        %v1694 = vpack.c.b16 %v1611, %v1610
        %v1695 = vpack.c.b16 %v1613, %v1612
        %v1696 = vpack.c.b16 %v1615, %v1614
        %v1697 = vpack.c.b16 %v1617, %v1616
        %v1698 = vpack.c.b16 %v1619, %v1618
        %v1699 = vpack.c.b16 %v1621, %v1620
        %v1700 = vpack.c.b16 %v1623, %v1622
        %v1701 = vpack.c.b16 %v1625, %v1624
        %v1702 = vpack.c.b16 %v1627, %v1626
        %v1703 = vpack.c.b16 %v1629, %v1628
        %v1704 = vpack.c.b16 %v1631, %v1630
        %v1705 = vpack.c.b16 %v1633, %v1632
        %v1706 = vpack.c.b16 %v1635, %v1634
        %v1707 = vpack.c.b16 %v1637, %v1636
        %v1708 = vpack.c.b16 %v1639, %v1638
        %v1709 = vpack.c.b16 %v1641, %v1640
        %v1710 = vpack.c.b16 %v1643, %v1642
        %v1711 = vpack.c.b16 %v1645, %v1644
        %v1712 = vpack.c.b16 %v1647, %v1646
        %v1713 = vpack.c.b16 %v1649, %v1648
        %v1714 = vpack.c.b16 %v1651, %v1650
        %v1715 = vpack.c.b16 %v1653, %v1652
        %v1716 = vpack.c.b16 %v1655, %v1654
        %v1717 = vpack.c.b16 %v1657, %v1656
        %v1718 = vpack.c.b16 %v1659, %v1658
        %v1719 = vpack.c.b16 %v1661, %v1660
        %v1720 = vpack.c.b16 %v1663, %v1662
        %v1721 = vpack.c.b16 %v1665, %v1664
        %1778 = vmatpush.bf16.msra.mxu0 %v1673
        %1779 = vmatpush.bf16.msra.mxu0 %v1672
        %1780 = vmatpush.bf16.msra.mxu0 %v1671
        %1781 = vmatpush.bf16.msra.mxu0 %v1670
        %1782 = vmatpush.bf16.msra.mxu0 %v1669
        %1783 = vmatpush.bf16.msra.mxu0 %v1668
        %1784 = vmatpush.bf16.msra.mxu0 %v1667
        %1785 = vmatpush.bf16.msra.mxu0 %v1666
        %1786 = vmatmul.bf16.gmra.mxu0 %v1218
        %v1787 = vpop.f32.mrf.mxu0
        %v1788 = vadd.f32 0.0, %v1787
        %v1789 = vpop.f32.mrf.mxu0
        %v1790 = vadd.f32 0.0, %v1789
        %1791 = vmatmul.bf16.gmra.mxu0 %v1225
        %v1792 = vpop.f32.mrf.mxu0
        %v1793 = vadd.f32 0.0, %v1792
        %v1794 = vpop.f32.mrf.mxu0
        %v1795 = vadd.f32 0.0, %v1794
        %1796 = vmatmul.bf16.gmra.mxu0 %v1232
        %v1797 = vpop.f32.mrf.mxu0
        %v1798 = vadd.f32 0.0, %v1797
        %v1799 = vpop.f32.mrf.mxu0
        %v1800 = vadd.f32 0.0, %v1799
        %1801 = vmatmul.bf16.gmra.mxu0 %v1239
        %v1802 = vpop.f32.mrf.mxu0
        %v1803 = vadd.f32 0.0, %v1802
        %v1804 = vpop.f32.mrf.mxu0
        %v1805 = vadd.f32 0.0, %v1804
        %1806 = vmatmul.bf16.gmra.mxu0 %v1246
        %v1807 = vpop.f32.mrf.mxu0
        %v1808 = vadd.f32 0.0, %v1807
        %v1809 = vpop.f32.mrf.mxu0
        %v1810 = vadd.f32 0.0, %v1809
        %1811 = vmatmul.bf16.gmra.mxu0 %v1253
        %v1812 = vpop.f32.mrf.mxu0
        %v1813 = vadd.f32 0.0, %v1812
        %v1814 = vpop.f32.mrf.mxu0
        %v1815 = vadd.f32 0.0, %v1814
        %1816 = vmatmul.bf16.gmra.mxu0 %v1260
        %v1817 = vpop.f32.mrf.mxu0
        %v1818 = vadd.f32 0.0, %v1817
        %v1819 = vpop.f32.mrf.mxu0
        %v1820 = vadd.f32 0.0, %v1819
        %1821 = vmatmul.bf16.gmra.mxu0 %v1267
        %v1822 = vpop.f32.mrf.mxu0
        %v1823 = vadd.f32 0.0, %v1822
        %v1824 = vpop.f32.mrf.mxu0
        %v1825 = vadd.f32 0.0, %v1824
        %1826 = vmatmul.bf16.gmra.mxu0 %v1274
        %v1827 = vpop.f32.mrf.mxu0
        %v1828 = vadd.f32 0.0, %v1827
        %v1829 = vpop.f32.mrf.mxu0
        %v1830 = vadd.f32 0.0, %v1829
        %1831 = vmatmul.bf16.gmra.mxu0 %v1281
        %v1832 = vpop.f32.mrf.mxu0
        %v1833 = vadd.f32 0.0, %v1832
        %v1834 = vpop.f32.mrf.mxu0
        %v1835 = vadd.f32 0.0, %v1834
        %1836 = vmatmul.bf16.gmra.mxu0 %v1288
        %v1837 = vpop.f32.mrf.mxu0
        %v1838 = vadd.f32 0.0, %v1837
        %v1839 = vpop.f32.mrf.mxu0
        %v1840 = vadd.f32 0.0, %v1839
        %1841 = vmatmul.bf16.gmra.mxu0 %v1295
        %v1842 = vpop.f32.mrf.mxu0
        %v1843 = vadd.f32 0.0, %v1842
        %v1844 = vpop.f32.mrf.mxu0
        %v1845 = vadd.f32 0.0, %v1844
        %1846 = vmatmul.bf16.gmra.mxu0 %v1302
        %v1847 = vpop.f32.mrf.mxu0
        %v1848 = vadd.f32 0.0, %v1847
        %v1849 = vpop.f32.mrf.mxu0
        %v1850 = vadd.f32 0.0, %v1849
        %1851 = vmatmul.bf16.gmra.mxu0 %v1309
        %v1852 = vpop.f32.mrf.mxu0
        %v1853 = vadd.f32 0.0, %v1852
        %v1854 = vpop.f32.mrf.mxu0
        %v1855 = vadd.f32 0.0, %v1854
        %1856 = vmatmul.bf16.gmra.mxu0 %v1316
        %v1857 = vpop.f32.mrf.mxu0
        %v1858 = vadd.f32 0.0, %v1857
        %v1859 = vpop.f32.mrf.mxu0
        %v1860 = vadd.f32 0.0, %v1859
        %1861 = vmatmul.bf16.gmra.mxu0 %v1323
        %v1862 = vpop.f32.mrf.mxu0
        %v1863 = vadd.f32 0.0, %v1862
        %v1864 = vpop.f32.mrf.mxu0
        %v1865 = vadd.f32 0.0, %v1864
        %1866 = vdwg.mxu0
        %1867 = vmatpush.bf16.msra.mxu0 %v1681
        %1868 = vmatpush.bf16.msra.mxu0 %v1680
        %1869 = vmatpush.bf16.msra.mxu0 %v1679
        %1870 = vmatpush.bf16.msra.mxu0 %v1678
        %1871 = vmatpush.bf16.msra.mxu0 %v1677
        %1872 = vmatpush.bf16.msra.mxu0 %v1676
        %1873 = vmatpush.bf16.msra.mxu0 %v1675
        %1874 = vmatpush.bf16.msra.mxu0 %v1674
        %1875 = vmatmul.bf16.gmra.mxu0 %v1219
        %v1876 = vpop.f32.mrf.mxu0
        %v1877 = vadd.f32 %v1788, %v1876
        %v1878 = vpop.f32.mrf.mxu0
        %v1879 = vadd.f32 %v1790, %v1878
        %1880 = vmatmul.bf16.gmra.mxu0 %v1226
        %v1881 = vpop.f32.mrf.mxu0
        %v1882 = vadd.f32 %v1793, %v1881
        %v1883 = vpop.f32.mrf.mxu0
        %v1884 = vadd.f32 %v1795, %v1883
        %1885 = vmatmul.bf16.gmra.mxu0 %v1233
        %v1886 = vpop.f32.mrf.mxu0
        %v1887 = vadd.f32 %v1798, %v1886
        %v1888 = vpop.f32.mrf.mxu0
        %v1889 = vadd.f32 %v1800, %v1888
        %1890 = vmatmul.bf16.gmra.mxu0 %v1240
        %v1891 = vpop.f32.mrf.mxu0
        %v1892 = vadd.f32 %v1803, %v1891
        %v1893 = vpop.f32.mrf.mxu0
        %v1894 = vadd.f32 %v1805, %v1893
        %1895 = vmatmul.bf16.gmra.mxu0 %v1247
        %v1896 = vpop.f32.mrf.mxu0
        %v1897 = vadd.f32 %v1808, %v1896
        %v1898 = vpop.f32.mrf.mxu0
        %v1899 = vadd.f32 %v1810, %v1898
        %1900 = vmatmul.bf16.gmra.mxu0 %v1254
        %v1901 = vpop.f32.mrf.mxu0
        %v1902 = vadd.f32 %v1813, %v1901
        %v1903 = vpop.f32.mrf.mxu0
        %v1904 = vadd.f32 %v1815, %v1903
        %1905 = vmatmul.bf16.gmra.mxu0 %v1261
        %v1906 = vpop.f32.mrf.mxu0
        %v1907 = vadd.f32 %v1818, %v1906
        %v1908 = vpop.f32.mrf.mxu0
        %v1909 = vadd.f32 %v1820, %v1908
        %1910 = vmatmul.bf16.gmra.mxu0 %v1268
        %v1911 = vpop.f32.mrf.mxu0
        %v1912 = vadd.f32 %v1823, %v1911
        %v1913 = vpop.f32.mrf.mxu0
        %v1914 = vadd.f32 %v1825, %v1913
        %1915 = vmatmul.bf16.gmra.mxu0 %v1275
        %v1916 = vpop.f32.mrf.mxu0
        %v1917 = vadd.f32 %v1828, %v1916
        %v1918 = vpop.f32.mrf.mxu0
        %v1919 = vadd.f32 %v1830, %v1918
        %1920 = vmatmul.bf16.gmra.mxu0 %v1282
        %v1921 = vpop.f32.mrf.mxu0
        %v1922 = vadd.f32 %v1833, %v1921
        %v1923 = vpop.f32.mrf.mxu0
        %v1924 = vadd.f32 %v1835, %v1923
        %1925 = vmatmul.bf16.gmra.mxu0 %v1289
        %v1926 = vpop.f32.mrf.mxu0
        %v1927 = vadd.f32 %v1838, %v1926
        %v1928 = vpop.f32.mrf.mxu0
        %v1929 = vadd.f32 %v1840, %v1928
        %1930 = vmatmul.bf16.gmra.mxu0 %v1296
        %v1931 = vpop.f32.mrf.mxu0
        %v1932 = vadd.f32 %v1843, %v1931
        %v1933 = vpop.f32.mrf.mxu0
        %v1934 = vadd.f32 %v1845, %v1933
        %1935 = vmatmul.bf16.gmra.mxu0 %v1303
        %v1936 = vpop.f32.mrf.mxu0
        %v1937 = vadd.f32 %v1848, %v1936
        %v1938 = vpop.f32.mrf.mxu0
        %v1939 = vadd.f32 %v1850, %v1938
        %1940 = vmatmul.bf16.gmra.mxu0 %v1310
        %v1941 = vpop.f32.mrf.mxu0
        %v1942 = vadd.f32 %v1853, %v1941
        %v1943 = vpop.f32.mrf.mxu0
        %v1944 = vadd.f32 %v1855, %v1943
        %1945 = vmatmul.bf16.gmra.mxu0 %v1317
        %v1946 = vpop.f32.mrf.mxu0
        %v1947 = vadd.f32 %v1858, %v1946
        %v1948 = vpop.f32.mrf.mxu0
        %v1949 = vadd.f32 %v1860, %v1948
        %1950 = vmatmul.bf16.gmra.mxu0 %v1324
        %v1951 = vpop.f32.mrf.mxu0
        %v1952 = vadd.f32 %v1863, %v1951
        %v1953 = vpop.f32.mrf.mxu0
        %v1954 = vadd.f32 %v1865, %v1953
        %1955 = vdwg.mxu0
        %1956 = vmatpush.bf16.msra.mxu0 %v1689
        %1957 = vmatpush.bf16.msra.mxu0 %v1688
        %1958 = vmatpush.bf16.msra.mxu0 %v1687
        %1959 = vmatpush.bf16.msra.mxu0 %v1686
        %1960 = vmatpush.bf16.msra.mxu0 %v1685
        %1961 = vmatpush.bf16.msra.mxu0 %v1684
        %1962 = vmatpush.bf16.msra.mxu0 %v1683
        %1963 = vmatpush.bf16.msra.mxu0 %v1682
        %1964 = vmatmul.bf16.gmra.mxu0 %v1220
        %v1965 = vpop.f32.mrf.mxu0
        %v1966 = vadd.f32 %v1877, %v1965
        %v1967 = vpop.f32.mrf.mxu0
        %v1968 = vadd.f32 %v1879, %v1967
        %1969 = vmatmul.bf16.gmra.mxu0 %v1227
        %v1970 = vpop.f32.mrf.mxu0
        %v1971 = vadd.f32 %v1882, %v1970
        %v1972 = vpop.f32.mrf.mxu0
        %v1973 = vadd.f32 %v1884, %v1972
        %1974 = vmatmul.bf16.gmra.mxu0 %v1234
        %v1975 = vpop.f32.mrf.mxu0
        %v1976 = vadd.f32 %v1887, %v1975
        %v1977 = vpop.f32.mrf.mxu0
        %v1978 = vadd.f32 %v1889, %v1977
        %1979 = vmatmul.bf16.gmra.mxu0 %v1241
        %v1980 = vpop.f32.mrf.mxu0
        %v1981 = vadd.f32 %v1892, %v1980
        %v1982 = vpop.f32.mrf.mxu0
        %v1983 = vadd.f32 %v1894, %v1982
        %1984 = vmatmul.bf16.gmra.mxu0 %v1248
        %v1985 = vpop.f32.mrf.mxu0
        %v1986 = vadd.f32 %v1897, %v1985
        %v1987 = vpop.f32.mrf.mxu0
        %v1988 = vadd.f32 %v1899, %v1987
        %1989 = vmatmul.bf16.gmra.mxu0 %v1255
        %v1990 = vpop.f32.mrf.mxu0
        %v1991 = vadd.f32 %v1902, %v1990
        %v1992 = vpop.f32.mrf.mxu0
        %v1993 = vadd.f32 %v1904, %v1992
        %1994 = vmatmul.bf16.gmra.mxu0 %v1262
        %v1995 = vpop.f32.mrf.mxu0
        %v1996 = vadd.f32 %v1907, %v1995
        %v1997 = vpop.f32.mrf.mxu0
        %v1998 = vadd.f32 %v1909, %v1997
        %1999 = vmatmul.bf16.gmra.mxu0 %v1269
        %v2000 = vpop.f32.mrf.mxu0
        %v2001 = vadd.f32 %v1912, %v2000
        %v2002 = vpop.f32.mrf.mxu0
        %v2003 = vadd.f32 %v1914, %v2002
        %2004 = vmatmul.bf16.gmra.mxu0 %v1276
        %v2005 = vpop.f32.mrf.mxu0
        %v2006 = vadd.f32 %v1917, %v2005
        %v2007 = vpop.f32.mrf.mxu0
        %v2008 = vadd.f32 %v1919, %v2007
        %2009 = vmatmul.bf16.gmra.mxu0 %v1283
        %v2010 = vpop.f32.mrf.mxu0
        %v2011 = vadd.f32 %v1922, %v2010
        %v2012 = vpop.f32.mrf.mxu0
        %v2013 = vadd.f32 %v1924, %v2012
        %2014 = vmatmul.bf16.gmra.mxu0 %v1290
        %v2015 = vpop.f32.mrf.mxu0
        %v2016 = vadd.f32 %v1927, %v2015
        %v2017 = vpop.f32.mrf.mxu0
        %v2018 = vadd.f32 %v1929, %v2017
        %2019 = vmatmul.bf16.gmra.mxu0 %v1297
        %v2020 = vpop.f32.mrf.mxu0
        %v2021 = vadd.f32 %v1932, %v2020
        %v2022 = vpop.f32.mrf.mxu0
        %v2023 = vadd.f32 %v1934, %v2022
        %2024 = vmatmul.bf16.gmra.mxu0 %v1304
        %v2025 = vpop.f32.mrf.mxu0
        %v2026 = vadd.f32 %v1937, %v2025
        %v2027 = vpop.f32.mrf.mxu0
        %v2028 = vadd.f32 %v1939, %v2027
        %2029 = vmatmul.bf16.gmra.mxu0 %v1311
        %v2030 = vpop.f32.mrf.mxu0
        %v2031 = vadd.f32 %v1942, %v2030
        %v2032 = vpop.f32.mrf.mxu0
        %v2033 = vadd.f32 %v1944, %v2032
        %2034 = vmatmul.bf16.gmra.mxu0 %v1318
        %v2035 = vpop.f32.mrf.mxu0
        %v2036 = vadd.f32 %v1947, %v2035
        %v2037 = vpop.f32.mrf.mxu0
        %v2038 = vadd.f32 %v1949, %v2037
        %2039 = vmatmul.bf16.gmra.mxu0 %v1325
        %v2040 = vpop.f32.mrf.mxu0
        %v2041 = vadd.f32 %v1952, %v2040
        %v2042 = vpop.f32.mrf.mxu0
        %v2043 = vadd.f32 %v1954, %v2042
        %2044 = vdwg.mxu0
        %2045 = vmatpush.bf16.msra.mxu0 %v1697
        %2046 = vmatpush.bf16.msra.mxu0 %v1696
        %2047 = vmatpush.bf16.msra.mxu0 %v1695
        %2048 = vmatpush.bf16.msra.mxu0 %v1694
        %2049 = vmatpush.bf16.msra.mxu0 %v1693
        %2050 = vmatpush.bf16.msra.mxu0 %v1692
        %2051 = vmatpush.bf16.msra.mxu0 %v1691
        %2052 = vmatpush.bf16.msra.mxu0 %v1690
        %2053 = vmatmul.bf16.gmra.mxu0 %v1221
        %v2054 = vpop.f32.mrf.mxu0
        %v2055 = vadd.f32 %v1966, %v2054
        %v2056 = vpop.f32.mrf.mxu0
        %v2057 = vadd.f32 %v1968, %v2056
        %2058 = vmatmul.bf16.gmra.mxu0 %v1228
        %v2059 = vpop.f32.mrf.mxu0
        %v2060 = vadd.f32 %v1971, %v2059
        %v2061 = vpop.f32.mrf.mxu0
        %v2062 = vadd.f32 %v1973, %v2061
        %2063 = vmatmul.bf16.gmra.mxu0 %v1235
        %v2064 = vpop.f32.mrf.mxu0
        %v2065 = vadd.f32 %v1976, %v2064
        %v2066 = vpop.f32.mrf.mxu0
        %v2067 = vadd.f32 %v1978, %v2066
        %2068 = vmatmul.bf16.gmra.mxu0 %v1242
        %v2069 = vpop.f32.mrf.mxu0
        %v2070 = vadd.f32 %v1981, %v2069
        %v2071 = vpop.f32.mrf.mxu0
        %v2072 = vadd.f32 %v1983, %v2071
        %2073 = vmatmul.bf16.gmra.mxu0 %v1249
        %v2074 = vpop.f32.mrf.mxu0
        %v2075 = vadd.f32 %v1986, %v2074
        %v2076 = vpop.f32.mrf.mxu0
        %v2077 = vadd.f32 %v1988, %v2076
        %2078 = vmatmul.bf16.gmra.mxu0 %v1256
        %v2079 = vpop.f32.mrf.mxu0
        %v2080 = vadd.f32 %v1991, %v2079
        %v2081 = vpop.f32.mrf.mxu0
        %v2082 = vadd.f32 %v1993, %v2081
        %2083 = vmatmul.bf16.gmra.mxu0 %v1263
        %v2084 = vpop.f32.mrf.mxu0
        %v2085 = vadd.f32 %v1996, %v2084
        %v2086 = vpop.f32.mrf.mxu0
        %v2087 = vadd.f32 %v1998, %v2086
        %2088 = vmatmul.bf16.gmra.mxu0 %v1270
        %v2089 = vpop.f32.mrf.mxu0
        %v2090 = vadd.f32 %v2001, %v2089
        %v2091 = vpop.f32.mrf.mxu0
        %v2092 = vadd.f32 %v2003, %v2091
        %2093 = vmatmul.bf16.gmra.mxu0 %v1277
        %v2094 = vpop.f32.mrf.mxu0
        %v2095 = vadd.f32 %v2006, %v2094
        %v2096 = vpop.f32.mrf.mxu0
        %v2097 = vadd.f32 %v2008, %v2096
        %2098 = vmatmul.bf16.gmra.mxu0 %v1284
        %v2099 = vpop.f32.mrf.mxu0
        %v2100 = vadd.f32 %v2011, %v2099
        %v2101 = vpop.f32.mrf.mxu0
        %v2102 = vadd.f32 %v2013, %v2101
        %2103 = vmatmul.bf16.gmra.mxu0 %v1291
        %v2104 = vpop.f32.mrf.mxu0
        %v2105 = vadd.f32 %v2016, %v2104
        %v2106 = vpop.f32.mrf.mxu0
        %v2107 = vadd.f32 %v2018, %v2106
        %2108 = vmatmul.bf16.gmra.mxu0 %v1298
        %v2109 = vpop.f32.mrf.mxu0
        %v2110 = vadd.f32 %v2021, %v2109
        %v2111 = vpop.f32.mrf.mxu0
        %v2112 = vadd.f32 %v2023, %v2111
        %2113 = vmatmul.bf16.gmra.mxu0 %v1305
        %v2114 = vpop.f32.mrf.mxu0
        %v2115 = vadd.f32 %v2026, %v2114
        %v2116 = vpop.f32.mrf.mxu0
        %v2117 = vadd.f32 %v2028, %v2116
        %2118 = vmatmul.bf16.gmra.mxu0 %v1312
        %v2119 = vpop.f32.mrf.mxu0
        %v2120 = vadd.f32 %v2031, %v2119
        %v2121 = vpop.f32.mrf.mxu0
        %v2122 = vadd.f32 %v2033, %v2121
        %2123 = vmatmul.bf16.gmra.mxu0 %v1319
        %v2124 = vpop.f32.mrf.mxu0
        %v2125 = vadd.f32 %v2036, %v2124
        %v2126 = vpop.f32.mrf.mxu0
        %v2127 = vadd.f32 %v2038, %v2126
        %2128 = vmatmul.bf16.gmra.mxu0 %v1326
        %v2129 = vpop.f32.mrf.mxu0
        %v2130 = vadd.f32 %v2041, %v2129
        %v2131 = vpop.f32.mrf.mxu0
        %v2132 = vadd.f32 %v2043, %v2131
        %2133 = vdwg.mxu0
        %2134 = vmatpush.bf16.msra.mxu0 %v1705
        %2135 = vmatpush.bf16.msra.mxu0 %v1704
        %2136 = vmatpush.bf16.msra.mxu0 %v1703
        %2137 = vmatpush.bf16.msra.mxu0 %v1702
        %2138 = vmatpush.bf16.msra.mxu0 %v1701
        %2139 = vmatpush.bf16.msra.mxu0 %v1700
        %2140 = vmatpush.bf16.msra.mxu0 %v1699
        %2141 = vmatpush.bf16.msra.mxu0 %v1698
        %2142 = vmatmul.bf16.gmra.mxu0 %v1222
        %v2143 = vpop.f32.mrf.mxu0
        %v2144 = vadd.f32 %v2055, %v2143
        %v2145 = vpop.f32.mrf.mxu0
        %v2146 = vadd.f32 %v2057, %v2145
        %2147 = vmatmul.bf16.gmra.mxu0 %v1229
        %v2148 = vpop.f32.mrf.mxu0
        %v2149 = vadd.f32 %v2060, %v2148
        %v2150 = vpop.f32.mrf.mxu0
        %v2151 = vadd.f32 %v2062, %v2150
        %2152 = vmatmul.bf16.gmra.mxu0 %v1236
        %v2153 = vpop.f32.mrf.mxu0
        %v2154 = vadd.f32 %v2065, %v2153
        %v2155 = vpop.f32.mrf.mxu0
        %v2156 = vadd.f32 %v2067, %v2155
        %2157 = vmatmul.bf16.gmra.mxu0 %v1243
        %v2158 = vpop.f32.mrf.mxu0
        %v2159 = vadd.f32 %v2070, %v2158
        %v2160 = vpop.f32.mrf.mxu0
        %v2161 = vadd.f32 %v2072, %v2160
        %2162 = vmatmul.bf16.gmra.mxu0 %v1250
        %v2163 = vpop.f32.mrf.mxu0
        %v2164 = vadd.f32 %v2075, %v2163
        %v2165 = vpop.f32.mrf.mxu0
        %v2166 = vadd.f32 %v2077, %v2165
        %2167 = vmatmul.bf16.gmra.mxu0 %v1257
        %v2168 = vpop.f32.mrf.mxu0
        %v2169 = vadd.f32 %v2080, %v2168
        %v2170 = vpop.f32.mrf.mxu0
        %v2171 = vadd.f32 %v2082, %v2170
        %2172 = vmatmul.bf16.gmra.mxu0 %v1264
        %v2173 = vpop.f32.mrf.mxu0
        %v2174 = vadd.f32 %v2085, %v2173
        %v2175 = vpop.f32.mrf.mxu0
        %v2176 = vadd.f32 %v2087, %v2175
        %2177 = vmatmul.bf16.gmra.mxu0 %v1271
        %v2178 = vpop.f32.mrf.mxu0
        %v2179 = vadd.f32 %v2090, %v2178
        %v2180 = vpop.f32.mrf.mxu0
        %v2181 = vadd.f32 %v2092, %v2180
        %2182 = vmatmul.bf16.gmra.mxu0 %v1278
        %v2183 = vpop.f32.mrf.mxu0
        %v2184 = vadd.f32 %v2095, %v2183
        %v2185 = vpop.f32.mrf.mxu0
        %v2186 = vadd.f32 %v2097, %v2185
        %2187 = vmatmul.bf16.gmra.mxu0 %v1285
        %v2188 = vpop.f32.mrf.mxu0
        %v2189 = vadd.f32 %v2100, %v2188
        %v2190 = vpop.f32.mrf.mxu0
        %v2191 = vadd.f32 %v2102, %v2190
        %2192 = vmatmul.bf16.gmra.mxu0 %v1292
        %v2193 = vpop.f32.mrf.mxu0
        %v2194 = vadd.f32 %v2105, %v2193
        %v2195 = vpop.f32.mrf.mxu0
        %v2196 = vadd.f32 %v2107, %v2195
        %2197 = vmatmul.bf16.gmra.mxu0 %v1299
        %v2198 = vpop.f32.mrf.mxu0
        %v2199 = vadd.f32 %v2110, %v2198
        %v2200 = vpop.f32.mrf.mxu0
        %v2201 = vadd.f32 %v2112, %v2200
        %2202 = vmatmul.bf16.gmra.mxu0 %v1306
        %v2203 = vpop.f32.mrf.mxu0
        %v2204 = vadd.f32 %v2115, %v2203
        %v2205 = vpop.f32.mrf.mxu0
        %v2206 = vadd.f32 %v2117, %v2205
        %2207 = vmatmul.bf16.gmra.mxu0 %v1313
        %v2208 = vpop.f32.mrf.mxu0
        %v2209 = vadd.f32 %v2120, %v2208
        %v2210 = vpop.f32.mrf.mxu0
        %v2211 = vadd.f32 %v2122, %v2210
        %2212 = vmatmul.bf16.gmra.mxu0 %v1320
        %v2213 = vpop.f32.mrf.mxu0
        %v2214 = vadd.f32 %v2125, %v2213
        %v2215 = vpop.f32.mrf.mxu0
        %v2216 = vadd.f32 %v2127, %v2215
        %2217 = vmatmul.bf16.gmra.mxu0 %v1327
        %v2218 = vpop.f32.mrf.mxu0
        %v2219 = vadd.f32 %v2130, %v2218
        %v2220 = vpop.f32.mrf.mxu0
        %v2221 = vadd.f32 %v2132, %v2220
        %2222 = vdwg.mxu0
        %2223 = vmatpush.bf16.msra.mxu0 %v1713
        %2224 = vmatpush.bf16.msra.mxu0 %v1712
        %2225 = vmatpush.bf16.msra.mxu0 %v1711
        %2226 = vmatpush.bf16.msra.mxu0 %v1710
        %2227 = vmatpush.bf16.msra.mxu0 %v1709
        %2228 = vmatpush.bf16.msra.mxu0 %v1708
        %2229 = vmatpush.bf16.msra.mxu0 %v1707
        %2230 = vmatpush.bf16.msra.mxu0 %v1706
        %2231 = vmatmul.bf16.gmra.mxu0 %v1223
        %v2232 = vpop.f32.mrf.mxu0
        %v2233 = vadd.f32 %v2144, %v2232
        %v2234 = vpop.f32.mrf.mxu0
        %v2235 = vadd.f32 %v2146, %v2234
        %2236 = vmatmul.bf16.gmra.mxu0 %v1230
        %v2237 = vpop.f32.mrf.mxu0
        %v2238 = vadd.f32 %v2149, %v2237
        %v2239 = vpop.f32.mrf.mxu0
        %v2240 = vadd.f32 %v2151, %v2239
        %2241 = vmatmul.bf16.gmra.mxu0 %v1237
        %v2242 = vpop.f32.mrf.mxu0
        %v2243 = vadd.f32 %v2154, %v2242
        %v2244 = vpop.f32.mrf.mxu0
        %v2245 = vadd.f32 %v2156, %v2244
        %2246 = vmatmul.bf16.gmra.mxu0 %v1244
        %v2247 = vpop.f32.mrf.mxu0
        %v2248 = vadd.f32 %v2159, %v2247
        %v2249 = vpop.f32.mrf.mxu0
        %v2250 = vadd.f32 %v2161, %v2249
        %2251 = vmatmul.bf16.gmra.mxu0 %v1251
        %v2252 = vpop.f32.mrf.mxu0
        %v2253 = vadd.f32 %v2164, %v2252
        %v2254 = vpop.f32.mrf.mxu0
        %v2255 = vadd.f32 %v2166, %v2254
        %2256 = vmatmul.bf16.gmra.mxu0 %v1258
        %v2257 = vpop.f32.mrf.mxu0
        %v2258 = vadd.f32 %v2169, %v2257
        %v2259 = vpop.f32.mrf.mxu0
        %v2260 = vadd.f32 %v2171, %v2259
        %2261 = vmatmul.bf16.gmra.mxu0 %v1265
        %v2262 = vpop.f32.mrf.mxu0
        %v2263 = vadd.f32 %v2174, %v2262
        %v2264 = vpop.f32.mrf.mxu0
        %v2265 = vadd.f32 %v2176, %v2264
        %2266 = vmatmul.bf16.gmra.mxu0 %v1272
        %v2267 = vpop.f32.mrf.mxu0
        %v2268 = vadd.f32 %v2179, %v2267
        %v2269 = vpop.f32.mrf.mxu0
        %v2270 = vadd.f32 %v2181, %v2269
        %2271 = vmatmul.bf16.gmra.mxu0 %v1279
        %v2272 = vpop.f32.mrf.mxu0
        %v2273 = vadd.f32 %v2184, %v2272
        %v2274 = vpop.f32.mrf.mxu0
        %v2275 = vadd.f32 %v2186, %v2274
        %2276 = vmatmul.bf16.gmra.mxu0 %v1286
        %v2277 = vpop.f32.mrf.mxu0
        %v2278 = vadd.f32 %v2189, %v2277
        %v2279 = vpop.f32.mrf.mxu0
        %v2280 = vadd.f32 %v2191, %v2279
        %2281 = vmatmul.bf16.gmra.mxu0 %v1293
        %v2282 = vpop.f32.mrf.mxu0
        %v2283 = vadd.f32 %v2194, %v2282
        %v2284 = vpop.f32.mrf.mxu0
        %v2285 = vadd.f32 %v2196, %v2284
        %2286 = vmatmul.bf16.gmra.mxu0 %v1300
        %v2287 = vpop.f32.mrf.mxu0
        %v2288 = vadd.f32 %v2199, %v2287
        %v2289 = vpop.f32.mrf.mxu0
        %v2290 = vadd.f32 %v2201, %v2289
        %2291 = vmatmul.bf16.gmra.mxu0 %v1307
        %v2292 = vpop.f32.mrf.mxu0
        %v2293 = vadd.f32 %v2204, %v2292
        %v2294 = vpop.f32.mrf.mxu0
        %v2295 = vadd.f32 %v2206, %v2294
        %2296 = vmatmul.bf16.gmra.mxu0 %v1314
        %v2297 = vpop.f32.mrf.mxu0
        %v2298 = vadd.f32 %v2209, %v2297
        %v2299 = vpop.f32.mrf.mxu0
        %v2300 = vadd.f32 %v2211, %v2299
        %2301 = vmatmul.bf16.gmra.mxu0 %v1321
        %v2302 = vpop.f32.mrf.mxu0
        %v2303 = vadd.f32 %v2214, %v2302
        %v2304 = vpop.f32.mrf.mxu0
        %v2305 = vadd.f32 %v2216, %v2304
        %2306 = vmatmul.bf16.gmra.mxu0 %v1328
        %v2307 = vpop.f32.mrf.mxu0
        %v2308 = vadd.f32 %v2219, %v2307
        %v2309 = vpop.f32.mrf.mxu0
        %v2310 = vadd.f32 %v2221, %v2309
        %2311 = vdwg.mxu0
        %2312 = vmatpush.bf16.msra.mxu0 %v1721
        %2313 = vmatpush.bf16.msra.mxu0 %v1720
        %2314 = vmatpush.bf16.msra.mxu0 %v1719
        %2315 = vmatpush.bf16.msra.mxu0 %v1718
        %2316 = vmatpush.bf16.msra.mxu0 %v1717
        %2317 = vmatpush.bf16.msra.mxu0 %v1716
        %2318 = vmatpush.bf16.msra.mxu0 %v1715
        %2319 = vmatpush.bf16.msra.mxu0 %v1714
        %2320 = vmatmul.bf16.gmra.mxu0 %v1224
        %v2321 = vpop.f32.mrf.mxu0
        %v2322 = vadd.f32 %v2233, %v2321
        %v2323 = vpop.f32.mrf.mxu0
        %v2324 = vadd.f32 %v2235, %v2323
        %2325 = vmatmul.bf16.gmra.mxu0 %v1231
        %v2326 = vpop.f32.mrf.mxu0
        %v2327 = vadd.f32 %v2238, %v2326
        %v2328 = vpop.f32.mrf.mxu0
        %v2329 = vadd.f32 %v2240, %v2328
        %2330 = vmatmul.bf16.gmra.mxu0 %v1238
        %v2331 = vpop.f32.mrf.mxu0
        %v2332 = vadd.f32 %v2243, %v2331
        %v2333 = vpop.f32.mrf.mxu0
        %v2334 = vadd.f32 %v2245, %v2333
        %2335 = vmatmul.bf16.gmra.mxu0 %v1245
        %v2336 = vpop.f32.mrf.mxu0
        %v2337 = vadd.f32 %v2248, %v2336
        %v2338 = vpop.f32.mrf.mxu0
        %v2339 = vadd.f32 %v2250, %v2338
        %2340 = vmatmul.bf16.gmra.mxu0 %v1252
        %v2341 = vpop.f32.mrf.mxu0
        %v2342 = vadd.f32 %v2253, %v2341
        %v2343 = vpop.f32.mrf.mxu0
        %v2344 = vadd.f32 %v2255, %v2343
        %2345 = vmatmul.bf16.gmra.mxu0 %v1259
        %v2346 = vpop.f32.mrf.mxu0
        %v2347 = vadd.f32 %v2258, %v2346
        %v2348 = vpop.f32.mrf.mxu0
        %v2349 = vadd.f32 %v2260, %v2348
        %2350 = vmatmul.bf16.gmra.mxu0 %v1266
        %v2351 = vpop.f32.mrf.mxu0
        %v2352 = vadd.f32 %v2263, %v2351
        %v2353 = vpop.f32.mrf.mxu0
        %v2354 = vadd.f32 %v2265, %v2353
        %2355 = vmatmul.bf16.gmra.mxu0 %v1273
        %v2356 = vpop.f32.mrf.mxu0
        %v2357 = vadd.f32 %v2268, %v2356
        %v2358 = vpop.f32.mrf.mxu0
        %v2359 = vadd.f32 %v2270, %v2358
        %2360 = vmatmul.bf16.gmra.mxu0 %v1280
        %v2361 = vpop.f32.mrf.mxu0
        %v2362 = vadd.f32 %v2273, %v2361
        %v2363 = vpop.f32.mrf.mxu0
        %v2364 = vadd.f32 %v2275, %v2363
        %2365 = vmatmul.bf16.gmra.mxu0 %v1287
        %v2366 = vpop.f32.mrf.mxu0
        %v2367 = vadd.f32 %v2278, %v2366
        %v2368 = vpop.f32.mrf.mxu0
        %v2369 = vadd.f32 %v2280, %v2368
        %2370 = vmatmul.bf16.gmra.mxu0 %v1294
        %v2371 = vpop.f32.mrf.mxu0
        %v2372 = vadd.f32 %v2283, %v2371
        %v2373 = vpop.f32.mrf.mxu0
        %v2374 = vadd.f32 %v2285, %v2373
        %2375 = vmatmul.bf16.gmra.mxu0 %v1301
        %v2376 = vpop.f32.mrf.mxu0
        %v2377 = vadd.f32 %v2288, %v2376
        %v2378 = vpop.f32.mrf.mxu0
        %v2379 = vadd.f32 %v2290, %v2378
        %2380 = vmatmul.bf16.gmra.mxu0 %v1308
        %v2381 = vpop.f32.mrf.mxu0
        %v2382 = vadd.f32 %v2293, %v2381
        %v2383 = vpop.f32.mrf.mxu0
        %v2384 = vadd.f32 %v2295, %v2383
        %2385 = vmatmul.bf16.gmra.mxu0 %v1315
        %v2386 = vpop.f32.mrf.mxu0
        %v2387 = vadd.f32 %v2298, %v2386
        %v2388 = vpop.f32.mrf.mxu0
        %v2389 = vadd.f32 %v2300, %v2388
        %2390 = vmatmul.bf16.gmra.mxu0 %v1322
        %v2391 = vpop.f32.mrf.mxu0
        %v2392 = vadd.f32 %v2303, %v2391
        %v2393 = vpop.f32.mrf.mxu0
        %v2394 = vadd.f32 %v2305, %v2393
        %2395 = vmatmul.bf16.gmra.mxu0 %v1329
        %v2396 = vpop.f32.mrf.mxu0
        %v2397 = vadd.f32 %v2308, %v2396
        %v2398 = vpop.f32.mrf.mxu0
        %v2399 = vadd.f32 %v2310, %v2398
        %2400 = vdwg.mxu0
        %v2401 = vadd.f32 %v594, %v2322
        %v2402 = vadd.f32 %v595, %v2324
        %v2403 = vadd.f32 %v596, %v2327
        %v2404 = vadd.f32 %v597, %v2329
        %v2405 = vadd.f32 %v598, %v2332
        %v2406 = vadd.f32 %v599, %v2334
        %v2407 = vadd.f32 %v600, %v2337
        %v2408 = vadd.f32 %v601, %v2339
        %v2409 = vadd.f32 %v602, %v2342
        %v2410 = vadd.f32 %v603, %v2344
        %v2411 = vadd.f32 %v604, %v2347
        %v2412 = vadd.f32 %v605, %v2349
        %v2413 = vadd.f32 %v606, %v2352
        %v2414 = vadd.f32 %v607, %v2354
        %v2415 = vadd.f32 %v608, %v2357
        %v2416 = vadd.f32 %v609, %v2359
        %v2417 = vadd.f32 %v610, %v2362
        %v2418 = vadd.f32 %v611, %v2364
        %v2419 = vadd.f32 %v612, %v2367
        %v2420 = vadd.f32 %v613, %v2369
        %v2421 = vadd.f32 %v614, %v2372
        %v2422 = vadd.f32 %v615, %v2374
        %v2423 = vadd.f32 %v616, %v2377
        %v2424 = vadd.f32 %v617, %v2379
        %v2425 = vadd.f32 %v618, %v2382
        %v2426 = vadd.f32 %v619, %v2384
        %v2427 = vadd.f32 %v620, %v2387
        %v2428 = vadd.f32 %v621, %v2389
        %v2429 = vadd.f32 %v622, %v2392
        %v2430 = vadd.f32 %v623, %v2394
        %v2431 = vadd.f32 %v624, %v2397
        %v2432 = vadd.f32 %v625, %v2399
        %2433 = vst [vmem:[#allocation2] sm:$0xff] %v2401
        %2434 = vst [vmem:[#allocation2 + $0x8] sm:$0xff] %v2402
        %2435 = vst [vmem:[#allocation2 + $0x10] sm:$0xff] %v2403
        %2436 = vst [vmem:[#allocation2 + $0x18] sm:$0xff] %v2404
        %2437 = vst [vmem:[#allocation2 + $0x20] sm:$0xff] %v2405
        %2438 = vst [vmem:[#allocation2 + $0x28] sm:$0xff] %v2406
        %2439 = vst [vmem:[#allocation2 + $0x30] sm:$0xff] %v2407
        %2440 = vst [vmem:[#allocation2 + $0x38] sm:$0xff] %v2408
        %2441 = vst [vmem:[#allocation2 + $0x40] sm:$0xff] %v2409
        %2442 = vst [vmem:[#allocation2 + $0x48] sm:$0xff] %v2410
        %2443 = vst [vmem:[#allocation2 + $0x50] sm:$0xff] %v2411
        %2444 = vst [vmem:[#allocation2 + $0x58] sm:$0xff] %v2412
        %2445 = vst [vmem:[#allocation2 + $0x60] sm:$0xff] %v2413
        %2446 = vst [vmem:[#allocation2 + $0x68] sm:$0xff] %v2414
        %2447 = vst [vmem:[#allocation2 + $0x70] sm:$0xff] %v2415
        %2448 = vst [vmem:[#allocation2 + $0x78] sm:$0xff] %v2416
        %2449 = vst [vmem:[#allocation2 + $0x80] sm:$0xff] %v2417
        %2450 = vst [vmem:[#allocation2 + $0x88] sm:$0xff] %v2418
        %2451 = vst [vmem:[#allocation2 + $0x90] sm:$0xff] %v2419
        %2452 = vst [vmem:[#allocation2 + $0x98] sm:$0xff] %v2420
        %2453 = vst [vmem:[#allocation2 + $0xa0] sm:$0xff] %v2421
        %2454 = vst [vmem:[#allocation2 + $0xa8] sm:$0xff] %v2422
        %2455 = vst [vmem:[#allocation2 + $0xb0] sm:$0xff] %v2423
        %2456 = vst [vmem:[#allocation2 + $0xb8] sm:$0xff] %v2424
        %2457 = vst [vmem:[#allocation2 + $0xc0] sm:$0xff] %v2425
        %2458 = vst [vmem:[#allocation2 + $0xc8] sm:$0xff] %v2426
        %2459 = vst [vmem:[#allocation2 + $0xd0] sm:$0xff] %v2427
        %2460 = vst [vmem:[#allocation2 + $0xd8] sm:$0xff] %v2428
        %2461 = vst [vmem:[#allocation2 + $0xe0] sm:$0xff] %v2429
        %2462 = vst [vmem:[#allocation2 + $0xe8] sm:$0xff] %v2430
        %2463 = vst [vmem:[#allocation2 + $0xf0] sm:$0xff] %v2431
        %2464 = vst [vmem:[#allocation2 + $0xf8] sm:$0xff] %v2432
        %p2465 = scmp.eq.s32.totalorder %s23, 6
        // Predicated region
        $region63: #{resnet_generator_forward.37} parent=53 // pred_check
          %p2466 = pneg %p2465
        $region64: #{resnet_generator_forward.37} parent=53 // pred_check_branch
          %2468 = sbr.rel (%p2466) target = $region66
        $region65: #{resnet_generator_forward.37} parent=53 // pred_region
          %v2469 = vld [vmem:[#allocation2] sm:$0xff]
          %v2470 = vld [vmem:[#allocation2 + $0x8] sm:$0xff]
          %v2471 = vld [vmem:[#allocation2 + $0x10] sm:$0xff]
          %v2472 = vld [vmem:[#allocation2 + $0x18] sm:$0xff]
          %v2473 = vld [vmem:[#allocation2 + $0x20] sm:$0xff]
          %v2474 = vld [vmem:[#allocation2 + $0x28] sm:$0xff]
          %v2475 = vld [vmem:[#allocation2 + $0x30] sm:$0xff]
          %v2476 = vld [vmem:[#allocation2 + $0x38] sm:$0xff]
          %v2477 = vld [vmem:[#allocation2 + $0x40] sm:$0xff]
          %v2478 = vld [vmem:[#allocation2 + $0x48] sm:$0xff]
          %v2479 = vld [vmem:[#allocation2 + $0x50] sm:$0xff]
          %v2480 = vld [vmem:[#allocation2 + $0x58] sm:$0xff]
          %v2481 = vld [vmem:[#allocation2 + $0x60] sm:$0xff]
          %v2482 = vld [vmem:[#allocation2 + $0x68] sm:$0xff]
          %v2483 = vld [vmem:[#allocation2 + $0x70] sm:$0xff]
          %v2484 = vld [vmem:[#allocation2 + $0x78] sm:$0xff]
          %v2485 = vld [vmem:[#allocation2 + $0x80] sm:$0xff]
          %v2486 = vld [vmem:[#allocation2 + $0x88] sm:$0xff]
          %v2487 = vld [vmem:[#allocation2 + $0x90] sm:$0xff]
          %v2488 = vld [vmem:[#allocation2 + $0x98] sm:$0xff]
          %v2489 = vld [vmem:[#allocation2 + $0xa0] sm:$0xff]
          %v2490 = vld [vmem:[#allocation2 + $0xa8] sm:$0xff]
          %v2491 = vld [vmem:[#allocation2 + $0xb0] sm:$0xff]
          %v2492 = vld [vmem:[#allocation2 + $0xb8] sm:$0xff]
          %v2493 = vld [vmem:[#allocation2 + $0xc0] sm:$0xff]
          %v2494 = vld [vmem:[#allocation2 + $0xc8] sm:$0xff]
          %v2495 = vld [vmem:[#allocation2 + $0xd0] sm:$0xff]
          %v2496 = vld [vmem:[#allocation2 + $0xd8] sm:$0xff]
          %v2497 = vld [vmem:[#allocation2 + $0xe0] sm:$0xff]
          %v2498 = vld [vmem:[#allocation2 + $0xe8] sm:$0xff]
          %v2499 = vld [vmem:[#allocation2 + $0xf0] sm:$0xff]
          %v2500 = vld [vmem:[#allocation2 + $0xf8] sm:$0xff]
          %v2501 = vld [vmem:[%s544] sm:$0x1]
          %v2503 = vperm.slane %v2501, 0
          %v2505 = vadd.f32 %v2469, %v2503
          %v2506 = vadd.f32 %v2470, %v2503
          %v2507 = vadd.f32 %v2471, %v2503
          %v2508 = vadd.f32 %v2472, %v2503
          %v2509 = vadd.f32 %v2473, %v2503
          %v2510 = vadd.f32 %v2474, %v2503
          %v2511 = vadd.f32 %v2475, %v2503
          %v2512 = vadd.f32 %v2476, %v2503
          %v2513 = vadd.f32 %v2477, %v2503
          %v2514 = vadd.f32 %v2478, %v2503
          %v2515 = vadd.f32 %v2479, %v2503
          %v2516 = vadd.f32 %v2480, %v2503
          %v2517 = vadd.f32 %v2481, %v2503
          %v2518 = vadd.f32 %v2482, %v2503
          %v2519 = vadd.f32 %v2483, %v2503
          %v2520 = vadd.f32 %v2484, %v2503
          %v2521 = vadd.f32 %v2485, %v2503
          %v2522 = vadd.f32 %v2486, %v2503
          %v2523 = vadd.f32 %v2487, %v2503
          %v2524 = vadd.f32 %v2488, %v2503
          %v2525 = vadd.f32 %v2489, %v2503
          %v2526 = vadd.f32 %v2490, %v2503
          %v2527 = vadd.f32 %v2491, %v2503
          %v2528 = vadd.f32 %v2492, %v2503
          %v2529 = vadd.f32 %v2493, %v2503
          %v2530 = vadd.f32 %v2494, %v2503
          %v2531 = vadd.f32 %v2495, %v2503
          %v2532 = vadd.f32 %v2496, %v2503
          %v2533 = vadd.f32 %v2497, %v2503
          %v2534 = vadd.f32 %v2498, %v2503
          %v2535 = vadd.f32 %v2499, %v2503
          %v2536 = vadd.f32 %v2500, %v2503
          %v2537 = vtanh.pop %v2505
          %v2538 = vtanh.pop %v2506
          %v2539 = vtanh.pop %v2507
          %v2540 = vtanh.pop %v2508
          %v2541 = vtanh.pop %v2509
          %v2542 = vtanh.pop %v2510
          %v2543 = vtanh.pop %v2511
          %v2544 = vtanh.pop %v2512
          %v2545 = vtanh.pop %v2513
          %v2546 = vtanh.pop %v2514
          %v2547 = vtanh.pop %v2515
          %v2548 = vtanh.pop %v2516
          %v2549 = vtanh.pop %v2517
          %v2550 = vtanh.pop %v2518
          %v2551 = vtanh.pop %v2519
          %v2552 = vtanh.pop %v2520
          %v2553 = vtanh.pop %v2521
          %v2554 = vtanh.pop %v2522
          %v2555 = vtanh.pop %v2523
          %v2556 = vtanh.pop %v2524
          %v2557 = vtanh.pop %v2525
          %v2558 = vtanh.pop %v2526
          %v2559 = vtanh.pop %v2527
          %v2560 = vtanh.pop %v2528
          %v2561 = vtanh.pop %v2529
          %v2562 = vtanh.pop %v2530
          %v2563 = vtanh.pop %v2531
          %v2564 = vtanh.pop %v2532
          %v2565 = vtanh.pop %v2533
          %v2566 = vtanh.pop %v2534
          %v2567 = vtanh.pop %v2535
          %v2568 = vtanh.pop %v2536
          %2569 = vst [vmem:[%s556] sm:$0xff] %v2537
          %2570 = vst [vmem:[%s556 + $0x8] sm:$0xff] %v2538
          %2571 = vst [vmem:[%s556 + $0x10] sm:$0xff] %v2539
          %2572 = vst [vmem:[%s556 + $0x18] sm:$0xff] %v2540
          %2573 = vst [vmem:[%s556 + $0x20] sm:$0xff] %v2541
          %2574 = vst [vmem:[%s556 + $0x28] sm:$0xff] %v2542
          %2575 = vst [vmem:[%s556 + $0x30] sm:$0xff] %v2543
          %2576 = vst [vmem:[%s556 + $0x38] sm:$0xff] %v2544
          %2577 = vst [vmem:[%s556 + $0x40] sm:$0xff] %v2545
          %2578 = vst [vmem:[%s556 + $0x48] sm:$0xff] %v2546
          %2579 = vst [vmem:[%s556 + $0x50] sm:$0xff] %v2547
          %2580 = vst [vmem:[%s556 + $0x58] sm:$0xff] %v2548
          %2581 = vst [vmem:[%s556 + $0x60] sm:$0xff] %v2549
          %2582 = vst [vmem:[%s556 + $0x68] sm:$0xff] %v2550
          %2583 = vst [vmem:[%s556 + $0x70] sm:$0xff] %v2551
          %2584 = vst [vmem:[%s556 + $0x78] sm:$0xff] %v2552
          %2585 = vst [vmem:[%s556 + $0x80] sm:$0xff] %v2553
          %2586 = vst [vmem:[%s556 + $0x88] sm:$0xff] %v2554
          %2587 = vst [vmem:[%s556 + $0x90] sm:$0xff] %v2555
          %2588 = vst [vmem:[%s556 + $0x98] sm:$0xff] %v2556
          %2589 = vst [vmem:[%s556 + $0xa0] sm:$0xff] %v2557
          %2590 = vst [vmem:[%s556 + $0xa8] sm:$0xff] %v2558
          %2591 = vst [vmem:[%s556 + $0xb0] sm:$0xff] %v2559
          %2592 = vst [vmem:[%s556 + $0xb8] sm:$0xff] %v2560
          %2593 = vst [vmem:[%s556 + $0xc0] sm:$0xff] %v2561
          %2594 = vst [vmem:[%s556 + $0xc8] sm:$0xff] %v2562
          %2595 = vst [vmem:[%s556 + $0xd0] sm:$0xff] %v2563
          %2596 = vst [vmem:[%s556 + $0xd8] sm:$0xff] %v2564
          %2597 = vst [vmem:[%s556 + $0xe0] sm:$0xff] %v2565
          %2598 = vst [vmem:[%s556 + $0xe8] sm:$0xff] %v2566
          %2599 = vst [vmem:[%s556 + $0xf0] sm:$0xff] %v2567
          %2600 = vst [vmem:[%s556 + $0xf8] sm:$0xff] %v2568
        $region66: #{resnet_generator_forward.37} parent=53 // pred_fallthru
          _
        %s2601 = smul.u32 32, %s22
        %p2602 = scmp.lt.s32.totalorder %s20, 1
        %s2603 = scalar_select %p2602, %s20, 1
        %p2604 = scmp.lt.s32.totalorder %s2601, 31
        %s2605 = scalar_select %p2604, %s2601, 31
        %p2606 = scmp.lt.s32.totalorder %s21, 0
        %s2607 = scalar_select %p2606, %s21, 0
        %s2608 = sadd.s32 %s2607, %s2605
        %s2609 = smul.addr %s2603, 32
        %s2610 = sadd.s32 %s2608, %s2609
        %s2611 = smul.addr %s2610, 8
        %s2612 = scalar_lea.vmem %s3, %s2611
        // Predicated region
        $region67: #{resnet_generator_forward.37} parent=53 // pred_check
          %p2613 = pneg %p146
        $region68: #{resnet_generator_forward.37} parent=53 // pred_check_branch
          %2615 = sbr.rel (%p2613) target = $region70
        $region69: #{resnet_generator_forward.37} parent=53 // pred_region
          %s2616 = smul.u32 32, %s22
        $region70: #{resnet_generator_forward.37} parent=53 // pred_fallthru
          _
      $region54: #{resnet_generator_forward.37} parent=5 // pred_fallthru
        _
      %p2617 = scmp.le.s32.totalorder 2, %s9
      // Predicated region
      $region71: #{resnet_generator_forward.37} parent=5 // pred_check
        %p2618 = pneg %p2617
      $region72: #{resnet_generator_forward.37} parent=5 // pred_check_branch
        %2620 = sbr.rel (%p2618) target = $region74
      $region73: #{resnet_generator_forward.37} parent=5 // pred_region
        %s2621 = ssub.s32 %s9, 2
        // Predicated region
        $region75: #{resnet_generator_forward.37} parent=73 // pred_check
          %p2622 = pneg %p152
        $region76: #{resnet_generator_forward.37} parent=73 // pred_check_branch
          %2624 = sbr.rel (%p2622) target = $region78
        $region77: #{resnet_generator_forward.37} parent=73 // pred_region
          %s2625 = smul.u32 32, %s26
          %p2626 = scmp.lt.s32.totalorder %s24, 1
          %s2627 = scalar_select %p2626, %s24, 1
          %p2628 = scmp.lt.s32.totalorder %s2625, 31
          %s2629 = scalar_select %p2628, %s2625, 31
          %p2630 = scmp.lt.s32.totalorder %s25, 0
          %s2631 = scalar_select %p2630, %s25, 0
          %s2632 = sadd.s32 %s2631, %s2629
          %s2633 = smul.addr %s2627, 32
          %s2634 = sadd.s32 %s2632, %s2633
          %s2635 = smul.addr %s2634, 8
          %s2636 = scalar_lea.vmem %s3, %s2635
        $region78: #{resnet_generator_forward.37} parent=73 // pred_fallthru
          _
      $region74: #{resnet_generator_forward.37} parent=5 // pred_fallthru
        _
    $region6: #{resnet_generator_forward.37} parent=1 // loop_footer
      %s13 = sadd.s32 1, %s9
    $region7: #{resnet_generator_forward.37} parent=1 // loop_footer_branch
      %8 = sbr.rel target = $region3
    $region8: #{resnet_generator_forward.37} parent=1 // loop_exit
      _

</llo_original>
